<compile_context>
chip_gen: v7x
topology: tpu7x:2x2x1
jax: 0.10.0
libtpu: 0.0.40
codegen_flags: <defaults>
</compile_context>

<pallas_src>
import jax
import jax.numpy as jnp
from jax.experimental import pallas as pl
from jax.experimental.pallas import tpu as pltpu

NUM_CLASSES = 10
NOISE_DIM = 100
IMAGE_SIZE = 28
CHANNELS = 1
IN_DIM = NOISE_DIM + NUM_CLASSES                  # 110
IN_DIM_PAD = 128                                  # lane-padded input features
OUT_DIM = CHANNELS * IMAGE_SIZE * IMAGE_SIZE      # 784
OUT_DIM_PAD = 896                                 # 7 * 128 (lane aligned)
OUT_SPLIT = 512                                   # w5 chunk A cols (chunk B = 384)
BN_EPS = 1e-5
LRELU_SLOPE = 0.2


# ----------------------------------------------------------------------------
# Pallas kernel: full MLP hot path (5 bf16 matmuls + LeakyReLU + BN + tanh),
# with manual, staggered int8 weight streaming for w4 / w5.
# ----------------------------------------------------------------------------
def _generator_kernel(x_ref,
                      w1_ref, b1_ref,
                      w2_ref, g2_ref, be2_ref,
                      w3_ref, g3_ref, be3_ref,
                      w4_hbm, s4_ref, g4_ref, be4_ref,
                      w5a_hbm, w5b_hbm, s5_ref, b5_ref,
                      out_ref,
                      w4_vmem, w5a_vmem, w5b_vmem, dma_sems):
    # DMA descriptors for the two dominant (int8-quantized) weights.
    cp4 = pltpu.make_async_copy(w4_hbm, w4_vmem, dma_sems.at[0])
    cp5a = pltpu.make_async_copy(w5a_hbm, w5a_vmem, dma_sems.at[1])
    cp5b = pltpu.make_async_copy(w5b_hbm, w5b_vmem, dma_sems.at[2])

    # w4 is needed first: give it the whole HBM bandwidth (nothing else queued).
    cp4.start()

    def lrelu(h):
        return jnp.where(h > 0, h, LRELU_SLOPE * h)

    def batchnorm(h, gamma, beta):
        # training-mode BatchNorm1d: batch statistics, biased variance
        mu = jnp.mean(h, axis=0, keepdims=True)
        var = jnp.mean((h - mu) * (h - mu), axis=0, keepdims=True)
        return (h - mu) * jax.lax.rsqrt(var + BN_EPS) * gamma + beta

    def bf16_dot(h, w):
        # bf16 operands on the MXU, f32 accumulation
        return jnp.dot(h.astype(jnp.bfloat16), w,
                       preferred_element_type=jnp.float32)

    def dequant(q, scale):
        # int8 -> f32 -> per-output-channel scale -> bf16 MXU operand
        return (q.astype(jnp.float32) * scale).astype(jnp.bfloat16)

    x = x_ref[...]

    h = lrelu(bf16_dot(x, w1_ref[...]) + b1_ref[...])

    # Layers 2-4: pre-BN biases omitted (they cancel exactly in training-mode BN).
    h = lrelu(batchnorm(bf16_dot(h, w2_ref[...]), g2_ref[...], be2_ref[...]))
    h = lrelu(batchnorm(bf16_dot(h, w3_ref[...]), g3_ref[...], be3_ref[...]))

    cp4.wait()
    cp5a.start()                       # streams under layer-4 dequant + matmul
    w4 = dequant(w4_vmem[...], s4_ref[...])
    h = lrelu(batchnorm(bf16_dot(h, w4), g4_ref[...], be4_ref[...]))

    cp5a.wait()
    cp5b.start()                       # streams under chunk-A epilogue
    w5a = dequant(w5a_vmem[...], s5_ref[:, :OUT_SPLIT])
    out_ref[:, :OUT_SPLIT] = jnp.tanh(bf16_dot(h, w5a) + b5_ref[:, :OUT_SPLIT])

    cp5b.wait()
    w5b = dequant(w5b_vmem[...], s5_ref[:, OUT_SPLIT:])
    out_ref[:, OUT_SPLIT:] = jnp.tanh(bf16_dot(h, w5b) + b5_ref[:, OUT_SPLIT:])


# ----------------------------------------------------------------------------
# Parameter setup (mirrors PyTorch __init__ / _initialize_weights)
# ----------------------------------------------------------------------------
def _quantize_int8(w):
    """Symmetric per-output-channel int8 quantization; f32 scales."""
    amax = jnp.max(jnp.abs(w), axis=0, keepdims=True)
    scale = jnp.where(amax > 0, amax / 127.0, jnp.float32(1.0))
    q = jnp.clip(jnp.round(w / scale), -127.0, 127.0).astype(jnp.int8)
    return q, scale.astype(jnp.float32)


def init_params(key):
    """Kaiming-normal * 0.1 Linear weights (w1-w3 bf16, w4/w5 int8+scale),
    zero biases; BN gamma=1, beta=0; Embedding ~ N(0,1).
    w1 row-padded 110->128; w5 column-padded 784->896 and split 512+384."""
    dims = [IN_DIM, 128, 256, 512, 1024, OUT_DIM]
    keys = jax.random.split(key, 6)
    params = {}

    params["emb"] = jax.random.normal(keys[0], (NUM_CLASSES, NUM_CLASSES),
                                      dtype=jnp.float32)

    ws = []
    for i in range(5):
        fan_in, fan_out = dims[i], dims[i + 1]
        std = (2.0 / fan_in) ** 0.5 * 0.1
        # stored (in, out) so the kernel computes x @ W (== PyTorch x @ W.T)
        ws.append(std * jax.random.normal(keys[i + 1], (fan_in, fan_out),
                                          dtype=jnp.float32))

    params["w1"] = jnp.pad(ws[0], ((0, IN_DIM_PAD - IN_DIM), (0, 0))
                           ).astype(jnp.bfloat16)
    params["w2"] = ws[1].astype(jnp.bfloat16)
    params["w3"] = ws[2].astype(jnp.bfloat16)

    params["w4q"], params["s4"] = _quantize_int8(ws[3])

    w5 = jnp.pad(ws[4], ((0, 0), (0, OUT_DIM_PAD - OUT_DIM)))
    w5q, s5 = _quantize_int8(w5)
    params["w5aq"] = jnp.asarray(w5q[:, :OUT_SPLIT])   # contiguous chunk A
    params["w5bq"] = jnp.asarray(w5q[:, OUT_SPLIT:])   # contiguous chunk B
    params["s5"] = s5

    params["b1"] = jnp.zeros((1, 128), dtype=jnp.float32)
    params["b5"] = jnp.zeros((1, OUT_DIM_PAD), dtype=jnp.float32)
    for i, d in [(2, 256), (3, 512), (4, 1024)]:
        params[f"g{i}"] = jnp.ones((1, d), dtype=jnp.float32)
        params[f"be{i}"] = jnp.zeros((1, d), dtype=jnp.float32)
    return params


# ----------------------------------------------------------------------------
# Wrapper
# ----------------------------------------------------------------------------
@jax.jit
def generator_forward(params, noise, labels):
    # Glue: embedding gather + concat (data-dependent gather stays in JAX).
    emb = jnp.take(params["emb"], labels, axis=0)            # (N, num_classes)
    x = jnp.concatenate([noise, emb], axis=-1)               # (N, 110)
    x = jnp.pad(x, ((0, 0), (0, IN_DIM_PAD - IN_DIM)))       # (N, 128) lane-dense
    n = x.shape[0]

    vmem = pl.BlockSpec(memory_space=pltpu.MemorySpace.VMEM)
    hbm = pl.BlockSpec(memory_space=pl.ANY)

    in_specs = [vmem,                   # x
                vmem, vmem,             # w1, b1
                vmem, vmem, vmem,       # w2, g2, be2
                vmem, vmem, vmem,       # w3, g3, be3
                hbm, vmem, vmem, vmem,  # w4q (manual DMA), s4, g4, be4
                hbm, hbm, vmem, vmem]   # w5aq, w5bq (manual DMA), s5, b5

    flat = pl.pallas_call(
        _generator_kernel,
        out_shape=jax.ShapeDtypeStruct((n, OUT_DIM_PAD), jnp.float32),
        in_specs=in_specs,
        out_specs=vmem,
        scratch_shapes=[
            pltpu.VMEM((512, 1024), jnp.int8),              # w4 staging
            pltpu.VMEM((1024, OUT_SPLIT), jnp.int8),        # w5 chunk A staging
            pltpu.VMEM((1024, OUT_DIM_PAD - OUT_SPLIT), jnp.int8),  # chunk B
            pltpu.SemaphoreType.DMA((3,)),
        ],
    )(x,
      params["w1"], params["b1"],
      params["w2"], params["g2"], params["be2"],
      params["w3"], params["g3"], params["be3"],
      params["w4q"], params["s4"], params["g4"], params["be4"],
      params["w5aq"], params["w5bq"], params["s5"], params["b5"])

    # drop lane padding, then NCHW reshape (same as torch reshape(N, C, H, W))
    return flat[:, :OUT_DIM].reshape(n, CHANNELS, IMAGE_SIZE, IMAGE_SIZE)


# ----------------------------------------------------------------------------
# Pure-JAX reference (same bf16/int8 weights, f32 accumulation) for correctness
# ----------------------------------------------------------------------------
def generator_reference(params, noise, labels):
    emb = jnp.take(params["emb"], labels, axis=0)
    x = jnp.concatenate([noise, emb], axis=-1)
    x = jnp.pad(x, ((0, 0), (0, IN_DIM_PAD - IN_DIM)))

    def lrelu(v):
        return jnp.where(v > 0, v, LRELU_SLOPE * v)

    def bn(v, g, b):
        mu = jnp.mean(v, axis=0, keepdims=True)
        var = jnp.mean((v - mu) ** 2, axis=0, keepdims=True)
        return (v - mu) * jax.lax.rsqrt(var + BN_EPS) * g + b

    def dot(a, w):
        return jnp.dot(a.astype(jnp.bfloat16), w,
                       preferred_element_type=jnp.float32)

    def deq(q, s):
        return (q.astype(jnp.float32) * s).astype(jnp.bfloat16)

    h = lrelu(dot(x, params["w1"]) + params["b1"])
    h = lrelu(bn(dot(h, params["w2"]), params["g2"], params["be2"]))
    h = lrelu(bn(dot(h, params["w3"]), params["g3"], params["be3"]))
    h = lrelu(bn(dot(h, deq(params["w4q"], params["s4"])),
                 params["g4"], params["be4"]))
    w5 = jnp.concatenate(
        [deq(params["w5aq"], params["s5"][:, :OUT_SPLIT]),
         deq(params["w5bq"], params["s5"][:, OUT_SPLIT:])], axis=1)
    h = jnp.tanh(dot(h, w5) + params["b5"])
    return h[:, :OUT_DIM].reshape(h.shape[0], CHANNELS, IMAGE_SIZE, IMAGE_SIZE)


if __name__ == "__main__":
    key = jax.random.PRNGKey(0)
    k_param, k_noise, k_label = jax.random.split(key, 3)

    batch = 8
    params = init_params(k_param)
    noise = jax.random.normal(k_noise, (batch, NOISE_DIM), dtype=jnp.float32)
    labels = jax.random.randint(k_label, (batch,), 0, NUM_CLASSES,
                                dtype=jnp.int32)

    out = jax.block_until_ready(generator_forward(params, noise, labels))
    ref = jax.block_until_ready(generator_reference(params, noise, labels))

    assert out.shape == (batch, CHANNELS, IMAGE_SIZE, IMAGE_SIZE), out.shape
    # kernel and reference use identical bf16/int8 quantized weights, so the
    # only differences are accumulation order / transcendental approximations
    assert jnp.allclose(out, ref, atol=2e-2, rtol=2e-2), \
        float(jnp.max(jnp.abs(out - ref)))

    print("KERNEL_OK")
</pallas_src>

<mosaic_0001>
module attributes {stable_mosaic.version = 11 : i64} {
  func.func @_generator_kernel(%arg0: memref<8x128xf32, #tpu.memory_space<vmem>>, %arg1: memref<128x128xbf16, #tpu.memory_space<vmem>>, %arg2: memref<1x128xf32, #tpu.memory_space<vmem>>, %arg3: memref<128x256xbf16, #tpu.memory_space<vmem>>, %arg4: memref<1x256xf32, #tpu.memory_space<vmem>>, %arg5: memref<1x256xf32, #tpu.memory_space<vmem>>, %arg6: memref<256x512xbf16, #tpu.memory_space<vmem>>, %arg7: memref<1x512xf32, #tpu.memory_space<vmem>>, %arg8: memref<1x512xf32, #tpu.memory_space<vmem>>, %arg9: memref<512x1024xi8, #tpu.memory_space<any>>, %arg10: memref<1x1024xf32, #tpu.memory_space<vmem>>, %arg11: memref<1x1024xf32, #tpu.memory_space<vmem>>, %arg12: memref<1x1024xf32, #tpu.memory_space<vmem>>, %arg13: memref<1024x512xi8, #tpu.memory_space<any>>, %arg14: memref<1024x384xi8, #tpu.memory_space<any>>, %arg15: memref<1x896xf32, #tpu.memory_space<vmem>>, %arg16: memref<1x896xf32, #tpu.memory_space<vmem>>, %arg17: memref<8x896xf32, #tpu.memory_space<vmem>>, %arg18: memref<512x1024xi8, #tpu.memory_space<vmem>>, %arg19: memref<1024x512xi8, #tpu.memory_space<vmem>>, %arg20: memref<1024x384xi8, #tpu.memory_space<vmem>>, %arg21: memref<3x!tpu.dma_semaphore, #tpu.memory_space<semaphore_mem>>) attributes {dimension_semantics = [], scalar_prefetch = 0 : i64, scratch_operands = 4 : i64, tpu.core_type = #tpu.core_type<tc>} {
    %c0_i32 = arith.constant 0 : i32
    %0 = tpu.memref_slice %arg21[%c0_i32] : memref<3x!tpu.dma_semaphore, #tpu.memory_space<semaphore_mem>> -> memref<1x!tpu.dma_semaphore, #tpu.memory_space<semaphore_mem>>
    %1 = tpu.memref_squeeze %0 : memref<1x!tpu.dma_semaphore, #tpu.memory_space<semaphore_mem>> -> memref<!tpu.dma_semaphore, #tpu.memory_space<semaphore_mem>>
    tpu.enqueue_dma source(%arg9 : memref<512x1024xi8, #tpu.memory_space<any>>) target(%arg18 : memref<512x1024xi8, #tpu.memory_space<vmem>>) target_semaphore(%1 : memref<!tpu.dma_semaphore, #tpu.memory_space<semaphore_mem>>)
    %c0 = arith.constant 0 : index
    %c0_0 = arith.constant 0 : index
    %2 = vector.load %arg0[%c0, %c0_0] : memref<8x128xf32, #tpu.memory_space<vmem>>, vector<8x128xf32>
    %c0_1 = arith.constant 0 : index
    %c0_2 = arith.constant 0 : index
    %3 = vector.load %arg1[%c0_1, %c0_2] : memref<128x128xbf16, #tpu.memory_space<vmem>>, vector<128x128xbf16>
    %4 = arith.truncf %2 : vector<8x128xf32> to vector<8x128xbf16>
    %cst = arith.constant dense<0.000000e+00> : vector<8x128xf32>
    %5 = tpu.matmul %4, %3, %cst {dimension_numbers = #tpu.dot_dimension_numbers<[1], [0], [0], [1], [0, 0, 1, 1], [], []>} : vector<8x128xbf16>, vector<128x128xbf16>, vector<8x128xf32> -> vector<8x128xf32>
    %c0_3 = arith.constant 0 : index
    %c0_4 = arith.constant 0 : index
    %6 = vector.load %arg2[%c0_3, %c0_4] : memref<1x128xf32, #tpu.memory_space<vmem>>, vector<1x128xf32>
    %7 = vector.broadcast %6 : vector<1x128xf32> to vector<8x128xf32>
    %8 = arith.addf %5, %7 : vector<8x128xf32>
    %cst_5 = arith.constant 0.000000e+00 : f32
    %9 = vector.broadcast %cst_5 : f32 to vector<8x128xf32>
    %10 = arith.cmpf ogt, %8, %9 : vector<8x128xf32>
    %cst_6 = arith.constant 2.000000e-01 : f32
    %11 = vector.broadcast %cst_6 : f32 to vector<8x128xf32>
    %12 = arith.mulf %11, %8 : vector<8x128xf32>
    %13 = arith.select %10, %8, %12 : vector<8x128xi1>, vector<8x128xf32>
    %c0_7 = arith.constant 0 : index
    %c0_8 = arith.constant 0 : index
    %14 = vector.load %arg3[%c0_7, %c0_8] : memref<128x256xbf16, #tpu.memory_space<vmem>>, vector<128x256xbf16>
    %15 = arith.truncf %13 : vector<8x128xf32> to vector<8x128xbf16>
    %cst_9 = arith.constant dense<0.000000e+00> : vector<8x256xf32>
    %16 = tpu.matmul %15, %14, %cst_9 {dimension_numbers = #tpu.dot_dimension_numbers<[1], [0], [0], [1], [0, 0, 1, 1], [], []>} : vector<8x128xbf16>, vector<128x256xbf16>, vector<8x256xf32> -> vector<8x256xf32>
    %c0_10 = arith.constant 0 : index
    %c0_11 = arith.constant 0 : index
    %17 = vector.load %arg4[%c0_10, %c0_11] : memref<1x256xf32, #tpu.memory_space<vmem>>, vector<1x256xf32>
    %c0_12 = arith.constant 0 : index
    %c0_13 = arith.constant 0 : index
    %18 = vector.load %arg5[%c0_12, %c0_13] : memref<1x256xf32, #tpu.memory_space<vmem>>, vector<1x256xf32>
    %cst_14 = arith.constant dense<0.000000e+00> : vector<256xf32>
    %19 = vector.multi_reduction <add>, %16, %cst_14 [0] : vector<8x256xf32> to vector<256xf32>
    %20 = vector.shape_cast %19 : vector<256xf32> to vector<1x256xf32>
    %cst_15 = arith.constant 8.000000e+00 : f32
    %21 = vector.broadcast %cst_15 : f32 to vector<1x256xf32>
    %22 = arith.divf %20, %21 : vector<1x256xf32>
    %23 = vector.broadcast %22 : vector<1x256xf32> to vector<8x256xf32>
    %24 = arith.subf %16, %23 : vector<8x256xf32>
    %25 = vector.broadcast %22 : vector<1x256xf32> to vector<8x256xf32>
    %26 = arith.subf %16, %25 : vector<8x256xf32>
    %27 = arith.mulf %24, %26 : vector<8x256xf32>
    %cst_16 = arith.constant dense<0.000000e+00> : vector<256xf32>
    %28 = vector.multi_reduction <add>, %27, %cst_16 [0] : vector<8x256xf32> to vector<256xf32>
    %29 = vector.shape_cast %28 : vector<256xf32> to vector<1x256xf32>
    %cst_17 = arith.constant 8.000000e+00 : f32
    %30 = vector.broadcast %cst_17 : f32 to vector<1x256xf32>
    %31 = arith.divf %29, %30 : vector<1x256xf32>
    %32 = vector.broadcast %22 : vector<1x256xf32> to vector<8x256xf32>
    %33 = arith.subf %16, %32 : vector<8x256xf32>
    %cst_18 = arith.constant 9.99999974E-6 : f32
    %34 = vector.broadcast %cst_18 : f32 to vector<1x256xf32>
    %35 = arith.addf %31, %34 : vector<1x256xf32>
    %36 = math.rsqrt %35 : vector<1x256xf32>
    %37 = vector.broadcast %36 : vector<1x256xf32> to vector<8x256xf32>
    %38 = arith.mulf %33, %37 : vector<8x256xf32>
    %39 = vector.broadcast %17 : vector<1x256xf32> to vector<8x256xf32>
    %40 = arith.mulf %38, %39 : vector<8x256xf32>
    %41 = vector.broadcast %18 : vector<1x256xf32> to vector<8x256xf32>
    %42 = arith.addf %40, %41 : vector<8x256xf32>
    %cst_19 = arith.constant 0.000000e+00 : f32
    %43 = vector.broadcast %cst_19 : f32 to vector<8x256xf32>
    %44 = arith.cmpf ogt, %42, %43 : vector<8x256xf32>
    %cst_20 = arith.constant 2.000000e-01 : f32
    %45 = vector.broadcast %cst_20 : f32 to vector<8x256xf32>
    %46 = arith.mulf %45, %42 : vector<8x256xf32>
    %47 = arith.select %44, %42, %46 : vector<8x256xi1>, vector<8x256xf32>
    %c0_21 = arith.constant 0 : index
    %c0_22 = arith.constant 0 : index
    %48 = vector.load %arg6[%c0_21, %c0_22] : memref<256x512xbf16, #tpu.memory_space<vmem>>, vector<256x512xbf16>
    %49 = arith.truncf %47 : vector<8x256xf32> to vector<8x256xbf16>
    %cst_23 = arith.constant dense<0.000000e+00> : vector<8x512xf32>
    %50 = tpu.matmul %49, %48, %cst_23 {dimension_numbers = #tpu.dot_dimension_numbers<[1], [0], [0], [1], [0, 0, 1, 1], [], []>} : vector<8x256xbf16>, vector<256x512xbf16>, vector<8x512xf32> -> vector<8x512xf32>
    %c0_24 = arith.constant 0 : index
    %c0_25 = arith.constant 0 : index
    %51 = vector.load %arg7[%c0_24, %c0_25] : memref<1x512xf32, #tpu.memory_space<vmem>>, vector<1x512xf32>
    %c0_26 = arith.constant 0 : index
    %c0_27 = arith.constant 0 : index
    %52 = vector.load %arg8[%c0_26, %c0_27] : memref<1x512xf32, #tpu.memory_space<vmem>>, vector<1x512xf32>
    %cst_28 = arith.constant dense<0.000000e+00> : vector<512xf32>
    %53 = vector.multi_reduction <add>, %50, %cst_28 [0] : vector<8x512xf32> to vector<512xf32>
    %54 = vector.shape_cast %53 : vector<512xf32> to vector<1x512xf32>
    %cst_29 = arith.constant 8.000000e+00 : f32
    %55 = vector.broadcast %cst_29 : f32 to vector<1x512xf32>
    %56 = arith.divf %54, %55 : vector<1x512xf32>
    %57 = vector.broadcast %56 : vector<1x512xf32> to vector<8x512xf32>
    %58 = arith.subf %50, %57 : vector<8x512xf32>
    %59 = vector.broadcast %56 : vector<1x512xf32> to vector<8x512xf32>
    %60 = arith.subf %50, %59 : vector<8x512xf32>
    %61 = arith.mulf %58, %60 : vector<8x512xf32>
    %cst_30 = arith.constant dense<0.000000e+00> : vector<512xf32>
    %62 = vector.multi_reduction <add>, %61, %cst_30 [0] : vector<8x512xf32> to vector<512xf32>
    %63 = vector.shape_cast %62 : vector<512xf32> to vector<1x512xf32>
    %cst_31 = arith.constant 8.000000e+00 : f32
    %64 = vector.broadcast %cst_31 : f32 to vector<1x512xf32>
    %65 = arith.divf %63, %64 : vector<1x512xf32>
    %66 = vector.broadcast %56 : vector<1x512xf32> to vector<8x512xf32>
    %67 = arith.subf %50, %66 : vector<8x512xf32>
    %cst_32 = arith.constant 9.99999974E-6 : f32
    %68 = vector.broadcast %cst_32 : f32 to vector<1x512xf32>
    %69 = arith.addf %65, %68 : vector<1x512xf32>
    %70 = math.rsqrt %69 : vector<1x512xf32>
    %71 = vector.broadcast %70 : vector<1x512xf32> to vector<8x512xf32>
    %72 = arith.mulf %67, %71 : vector<8x512xf32>
    %73 = vector.broadcast %51 : vector<1x512xf32> to vector<8x512xf32>
    %74 = arith.mulf %72, %73 : vector<8x512xf32>
    %75 = vector.broadcast %52 : vector<1x512xf32> to vector<8x512xf32>
    %76 = arith.addf %74, %75 : vector<8x512xf32>
    %cst_33 = arith.constant 0.000000e+00 : f32
    %77 = vector.broadcast %cst_33 : f32 to vector<8x512xf32>
    %78 = arith.cmpf ogt, %76, %77 : vector<8x512xf32>
    %cst_34 = arith.constant 2.000000e-01 : f32
    %79 = vector.broadcast %cst_34 : f32 to vector<8x512xf32>
    %80 = arith.mulf %79, %76 : vector<8x512xf32>
    %81 = arith.select %78, %76, %80 : vector<8x512xi1>, vector<8x512xf32>
    %c0_i32_35 = arith.constant 0 : i32
    %82 = tpu.memref_slice %arg21[%c0_i32_35] : memref<3x!tpu.dma_semaphore, #tpu.memory_space<semaphore_mem>> -> memref<1x!tpu.dma_semaphore, #tpu.memory_space<semaphore_mem>>
    %83 = tpu.memref_squeeze %82 : memref<1x!tpu.dma_semaphore, #tpu.memory_space<semaphore_mem>> -> memref<!tpu.dma_semaphore, #tpu.memory_space<semaphore_mem>>
    tpu.wait_dma2 semaphore(%83 : memref<!tpu.dma_semaphore, #tpu.memory_space<semaphore_mem>>) src(%arg9 : memref<512x1024xi8, #tpu.memory_space<any>>) dst(%arg18 : memref<512x1024xi8, #tpu.memory_space<vmem>>)
    %c1_i32 = arith.constant 1 : i32
    %84 = tpu.memref_slice %arg21[%c1_i32] : memref<3x!tpu.dma_semaphore, #tpu.memory_space<semaphore_mem>> -> memref<1x!tpu.dma_semaphore, #tpu.memory_space<semaphore_mem>>
    %85 = tpu.memref_squeeze %84 : memref<1x!tpu.dma_semaphore, #tpu.memory_space<semaphore_mem>> -> memref<!tpu.dma_semaphore, #tpu.memory_space<semaphore_mem>>
    tpu.enqueue_dma source(%arg13 : memref<1024x512xi8, #tpu.memory_space<any>>) target(%arg19 : memref<1024x512xi8, #tpu.memory_space<vmem>>) target_semaphore(%85 : memref<!tpu.dma_semaphore, #tpu.memory_space<semaphore_mem>>)
    %c0_36 = arith.constant 0 : index
    %c0_37 = arith.constant 0 : index
    %86 = vector.load %arg18[%c0_36, %c0_37] : memref<512x1024xi8, #tpu.memory_space<vmem>>, vector<512x1024xi8>
    %c0_38 = arith.constant 0 : index
    %c0_39 = arith.constant 0 : index
    %87 = vector.load %arg10[%c0_38, %c0_39] : memref<1x1024xf32, #tpu.memory_space<vmem>>, vector<1x1024xf32>
    %88 = arith.sitofp %86 : vector<512x1024xi8> to vector<512x1024xf32>
    %89 = vector.broadcast %87 : vector<1x1024xf32> to vector<512x1024xf32>
    %90 = arith.mulf %88, %89 : vector<512x1024xf32>
    %91 = arith.truncf %90 : vector<512x1024xf32> to vector<512x1024xbf16>
    %92 = arith.truncf %81 : vector<8x512xf32> to vector<8x512xbf16>
    %cst_40 = arith.constant dense<0.000000e+00> : vector<8x1024xf32>
    %93 = tpu.matmul %92, %91, %cst_40 {dimension_numbers = #tpu.dot_dimension_numbers<[1], [0], [0], [1], [0, 0, 1, 1], [], []>} : vector<8x512xbf16>, vector<512x1024xbf16>, vector<8x1024xf32> -> vector<8x1024xf32>
    %c0_41 = arith.constant 0 : index
    %c0_42 = arith.constant 0 : index
    %94 = vector.load %arg11[%c0_41, %c0_42] : memref<1x1024xf32, #tpu.memory_space<vmem>>, vector<1x1024xf32>
    %c0_43 = arith.constant 0 : index
    %c0_44 = arith.constant 0 : index
    %95 = vector.load %arg12[%c0_43, %c0_44] : memref<1x1024xf32, #tpu.memory_space<vmem>>, vector<1x1024xf32>
    %cst_45 = arith.constant dense<0.000000e+00> : vector<1024xf32>
    %96 = vector.multi_reduction <add>, %93, %cst_45 [0] : vector<8x1024xf32> to vector<1024xf32>
    %97 = vector.shape_cast %96 : vector<1024xf32> to vector<1x1024xf32>
    %cst_46 = arith.constant 8.000000e+00 : f32
    %98 = vector.broadcast %cst_46 : f32 to vector<1x1024xf32>
    %99 = arith.divf %97, %98 : vector<1x1024xf32>
    %100 = vector.broadcast %99 : vector<1x1024xf32> to vector<8x1024xf32>
    %101 = arith.subf %93, %100 : vector<8x1024xf32>
    %102 = vector.broadcast %99 : vector<1x1024xf32> to vector<8x1024xf32>
    %103 = arith.subf %93, %102 : vector<8x1024xf32>
    %104 = arith.mulf %101, %103 : vector<8x1024xf32>
    %cst_47 = arith.constant dense<0.000000e+00> : vector<1024xf32>
    %105 = vector.multi_reduction <add>, %104, %cst_47 [0] : vector<8x1024xf32> to vector<1024xf32>
    %106 = vector.shape_cast %105 : vector<1024xf32> to vector<1x1024xf32>
    %cst_48 = arith.constant 8.000000e+00 : f32
    %107 = vector.broadcast %cst_48 : f32 to vector<1x1024xf32>
    %108 = arith.divf %106, %107 : vector<1x1024xf32>
    %109 = vector.broadcast %99 : vector<1x1024xf32> to vector<8x1024xf32>
    %110 = arith.subf %93, %109 : vector<8x1024xf32>
    %cst_49 = arith.constant 9.99999974E-6 : f32
    %111 = vector.broadcast %cst_49 : f32 to vector<1x1024xf32>
    %112 = arith.addf %108, %111 : vector<1x1024xf32>
    %113 = math.rsqrt %112 : vector<1x1024xf32>
    %114 = vector.broadcast %113 : vector<1x1024xf32> to vector<8x1024xf32>
    %115 = arith.mulf %110, %114 : vector<8x1024xf32>
    %116 = vector.broadcast %94 : vector<1x1024xf32> to vector<8x1024xf32>
    %117 = arith.mulf %115, %116 : vector<8x1024xf32>
    %118 = vector.broadcast %95 : vector<1x1024xf32> to vector<8x1024xf32>
    %119 = arith.addf %117, %118 : vector<8x1024xf32>
    %cst_50 = arith.constant 0.000000e+00 : f32
    %120 = vector.broadcast %cst_50 : f32 to vector<8x1024xf32>
    %121 = arith.cmpf ogt, %119, %120 : vector<8x1024xf32>
    %cst_51 = arith.constant 2.000000e-01 : f32
    %122 = vector.broadcast %cst_51 : f32 to vector<8x1024xf32>
    %123 = arith.mulf %122, %119 : vector<8x1024xf32>
    %124 = arith.select %121, %119, %123 : vector<8x1024xi1>, vector<8x1024xf32>
    %c1_i32_52 = arith.constant 1 : i32
    %125 = tpu.memref_slice %arg21[%c1_i32_52] : memref<3x!tpu.dma_semaphore, #tpu.memory_space<semaphore_mem>> -> memref<1x!tpu.dma_semaphore, #tpu.memory_space<semaphore_mem>>
    %126 = tpu.memref_squeeze %125 : memref<1x!tpu.dma_semaphore, #tpu.memory_space<semaphore_mem>> -> memref<!tpu.dma_semaphore, #tpu.memory_space<semaphore_mem>>
    tpu.wait_dma2 semaphore(%126 : memref<!tpu.dma_semaphore, #tpu.memory_space<semaphore_mem>>) src(%arg13 : memref<1024x512xi8, #tpu.memory_space<any>>) dst(%arg19 : memref<1024x512xi8, #tpu.memory_space<vmem>>)
    %c2_i32 = arith.constant 2 : i32
    %127 = tpu.memref_slice %arg21[%c2_i32] : memref<3x!tpu.dma_semaphore, #tpu.memory_space<semaphore_mem>> -> memref<1x!tpu.dma_semaphore, #tpu.memory_space<semaphore_mem>>
    %128 = tpu.memref_squeeze %127 : memref<1x!tpu.dma_semaphore, #tpu.memory_space<semaphore_mem>> -> memref<!tpu.dma_semaphore, #tpu.memory_space<semaphore_mem>>
    tpu.enqueue_dma source(%arg14 : memref<1024x384xi8, #tpu.memory_space<any>>) target(%arg20 : memref<1024x384xi8, #tpu.memory_space<vmem>>) target_semaphore(%128 : memref<!tpu.dma_semaphore, #tpu.memory_space<semaphore_mem>>)
    %c0_53 = arith.constant 0 : index
    %c0_54 = arith.constant 0 : index
    %129 = vector.load %arg19[%c0_53, %c0_54] : memref<1024x512xi8, #tpu.memory_space<vmem>>, vector<1024x512xi8>
    %c0_55 = arith.constant 0 : index
    %c0_56 = arith.constant 0 : index
    %130 = vector.load %arg15[%c0_55, %c0_56] : memref<1x896xf32, #tpu.memory_space<vmem>>, vector<1x512xf32>
    %131 = arith.sitofp %129 : vector<1024x512xi8> to vector<1024x512xf32>
    %132 = vector.broadcast %130 : vector<1x512xf32> to vector<1024x512xf32>
    %133 = arith.mulf %131, %132 : vector<1024x512xf32>
    %134 = arith.truncf %133 : vector<1024x512xf32> to vector<1024x512xbf16>
    %135 = arith.truncf %124 : vector<8x1024xf32> to vector<8x1024xbf16>
    %cst_57 = arith.constant dense<0.000000e+00> : vector<8x512xf32>
    %136 = tpu.matmul %135, %134, %cst_57 {dimension_numbers = #tpu.dot_dimension_numbers<[1], [0], [0], [1], [0, 0, 1, 1], [], []>} : vector<8x1024xbf16>, vector<1024x512xbf16>, vector<8x512xf32> -> vector<8x512xf32>
    %c0_58 = arith.constant 0 : index
    %c0_59 = arith.constant 0 : index
    %137 = vector.load %arg16[%c0_58, %c0_59] : memref<1x896xf32, #tpu.memory_space<vmem>>, vector<1x512xf32>
    %138 = vector.broadcast %137 : vector<1x512xf32> to vector<8x512xf32>
    %139 = arith.addf %136, %138 : vector<8x512xf32>
    %140 = math.tanh %139 : vector<8x512xf32>
    %c0_60 = arith.constant 0 : index
    %c0_61 = arith.constant 0 : index
    %141 = vector.load %arg17[%c0_60, %c0_61] : memref<8x896xf32, #tpu.memory_space<vmem>>, vector<8x512xf32>
    tpu.vector_store %arg17[%c0_60, %c0_61], %140 {strides = array<i32>} : memref<8x896xf32, #tpu.memory_space<vmem>>, vector<8x512xf32>,
    %c2_i32_62 = arith.constant 2 : i32
    %142 = tpu.memref_slice %arg21[%c2_i32_62] : memref<3x!tpu.dma_semaphore, #tpu.memory_space<semaphore_mem>> -> memref<1x!tpu.dma_semaphore, #tpu.memory_space<semaphore_mem>>
    %143 = tpu.memref_squeeze %142 : memref<1x!tpu.dma_semaphore, #tpu.memory_space<semaphore_mem>> -> memref<!tpu.dma_semaphore, #tpu.memory_space<semaphore_mem>>
    tpu.wait_dma2 semaphore(%143 : memref<!tpu.dma_semaphore, #tpu.memory_space<semaphore_mem>>) src(%arg14 : memref<1024x384xi8, #tpu.memory_space<any>>) dst(%arg20 : memref<1024x384xi8, #tpu.memory_space<vmem>>)
    %c0_63 = arith.constant 0 : index
    %c0_64 = arith.constant 0 : index
    %144 = vector.load %arg20[%c0_63, %c0_64] : memref<1024x384xi8, #tpu.memory_space<vmem>>, vector<1024x384xi8>
    %c0_65 = arith.constant 0 : index
    %c512 = arith.constant 512 : index
    %145 = vector.load %arg15[%c0_65, %c512] : memref<1x896xf32, #tpu.memory_space<vmem>>, vector<1x384xf32>
    %146 = arith.sitofp %144 : vector<1024x384xi8> to vector<1024x384xf32>
    %147 = vector.broadcast %145 : vector<1x384xf32> to vector<1024x384xf32>
    %148 = arith.mulf %146, %147 : vector<1024x384xf32>
    %149 = arith.truncf %148 : vector<1024x384xf32> to vector<1024x384xbf16>
    %150 = arith.truncf %124 : vector<8x1024xf32> to vector<8x1024xbf16>
    %cst_66 = arith.constant dense<0.000000e+00> : vector<8x384xf32>
    %151 = tpu.matmul %150, %149, %cst_66 {dimension_numbers = #tpu.dot_dimension_numbers<[1], [0], [0], [1], [0, 0, 1, 1], [], []>} : vector<8x1024xbf16>, vector<1024x384xbf16>, vector<8x384xf32> -> vector<8x384xf32>
    %c0_67 = arith.constant 0 : index
    %c512_68 = arith.constant 512 : index
    %152 = vector.load %arg16[%c0_67, %c512_68] : memref<1x896xf32, #tpu.memory_space<vmem>>, vector<1x384xf32>
    %153 = vector.broadcast %152 : vector<1x384xf32> to vector<8x384xf32>
    %154 = arith.addf %151, %153 : vector<8x384xf32>
    %155 = math.tanh %154 : vector<8x384xf32>
    %c0_69 = arith.constant 0 : index
    %c512_70 = arith.constant 512 : index
    %156 = vector.load %arg17[%c0_69, %c512_70] : memref<8x896xf32, #tpu.memory_space<vmem>>, vector<8x384xf32>
    tpu.vector_store %arg17[%c0_69, %c512_70], %155 {strides = array<i32>} : memref<8x896xf32, #tpu.memory_space<vmem>>, vector<8x384xf32>,
    return
  }
}

</mosaic_0001>

<llo_original>
// kernel: generator_forward.1
$region0: #{generator_forward.1}
  #allocation0 [shape = 'u32[]', space=smem, size = 0x4, offset = 0x4, fixed_abs, tag = 'smem constant byte address 0x4 - core index']
  #allocation1 [shape = 'u32[144,128]{1,0:T(1,128)}', space=vmem, size = 0x12000, scoped, tag = 'internal scratch']
  #allocation2 [shape = 's8[512,1024]{1,0:T(32,128)(4,1)}', space=vmem, size = 0x80000, scoped, tag = 'scratch operand']
  #allocation3 [shape = 's8[1024,512]{1,0:T(32,128)(4,1)}', space=vmem, size = 0x80000, scoped, tag = 'scratch operand']
  #allocation4 [shape = 's8[1024,384]{1,0:T(32,128)(4,1)}', space=vmem, size = 0x60000, scoped, tag = 'scratch operand']
  #allocation5 [shape = 's32[3]{0}', space=sflag, size = 0xc, scoped, tag = 'scratch operand']
  #allocation16 [shape = 's32[]', space=sflag, size = 0x4, offset = 0, fixed_abs, tag = 'sflag constant byte address 0x0 - dummy sync flag']
  #allocation17 [shape = 's32[]', space=sflag, size = 0x4, offset = 0, fixed_abs, tag = 'sflag constant byte address 0x0 - dummy sync flag']
  #allocation18 [shape = 'u32[]', space=smem, size = 0x4, offset = 0x44, fixed_abs, tag = 'smem constant byte address 0x44 - assertion arg 0']
  #allocation19 [shape = 'u32[]', space=smem, size = 0x4, offset = 0x48, fixed_abs, tag = 'smem constant byte address 0x48 - assertion arg 1']
  #allocation20 [shape = 's32[]', space=sflag, size = 0x4, offset = 0, fixed_abs, tag = 'sflag constant byte address 0x0 - dummy sync flag']
  #allocation21 [shape = 's32[]', space=sflag, size = 0x4, offset = 0, fixed_abs, tag = 'sflag constant byte address 0x0 - dummy sync flag']
  #allocation22 [shape = 's32[]', space=sflag, size = 0x4, offset = 0, fixed_abs, tag = 'sflag constant byte address 0x0 - dummy sync flag']
  #allocation23 [shape = 's32[]', space=sflag, size = 0x4, offset = 0, fixed_abs, tag = 'sflag constant byte address 0x0 - dummy sync flag']
  %s0 = inlined_call_operand.vmem [shape: f32[8,128], index: 0, kind: input, shape index: {}]
  %s1 = inlined_call_operand.hbm [shape: bf16[128,128], index: 1, kind: input, shape index: {}]
  %s2 = inlined_call_operand.hbm [shape: f32[1,128], index: 2, kind: input, shape index: {}]
  %s3 = inlined_call_operand.vmem [shape: bf16[128,256], index: 3, kind: input, shape index: {}]
  %s4 = inlined_call_operand.vmem [shape: f32[1,256], index: 4, kind: input, shape index: {}]
  %s5 = inlined_call_operand.hbm [shape: f32[1,256], index: 5, kind: input, shape index: {}]
  %s6 = inlined_call_operand.hbm [shape: bf16[256,512], index: 6, kind: input, shape index: {}]
  %s7 = inlined_call_operand.hbm [shape: f32[1,512], index: 7, kind: input, shape index: {}]
  %s8 = inlined_call_operand.hbm [shape: f32[1,512], index: 8, kind: input, shape index: {}]
  %s9 = inlined_call_operand.hbm [shape: s8[512,1024], index: 9, kind: input, shape index: {}]
  %s10 = inlined_call_operand.vmem [shape: f32[1,1024], index: 10, kind: input, shape index: {}]
  %s11 = inlined_call_operand.vmem [shape: f32[1,1024], index: 11, kind: input, shape index: {}]
  %s12 = inlined_call_operand.vmem [shape: f32[1,1024], index: 12, kind: input, shape index: {}]
  %s13 = inlined_call_operand.hbm [shape: s8[1024,512], index: 13, kind: input, shape index: {}]
  %s14 = inlined_call_operand.hbm [shape: s8[1024,384], index: 14, kind: input, shape index: {}]
  %s15 = inlined_call_operand.vmem [shape: f32[1,896], index: 15, kind: input, shape index: {}]
  %s16 = inlined_call_operand.vmem [shape: f32[1,896], index: 16, kind: input, shape index: {}]
  %s17 = inlined_call_operand.vmem [shape: f32[8,896], index: 17, kind: output, shape index: {}]
  %s18 = sld [smem:[#allocation0]]
  $region102: #{generator_forward.1} parent=0
    _
  %s20 = ssub.s32 1, %s18
  %s21 = scalar_select 0, %s20, %s18
  $region1: #{generator_forward.1} parent=0
    #allocation6 [shape = 'u8[32768]{0}', space=vmem, size = 0x8000, scoped, tag = 'input window, operand 1, single buffered']
    #allocation7 [shape = 's32[1]{0}', space=sflag, size = 0x4, scoped, tag = 'scoped memory for generator_forward.1']
    #allocation8 [shape = 'u8[512]{0}', space=vmem, size = 0x400, scoped, tag = 'input window, operand 2, single buffered']
    #allocation9 [shape = 's32[1]{0}', space=sflag, size = 0x4, scoped, tag = 'scoped memory for generator_forward.1']
    #allocation10 [shape = 'u8[1024]{0}', space=vmem, size = 0x400, scoped, tag = 'input window, operand 5, single buffered']
    #allocation11 [shape = 'u8[262144]{0}', space=vmem, size = 0x40000, scoped, tag = 'input window, operand 6, single buffered']
    #allocation12 [shape = 's32[1]{0}', space=sflag, size = 0x4, scoped, tag = 'scoped memory for generator_forward.1']
    #allocation13 [shape = 'u8[2048]{0}', space=vmem, size = 0x800, scoped, tag = 'input window, operand 7, single buffered']
    #allocation14 [shape = 'u8[2048]{0}', space=vmem, size = 0x800, scoped, tag = 'input window, operand 8, single buffered']
    #allocation15 [shape = 's32[1]{0}', space=sflag, size = 0x4, scoped, tag = 'scoped memory for generator_forward.1']
    %22 = vsyncpa [#allocation7], 0
    %23 = vsyncpa [#allocation9], 0
    %24 = vsyncpa [#allocation12], 0
    %25 = vsyncpa [#allocation15], 0
    // Predicated region
    $region2: #{generator_forward.1} parent=1 // pred_check
      _
    $region3: #{generator_forward.1} parent=1 // pred_check_branch
      %27 = sbr.rel (0) target = $region5
    $region4: #{generator_forward.1} parent=1 // pred_region
      _
    $region5: #{generator_forward.1} parent=1 // pred_fallthru
      _
    // Predicated region
    $region6: #{generator_forward.1} parent=1 // pred_check
      _
    $region7: #{generator_forward.1} parent=1 // pred_check_branch
      %29 = sbr.rel (0) target = $region9
    $region8: #{generator_forward.1} parent=1 // pred_region
      %s31 = ssub.s32 1024, 1024
      %32 = vsyncadd [#allocation7], %s31
      %s33 = sshll.u32 [#allocation6], 4
      %s34 = int_to_ptr.vmem [resolvable:$true] %s33
      %39 = dma.hbm_to_vmem [thread:$0]  %s1, 1024, %s34, [#allocation7], 64, 64, 4
    $region9: #{generator_forward.1} parent=1 // pred_fallthru
      _
    // Predicated region
    $region10: #{generator_forward.1} parent=1 // pred_check
      _
    $region11: #{generator_forward.1} parent=1 // pred_check_branch
      %41 = sbr.rel (0) target = $region13
    $region12: #{generator_forward.1} parent=1 // pred_region
      %s43 = ssub.s32 16, 16
      %44 = vsyncadd [#allocation9], %s43
      %s46 = sshll.u32 [#allocation8], 4
      %s47 = int_to_ptr.vmem [resolvable:$true] %s46
      %49 = dma.hbm_to_vmem [thread:$0]  %s2, 16, %s47, [#allocation9]
    $region13: #{generator_forward.1} parent=1 // pred_fallthru
      _
    // Predicated region
    $region14: #{generator_forward.1} parent=1 // pred_check
      _
    $region15: #{generator_forward.1} parent=1 // pred_check_branch
      %51 = sbr.rel (0) target = $region17
    $region16: #{generator_forward.1} parent=1 // pred_region
      _
    $region17: #{generator_forward.1} parent=1 // pred_fallthru
      _
    // Predicated region
    $region18: #{generator_forward.1} parent=1 // pred_check
      _
    $region19: #{generator_forward.1} parent=1 // pred_check_branch
      %53 = sbr.rel (0) target = $region21
    $region20: #{generator_forward.1} parent=1 // pred_region
      _
    $region21: #{generator_forward.1} parent=1 // pred_fallthru
      _
    // Predicated region
    $region22: #{generator_forward.1} parent=1 // pred_check
      _
    $region23: #{generator_forward.1} parent=1 // pred_check_branch
      %55 = sbr.rel (0) target = $region25
    $region24: #{generator_forward.1} parent=1 // pred_region
      %s57 = ssub.s32 32, 32
      %58 = vsyncadd [#allocation9], %s57
      %s60 = sshll.u32 [#allocation10], 4
      %s61 = int_to_ptr.vmem [resolvable:$true] %s60
      %63 = dma.hbm_to_vmem [thread:$0]  %s5, 32, %s61, [#allocation9]
    $region25: #{generator_forward.1} parent=1 // pred_fallthru
      _
    // Predicated region
    $region26: #{generator_forward.1} parent=1 // pred_check
      _
    $region27: #{generator_forward.1} parent=1 // pred_check_branch
      %65 = sbr.rel (0) target = $region29
    $region28: #{generator_forward.1} parent=1 // pred_region
      %s67 = ssub.s32 8192, 8192
      %68 = vsyncadd [#allocation12], %s67
      %s69 = sshll.u32 [#allocation11], 4
      %s70 = int_to_ptr.vmem [resolvable:$true] %s69
      %75 = dma.hbm_to_vmem [thread:$0]  %s6, 8192, %s70, [#allocation12], 256, 256, 16
    $region29: #{generator_forward.1} parent=1 // pred_fallthru
      _
    // Predicated region
    $region30: #{generator_forward.1} parent=1 // pred_check
      _
    $region31: #{generator_forward.1} parent=1 // pred_check_branch
      %77 = sbr.rel (0) target = $region33
    $region32: #{generator_forward.1} parent=1 // pred_region
      %s79 = ssub.s32 64, 64
      %80 = vsyncadd [#allocation12], %s79
      %s82 = sshll.u32 [#allocation13], 4
      %s83 = int_to_ptr.vmem [resolvable:$true] %s82
      %85 = dma.hbm_to_vmem [thread:$0]  %s7, 64, %s83, [#allocation12]
    $region33: #{generator_forward.1} parent=1 // pred_fallthru
      _
    // Predicated region
    $region34: #{generator_forward.1} parent=1 // pred_check
      _
    $region35: #{generator_forward.1} parent=1 // pred_check_branch
      %87 = sbr.rel (0) target = $region37
    $region36: #{generator_forward.1} parent=1 // pred_region
      %s89 = ssub.s32 64, 64
      %90 = vsyncadd [#allocation15], %s89
      %s92 = sshll.u32 [#allocation14], 4
      %s93 = int_to_ptr.vmem [resolvable:$true] %s92
      %95 = dma.hbm_to_vmem [thread:$0]  %s8, 64, %s93, [#allocation15]
    $region37: #{generator_forward.1} parent=1 // pred_fallthru
      _
    // Predicated region
    $region38: #{generator_forward.1} parent=1 // pred_check
      _
    $region39: #{generator_forward.1} parent=1 // pred_check_branch
      %97 = sbr.rel (0) target = $region41
    $region40: #{generator_forward.1} parent=1 // pred_region
      _
    $region41: #{generator_forward.1} parent=1 // pred_fallthru
      _
    // Predicated region
    $region42: #{generator_forward.1} parent=1 // pred_check
      _
    $region43: #{generator_forward.1} parent=1 // pred_check_branch
      %99 = sbr.rel (0) target = $region45
    $region44: #{generator_forward.1} parent=1 // pred_region
      _
    $region45: #{generator_forward.1} parent=1 // pred_fallthru
      _
    // Predicated region
    $region46: #{generator_forward.1} parent=1 // pred_check
      _
    $region47: #{generator_forward.1} parent=1 // pred_check_branch
      %101 = sbr.rel (0) target = $region49
    $region48: #{generator_forward.1} parent=1 // pred_region
      _
    $region49: #{generator_forward.1} parent=1 // pred_fallthru
      _
    // Predicated region
    $region50: #{generator_forward.1} parent=1 // pred_check
      _
    $region51: #{generator_forward.1} parent=1 // pred_check_branch
      %103 = sbr.rel (0) target = $region53
    $region52: #{generator_forward.1} parent=1 // pred_region
      _
    $region53: #{generator_forward.1} parent=1 // pred_fallthru
      _
    // Predicated region
    $region54: #{generator_forward.1} parent=1 // pred_check
      _
    $region55: #{generator_forward.1} parent=1 // pred_check_branch
      %105 = sbr.rel (0) target = $region57
    $region56: #{generator_forward.1} parent=1 // pred_region
      _
    $region57: #{generator_forward.1} parent=1 // pred_fallthru
      _
    // Predicated region
    $region58: #{generator_forward.1} parent=1 // pred_check
      _
    $region59: #{generator_forward.1} parent=1 // pred_check_branch
      %107 = sbr.rel (0) target = $region61
    $region60: #{generator_forward.1} parent=1 // pred_region
      %108 = dma.done [#allocation7], 1024
    $region61: #{generator_forward.1} parent=1 // pred_fallthru
      _
    // Predicated region
    $region62: #{generator_forward.1} parent=1 // pred_check
      _
    $region63: #{generator_forward.1} parent=1 // pred_check_branch
      %110 = sbr.rel (0) target = $region65
    $region64: #{generator_forward.1} parent=1 // pred_region
      %111 = dma.done [#allocation9], 16
    $region65: #{generator_forward.1} parent=1 // pred_fallthru
      _
    // Predicated region
    $region66: #{generator_forward.1} parent=1 // pred_check
      _
    $region67: #{generator_forward.1} parent=1 // pred_check_branch
      %113 = sbr.rel (0) target = $region69
    $region68: #{generator_forward.1} parent=1 // pred_region
      %114 = dma.done [#allocation9], 32
    $region69: #{generator_forward.1} parent=1 // pred_fallthru
      _
    // Predicated region
    $region70: #{generator_forward.1} parent=1 // pred_check
      _
    $region71: #{generator_forward.1} parent=1 // pred_check_branch
      %116 = sbr.rel (0) target = $region73
    $region72: #{generator_forward.1} parent=1 // pred_region
      %117 = dma.done [#allocation12], 8192
    $region73: #{generator_forward.1} parent=1 // pred_fallthru
      _
    // Predicated region
    $region74: #{generator_forward.1} parent=1 // pred_check
      _
    $region75: #{generator_forward.1} parent=1 // pred_check_branch
      %119 = sbr.rel (0) target = $region77
    $region76: #{generator_forward.1} parent=1 // pred_region
      %120 = dma.done [#allocation12], 64
    $region77: #{generator_forward.1} parent=1 // pred_fallthru
      _
    // Predicated region
    $region78: #{generator_forward.1} parent=1 // pred_check
      _
    $region79: #{generator_forward.1} parent=1 // pred_check_branch
      %122 = sbr.rel (0) target = $region81
    $region80: #{generator_forward.1} parent=1 // pred_region
      %123 = dma.done [#allocation15], 64
    $region81: #{generator_forward.1} parent=1 // pred_fallthru
      _
    // Predicated region
    $region82: #{generator_forward.1} parent=1 // pred_check
      _
    $region83: #{generator_forward.1} parent=1 // pred_check_branch
      %126 = sbr.rel target = $region85
    $region84: #{generator_forward.1} parent=1 // pred_region
      %127 = sst [smem:[#allocation18]] [#allocation17]
      %128 = sst [smem:[#allocation19]] [#allocation16]
    $region85: #{generator_forward.1} parent=1 // pred_fallthru
      _
    %130 = shalt.err (0)
    %s132 = sshll.u32 [#allocation2], 4
    %s133 = int_to_ptr.vmem [resolvable:$true] %s132
    %135 = dma.hbm_to_vmem [thread:$0]  %s9, 16384, %s133, [#allocation5]
    %v136 = vld [vmem:[%s0] sm:$0xff]
    %v137 = vld [vmem:[#allocation6] sm:$0xf]
    %v138 = vld [vmem:[#allocation6 + $0x4] sm:$0xf]
    %v139 = vld [vmem:[#allocation6 + $0x8] sm:$0xf]
    %v140 = vld [vmem:[#allocation6 + $0xc] sm:$0xf]
    %v141 = vld [vmem:[#allocation6 + $0x10] sm:$0xf]
    %v142 = vld [vmem:[#allocation6 + $0x14] sm:$0xf]
    %v143 = vld [vmem:[#allocation6 + $0x18] sm:$0xf]
    %v144 = vld [vmem:[#allocation6 + $0x1c] sm:$0xf]
    %v145 = vld [vmem:[#allocation6 + $0x20] sm:$0xf]
    %v146 = vld [vmem:[#allocation6 + $0x24] sm:$0xf]
    %v147 = vld [vmem:[#allocation6 + $0x28] sm:$0xf]
    %v148 = vld [vmem:[#allocation6 + $0x2c] sm:$0xf]
    %v149 = vld [vmem:[#allocation6 + $0x30] sm:$0xf]
    %v150 = vld [vmem:[#allocation6 + $0x34] sm:$0xf]
    %v151 = vld [vmem:[#allocation6 + $0x38] sm:$0xf]
    %v152 = vld [vmem:[#allocation6 + $0x3c] sm:$0xf]
    %v153 = vpack.c.bf16 %v136, %v136
    %v154 = vld [vmem:[#allocation8] sm:$0x1]
    %v156 = vlaneseq
    %v157 = vshrl.u32 %v156, 7
    %v158 = vsub.s32 0, %v157
    %v159 = vrot.slane %v154, %v158
    %v177 = vunpack.c.l.b16 %v137
    %v178 = vunpack.c.l.b16 %v138
    %v179 = vunpack.c.l.b16 %v139
    %v180 = vunpack.c.l.b16 %v140
    %v181 = vunpack.c.l.b16 %v141
    %v182 = vunpack.c.l.b16 %v142
    %v183 = vunpack.c.l.b16 %v143
    %v184 = vunpack.c.l.b16 %v144
    %v185 = vunpack.c.l.b16 %v145
    %v186 = vunpack.c.l.b16 %v146
    %v187 = vunpack.c.l.b16 %v147
    %v188 = vunpack.c.l.b16 %v148
    %v189 = vunpack.c.l.b16 %v149
    %v190 = vunpack.c.l.b16 %v150
    %v191 = vunpack.c.l.b16 %v151
    %v192 = vunpack.c.l.b16 %v152
    %v193 = vpack.c.b16 %v178, %v177
    %v194 = vpack.c.b16 %v180, %v179
    %v195 = vpack.c.b16 %v182, %v181
    %v196 = vpack.c.b16 %v184, %v183
    %v197 = vpack.c.b16 %v186, %v185
    %v198 = vpack.c.b16 %v188, %v187
    %v199 = vpack.c.b16 %v190, %v189
    %v200 = vpack.c.b16 %v192, %v191
    %209 = vmatprep.subr.bf16.mxu0 0
    %210 = vmatpush1.bf16.msra.mxu0 %v193
    %211 = vmatprep.subr.bf16.mxu0 0
    %212 = vmatpush1.bf16.msra.mxu0 %v194
    %213 = vmatprep.subr.bf16.mxu0 0
    %214 = vmatpush1.bf16.msra.mxu0 %v195
    %215 = vmatprep.subr.bf16.mxu0 0
    %216 = vmatpush1.bf16.msra.mxu0 %v196
    %217 = vmatprep.subr.bf16.mxu0 0
    %218 = vmatpush1.bf16.msra.mxu0 %v197
    %219 = vmatprep.subr.bf16.mxu0 0
    %220 = vmatpush1.bf16.msra.mxu0 %v198
    %221 = vmatprep.subr.bf16.mxu0 0
    %222 = vmatpush1.bf16.msra.mxu0 %v199
    %223 = vmatprep.subr.bf16.mxu0 0
    %224 = vmatpush1.bf16.msra.mxu0 %v200
    %225 = vmatprep.subr.bf16.mxu0 0
    %226 = vmatpush1.bf16.msra.mxu0 0
    %227 = vmatprep.subr.bf16.mxu0 0
    %228 = vmatpush1.bf16.msra.mxu0 0
    %229 = vmatprep.subr.bf16.mxu0 0
    %230 = vmatpush1.bf16.msra.mxu0 0
    %231 = vmatprep.subr.bf16.mxu0 0
    %232 = vmatpush1.bf16.msra.mxu0 0
    %233 = vmatprep.subr.bf16.mxu0 0
    %234 = vmatpush1.bf16.msra.mxu0 0
    %235 = vmatprep.subr.bf16.mxu0 0
    %236 = vmatpush1.bf16.msra.mxu0 0
    %237 = vmatprep.subr.bf16.mxu0 0
    %238 = vmatpush1.bf16.msra.mxu0 0
    %239 = vmatprep.subr.bf16.mxu0 0
    %240 = vmatpush1.bf16.msra.mxu0 0
    %241 = vmatprep.mubr.bf16.mxu0 0
    %242 = vmatmul.mubr.bf16.gmra.mrb[0].mxu0 %v153
    %v243 = vpop.f32.mrb[0].mxu0
    %v244 = vadd.f32 %v159, %v243
    %v245 = vpop.f32.mrb[0].mxu0
    %v246 = vpop.f32.mrb[0].mxu0
    %v247 = vpop.f32.mrb[0].mxu0
    %248 = vdwg.mxu0
    %vm249 = vcmp.gt.f32.partialorder %v244, 0.0
    %v250 = vmul.f32 %v244, 0.2
    %v251 = vsel %vm249, %v244, %v250
    %v252 = vld [vmem:[%s3] sm:$0xff]
    %v253 = vld [vmem:[%s3 + $0x8] sm:$0xff]
    %v254 = vld [vmem:[%s3 + $0x10] sm:$0xff]
    %v255 = vld [vmem:[%s3 + $0x18] sm:$0xff]
    %v256 = vld [vmem:[%s3 + $0x20] sm:$0xff]
    %v257 = vld [vmem:[%s3 + $0x28] sm:$0xff]
    %v258 = vld [vmem:[%s3 + $0x30] sm:$0xff]
    %v259 = vld [vmem:[%s3 + $0x38] sm:$0xff]
    %v260 = vld [vmem:[%s3 + $0x40] sm:$0xff]
    %v261 = vld [vmem:[%s3 + $0x48] sm:$0xff]
    %v262 = vld [vmem:[%s3 + $0x50] sm:$0xff]
    %v263 = vld [vmem:[%s3 + $0x58] sm:$0xff]
    %v264 = vld [vmem:[%s3 + $0x60] sm:$0xff]
    %v265 = vld [vmem:[%s3 + $0x68] sm:$0xff]
    %v266 = vld [vmem:[%s3 + $0x70] sm:$0xff]
    %v267 = vld [vmem:[%s3 + $0x78] sm:$0xff]
    %v268 = vpack.c.bf16 %v251, %v251
    %v285 = vunpack.c.l.b16 %v252
    %v286 = vunpack.c.h.b16 %v252
    %v287 = vunpack.c.l.b16 %v253
    %v288 = vunpack.c.h.b16 %v253
    %v289 = vunpack.c.l.b16 %v254
    %v290 = vunpack.c.h.b16 %v254
    %v291 = vunpack.c.l.b16 %v255
    %v292 = vunpack.c.h.b16 %v255
    %v293 = vunpack.c.l.b16 %v256
    %v294 = vunpack.c.h.b16 %v256
    %v295 = vunpack.c.l.b16 %v257
    %v296 = vunpack.c.h.b16 %v257
    %v297 = vunpack.c.l.b16 %v258
    %v298 = vunpack.c.h.b16 %v258
    %v299 = vunpack.c.l.b16 %v259
    %v300 = vunpack.c.h.b16 %v259
    %v301 = vunpack.c.l.b16 %v260
    %v302 = vunpack.c.h.b16 %v260
    %v303 = vunpack.c.l.b16 %v261
    %v304 = vunpack.c.h.b16 %v261
    %v305 = vunpack.c.l.b16 %v262
    %v306 = vunpack.c.h.b16 %v262
    %v307 = vunpack.c.l.b16 %v263
    %v308 = vunpack.c.h.b16 %v263
    %v309 = vunpack.c.l.b16 %v264
    %v310 = vunpack.c.h.b16 %v264
    %v311 = vunpack.c.l.b16 %v265
    %v312 = vunpack.c.h.b16 %v265
    %v313 = vunpack.c.l.b16 %v266
    %v314 = vunpack.c.h.b16 %v266
    %v315 = vunpack.c.l.b16 %v267
    %v316 = vunpack.c.h.b16 %v267
    %v317 = vpack.c.b16 %v287, %v285
    %v318 = vpack.c.b16 %v288, %v286
    %v319 = vpack.c.b16 %v291, %v289
    %v320 = vpack.c.b16 %v292, %v290
    %v321 = vpack.c.b16 %v295, %v293
    %v322 = vpack.c.b16 %v296, %v294
    %v323 = vpack.c.b16 %v299, %v297
    %v324 = vpack.c.b16 %v300, %v298
    %v325 = vpack.c.b16 %v303, %v301
    %v326 = vpack.c.b16 %v304, %v302
    %v327 = vpack.c.b16 %v307, %v305
    %v328 = vpack.c.b16 %v308, %v306
    %v329 = vpack.c.b16 %v311, %v309
    %v330 = vpack.c.b16 %v312, %v310
    %v331 = vpack.c.b16 %v315, %v313
    %v332 = vpack.c.b16 %v316, %v314
    %349 = vmatprep.subr.bf16.mxu0 %v318
    %350 = vmatpush1.bf16.msra.mxu0 %v317
    %351 = vmatprep.subr.bf16.mxu0 %v320
    %352 = vmatpush1.bf16.msra.mxu0 %v319
    %353 = vmatprep.subr.bf16.mxu0 %v322
    %354 = vmatpush1.bf16.msra.mxu0 %v321
    %355 = vmatprep.subr.bf16.mxu0 %v324
    %356 = vmatpush1.bf16.msra.mxu0 %v323
    %357 = vmatprep.subr.bf16.mxu0 %v326
    %358 = vmatpush1.bf16.msra.mxu0 %v325
    %359 = vmatprep.subr.bf16.mxu0 %v328
    %360 = vmatpush1.bf16.msra.mxu0 %v327
    %361 = vmatprep.subr.bf16.mxu0 %v330
    %362 = vmatpush1.bf16.msra.mxu0 %v329
    %363 = vmatprep.subr.bf16.mxu0 %v332
    %364 = vmatpush1.bf16.msra.mxu0 %v331
    %365 = vmatprep.subr.bf16.mxu0 0
    %366 = vmatpush1.bf16.msra.mxu0 0
    %367 = vmatprep.subr.bf16.mxu0 0
    %368 = vmatpush1.bf16.msra.mxu0 0
    %369 = vmatprep.subr.bf16.mxu0 0
    %370 = vmatpush1.bf16.msra.mxu0 0
    %371 = vmatprep.subr.bf16.mxu0 0
    %372 = vmatpush1.bf16.msra.mxu0 0
    %373 = vmatprep.subr.bf16.mxu0 0
    %374 = vmatpush1.bf16.msra.mxu0 0
    %375 = vmatprep.subr.bf16.mxu0 0
    %376 = vmatpush1.bf16.msra.mxu0 0
    %377 = vmatprep.subr.bf16.mxu0 0
    %378 = vmatpush1.bf16.msra.mxu0 0
    %379 = vmatprep.subr.bf16.mxu0 0
    %380 = vmatpush1.bf16.msra.mxu0 0
    %381 = vmatprep.mubr.bf16.mxu0 0
    %382 = vmatmul.mubr.bf16.gmra.mrb[0].mxu0 %v268
    %v383 = vpop.f32.mrb[0].mxu0
    %v384 = vadd.f32 0.0, %v383
    %v385 = vpop.f32.mrb[0].mxu0
    %v386 = vadd.f32 0.0, %v385
    %v387 = vpop.f32.mrb[0].mxu0
    %v388 = vpop.f32.mrb[0].mxu0
    %389 = vdwg.mxu0
    %v390 = vld [vmem:[%s4] sm:$0x3]
    %v391 = vld [vmem:[#allocation10] sm:$0x3]
    %v392 = vrot.slane %v384, 4
    %v393 = vadd.f32 %v384, %v392
    %v394 = vrot.slane %v393, 2
    %v395 = vadd.f32 %v393, %v394
    %v396 = vrot.slane %v395, 1
    %v397 = vadd.f32 %v395, %v396
    %v398 = vrot.slane %v386, 4
    %v399 = vadd.f32 %v386, %v398
    %v400 = vrot.slane %v399, 2
    %v401 = vadd.f32 %v399, %v400
    %v402 = vrot.slane %v401, 1
    %v403 = vadd.f32 %v401, %v402
    %v404 = vrcp.pop 8.0
    %v405 = vmul.f32 %v397, %v404
    %v406 = vmul.f32 %v403, %v404
    %v407 = vsub.f32 %v384, %v405
    %v408 = vsub.f32 %v386, %v406
    %v409 = vmul.f32 %v407, %v407
    %v410 = vmul.f32 %v408, %v408
    %v411 = vrot.slane %v409, 4
    %v412 = vadd.f32 %v409, %v411
    %v413 = vrot.slane %v412, 2
    %v414 = vadd.f32 %v412, %v413
    %v415 = vrot.slane %v414, 1
    %v416 = vadd.f32 %v414, %v415
    %v417 = vrot.slane %v410, 4
    %v418 = vadd.f32 %v410, %v417
    %v419 = vrot.slane %v418, 2
    %v420 = vadd.f32 %v418, %v419
    %v421 = vrot.slane %v420, 1
    %v422 = vadd.f32 %v420, %v421
    %v423 = vmul.f32 %v416, %v404
    %v424 = vmul.f32 %v422, %v404
    %v425 = vadd.f32 %v423, 1e-05
    %v426 = vadd.f32 %v424, 1e-05
    %v427 = vrsqrt.pop %v425
    %v428 = vrsqrt.pop %v426
    %v429 = vmul.f32 %v407, %v427
    %v430 = vmul.f32 %v408, %v428
    %v432 = vlaneseq
    %v433 = vshrl.u32 %v432, 7
    %v434 = vsub.s32 0, %v433
    %v435 = vrot.slane %v390, %v434
    %v436 = vlaneseq
    %v437 = vshrl.u32 %v436, 7
    %v438 = vsub.s32 1, %v437
    %v439 = vrot.slane %v390, %v438
    %v442 = vmul.f32 %v429, %v435
    %v443 = vmul.f32 %v430, %v439
    %v445 = vlaneseq
    %v446 = vshrl.u32 %v445, 7
    %v447 = vsub.s32 0, %v446
    %v448 = vrot.slane %v391, %v447
    %v449 = vlaneseq
    %v450 = vshrl.u32 %v449, 7
    %v451 = vsub.s32 1, %v450
    %v452 = vrot.slane %v391, %v451
    %v455 = vadd.f32 %v442, %v448
    %v456 = vadd.f32 %v443, %v452
    %vm457 = vcmp.gt.f32.partialorder %v455, 0.0
    %vm458 = vcmp.gt.f32.partialorder %v456, 0.0
    %v459 = vmul.f32 %v455, 0.2
    %v460 = vmul.f32 %v456, 0.2
    %v461 = vsel %vm457, %v455, %v459
    %v462 = vsel %vm458, %v456, %v460
    %v463 = vld [vmem:[#allocation11] sm:$0xff]
    %v464 = vld [vmem:[#allocation11 + $0x8] sm:$0xff]
    %v465 = vld [vmem:[#allocation11 + $0x10] sm:$0xff]
    %v466 = vld [vmem:[#allocation11 + $0x18] sm:$0xff]
    %v467 = vld [vmem:[#allocation11 + $0x20] sm:$0xff]
    %v468 = vld [vmem:[#allocation11 + $0x28] sm:$0xff]
    %v469 = vld [vmem:[#allocation11 + $0x30] sm:$0xff]
    %v470 = vld [vmem:[#allocation11 + $0x38] sm:$0xff]
    %v471 = vld [vmem:[#allocation11 + $0x40] sm:$0xff]
    %v472 = vld [vmem:[#allocation11 + $0x48] sm:$0xff]
    %v473 = vld [vmem:[#allocation11 + $0x50] sm:$0xff]
    %v474 = vld [vmem:[#allocation11 + $0x58] sm:$0xff]
    %v475 = vld [vmem:[#allocation11 + $0x60] sm:$0xff]
    %v476 = vld [vmem:[#allocation11 + $0x68] sm:$0xff]
    %v477 = vld [vmem:[#allocation11 + $0x70] sm:$0xff]
    %v478 = vld [vmem:[#allocation11 + $0x78] sm:$0xff]
    %v479 = vld [vmem:[#allocation11 + $0x80] sm:$0xff]
    %v480 = vld [vmem:[#allocation11 + $0x88] sm:$0xff]
    %v481 = vld [vmem:[#allocation11 + $0x90] sm:$0xff]
    %v482 = vld [vmem:[#allocation11 + $0x98] sm:$0xff]
    %v483 = vld [vmem:[#allocation11 + $0xa0] sm:$0xff]
    %v484 = vld [vmem:[#allocation11 + $0xa8] sm:$0xff]
    %v485 = vld [vmem:[#allocation11 + $0xb0] sm:$0xff]
    %v486 = vld [vmem:[#allocation11 + $0xb8] sm:$0xff]
    %v487 = vld [vmem:[#allocation11 + $0xc0] sm:$0xff]
    %v488 = vld [vmem:[#allocation11 + $0xc8] sm:$0xff]
    %v489 = vld [vmem:[#allocation11 + $0xd0] sm:$0xff]
    %v490 = vld [vmem:[#allocation11 + $0xd8] sm:$0xff]
    %v491 = vld [vmem:[#allocation11 + $0xe0] sm:$0xff]
    %v492 = vld [vmem:[#allocation11 + $0xe8] sm:$0xff]
    %v493 = vld [vmem:[#allocation11 + $0xf0] sm:$0xff]
    %v494 = vld [vmem:[#allocation11 + $0xf8] sm:$0xff]
    %v495 = vld [vmem:[#allocation11 + $0x100] sm:$0xff]
    %v496 = vld [vmem:[#allocation11 + $0x108] sm:$0xff]
    %v497 = vld [vmem:[#allocation11 + $0x110] sm:$0xff]
    %v498 = vld [vmem:[#allocation11 + $0x118] sm:$0xff]
    %v499 = vld [vmem:[#allocation11 + $0x120] sm:$0xff]
    %v500 = vld [vmem:[#allocation11 + $0x128] sm:$0xff]
    %v501 = vld [vmem:[#allocation11 + $0x130] sm:$0xff]
    %v502 = vld [vmem:[#allocation11 + $0x138] sm:$0xff]
    %v503 = vld [vmem:[#allocation11 + $0x140] sm:$0xff]
    %v504 = vld [vmem:[#allocation11 + $0x148] sm:$0xff]
    %v505 = vld [vmem:[#allocation11 + $0x150] sm:$0xff]
    %v506 = vld [vmem:[#allocation11 + $0x158] sm:$0xff]
    %v507 = vld [vmem:[#allocation11 + $0x160] sm:$0xff]
    %v508 = vld [vmem:[#allocation11 + $0x168] sm:$0xff]
    %v509 = vld [vmem:[#allocation11 + $0x170] sm:$0xff]
    %v510 = vld [vmem:[#allocation11 + $0x178] sm:$0xff]
    %v511 = vld [vmem:[#allocation11 + $0x180] sm:$0xff]
    %v512 = vld [vmem:[#allocation11 + $0x188] sm:$0xff]
    %v513 = vld [vmem:[#allocation11 + $0x190] sm:$0xff]
    %v514 = vld [vmem:[#allocation11 + $0x198] sm:$0xff]
    %v515 = vld [vmem:[#allocation11 + $0x1a0] sm:$0xff]
    %v516 = vld [vmem:[#allocation11 + $0x1a8] sm:$0xff]
    %v517 = vld [vmem:[#allocation11 + $0x1b0] sm:$0xff]
    %v518 = vld [vmem:[#allocation11 + $0x1b8] sm:$0xff]
    %v519 = vld [vmem:[#allocation11 + $0x1c0] sm:$0xff]
    %v520 = vld [vmem:[#allocation11 + $0x1c8] sm:$0xff]
    %v521 = vld [vmem:[#allocation11 + $0x1d0] sm:$0xff]
    %v522 = vld [vmem:[#allocation11 + $0x1d8] sm:$0xff]
    %v523 = vld [vmem:[#allocation11 + $0x1e0] sm:$0xff]
    %v524 = vld [vmem:[#allocation11 + $0x1e8] sm:$0xff]
    %v525 = vld [vmem:[#allocation11 + $0x1f0] sm:$0xff]
    %v526 = vld [vmem:[#allocation11 + $0x1f8] sm:$0xff]
    %v527 = vpack.c.bf16 %v461, %v461
    %v528 = vpack.c.bf16 %v462, %v462
    %v593 = vunpack.c.l.b16 %v463
    %v594 = vunpack.c.h.b16 %v463
    %v595 = vunpack.c.l.b16 %v464
    %v596 = vunpack.c.h.b16 %v464
    %v597 = vunpack.c.l.b16 %v465
    %v598 = vunpack.c.h.b16 %v465
    %v599 = vunpack.c.l.b16 %v466
    %v600 = vunpack.c.h.b16 %v466
    %v601 = vunpack.c.l.b16 %v467
    %v602 = vunpack.c.h.b16 %v467
    %v603 = vunpack.c.l.b16 %v468
    %v604 = vunpack.c.h.b16 %v468
    %v605 = vunpack.c.l.b16 %v469
    %v606 = vunpack.c.h.b16 %v469
    %v607 = vunpack.c.l.b16 %v470
    %v608 = vunpack.c.h.b16 %v470
    %v609 = vunpack.c.l.b16 %v471
    %v610 = vunpack.c.h.b16 %v471
    %v611 = vunpack.c.l.b16 %v472
    %v612 = vunpack.c.h.b16 %v472
    %v613 = vunpack.c.l.b16 %v473
    %v614 = vunpack.c.h.b16 %v473
    %v615 = vunpack.c.l.b16 %v474
    %v616 = vunpack.c.h.b16 %v474
    %v617 = vunpack.c.l.b16 %v475
    %v618 = vunpack.c.h.b16 %v475
    %v619 = vunpack.c.l.b16 %v476
    %v620 = vunpack.c.h.b16 %v476
    %v621 = vunpack.c.l.b16 %v477
    %v622 = vunpack.c.h.b16 %v477
    %v623 = vunpack.c.l.b16 %v478
    %v624 = vunpack.c.h.b16 %v478
    %v625 = vunpack.c.l.b16 %v479
    %v626 = vunpack.c.h.b16 %v479
    %v627 = vunpack.c.l.b16 %v480
    %v628 = vunpack.c.h.b16 %v480
    %v629 = vunpack.c.l.b16 %v481
    %v630 = vunpack.c.h.b16 %v481
    %v631 = vunpack.c.l.b16 %v482
    %v632 = vunpack.c.h.b16 %v482
    %v633 = vunpack.c.l.b16 %v483
    %v634 = vunpack.c.h.b16 %v483
    %v635 = vunpack.c.l.b16 %v484
    %v636 = vunpack.c.h.b16 %v484
    %v637 = vunpack.c.l.b16 %v485
    %v638 = vunpack.c.h.b16 %v485
    %v639 = vunpack.c.l.b16 %v486
    %v640 = vunpack.c.h.b16 %v486
    %v641 = vunpack.c.l.b16 %v487
    %v642 = vunpack.c.h.b16 %v487
    %v643 = vunpack.c.l.b16 %v488
    %v644 = vunpack.c.h.b16 %v488
    %v645 = vunpack.c.l.b16 %v489
    %v646 = vunpack.c.h.b16 %v489
    %v647 = vunpack.c.l.b16 %v490
    %v648 = vunpack.c.h.b16 %v490
    %v649 = vunpack.c.l.b16 %v491
    %v650 = vunpack.c.h.b16 %v491
    %v651 = vunpack.c.l.b16 %v492
    %v652 = vunpack.c.h.b16 %v492
    %v653 = vunpack.c.l.b16 %v493
    %v654 = vunpack.c.h.b16 %v493
    %v655 = vunpack.c.l.b16 %v494
    %v656 = vunpack.c.h.b16 %v494
    %v657 = vunpack.c.l.b16 %v495
    %v658 = vunpack.c.h.b16 %v495
    %v659 = vunpack.c.l.b16 %v496
    %v660 = vunpack.c.h.b16 %v496
    %v661 = vunpack.c.l.b16 %v497
    %v662 = vunpack.c.h.b16 %v497
    %v663 = vunpack.c.l.b16 %v498
    %v664 = vunpack.c.h.b16 %v498
    %v665 = vunpack.c.l.b16 %v499
    %v666 = vunpack.c.h.b16 %v499
    %v667 = vunpack.c.l.b16 %v500
    %v668 = vunpack.c.h.b16 %v500
    %v669 = vunpack.c.l.b16 %v501
    %v670 = vunpack.c.h.b16 %v501
    %v671 = vunpack.c.l.b16 %v502
    %v672 = vunpack.c.h.b16 %v502
    %v673 = vunpack.c.l.b16 %v503
    %v674 = vunpack.c.h.b16 %v503
    %v675 = vunpack.c.l.b16 %v504
    %v676 = vunpack.c.h.b16 %v504
    %v677 = vunpack.c.l.b16 %v505
    %v678 = vunpack.c.h.b16 %v505
    %v679 = vunpack.c.l.b16 %v506
    %v680 = vunpack.c.h.b16 %v506
    %v681 = vunpack.c.l.b16 %v507
    %v682 = vunpack.c.h.b16 %v507
    %v683 = vunpack.c.l.b16 %v508
    %v684 = vunpack.c.h.b16 %v508
    %v685 = vunpack.c.l.b16 %v509
    %v686 = vunpack.c.h.b16 %v509
    %v687 = vunpack.c.l.b16 %v510
    %v688 = vunpack.c.h.b16 %v510
    %v689 = vunpack.c.l.b16 %v511
    %v690 = vunpack.c.h.b16 %v511
    %v691 = vunpack.c.l.b16 %v512
    %v692 = vunpack.c.h.b16 %v512
    %v693 = vunpack.c.l.b16 %v513
    %v694 = vunpack.c.h.b16 %v513
    %v695 = vunpack.c.l.b16 %v514
    %v696 = vunpack.c.h.b16 %v514
    %v697 = vunpack.c.l.b16 %v515
    %v698 = vunpack.c.h.b16 %v515
    %v699 = vunpack.c.l.b16 %v516
    %v700 = vunpack.c.h.b16 %v516
    %v701 = vunpack.c.l.b16 %v517
    %v702 = vunpack.c.h.b16 %v517
    %v703 = vunpack.c.l.b16 %v518
    %v704 = vunpack.c.h.b16 %v518
    %v705 = vunpack.c.l.b16 %v519
    %v706 = vunpack.c.h.b16 %v519
    %v707 = vunpack.c.l.b16 %v520
    %v708 = vunpack.c.h.b16 %v520
    %v709 = vunpack.c.l.b16 %v521
    %v710 = vunpack.c.h.b16 %v521
    %v711 = vunpack.c.l.b16 %v522
    %v712 = vunpack.c.h.b16 %v522
    %v713 = vunpack.c.l.b16 %v523
    %v714 = vunpack.c.h.b16 %v523
    %v715 = vunpack.c.l.b16 %v524
    %v716 = vunpack.c.h.b16 %v524
    %v717 = vunpack.c.l.b16 %v525
    %v718 = vunpack.c.h.b16 %v525
    %v719 = vunpack.c.l.b16 %v526
    %v720 = vunpack.c.h.b16 %v526
    %v721 = vpack.c.b16 %v597, %v593
    %v722 = vpack.c.b16 %v598, %v594
    %v723 = vpack.c.b16 %v599, %v595
    %v724 = vpack.c.b16 %v600, %v596
    %v725 = vpack.c.b16 %v605, %v601
    %v726 = vpack.c.b16 %v606, %v602
    %v727 = vpack.c.b16 %v607, %v603
    %v728 = vpack.c.b16 %v608, %v604
    %v729 = vpack.c.b16 %v613, %v609
    %v730 = vpack.c.b16 %v614, %v610
    %v731 = vpack.c.b16 %v615, %v611
    %v732 = vpack.c.b16 %v616, %v612
    %v733 = vpack.c.b16 %v621, %v617
    %v734 = vpack.c.b16 %v622, %v618
    %v735 = vpack.c.b16 %v623, %v619
    %v736 = vpack.c.b16 %v624, %v620
    %v737 = vpack.c.b16 %v629, %v625
    %v738 = vpack.c.b16 %v630, %v626
    %v739 = vpack.c.b16 %v631, %v627
    %v740 = vpack.c.b16 %v632, %v628
    %v741 = vpack.c.b16 %v637, %v633
    %v742 = vpack.c.b16 %v638, %v634
    %v743 = vpack.c.b16 %v639, %v635
    %v744 = vpack.c.b16 %v640, %v636
    %v745 = vpack.c.b16 %v645, %v641
    %v746 = vpack.c.b16 %v646, %v642
    %v747 = vpack.c.b16 %v647, %v643
    %v748 = vpack.c.b16 %v648, %v644
    %v749 = vpack.c.b16 %v653, %v649
    %v750 = vpack.c.b16 %v654, %v650
    %v751 = vpack.c.b16 %v655, %v651
    %v752 = vpack.c.b16 %v656, %v652
    %v753 = vpack.c.b16 %v661, %v657
    %v754 = vpack.c.b16 %v662, %v658
    %v755 = vpack.c.b16 %v663, %v659
    %v756 = vpack.c.b16 %v664, %v660
    %v757 = vpack.c.b16 %v669, %v665
    %v758 = vpack.c.b16 %v670, %v666
    %v759 = vpack.c.b16 %v671, %v667
    %v760 = vpack.c.b16 %v672, %v668
    %v761 = vpack.c.b16 %v677, %v673
    %v762 = vpack.c.b16 %v678, %v674
    %v763 = vpack.c.b16 %v679, %v675
    %v764 = vpack.c.b16 %v680, %v676
    %v765 = vpack.c.b16 %v685, %v681
    %v766 = vpack.c.b16 %v686, %v682
    %v767 = vpack.c.b16 %v687, %v683
    %v768 = vpack.c.b16 %v688, %v684
    %v769 = vpack.c.b16 %v693, %v689
    %v770 = vpack.c.b16 %v694, %v690
    %v771 = vpack.c.b16 %v695, %v691
    %v772 = vpack.c.b16 %v696, %v692
    %v773 = vpack.c.b16 %v701, %v697
    %v774 = vpack.c.b16 %v702, %v698
    %v775 = vpack.c.b16 %v703, %v699
    %v776 = vpack.c.b16 %v704, %v700
    %v777 = vpack.c.b16 %v709, %v705
    %v778 = vpack.c.b16 %v710, %v706
    %v779 = vpack.c.b16 %v711, %v707
    %v780 = vpack.c.b16 %v712, %v708
    %v781 = vpack.c.b16 %v717, %v713
    %v782 = vpack.c.b16 %v718, %v714
    %v783 = vpack.c.b16 %v719, %v715
    %v784 = vpack.c.b16 %v720, %v716
    %849 = vmatprep.subr.bf16.mxu0 %v722
    %850 = vmatpush1.bf16.msra.mxu0 %v721
    %851 = vmatprep.subr.bf16.mxu0 %v726
    %852 = vmatpush1.bf16.msra.mxu0 %v725
    %853 = vmatprep.subr.bf16.mxu0 %v730
    %854 = vmatpush1.bf16.msra.mxu0 %v729
    %855 = vmatprep.subr.bf16.mxu0 %v734
    %856 = vmatpush1.bf16.msra.mxu0 %v733
    %857 = vmatprep.subr.bf16.mxu0 %v738
    %858 = vmatpush1.bf16.msra.mxu0 %v737
    %859 = vmatprep.subr.bf16.mxu0 %v742
    %860 = vmatpush1.bf16.msra.mxu0 %v741
    %861 = vmatprep.subr.bf16.mxu0 %v746
    %862 = vmatpush1.bf16.msra.mxu0 %v745
    %863 = vmatprep.subr.bf16.mxu0 %v750
    %864 = vmatpush1.bf16.msra.mxu0 %v749
    %865 = vmatprep.subr.bf16.mxu0 %v754
    %866 = vmatpush1.bf16.msra.mxu0 %v753
    %867 = vmatprep.subr.bf16.mxu0 %v758
    %868 = vmatpush1.bf16.msra.mxu0 %v757
    %869 = vmatprep.subr.bf16.mxu0 %v762
    %870 = vmatpush1.bf16.msra.mxu0 %v761
    %871 = vmatprep.subr.bf16.mxu0 %v766
    %872 = vmatpush1.bf16.msra.mxu0 %v765
    %873 = vmatprep.subr.bf16.mxu0 %v770
    %874 = vmatpush1.bf16.msra.mxu0 %v769
    %875 = vmatprep.subr.bf16.mxu0 %v774
    %876 = vmatpush1.bf16.msra.mxu0 %v773
    %877 = vmatprep.subr.bf16.mxu0 %v778
    %878 = vmatpush1.bf16.msra.mxu0 %v777
    %879 = vmatprep.subr.bf16.mxu0 %v782
    %880 = vmatpush1.bf16.msra.mxu0 %v781
    %881 = vmatprep.mubr.bf16.mxu0 %v528
    %882 = vmatmul.mubr.bf16.gmra.mrb[0].mxu0 %v527
    %v883 = vpop.f32.mrb[0].mxu0
    %v884 = vadd.f32 0.0, %v883
    %v885 = vpop.f32.mrb[0].mxu0
    %v886 = vadd.f32 0.0, %v885
    %v887 = vpop.f32.mrb[0].mxu0
    %v888 = vpop.f32.mrb[0].mxu0
    %889 = vdwg.mxu0
    %890 = vmatprep.subr.bf16.mxu0 %v724
    %891 = vmatpush1.bf16.msra.mxu0 %v723
    %892 = vmatprep.subr.bf16.mxu0 %v728
    %893 = vmatpush1.bf16.msra.mxu0 %v727
    %894 = vmatprep.subr.bf16.mxu0 %v732
    %895 = vmatpush1.bf16.msra.mxu0 %v731
    %896 = vmatprep.subr.bf16.mxu0 %v736
    %897 = vmatpush1.bf16.msra.mxu0 %v735
    %898 = vmatprep.subr.bf16.mxu0 %v740
    %899 = vmatpush1.bf16.msra.mxu0 %v739
    %900 = vmatprep.subr.bf16.mxu0 %v744
    %901 = vmatpush1.bf16.msra.mxu0 %v743
    %902 = vmatprep.subr.bf16.mxu0 %v748
    %903 = vmatpush1.bf16.msra.mxu0 %v747
    %904 = vmatprep.subr.bf16.mxu0 %v752
    %905 = vmatpush1.bf16.msra.mxu0 %v751
    %906 = vmatprep.subr.bf16.mxu0 %v756
    %907 = vmatpush1.bf16.msra.mxu0 %v755
    %908 = vmatprep.subr.bf16.mxu0 %v760
    %909 = vmatpush1.bf16.msra.mxu0 %v759
    %910 = vmatprep.subr.bf16.mxu0 %v764
    %911 = vmatpush1.bf16.msra.mxu0 %v763
    %912 = vmatprep.subr.bf16.mxu0 %v768
    %913 = vmatpush1.bf16.msra.mxu0 %v767
    %914 = vmatprep.subr.bf16.mxu0 %v772
    %915 = vmatpush1.bf16.msra.mxu0 %v771
    %916 = vmatprep.subr.bf16.mxu0 %v776
    %917 = vmatpush1.bf16.msra.mxu0 %v775
    %918 = vmatprep.subr.bf16.mxu0 %v780
    %919 = vmatpush1.bf16.msra.mxu0 %v779
    %920 = vmatprep.subr.bf16.mxu0 %v784
    %921 = vmatpush1.bf16.msra.mxu0 %v783
    %922 = vmatprep.mubr.bf16.mxu0 %v528
    %923 = vmatmul.mubr.bf16.gmra.mrb[0].mxu0 %v527
    %v924 = vpop.f32.mrb[0].mxu0
    %v925 = vadd.f32 0.0, %v924
    %v926 = vpop.f32.mrb[0].mxu0
    %v927 = vadd.f32 0.0, %v926
    %v928 = vpop.f32.mrb[0].mxu0
    %v929 = vpop.f32.mrb[0].mxu0
    %930 = vdwg.mxu0
    %v931 = vld [vmem:[#allocation13] sm:$0xf]
    %v932 = vld [vmem:[#allocation14] sm:$0xf]
    %v933 = vrot.slane %v884, 4
    %v934 = vadd.f32 %v884, %v933
    %v935 = vrot.slane %v934, 2
    %v936 = vadd.f32 %v934, %v935
    %v937 = vrot.slane %v936, 1
    %v938 = vadd.f32 %v936, %v937
    %v939 = vrot.slane %v886, 4
    %v940 = vadd.f32 %v886, %v939
    %v941 = vrot.slane %v940, 2
    %v942 = vadd.f32 %v940, %v941
    %v943 = vrot.slane %v942, 1
    %v944 = vadd.f32 %v942, %v943
    %v945 = vrot.slane %v925, 4
    %v946 = vadd.f32 %v925, %v945
    %v947 = vrot.slane %v946, 2
    %v948 = vadd.f32 %v946, %v947
    %v949 = vrot.slane %v948, 1
    %v950 = vadd.f32 %v948, %v949
    %v951 = vrot.slane %v927, 4
    %v952 = vadd.f32 %v927, %v951
    %v953 = vrot.slane %v952, 2
    %v954 = vadd.f32 %v952, %v953
    %v955 = vrot.slane %v954, 1
    %v956 = vadd.f32 %v954, %v955
    %v957 = vmul.f32 %v938, %v404
    %v958 = vmul.f32 %v944, %v404
    %v959 = vmul.f32 %v950, %v404
    %v960 = vmul.f32 %v956, %v404
    %v961 = vsub.f32 %v884, %v957
    %v962 = vsub.f32 %v886, %v958
    %v963 = vsub.f32 %v925, %v959
    %v964 = vsub.f32 %v927, %v960
    %v965 = vmul.f32 %v961, %v961
    %v966 = vmul.f32 %v962, %v962
    %v967 = vmul.f32 %v963, %v963
    %v968 = vmul.f32 %v964, %v964
    %v969 = vrot.slane %v965, 4
    %v970 = vadd.f32 %v965, %v969
    %v971 = vrot.slane %v970, 2
    %v972 = vadd.f32 %v970, %v971
    %v973 = vrot.slane %v972, 1
    %v974 = vadd.f32 %v972, %v973
    %v975 = vrot.slane %v966, 4
    %v976 = vadd.f32 %v966, %v975
    %v977 = vrot.slane %v976, 2
    %v978 = vadd.f32 %v976, %v977
    %v979 = vrot.slane %v978, 1
    %v980 = vadd.f32 %v978, %v979
    %v981 = vrot.slane %v967, 4
    %v982 = vadd.f32 %v967, %v981
    %v983 = vrot.slane %v982, 2
    %v984 = vadd.f32 %v982, %v983
    %v985 = vrot.slane %v984, 1
    %v986 = vadd.f32 %v984, %v985
    %v987 = vrot.slane %v968, 4
    %v988 = vadd.f32 %v968, %v987
    %v989 = vrot.slane %v988, 2
    %v990 = vadd.f32 %v988, %v989
    %v991 = vrot.slane %v990, 1
    %v992 = vadd.f32 %v990, %v991
    %v993 = vmul.f32 %v974, %v404
    %v994 = vmul.f32 %v980, %v404
    %v995 = vmul.f32 %v986, %v404
    %v996 = vmul.f32 %v992, %v404
    %v997 = vadd.f32 %v993, 1e-05
    %v998 = vadd.f32 %v994, 1e-05
    %v999 = vadd.f32 %v995, 1e-05
    %v1000 = vadd.f32 %v996, 1e-05
    %v1001 = vrsqrt.pop %v997
    %v1002 = vrsqrt.pop %v998
    %v1003 = vrsqrt.pop %v999
    %v1004 = vrsqrt.pop %v1000
    %v1005 = vmul.f32 %v961, %v1001
    %v1006 = vmul.f32 %v962, %v1002
    %v1007 = vmul.f32 %v963, %v1003
    %v1008 = vmul.f32 %v964, %v1004
    %v1010 = vlaneseq
    %v1011 = vshrl.u32 %v1010, 7
    %v1012 = vsub.s32 0, %v1011
    %v1013 = vrot.slane %v931, %v1012
    %v1014 = vlaneseq
    %v1015 = vshrl.u32 %v1014, 7
    %v1016 = vsub.s32 1, %v1015
    %v1017 = vrot.slane %v931, %v1016
    %v1018 = vlaneseq
    %v1019 = vshrl.u32 %v1018, 7
    %v1020 = vsub.s32 2, %v1019
    %v1021 = vrot.slane %v931, %v1020
    %v1022 = vlaneseq
    %v1023 = vshrl.u32 %v1022, 7
    %v1024 = vsub.s32 3, %v1023
    %v1025 = vrot.slane %v931, %v1024
    %v1030 = vmul.f32 %v1005, %v1013
    %v1031 = vmul.f32 %v1006, %v1017
    %v1032 = vmul.f32 %v1007, %v1021
    %v1033 = vmul.f32 %v1008, %v1025
    %v1035 = vlaneseq
    %v1036 = vshrl.u32 %v1035, 7
    %v1037 = vsub.s32 0, %v1036
    %v1038 = vrot.slane %v932, %v1037
    %v1039 = vlaneseq
    %v1040 = vshrl.u32 %v1039, 7
    %v1041 = vsub.s32 1, %v1040
    %v1042 = vrot.slane %v932, %v1041
    %v1043 = vlaneseq
    %v1044 = vshrl.u32 %v1043, 7
    %v1045 = vsub.s32 2, %v1044
    %v1046 = vrot.slane %v932, %v1045
    %v1047 = vlaneseq
    %v1048 = vshrl.u32 %v1047, 7
    %v1049 = vsub.s32 3, %v1048
    %v1050 = vrot.slane %v932, %v1049
    %v1055 = vadd.f32 %v1030, %v1038
    %v1056 = vadd.f32 %v1031, %v1042
    %v1057 = vadd.f32 %v1032, %v1046
    %v1058 = vadd.f32 %v1033, %v1050
    %vm1059 = vcmp.gt.f32.partialorder %v1055, 0.0
    %vm1060 = vcmp.gt.f32.partialorder %v1056, 0.0
    %vm1061 = vcmp.gt.f32.partialorder %v1057, 0.0
    %vm1062 = vcmp.gt.f32.partialorder %v1058, 0.0
    %v1063 = vmul.f32 %v1055, 0.2
    %v1064 = vmul.f32 %v1056, 0.2
    %v1065 = vmul.f32 %v1057, 0.2
    %v1066 = vmul.f32 %v1058, 0.2
    %v1067 = vsel %vm1059, %v1055, %v1063
    %v1068 = vsel %vm1060, %v1056, %v1064
    %v1069 = vsel %vm1061, %v1057, %v1065
    %v1070 = vsel %vm1062, %v1058, %v1066
    %s1071 = smul.u32 2, 64
    %s1072 = smul.u32 %s1071, 8
    %s1073 = sshll.u32 %s1072, 4
    %1074 = dma.done [#allocation5], %s1073
    %s1075 = scalar_lea.sflag [#allocation5], 1
    // Predicated region
    $region86: #{generator_forward.1} parent=1 // pred_check
      _
    $region87: #{generator_forward.1} parent=1 // pred_check_branch
      %1077 = sbr.rel target = $region89
    $region88: #{generator_forward.1} parent=1 // pred_region
      %1078 = sst [smem:[#allocation18]] [#allocation21]
      %1079 = sst [smem:[#allocation19]] [#allocation20]
    $region89: #{generator_forward.1} parent=1 // pred_fallthru
      _
    %1081 = shalt.err (0)
    %s1083 = sshll.u32 [#allocation3], 4
    %s1084 = int_to_ptr.vmem [resolvable:$true] %s1083
    %1086 = dma.hbm_to_vmem [thread:$0]  %s13, 16384, %s1084, %s1075
    %v1087 = vld [vmem:[#allocation2] sm:$0xff]
    %v1088 = vld [vmem:[#allocation2 + $0x8] sm:$0xff]
    %v1089 = vld [vmem:[#allocation2 + $0x10] sm:$0xff]
    %v1090 = vld [vmem:[#allocation2 + $0x18] sm:$0xff]
    %v1091 = vld [vmem:[#allocation2 + $0x20] sm:$0xff]
    %v1092 = vld [vmem:[#allocation2 + $0x28] sm:$0xff]
    %v1093 = vld [vmem:[#allocation2 + $0x30] sm:$0xff]
    %v1094 = vld [vmem:[#allocation2 + $0x38] sm:$0xff]
    %v1095 = vld [vmem:[#allocation2 + $0x40] sm:$0xff]
    %v1096 = vld [vmem:[#allocation2 + $0x48] sm:$0xff]
    %v1097 = vld [vmem:[#allocation2 + $0x50] sm:$0xff]
    %v1098 = vld [vmem:[#allocation2 + $0x58] sm:$0xff]
    %v1099 = vld [vmem:[#allocation2 + $0x60] sm:$0xff]
    %v1100 = vld [vmem:[#allocation2 + $0x68] sm:$0xff]
    %v1101 = vld [vmem:[#allocation2 + $0x70] sm:$0xff]
    %v1102 = vld [vmem:[#allocation2 + $0x78] sm:$0xff]
    %v1103 = vld [vmem:[#allocation2 + $0x80] sm:$0xff]
    %v1104 = vld [vmem:[#allocation2 + $0x88] sm:$0xff]
    %v1105 = vld [vmem:[#allocation2 + $0x90] sm:$0xff]
    %v1106 = vld [vmem:[#allocation2 + $0x98] sm:$0xff]
    %v1107 = vld [vmem:[#allocation2 + $0xa0] sm:$0xff]
    %v1108 = vld [vmem:[#allocation2 + $0xa8] sm:$0xff]
    %v1109 = vld [vmem:[#allocation2 + $0xb0] sm:$0xff]
    %v1110 = vld [vmem:[#allocation2 + $0xb8] sm:$0xff]
    %v1111 = vld [vmem:[#allocation2 + $0xc0] sm:$0xff]
    %v1112 = vld [vmem:[#allocation2 + $0xc8] sm:$0xff]
    %v1113 = vld [vmem:[#allocation2 + $0xd0] sm:$0xff]
    %v1114 = vld [vmem:[#allocation2 + $0xd8] sm:$0xff]
    %v1115 = vld [vmem:[#allocation2 + $0xe0] sm:$0xff]
    %v1116 = vld [vmem:[#allocation2 + $0xe8] sm:$0xff]
    %v1117 = vld [vmem:[#allocation2 + $0xf0] sm:$0xff]
    %v1118 = vld [vmem:[#allocation2 + $0xf8] sm:$0xff]
    %v1119 = vld [vmem:[#allocation2 + $0x100] sm:$0xff]
    %v1120 = vld [vmem:[#allocation2 + $0x108] sm:$0xff]
    %v1121 = vld [vmem:[#allocation2 + $0x110] sm:$0xff]
    %v1122 = vld [vmem:[#allocation2 + $0x118] sm:$0xff]
    %v1123 = vld [vmem:[#allocation2 + $0x120] sm:$0xff]
    %v1124 = vld [vmem:[#allocation2 + $0x128] sm:$0xff]
    %v1125 = vld [vmem:[#allocation2 + $0x130] sm:$0xff]
    %v1126 = vld [vmem:[#allocation2 + $0x138] sm:$0xff]
    %v1127 = vld [vmem:[#allocation2 + $0x140] sm:$0xff]
    %v1128 = vld [vmem:[#allocation2 + $0x148] sm:$0xff]
    %v1129 = vld [vmem:[#allocation2 + $0x150] sm:$0xff]
    %v1130 = vld [vmem:[#allocation2 + $0x158] sm:$0xff]
    %v1131 = vld [vmem:[#allocation2 + $0x160] sm:$0xff]
    %v1132 = vld [vmem:[#allocation2 + $0x168] sm:$0xff]
    %v1133 = vld [vmem:[#allocation2 + $0x170] sm:$0xff]
    %v1134 = vld [vmem:[#allocation2 + $0x178] sm:$0xff]
    %v1135 = vld [vmem:[#allocation2 + $0x180] sm:$0xff]
    %v1136 = vld [vmem:[#allocation2 + $0x188] sm:$0xff]
    %v1137 = vld [vmem:[#allocation2 + $0x190] sm:$0xff]
    %v1138 = vld [vmem:[#allocation2 + $0x198] sm:$0xff]
    %v1139 = vld [vmem:[#allocation2 + $0x1a0] sm:$0xff]
    %v1140 = vld [vmem:[#allocation2 + $0x1a8] sm:$0xff]
    %v1141 = vld [vmem:[#allocation2 + $0x1b0] sm:$0xff]
    %v1142 = vld [vmem:[#allocation2 + $0x1b8] sm:$0xff]
    %v1143 = vld [vmem:[#allocation2 + $0x1c0] sm:$0xff]
    %v1144 = vld [vmem:[#allocation2 + $0x1c8] sm:$0xff]
    %v1145 = vld [vmem:[#allocation2 + $0x1d0] sm:$0xff]
    %v1146 = vld [vmem:[#allocation2 + $0x1d8] sm:$0xff]
    %v1147 = vld [vmem:[#allocation2 + $0x1e0] sm:$0xff]
    %v1148 = vld [vmem:[#allocation2 + $0x1e8] sm:$0xff]
    %v1149 = vld [vmem:[#allocation2 + $0x1f0] sm:$0xff]
    %v1150 = vld [vmem:[#allocation2 + $0x1f8] sm:$0xff]
    %v1151 = vld [vmem:[#allocation2 + $0x200] sm:$0xff]
    %v1152 = vld [vmem:[#allocation2 + $0x208] sm:$0xff]
    %v1153 = vld [vmem:[#allocation2 + $0x210] sm:$0xff]
    %v1154 = vld [vmem:[#allocation2 + $0x218] sm:$0xff]
    %v1155 = vld [vmem:[#allocation2 + $0x220] sm:$0xff]
    %v1156 = vld [vmem:[#allocation2 + $0x228] sm:$0xff]
    %v1157 = vld [vmem:[#allocation2 + $0x230] sm:$0xff]
    %v1158 = vld [vmem:[#allocation2 + $0x238] sm:$0xff]
    %v1159 = vld [vmem:[#allocation2 + $0x240] sm:$0xff]
    %v1160 = vld [vmem:[#allocation2 + $0x248] sm:$0xff]
    %v1161 = vld [vmem:[#allocation2 + $0x250] sm:$0xff]
    %v1162 = vld [vmem:[#allocation2 + $0x258] sm:$0xff]
    %v1163 = vld [vmem:[#allocation2 + $0x260] sm:$0xff]
    %v1164 = vld [vmem:[#allocation2 + $0x268] sm:$0xff]
    %v1165 = vld [vmem:[#allocation2 + $0x270] sm:$0xff]
    %v1166 = vld [vmem:[#allocation2 + $0x278] sm:$0xff]
    %v1167 = vld [vmem:[#allocation2 + $0x280] sm:$0xff]
    %v1168 = vld [vmem:[#allocation2 + $0x288] sm:$0xff]
    %v1169 = vld [vmem:[#allocation2 + $0x290] sm:$0xff]
    %v1170 = vld [vmem:[#allocation2 + $0x298] sm:$0xff]
    %v1171 = vld [vmem:[#allocation2 + $0x2a0] sm:$0xff]
    %v1172 = vld [vmem:[#allocation2 + $0x2a8] sm:$0xff]
    %v1173 = vld [vmem:[#allocation2 + $0x2b0] sm:$0xff]
    %v1174 = vld [vmem:[#allocation2 + $0x2b8] sm:$0xff]
    %v1175 = vld [vmem:[#allocation2 + $0x2c0] sm:$0xff]
    %v1176 = vld [vmem:[#allocation2 + $0x2c8] sm:$0xff]
    %v1177 = vld [vmem:[#allocation2 + $0x2d0] sm:$0xff]
    %v1178 = vld [vmem:[#allocation2 + $0x2d8] sm:$0xff]
    %v1179 = vld [vmem:[#allocation2 + $0x2e0] sm:$0xff]
    %v1180 = vld [vmem:[#allocation2 + $0x2e8] sm:$0xff]
    %v1181 = vld [vmem:[#allocation2 + $0x2f0] sm:$0xff]
    %v1182 = vld [vmem:[#allocation2 + $0x2f8] sm:$0xff]
    %v1183 = vld [vmem:[#allocation2 + $0x300] sm:$0xff]
    %v1184 = vld [vmem:[#allocation2 + $0x308] sm:$0xff]
    %v1185 = vld [vmem:[#allocation2 + $0x310] sm:$0xff]
    %v1186 = vld [vmem:[#allocation2 + $0x318] sm:$0xff]
    %v1187 = vld [vmem:[#allocation2 + $0x320] sm:$0xff]
    %v1188 = vld [vmem:[#allocation2 + $0x328] sm:$0xff]
    %v1189 = vld [vmem:[#allocation2 + $0x330] sm:$0xff]
    %v1190 = vld [vmem:[#allocation2 + $0x338] sm:$0xff]
    %v1191 = vld [vmem:[#allocation2 + $0x340] sm:$0xff]
    %v1192 = vld [vmem:[#allocation2 + $0x348] sm:$0xff]
    %v1193 = vld [vmem:[#allocation2 + $0x350] sm:$0xff]
    %v1194 = vld [vmem:[#allocation2 + $0x358] sm:$0xff]
    %v1195 = vld [vmem:[#allocation2 + $0x360] sm:$0xff]
    %v1196 = vld [vmem:[#allocation2 + $0x368] sm:$0xff]
    %v1197 = vld [vmem:[#allocation2 + $0x370] sm:$0xff]
    %v1198 = vld [vmem:[#allocation2 + $0x378] sm:$0xff]
    %v1199 = vld [vmem:[#allocation2 + $0x380] sm:$0xff]
    %v1200 = vld [vmem:[#allocation2 + $0x388] sm:$0xff]
    %v1201 = vld [vmem:[#allocation2 + $0x390] sm:$0xff]
    %v1202 = vld [vmem:[#allocation2 + $0x398] sm:$0xff]
    %v1203 = vld [vmem:[#allocation2 + $0x3a0] sm:$0xff]
    %v1204 = vld [vmem:[#allocation2 + $0x3a8] sm:$0xff]
    %v1205 = vld [vmem:[#allocation2 + $0x3b0] sm:$0xff]
    %v1206 = vld [vmem:[#allocation2 + $0x3b8] sm:$0xff]
    %v1207 = vld [vmem:[#allocation2 + $0x3c0] sm:$0xff]
    %v1208 = vld [vmem:[#allocation2 + $0x3c8] sm:$0xff]
    %v1209 = vld [vmem:[#allocation2 + $0x3d0] sm:$0xff]
    %v1210 = vld [vmem:[#allocation2 + $0x3d8] sm:$0xff]
    %v1211 = vld [vmem:[#allocation2 + $0x3e0] sm:$0xff]
    %v1212 = vld [vmem:[#allocation2 + $0x3e8] sm:$0xff]
    %v1213 = vld [vmem:[#allocation2 + $0x3f0] sm:$0xff]
    %v1214 = vld [vmem:[#allocation2 + $0x3f8] sm:$0xff]
    %v1215 = vld [vmem:[%s10] sm:$0xff]
    %v1216 = vunpack.c.0.s8 %v1087
    %v1217 = vunpack.c.0.s8 %v1088
    %v1218 = vunpack.c.0.s8 %v1089
    %v1219 = vunpack.c.0.s8 %v1090
    %v1220 = vunpack.c.0.s8 %v1091
    %v1221 = vunpack.c.0.s8 %v1092
    %v1222 = vunpack.c.0.s8 %v1093
    %v1223 = vunpack.c.0.s8 %v1094
    %v1224 = vunpack.c.1.s8 %v1087
    %v1225 = vunpack.c.1.s8 %v1088
    %v1226 = vunpack.c.1.s8 %v1089
    %v1227 = vunpack.c.1.s8 %v1090
    %v1228 = vunpack.c.1.s8 %v1091
    %v1229 = vunpack.c.1.s8 %v1092
    %v1230 = vunpack.c.1.s8 %v1093
    %v1231 = vunpack.c.1.s8 %v1094
    %v1232 = vunpack.c.2.s8 %v1087
    %v1233 = vunpack.c.2.s8 %v1088
    %v1234 = vunpack.c.2.s8 %v1089
    %v1235 = vunpack.c.2.s8 %v1090
    %v1236 = vunpack.c.2.s8 %v1091
    %v1237 = vunpack.c.2.s8 %v1092
    %v1238 = vunpack.c.2.s8 %v1093
    %v1239 = vunpack.c.2.s8 %v1094
    %v1240 = vunpack.c.3.s8 %v1087
    %v1241 = vunpack.c.3.s8 %v1088
    %v1242 = vunpack.c.3.s8 %v1089
    %v1243 = vunpack.c.3.s8 %v1090
    %v1244 = vunpack.c.3.s8 %v1091
    %v1245 = vunpack.c.3.s8 %v1092
    %v1246 = vunpack.c.3.s8 %v1093
    %v1247 = vunpack.c.3.s8 %v1094
    %v1248 = vunpack.c.0.s8 %v1095
    %v1249 = vunpack.c.0.s8 %v1096
    %v1250 = vunpack.c.0.s8 %v1097
    %v1251 = vunpack.c.0.s8 %v1098
    %v1252 = vunpack.c.0.s8 %v1099
    %v1253 = vunpack.c.0.s8 %v1100
    %v1254 = vunpack.c.0.s8 %v1101
    %v1255 = vunpack.c.0.s8 %v1102
    %v1256 = vunpack.c.1.s8 %v1095
    %v1257 = vunpack.c.1.s8 %v1096
    %v1258 = vunpack.c.1.s8 %v1097
    %v1259 = vunpack.c.1.s8 %v1098
    %v1260 = vunpack.c.1.s8 %v1099
    %v1261 = vunpack.c.1.s8 %v1100
    %v1262 = vunpack.c.1.s8 %v1101
    %v1263 = vunpack.c.1.s8 %v1102
    %v1264 = vunpack.c.2.s8 %v1095
    %v1265 = vunpack.c.2.s8 %v1096
    %v1266 = vunpack.c.2.s8 %v1097
    %v1267 = vunpack.c.2.s8 %v1098
    %v1268 = vunpack.c.2.s8 %v1099
    %v1269 = vunpack.c.2.s8 %v1100
    %v1270 = vunpack.c.2.s8 %v1101
    %v1271 = vunpack.c.2.s8 %v1102
    %v1272 = vunpack.c.3.s8 %v1095
    %v1273 = vunpack.c.3.s8 %v1096
    %v1274 = vunpack.c.3.s8 %v1097
    %v1275 = vunpack.c.3.s8 %v1098
    %v1276 = vunpack.c.3.s8 %v1099
    %v1277 = vunpack.c.3.s8 %v1100
    %v1278 = vunpack.c.3.s8 %v1101
    %v1279 = vunpack.c.3.s8 %v1102
    %v1280 = vunpack.c.0.s8 %v1103
    %v1281 = vunpack.c.0.s8 %v1104
    %v1282 = vunpack.c.0.s8 %v1105
    %v1283 = vunpack.c.0.s8 %v1106
    %v1284 = vunpack.c.0.s8 %v1107
    %v1285 = vunpack.c.0.s8 %v1108
    %v1286 = vunpack.c.0.s8 %v1109
    %v1287 = vunpack.c.0.s8 %v1110
    %v1288 = vunpack.c.1.s8 %v1103
    %v1289 = vunpack.c.1.s8 %v1104
    %v1290 = vunpack.c.1.s8 %v1105
    %v1291 = vunpack.c.1.s8 %v1106
    %v1292 = vunpack.c.1.s8 %v1107
    %v1293 = vunpack.c.1.s8 %v1108
    %v1294 = vunpack.c.1.s8 %v1109
    %v1295 = vunpack.c.1.s8 %v1110
    %v1296 = vunpack.c.2.s8 %v1103
    %v1297 = vunpack.c.2.s8 %v1104
    %v1298 = vunpack.c.2.s8 %v1105
    %v1299 = vunpack.c.2.s8 %v1106
    %v1300 = vunpack.c.2.s8 %v1107
    %v1301 = vunpack.c.2.s8 %v1108
    %v1302 = vunpack.c.2.s8 %v1109
    %v1303 = vunpack.c.2.s8 %v1110
    %v1304 = vunpack.c.3.s8 %v1103
    %v1305 = vunpack.c.3.s8 %v1104
    %v1306 = vunpack.c.3.s8 %v1105
    %v1307 = vunpack.c.3.s8 %v1106
    %v1308 = vunpack.c.3.s8 %v1107
    %v1309 = vunpack.c.3.s8 %v1108
    %v1310 = vunpack.c.3.s8 %v1109
    %v1311 = vunpack.c.3.s8 %v1110
    %v1312 = vunpack.c.0.s8 %v1111
    %v1313 = vunpack.c.0.s8 %v1112
    %v1314 = vunpack.c.0.s8 %v1113
    %v1315 = vunpack.c.0.s8 %v1114
    %v1316 = vunpack.c.0.s8 %v1115
    %v1317 = vunpack.c.0.s8 %v1116
    %v1318 = vunpack.c.0.s8 %v1117
    %v1319 = vunpack.c.0.s8 %v1118
    %v1320 = vunpack.c.1.s8 %v1111
    %v1321 = vunpack.c.1.s8 %v1112
    %v1322 = vunpack.c.1.s8 %v1113
    %v1323 = vunpack.c.1.s8 %v1114
    %v1324 = vunpack.c.1.s8 %v1115
    %v1325 = vunpack.c.1.s8 %v1116
    %v1326 = vunpack.c.1.s8 %v1117
    %v1327 = vunpack.c.1.s8 %v1118
    %v1328 = vunpack.c.2.s8 %v1111
    %v1329 = vunpack.c.2.s8 %v1112
    %v1330 = vunpack.c.2.s8 %v1113
    %v1331 = vunpack.c.2.s8 %v1114
    %v1332 = vunpack.c.2.s8 %v1115
    %v1333 = vunpack.c.2.s8 %v1116
    %v1334 = vunpack.c.2.s8 %v1117
    %v1335 = vunpack.c.2.s8 %v1118
    %v1336 = vunpack.c.3.s8 %v1111
    %v1337 = vunpack.c.3.s8 %v1112
    %v1338 = vunpack.c.3.s8 %v1113
    %v1339 = vunpack.c.3.s8 %v1114
    %v1340 = vunpack.c.3.s8 %v1115
    %v1341 = vunpack.c.3.s8 %v1116
    %v1342 = vunpack.c.3.s8 %v1117
    %v1343 = vunpack.c.3.s8 %v1118
    %v1344 = vunpack.c.0.s8 %v1119
    %v1345 = vunpack.c.0.s8 %v1120
    %v1346 = vunpack.c.0.s8 %v1121
    %v1347 = vunpack.c.0.s8 %v1122
    %v1348 = vunpack.c.0.s8 %v1123
    %v1349 = vunpack.c.0.s8 %v1124
    %v1350 = vunpack.c.0.s8 %v1125
    %v1351 = vunpack.c.0.s8 %v1126
    %v1352 = vunpack.c.1.s8 %v1119
    %v1353 = vunpack.c.1.s8 %v1120
    %v1354 = vunpack.c.1.s8 %v1121
    %v1355 = vunpack.c.1.s8 %v1122
    %v1356 = vunpack.c.1.s8 %v1123
    %v1357 = vunpack.c.1.s8 %v1124
    %v1358 = vunpack.c.1.s8 %v1125
    %v1359 = vunpack.c.1.s8 %v1126
    %v1360 = vunpack.c.2.s8 %v1119
    %v1361 = vunpack.c.2.s8 %v1120
    %v1362 = vunpack.c.2.s8 %v1121
    %v1363 = vunpack.c.2.s8 %v1122
    %v1364 = vunpack.c.2.s8 %v1123
    %v1365 = vunpack.c.2.s8 %v1124
    %v1366 = vunpack.c.2.s8 %v1125
    %v1367 = vunpack.c.2.s8 %v1126
    %v1368 = vunpack.c.3.s8 %v1119
    %v1369 = vunpack.c.3.s8 %v1120
    %v1370 = vunpack.c.3.s8 %v1121
    %v1371 = vunpack.c.3.s8 %v1122
    %v1372 = vunpack.c.3.s8 %v1123
    %v1373 = vunpack.c.3.s8 %v1124
    %v1374 = vunpack.c.3.s8 %v1125
    %v1375 = vunpack.c.3.s8 %v1126
    %v1376 = vunpack.c.0.s8 %v1127
    %v1377 = vunpack.c.0.s8 %v1128
    %v1378 = vunpack.c.0.s8 %v1129
    %v1379 = vunpack.c.0.s8 %v1130
    %v1380 = vunpack.c.0.s8 %v1131
    %v1381 = vunpack.c.0.s8 %v1132
    %v1382 = vunpack.c.0.s8 %v1133
    %v1383 = vunpack.c.0.s8 %v1134
    %v1384 = vunpack.c.1.s8 %v1127
    %v1385 = vunpack.c.1.s8 %v1128
    %v1386 = vunpack.c.1.s8 %v1129
    %v1387 = vunpack.c.1.s8 %v1130
    %v1388 = vunpack.c.1.s8 %v1131
    %v1389 = vunpack.c.1.s8 %v1132
    %v1390 = vunpack.c.1.s8 %v1133
    %v1391 = vunpack.c.1.s8 %v1134
    %v1392 = vunpack.c.2.s8 %v1127
    %v1393 = vunpack.c.2.s8 %v1128
    %v1394 = vunpack.c.2.s8 %v1129
    %v1395 = vunpack.c.2.s8 %v1130
    %v1396 = vunpack.c.2.s8 %v1131
    %v1397 = vunpack.c.2.s8 %v1132
    %v1398 = vunpack.c.2.s8 %v1133
    %v1399 = vunpack.c.2.s8 %v1134
    %v1400 = vunpack.c.3.s8 %v1127
    %v1401 = vunpack.c.3.s8 %v1128
    %v1402 = vunpack.c.3.s8 %v1129
    %v1403 = vunpack.c.3.s8 %v1130
    %v1404 = vunpack.c.3.s8 %v1131
    %v1405 = vunpack.c.3.s8 %v1132
    %v1406 = vunpack.c.3.s8 %v1133
    %v1407 = vunpack.c.3.s8 %v1134
    %v1408 = vunpack.c.0.s8 %v1135
    %v1409 = vunpack.c.0.s8 %v1136
    %v1410 = vunpack.c.0.s8 %v1137
    %v1411 = vunpack.c.0.s8 %v1138
    %v1412 = vunpack.c.0.s8 %v1139
    %v1413 = vunpack.c.0.s8 %v1140
    %v1414 = vunpack.c.0.s8 %v1141
    %v1415 = vunpack.c.0.s8 %v1142
    %v1416 = vunpack.c.1.s8 %v1135
    %v1417 = vunpack.c.1.s8 %v1136
    %v1418 = vunpack.c.1.s8 %v1137
    %v1419 = vunpack.c.1.s8 %v1138
    %v1420 = vunpack.c.1.s8 %v1139
    %v1421 = vunpack.c.1.s8 %v1140
    %v1422 = vunpack.c.1.s8 %v1141
    %v1423 = vunpack.c.1.s8 %v1142
    %v1424 = vunpack.c.2.s8 %v1135
    %v1425 = vunpack.c.2.s8 %v1136
    %v1426 = vunpack.c.2.s8 %v1137
    %v1427 = vunpack.c.2.s8 %v1138
    %v1428 = vunpack.c.2.s8 %v1139
    %v1429 = vunpack.c.2.s8 %v1140
    %v1430 = vunpack.c.2.s8 %v1141
    %v1431 = vunpack.c.2.s8 %v1142
    %v1432 = vunpack.c.3.s8 %v1135
    %v1433 = vunpack.c.3.s8 %v1136
    %v1434 = vunpack.c.3.s8 %v1137
    %v1435 = vunpack.c.3.s8 %v1138
    %v1436 = vunpack.c.3.s8 %v1139
    %v1437 = vunpack.c.3.s8 %v1140
    %v1438 = vunpack.c.3.s8 %v1141
    %v1439 = vunpack.c.3.s8 %v1142
    %v1440 = vunpack.c.0.s8 %v1143
    %v1441 = vunpack.c.0.s8 %v1144
    %v1442 = vunpack.c.0.s8 %v1145
    %v1443 = vunpack.c.0.s8 %v1146
    %v1444 = vunpack.c.0.s8 %v1147
    %v1445 = vunpack.c.0.s8 %v1148
    %v1446 = vunpack.c.0.s8 %v1149
    %v1447 = vunpack.c.0.s8 %v1150
    %v1448 = vunpack.c.1.s8 %v1143
    %v1449 = vunpack.c.1.s8 %v1144
    %v1450 = vunpack.c.1.s8 %v1145
    %v1451 = vunpack.c.1.s8 %v1146
    %v1452 = vunpack.c.1.s8 %v1147
    %v1453 = vunpack.c.1.s8 %v1148
    %v1454 = vunpack.c.1.s8 %v1149
    %v1455 = vunpack.c.1.s8 %v1150
    %v1456 = vunpack.c.2.s8 %v1143
    %v1457 = vunpack.c.2.s8 %v1144
    %v1458 = vunpack.c.2.s8 %v1145
    %v1459 = vunpack.c.2.s8 %v1146
    %v1460 = vunpack.c.2.s8 %v1147
    %v1461 = vunpack.c.2.s8 %v1148
    %v1462 = vunpack.c.2.s8 %v1149
    %v1463 = vunpack.c.2.s8 %v1150
    %v1464 = vunpack.c.3.s8 %v1143
    %v1465 = vunpack.c.3.s8 %v1144
    %v1466 = vunpack.c.3.s8 %v1145
    %v1467 = vunpack.c.3.s8 %v1146
    %v1468 = vunpack.c.3.s8 %v1147
    %v1469 = vunpack.c.3.s8 %v1148
    %v1470 = vunpack.c.3.s8 %v1149
    %v1471 = vunpack.c.3.s8 %v1150
    %v1472 = vunpack.c.0.s8 %v1151
    %v1473 = vunpack.c.0.s8 %v1152
    %v1474 = vunpack.c.0.s8 %v1153
    %v1475 = vunpack.c.0.s8 %v1154
    %v1476 = vunpack.c.0.s8 %v1155
    %v1477 = vunpack.c.0.s8 %v1156
    %v1478 = vunpack.c.0.s8 %v1157
    %v1479 = vunpack.c.0.s8 %v1158
    %v1480 = vunpack.c.1.s8 %v1151
    %v1481 = vunpack.c.1.s8 %v1152
    %v1482 = vunpack.c.1.s8 %v1153
    %v1483 = vunpack.c.1.s8 %v1154
    %v1484 = vunpack.c.1.s8 %v1155
    %v1485 = vunpack.c.1.s8 %v1156
    %v1486 = vunpack.c.1.s8 %v1157
    %v1487 = vunpack.c.1.s8 %v1158
    %v1488 = vunpack.c.2.s8 %v1151
    %v1489 = vunpack.c.2.s8 %v1152
    %v1490 = vunpack.c.2.s8 %v1153
    %v1491 = vunpack.c.2.s8 %v1154
    %v1492 = vunpack.c.2.s8 %v1155
    %v1493 = vunpack.c.2.s8 %v1156
    %v1494 = vunpack.c.2.s8 %v1157
    %v1495 = vunpack.c.2.s8 %v1158
    %v1496 = vunpack.c.3.s8 %v1151
    %v1497 = vunpack.c.3.s8 %v1152
    %v1498 = vunpack.c.3.s8 %v1153
    %v1499 = vunpack.c.3.s8 %v1154
    %v1500 = vunpack.c.3.s8 %v1155
    %v1501 = vunpack.c.3.s8 %v1156
    %v1502 = vunpack.c.3.s8 %v1157
    %v1503 = vunpack.c.3.s8 %v1158
    %v1504 = vunpack.c.0.s8 %v1159
    %v1505 = vunpack.c.0.s8 %v1160
    %v1506 = vunpack.c.0.s8 %v1161
    %v1507 = vunpack.c.0.s8 %v1162
    %v1508 = vunpack.c.0.s8 %v1163
    %v1509 = vunpack.c.0.s8 %v1164
    %v1510 = vunpack.c.0.s8 %v1165
    %v1511 = vunpack.c.0.s8 %v1166
    %v1512 = vunpack.c.1.s8 %v1159
    %v1513 = vunpack.c.1.s8 %v1160
    %v1514 = vunpack.c.1.s8 %v1161
    %v1515 = vunpack.c.1.s8 %v1162
    %v1516 = vunpack.c.1.s8 %v1163
    %v1517 = vunpack.c.1.s8 %v1164
    %v1518 = vunpack.c.1.s8 %v1165
    %v1519 = vunpack.c.1.s8 %v1166
    %v1520 = vunpack.c.2.s8 %v1159
    %v1521 = vunpack.c.2.s8 %v1160
    %v1522 = vunpack.c.2.s8 %v1161
    %v1523 = vunpack.c.2.s8 %v1162
    %v1524 = vunpack.c.2.s8 %v1163
    %v1525 = vunpack.c.2.s8 %v1164
    %v1526 = vunpack.c.2.s8 %v1165
    %v1527 = vunpack.c.2.s8 %v1166
    %v1528 = vunpack.c.3.s8 %v1159
    %v1529 = vunpack.c.3.s8 %v1160
    %v1530 = vunpack.c.3.s8 %v1161
    %v1531 = vunpack.c.3.s8 %v1162
    %v1532 = vunpack.c.3.s8 %v1163
    %v1533 = vunpack.c.3.s8 %v1164
    %v1534 = vunpack.c.3.s8 %v1165
    %v1535 = vunpack.c.3.s8 %v1166
    %v1536 = vunpack.c.0.s8 %v1167
    %v1537 = vunpack.c.0.s8 %v1168
    %v1538 = vunpack.c.0.s8 %v1169
    %v1539 = vunpack.c.0.s8 %v1170
    %v1540 = vunpack.c.0.s8 %v1171
    %v1541 = vunpack.c.0.s8 %v1172
    %v1542 = vunpack.c.0.s8 %v1173
    %v1543 = vunpack.c.0.s8 %v1174
    %v1544 = vunpack.c.1.s8 %v1167
    %v1545 = vunpack.c.1.s8 %v1168
    %v1546 = vunpack.c.1.s8 %v1169
    %v1547 = vunpack.c.1.s8 %v1170
    %v1548 = vunpack.c.1.s8 %v1171
    %v1549 = vunpack.c.1.s8 %v1172
    %v1550 = vunpack.c.1.s8 %v1173
    %v1551 = vunpack.c.1.s8 %v1174
    %v1552 = vunpack.c.2.s8 %v1167
    %v1553 = vunpack.c.2.s8 %v1168
    %v1554 = vunpack.c.2.s8 %v1169
    %v1555 = vunpack.c.2.s8 %v1170
    %v1556 = vunpack.c.2.s8 %v1171
    %v1557 = vunpack.c.2.s8 %v1172
    %v1558 = vunpack.c.2.s8 %v1173
    %v1559 = vunpack.c.2.s8 %v1174
    %v1560 = vunpack.c.3.s8 %v1167
    %v1561 = vunpack.c.3.s8 %v1168
    %v1562 = vunpack.c.3.s8 %v1169
    %v1563 = vunpack.c.3.s8 %v1170
    %v1564 = vunpack.c.3.s8 %v1171
    %v1565 = vunpack.c.3.s8 %v1172
    %v1566 = vunpack.c.3.s8 %v1173
    %v1567 = vunpack.c.3.s8 %v1174
    %v1568 = vunpack.c.0.s8 %v1175
    %v1569 = vunpack.c.0.s8 %v1176
    %v1570 = vunpack.c.0.s8 %v1177
    %v1571 = vunpack.c.0.s8 %v1178
    %v1572 = vunpack.c.0.s8 %v1179
    %v1573 = vunpack.c.0.s8 %v1180
    %v1574 = vunpack.c.0.s8 %v1181
    %v1575 = vunpack.c.0.s8 %v1182
    %v1576 = vunpack.c.1.s8 %v1175
    %v1577 = vunpack.c.1.s8 %v1176
    %v1578 = vunpack.c.1.s8 %v1177
    %v1579 = vunpack.c.1.s8 %v1178
    %v1580 = vunpack.c.1.s8 %v1179
    %v1581 = vunpack.c.1.s8 %v1180
    %v1582 = vunpack.c.1.s8 %v1181
    %v1583 = vunpack.c.1.s8 %v1182
    %v1584 = vunpack.c.2.s8 %v1175
    %v1585 = vunpack.c.2.s8 %v1176
    %v1586 = vunpack.c.2.s8 %v1177
    %v1587 = vunpack.c.2.s8 %v1178
    %v1588 = vunpack.c.2.s8 %v1179
    %v1589 = vunpack.c.2.s8 %v1180
    %v1590 = vunpack.c.2.s8 %v1181
    %v1591 = vunpack.c.2.s8 %v1182
    %v1592 = vunpack.c.3.s8 %v1175
    %v1593 = vunpack.c.3.s8 %v1176
    %v1594 = vunpack.c.3.s8 %v1177
    %v1595 = vunpack.c.3.s8 %v1178
    %v1596 = vunpack.c.3.s8 %v1179
    %v1597 = vunpack.c.3.s8 %v1180
    %v1598 = vunpack.c.3.s8 %v1181
    %v1599 = vunpack.c.3.s8 %v1182
    %v1600 = vunpack.c.0.s8 %v1183
    %v1601 = vunpack.c.0.s8 %v1184
    %v1602 = vunpack.c.0.s8 %v1185
    %v1603 = vunpack.c.0.s8 %v1186
    %v1604 = vunpack.c.0.s8 %v1187
    %v1605 = vunpack.c.0.s8 %v1188
    %v1606 = vunpack.c.0.s8 %v1189
    %v1607 = vunpack.c.0.s8 %v1190
    %v1608 = vunpack.c.1.s8 %v1183
    %v1609 = vunpack.c.1.s8 %v1184
    %v1610 = vunpack.c.1.s8 %v1185
    %v1611 = vunpack.c.1.s8 %v1186
    %v1612 = vunpack.c.1.s8 %v1187
    %v1613 = vunpack.c.1.s8 %v1188
    %v1614 = vunpack.c.1.s8 %v1189
    %v1615 = vunpack.c.1.s8 %v1190
    %v1616 = vunpack.c.2.s8 %v1183
    %v1617 = vunpack.c.2.s8 %v1184
    %v1618 = vunpack.c.2.s8 %v1185
    %v1619 = vunpack.c.2.s8 %v1186
    %v1620 = vunpack.c.2.s8 %v1187
    %v1621 = vunpack.c.2.s8 %v1188
    %v1622 = vunpack.c.2.s8 %v1189
    %v1623 = vunpack.c.2.s8 %v1190
    %v1624 = vunpack.c.3.s8 %v1183
    %v1625 = vunpack.c.3.s8 %v1184
    %v1626 = vunpack.c.3.s8 %v1185
    %v1627 = vunpack.c.3.s8 %v1186
    %v1628 = vunpack.c.3.s8 %v1187
    %v1629 = vunpack.c.3.s8 %v1188
    %v1630 = vunpack.c.3.s8 %v1189
    %v1631 = vunpack.c.3.s8 %v1190
    %v1632 = vunpack.c.0.s8 %v1191
    %v1633 = vunpack.c.0.s8 %v1192
    %v1634 = vunpack.c.0.s8 %v1193
    %v1635 = vunpack.c.0.s8 %v1194
    %v1636 = vunpack.c.0.s8 %v1195
    %v1637 = vunpack.c.0.s8 %v1196
    %v1638 = vunpack.c.0.s8 %v1197
    %v1639 = vunpack.c.0.s8 %v1198
    %v1640 = vunpack.c.1.s8 %v1191
    %v1641 = vunpack.c.1.s8 %v1192
    %v1642 = vunpack.c.1.s8 %v1193
    %v1643 = vunpack.c.1.s8 %v1194
    %v1644 = vunpack.c.1.s8 %v1195
    %v1645 = vunpack.c.1.s8 %v1196
    %v1646 = vunpack.c.1.s8 %v1197
    %v1647 = vunpack.c.1.s8 %v1198
    %v1648 = vunpack.c.2.s8 %v1191
    %v1649 = vunpack.c.2.s8 %v1192
    %v1650 = vunpack.c.2.s8 %v1193
    %v1651 = vunpack.c.2.s8 %v1194
    %v1652 = vunpack.c.2.s8 %v1195
    %v1653 = vunpack.c.2.s8 %v1196
    %v1654 = vunpack.c.2.s8 %v1197
    %v1655 = vunpack.c.2.s8 %v1198
    %v1656 = vunpack.c.3.s8 %v1191
    %v1657 = vunpack.c.3.s8 %v1192
    %v1658 = vunpack.c.3.s8 %v1193
    %v1659 = vunpack.c.3.s8 %v1194
    %v1660 = vunpack.c.3.s8 %v1195
    %v1661 = vunpack.c.3.s8 %v1196
    %v1662 = vunpack.c.3.s8 %v1197
    %v1663 = vunpack.c.3.s8 %v1198
    %v1664 = vunpack.c.0.s8 %v1199
    %v1665 = vunpack.c.0.s8 %v1200
    %v1666 = vunpack.c.0.s8 %v1201
    %v1667 = vunpack.c.0.s8 %v1202
    %v1668 = vunpack.c.0.s8 %v1203
    %v1669 = vunpack.c.0.s8 %v1204
    %v1670 = vunpack.c.0.s8 %v1205
    %v1671 = vunpack.c.0.s8 %v1206
    %v1672 = vunpack.c.1.s8 %v1199
    %v1673 = vunpack.c.1.s8 %v1200
    %v1674 = vunpack.c.1.s8 %v1201
    %v1675 = vunpack.c.1.s8 %v1202
    %v1676 = vunpack.c.1.s8 %v1203
    %v1677 = vunpack.c.1.s8 %v1204
    %v1678 = vunpack.c.1.s8 %v1205
    %v1679 = vunpack.c.1.s8 %v1206
    %v1680 = vunpack.c.2.s8 %v1199
    %v1681 = vunpack.c.2.s8 %v1200
    %v1682 = vunpack.c.2.s8 %v1201
    %v1683 = vunpack.c.2.s8 %v1202
    %v1684 = vunpack.c.2.s8 %v1203
    %v1685 = vunpack.c.2.s8 %v1204
    %v1686 = vunpack.c.2.s8 %v1205
    %v1687 = vunpack.c.2.s8 %v1206
    %v1688 = vunpack.c.3.s8 %v1199
    %v1689 = vunpack.c.3.s8 %v1200
    %v1690 = vunpack.c.3.s8 %v1201
    %v1691 = vunpack.c.3.s8 %v1202
    %v1692 = vunpack.c.3.s8 %v1203
    %v1693 = vunpack.c.3.s8 %v1204
    %v1694 = vunpack.c.3.s8 %v1205
    %v1695 = vunpack.c.3.s8 %v1206
    %v1696 = vunpack.c.0.s8 %v1207
    %v1697 = vunpack.c.0.s8 %v1208
    %v1698 = vunpack.c.0.s8 %v1209
    %v1699 = vunpack.c.0.s8 %v1210
    %v1700 = vunpack.c.0.s8 %v1211
    %v1701 = vunpack.c.0.s8 %v1212
    %v1702 = vunpack.c.0.s8 %v1213
    %v1703 = vunpack.c.0.s8 %v1214
    %v1704 = vunpack.c.1.s8 %v1207
    %v1705 = vunpack.c.1.s8 %v1208
    %v1706 = vunpack.c.1.s8 %v1209
    %v1707 = vunpack.c.1.s8 %v1210
    %v1708 = vunpack.c.1.s8 %v1211
    %v1709 = vunpack.c.1.s8 %v1212
    %v1710 = vunpack.c.1.s8 %v1213
    %v1711 = vunpack.c.1.s8 %v1214
    %v1712 = vunpack.c.2.s8 %v1207
    %v1713 = vunpack.c.2.s8 %v1208
    %v1714 = vunpack.c.2.s8 %v1209
    %v1715 = vunpack.c.2.s8 %v1210
    %v1716 = vunpack.c.2.s8 %v1211
    %v1717 = vunpack.c.2.s8 %v1212
    %v1718 = vunpack.c.2.s8 %v1213
    %v1719 = vunpack.c.2.s8 %v1214
    %v1720 = vunpack.c.3.s8 %v1207
    %v1721 = vunpack.c.3.s8 %v1208
    %v1722 = vunpack.c.3.s8 %v1209
    %v1723 = vunpack.c.3.s8 %v1210
    %v1724 = vunpack.c.3.s8 %v1211
    %v1725 = vunpack.c.3.s8 %v1212
    %v1726 = vunpack.c.3.s8 %v1213
    %v1727 = vunpack.c.3.s8 %v1214
    %v1728 = vcvt.s32.f32 %v1216
    %v1729 = vcvt.s32.f32 %v1217
    %v1730 = vcvt.s32.f32 %v1218
    %v1731 = vcvt.s32.f32 %v1219
    %v1732 = vcvt.s32.f32 %v1220
    %v1733 = vcvt.s32.f32 %v1221
    %v1734 = vcvt.s32.f32 %v1222
    %v1735 = vcvt.s32.f32 %v1223
    %v1736 = vcvt.s32.f32 %v1224
    %v1737 = vcvt.s32.f32 %v1225
    %v1738 = vcvt.s32.f32 %v1226
    %v1739 = vcvt.s32.f32 %v1227
    %v1740 = vcvt.s32.f32 %v1228
    %v1741 = vcvt.s32.f32 %v1229
    %v1742 = vcvt.s32.f32 %v1230
    %v1743 = vcvt.s32.f32 %v1231
    %v1744 = vcvt.s32.f32 %v1232
    %v1745 = vcvt.s32.f32 %v1233
    %v1746 = vcvt.s32.f32 %v1234
    %v1747 = vcvt.s32.f32 %v1235
    %v1748 = vcvt.s32.f32 %v1236
    %v1749 = vcvt.s32.f32 %v1237
    %v1750 = vcvt.s32.f32 %v1238
    %v1751 = vcvt.s32.f32 %v1239
    %v1752 = vcvt.s32.f32 %v1240
    %v1753 = vcvt.s32.f32 %v1241
    %v1754 = vcvt.s32.f32 %v1242
    %v1755 = vcvt.s32.f32 %v1243
    %v1756 = vcvt.s32.f32 %v1244
    %v1757 = vcvt.s32.f32 %v1245
    %v1758 = vcvt.s32.f32 %v1246
    %v1759 = vcvt.s32.f32 %v1247
    %v1760 = vcvt.s32.f32 %v1248
    %v1761 = vcvt.s32.f32 %v1249
    %v1762 = vcvt.s32.f32 %v1250
    %v1763 = vcvt.s32.f32 %v1251
    %v1764 = vcvt.s32.f32 %v1252
    %v1765 = vcvt.s32.f32 %v1253
    %v1766 = vcvt.s32.f32 %v1254
    %v1767 = vcvt.s32.f32 %v1255
    %v1768 = vcvt.s32.f32 %v1256
    %v1769 = vcvt.s32.f32 %v1257
    %v1770 = vcvt.s32.f32 %v1258
    %v1771 = vcvt.s32.f32 %v1259
    %v1772 = vcvt.s32.f32 %v1260
    %v1773 = vcvt.s32.f32 %v1261
    %v1774 = vcvt.s32.f32 %v1262
    %v1775 = vcvt.s32.f32 %v1263
    %v1776 = vcvt.s32.f32 %v1264
    %v1777 = vcvt.s32.f32 %v1265
    %v1778 = vcvt.s32.f32 %v1266
    %v1779 = vcvt.s32.f32 %v1267
    %v1780 = vcvt.s32.f32 %v1268
    %v1781 = vcvt.s32.f32 %v1269
    %v1782 = vcvt.s32.f32 %v1270
    %v1783 = vcvt.s32.f32 %v1271
    %v1784 = vcvt.s32.f32 %v1272
    %v1785 = vcvt.s32.f32 %v1273
    %v1786 = vcvt.s32.f32 %v1274
    %v1787 = vcvt.s32.f32 %v1275
    %v1788 = vcvt.s32.f32 %v1276
    %v1789 = vcvt.s32.f32 %v1277
    %v1790 = vcvt.s32.f32 %v1278
    %v1791 = vcvt.s32.f32 %v1279
    %v1792 = vcvt.s32.f32 %v1280
    %v1793 = vcvt.s32.f32 %v1281
    %v1794 = vcvt.s32.f32 %v1282
    %v1795 = vcvt.s32.f32 %v1283
    %v1796 = vcvt.s32.f32 %v1284
    %v1797 = vcvt.s32.f32 %v1285
    %v1798 = vcvt.s32.f32 %v1286
    %v1799 = vcvt.s32.f32 %v1287
    %v1800 = vcvt.s32.f32 %v1288
    %v1801 = vcvt.s32.f32 %v1289
    %v1802 = vcvt.s32.f32 %v1290
    %v1803 = vcvt.s32.f32 %v1291
    %v1804 = vcvt.s32.f32 %v1292
    %v1805 = vcvt.s32.f32 %v1293
    %v1806 = vcvt.s32.f32 %v1294
    %v1807 = vcvt.s32.f32 %v1295
    %v1808 = vcvt.s32.f32 %v1296
    %v1809 = vcvt.s32.f32 %v1297
    %v1810 = vcvt.s32.f32 %v1298
    %v1811 = vcvt.s32.f32 %v1299
    %v1812 = vcvt.s32.f32 %v1300
    %v1813 = vcvt.s32.f32 %v1301
    %v1814 = vcvt.s32.f32 %v1302
    %v1815 = vcvt.s32.f32 %v1303
    %v1816 = vcvt.s32.f32 %v1304
    %v1817 = vcvt.s32.f32 %v1305
    %v1818 = vcvt.s32.f32 %v1306
    %v1819 = vcvt.s32.f32 %v1307
    %v1820 = vcvt.s32.f32 %v1308
    %v1821 = vcvt.s32.f32 %v1309
    %v1822 = vcvt.s32.f32 %v1310
    %v1823 = vcvt.s32.f32 %v1311
    %v1824 = vcvt.s32.f32 %v1312
    %v1825 = vcvt.s32.f32 %v1313
    %v1826 = vcvt.s32.f32 %v1314
    %v1827 = vcvt.s32.f32 %v1315
    %v1828 = vcvt.s32.f32 %v1316
    %v1829 = vcvt.s32.f32 %v1317
    %v1830 = vcvt.s32.f32 %v1318
    %v1831 = vcvt.s32.f32 %v1319
    %v1832 = vcvt.s32.f32 %v1320
    %v1833 = vcvt.s32.f32 %v1321
    %v1834 = vcvt.s32.f32 %v1322
    %v1835 = vcvt.s32.f32 %v1323
    %v1836 = vcvt.s32.f32 %v1324
    %v1837 = vcvt.s32.f32 %v1325
    %v1838 = vcvt.s32.f32 %v1326
    %v1839 = vcvt.s32.f32 %v1327
    %v1840 = vcvt.s32.f32 %v1328
    %v1841 = vcvt.s32.f32 %v1329
    %v1842 = vcvt.s32.f32 %v1330
    %v1843 = vcvt.s32.f32 %v1331
    %v1844 = vcvt.s32.f32 %v1332
    %v1845 = vcvt.s32.f32 %v1333
    %v1846 = vcvt.s32.f32 %v1334
    %v1847 = vcvt.s32.f32 %v1335
    %v1848 = vcvt.s32.f32 %v1336
    %v1849 = vcvt.s32.f32 %v1337
    %v1850 = vcvt.s32.f32 %v1338
    %v1851 = vcvt.s32.f32 %v1339
    %v1852 = vcvt.s32.f32 %v1340
    %v1853 = vcvt.s32.f32 %v1341
    %v1854 = vcvt.s32.f32 %v1342
    %v1855 = vcvt.s32.f32 %v1343
    %v1856 = vcvt.s32.f32 %v1344
    %v1857 = vcvt.s32.f32 %v1345
    %v1858 = vcvt.s32.f32 %v1346
    %v1859 = vcvt.s32.f32 %v1347
    %v1860 = vcvt.s32.f32 %v1348
    %v1861 = vcvt.s32.f32 %v1349
    %v1862 = vcvt.s32.f32 %v1350
    %v1863 = vcvt.s32.f32 %v1351
    %v1864 = vcvt.s32.f32 %v1352
    %v1865 = vcvt.s32.f32 %v1353
    %v1866 = vcvt.s32.f32 %v1354
    %v1867 = vcvt.s32.f32 %v1355
    %v1868 = vcvt.s32.f32 %v1356
    %v1869 = vcvt.s32.f32 %v1357
    %v1870 = vcvt.s32.f32 %v1358
    %v1871 = vcvt.s32.f32 %v1359
    %v1872 = vcvt.s32.f32 %v1360
    %v1873 = vcvt.s32.f32 %v1361
    %v1874 = vcvt.s32.f32 %v1362
    %v1875 = vcvt.s32.f32 %v1363
    %v1876 = vcvt.s32.f32 %v1364
    %v1877 = vcvt.s32.f32 %v1365
    %v1878 = vcvt.s32.f32 %v1366
    %v1879 = vcvt.s32.f32 %v1367
    %v1880 = vcvt.s32.f32 %v1368
    %v1881 = vcvt.s32.f32 %v1369
    %v1882 = vcvt.s32.f32 %v1370
    %v1883 = vcvt.s32.f32 %v1371
    %v1884 = vcvt.s32.f32 %v1372
    %v1885 = vcvt.s32.f32 %v1373
    %v1886 = vcvt.s32.f32 %v1374
    %v1887 = vcvt.s32.f32 %v1375
    %v1888 = vcvt.s32.f32 %v1376
    %v1889 = vcvt.s32.f32 %v1377
    %v1890 = vcvt.s32.f32 %v1378
    %v1891 = vcvt.s32.f32 %v1379
    %v1892 = vcvt.s32.f32 %v1380
    %v1893 = vcvt.s32.f32 %v1381
    %v1894 = vcvt.s32.f32 %v1382
    %v1895 = vcvt.s32.f32 %v1383
    %v1896 = vcvt.s32.f32 %v1384
    %v1897 = vcvt.s32.f32 %v1385
    %v1898 = vcvt.s32.f32 %v1386
    %v1899 = vcvt.s32.f32 %v1387
    %v1900 = vcvt.s32.f32 %v1388
    %v1901 = vcvt.s32.f32 %v1389
    %v1902 = vcvt.s32.f32 %v1390
    %v1903 = vcvt.s32.f32 %v1391
    %v1904 = vcvt.s32.f32 %v1392
    %v1905 = vcvt.s32.f32 %v1393
    %v1906 = vcvt.s32.f32 %v1394
    %v1907 = vcvt.s32.f32 %v1395
    %v1908 = vcvt.s32.f32 %v1396
    %v1909 = vcvt.s32.f32 %v1397
    %v1910 = vcvt.s32.f32 %v1398
    %v1911 = vcvt.s32.f32 %v1399
    %v1912 = vcvt.s32.f32 %v1400
    %v1913 = vcvt.s32.f32 %v1401
    %v1914 = vcvt.s32.f32 %v1402
    %v1915 = vcvt.s32.f32 %v1403
    %v1916 = vcvt.s32.f32 %v1404
    %v1917 = vcvt.s32.f32 %v1405
    %v1918 = vcvt.s32.f32 %v1406
    %v1919 = vcvt.s32.f32 %v1407
    %v1920 = vcvt.s32.f32 %v1408
    %v1921 = vcvt.s32.f32 %v1409
    %v1922 = vcvt.s32.f32 %v1410
    %v1923 = vcvt.s32.f32 %v1411
    %v1924 = vcvt.s32.f32 %v1412
    %v1925 = vcvt.s32.f32 %v1413
    %v1926 = vcvt.s32.f32 %v1414
    %v1927 = vcvt.s32.f32 %v1415
    %v1928 = vcvt.s32.f32 %v1416
    %v1929 = vcvt.s32.f32 %v1417
    %v1930 = vcvt.s32.f32 %v1418
    %v1931 = vcvt.s32.f32 %v1419
    %v1932 = vcvt.s32.f32 %v1420
    %v1933 = vcvt.s32.f32 %v1421
    %v1934 = vcvt.s32.f32 %v1422
    %v1935 = vcvt.s32.f32 %v1423
    %v1936 = vcvt.s32.f32 %v1424
    %v1937 = vcvt.s32.f32 %v1425
    %v1938 = vcvt.s32.f32 %v1426
    %v1939 = vcvt.s32.f32 %v1427
    %v1940 = vcvt.s32.f32 %v1428
    %v1941 = vcvt.s32.f32 %v1429
    %v1942 = vcvt.s32.f32 %v1430
    %v1943 = vcvt.s32.f32 %v1431
    %v1944 = vcvt.s32.f32 %v1432
    %v1945 = vcvt.s32.f32 %v1433
    %v1946 = vcvt.s32.f32 %v1434
    %v1947 = vcvt.s32.f32 %v1435
    %v1948 = vcvt.s32.f32 %v1436
    %v1949 = vcvt.s32.f32 %v1437
    %v1950 = vcvt.s32.f32 %v1438
    %v1951 = vcvt.s32.f32 %v1439
    %v1952 = vcvt.s32.f32 %v1440
    %v1953 = vcvt.s32.f32 %v1441
    %v1954 = vcvt.s32.f32 %v1442
    %v1955 = vcvt.s32.f32 %v1443
    %v1956 = vcvt.s32.f32 %v1444
    %v1957 = vcvt.s32.f32 %v1445
    %v1958 = vcvt.s32.f32 %v1446
    %v1959 = vcvt.s32.f32 %v1447
    %v1960 = vcvt.s32.f32 %v1448
    %v1961 = vcvt.s32.f32 %v1449
    %v1962 = vcvt.s32.f32 %v1450
    %v1963 = vcvt.s32.f32 %v1451
    %v1964 = vcvt.s32.f32 %v1452
    %v1965 = vcvt.s32.f32 %v1453
    %v1966 = vcvt.s32.f32 %v1454
    %v1967 = vcvt.s32.f32 %v1455
    %v1968 = vcvt.s32.f32 %v1456
    %v1969 = vcvt.s32.f32 %v1457
    %v1970 = vcvt.s32.f32 %v1458
    %v1971 = vcvt.s32.f32 %v1459
    %v1972 = vcvt.s32.f32 %v1460
    %v1973 = vcvt.s32.f32 %v1461
    %v1974 = vcvt.s32.f32 %v1462
    %v1975 = vcvt.s32.f32 %v1463
    %v1976 = vcvt.s32.f32 %v1464
    %v1977 = vcvt.s32.f32 %v1465
    %v1978 = vcvt.s32.f32 %v1466
    %v1979 = vcvt.s32.f32 %v1467
    %v1980 = vcvt.s32.f32 %v1468
    %v1981 = vcvt.s32.f32 %v1469
    %v1982 = vcvt.s32.f32 %v1470
    %v1983 = vcvt.s32.f32 %v1471
    %v1984 = vcvt.s32.f32 %v1472
    %v1985 = vcvt.s32.f32 %v1473
    %v1986 = vcvt.s32.f32 %v1474
    %v1987 = vcvt.s32.f32 %v1475
    %v1988 = vcvt.s32.f32 %v1476
    %v1989 = vcvt.s32.f32 %v1477
    %v1990 = vcvt.s32.f32 %v1478
    %v1991 = vcvt.s32.f32 %v1479
    %v1992 = vcvt.s32.f32 %v1480
    %v1993 = vcvt.s32.f32 %v1481
    %v1994 = vcvt.s32.f32 %v1482
    %v1995 = vcvt.s32.f32 %v1483
    %v1996 = vcvt.s32.f32 %v1484
    %v1997 = vcvt.s32.f32 %v1485
    %v1998 = vcvt.s32.f32 %v1486
    %v1999 = vcvt.s32.f32 %v1487
    %v2000 = vcvt.s32.f32 %v1488
    %v2001 = vcvt.s32.f32 %v1489
    %v2002 = vcvt.s32.f32 %v1490
    %v2003 = vcvt.s32.f32 %v1491
    %v2004 = vcvt.s32.f32 %v1492
    %v2005 = vcvt.s32.f32 %v1493
    %v2006 = vcvt.s32.f32 %v1494
    %v2007 = vcvt.s32.f32 %v1495
    %v2008 = vcvt.s32.f32 %v1496
    %v2009 = vcvt.s32.f32 %v1497
    %v2010 = vcvt.s32.f32 %v1498
    %v2011 = vcvt.s32.f32 %v1499
    %v2012 = vcvt.s32.f32 %v1500
    %v2013 = vcvt.s32.f32 %v1501
    %v2014 = vcvt.s32.f32 %v1502
    %v2015 = vcvt.s32.f32 %v1503
    %v2016 = vcvt.s32.f32 %v1504
    %v2017 = vcvt.s32.f32 %v1505
    %v2018 = vcvt.s32.f32 %v1506
    %v2019 = vcvt.s32.f32 %v1507
    %v2020 = vcvt.s32.f32 %v1508
    %v2021 = vcvt.s32.f32 %v1509
    %v2022 = vcvt.s32.f32 %v1510
    %v2023 = vcvt.s32.f32 %v1511
    %v2024 = vcvt.s32.f32 %v1512
    %v2025 = vcvt.s32.f32 %v1513
    %v2026 = vcvt.s32.f32 %v1514
    %v2027 = vcvt.s32.f32 %v1515
    %v2028 = vcvt.s32.f32 %v1516
    %v2029 = vcvt.s32.f32 %v1517
    %v2030 = vcvt.s32.f32 %v1518
    %v2031 = vcvt.s32.f32 %v1519
    %v2032 = vcvt.s32.f32 %v1520
    %v2033 = vcvt.s32.f32 %v1521
    %v2034 = vcvt.s32.f32 %v1522
    %v2035 = vcvt.s32.f32 %v1523
    %v2036 = vcvt.s32.f32 %v1524
    %v2037 = vcvt.s32.f32 %v1525
    %v2038 = vcvt.s32.f32 %v1526
    %v2039 = vcvt.s32.f32 %v1527
    %v2040 = vcvt.s32.f32 %v1528
    %v2041 = vcvt.s32.f32 %v1529
    %v2042 = vcvt.s32.f32 %v1530
    %v2043 = vcvt.s32.f32 %v1531
    %v2044 = vcvt.s32.f32 %v1532
    %v2045 = vcvt.s32.f32 %v1533
    %v2046 = vcvt.s32.f32 %v1534
    %v2047 = vcvt.s32.f32 %v1535
    %v2048 = vcvt.s32.f32 %v1536
    %v2049 = vcvt.s32.f32 %v1537
    %v2050 = vcvt.s32.f32 %v1538
    %v2051 = vcvt.s32.f32 %v1539
    %v2052 = vcvt.s32.f32 %v1540
    %v2053 = vcvt.s32.f32 %v1541
    %v2054 = vcvt.s32.f32 %v1542
    %v2055 = vcvt.s32.f32 %v1543
    %v2056 = vcvt.s32.f32 %v1544
    %v2057 = vcvt.s32.f32 %v1545
    %v2058 = vcvt.s32.f32 %v1546
    %v2059 = vcvt.s32.f32 %v1547
    %v2060 = vcvt.s32.f32 %v1548
    %v2061 = vcvt.s32.f32 %v1549
    %v2062 = vcvt.s32.f32 %v1550
    %v2063 = vcvt.s32.f32 %v1551
    %v2064 = vcvt.s32.f32 %v1552
    %v2065 = vcvt.s32.f32 %v1553
    %v2066 = vcvt.s32.f32 %v1554
    %v2067 = vcvt.s32.f32 %v1555
    %v2068 = vcvt.s32.f32 %v1556
    %v2069 = vcvt.s32.f32 %v1557
    %v2070 = vcvt.s32.f32 %v1558
    %v2071 = vcvt.s32.f32 %v1559
    %v2072 = vcvt.s32.f32 %v1560
    %v2073 = vcvt.s32.f32 %v1561
    %v2074 = vcvt.s32.f32 %v1562
    %v2075 = vcvt.s32.f32 %v1563
    %v2076 = vcvt.s32.f32 %v1564
    %v2077 = vcvt.s32.f32 %v1565
    %v2078 = vcvt.s32.f32 %v1566
    %v2079 = vcvt.s32.f32 %v1567
    %v2080 = vcvt.s32.f32 %v1568
    %v2081 = vcvt.s32.f32 %v1569
    %v2082 = vcvt.s32.f32 %v1570
    %v2083 = vcvt.s32.f32 %v1571
    %v2084 = vcvt.s32.f32 %v1572
    %v2085 = vcvt.s32.f32 %v1573
    %v2086 = vcvt.s32.f32 %v1574
    %v2087 = vcvt.s32.f32 %v1575
    %v2088 = vcvt.s32.f32 %v1576
    %v2089 = vcvt.s32.f32 %v1577
    %v2090 = vcvt.s32.f32 %v1578
    %v2091 = vcvt.s32.f32 %v1579
    %v2092 = vcvt.s32.f32 %v1580
    %v2093 = vcvt.s32.f32 %v1581
    %v2094 = vcvt.s32.f32 %v1582
    %v2095 = vcvt.s32.f32 %v1583
    %v2096 = vcvt.s32.f32 %v1584
    %v2097 = vcvt.s32.f32 %v1585
    %v2098 = vcvt.s32.f32 %v1586
    %v2099 = vcvt.s32.f32 %v1587
    %v2100 = vcvt.s32.f32 %v1588
    %v2101 = vcvt.s32.f32 %v1589
    %v2102 = vcvt.s32.f32 %v1590
    %v2103 = vcvt.s32.f32 %v1591
    %v2104 = vcvt.s32.f32 %v1592
    %v2105 = vcvt.s32.f32 %v1593
    %v2106 = vcvt.s32.f32 %v1594
    %v2107 = vcvt.s32.f32 %v1595
    %v2108 = vcvt.s32.f32 %v1596
    %v2109 = vcvt.s32.f32 %v1597
    %v2110 = vcvt.s32.f32 %v1598
    %v2111 = vcvt.s32.f32 %v1599
    %v2112 = vcvt.s32.f32 %v1600
    %v2113 = vcvt.s32.f32 %v1601
    %v2114 = vcvt.s32.f32 %v1602
    %v2115 = vcvt.s32.f32 %v1603
    %v2116 = vcvt.s32.f32 %v1604
    %v2117 = vcvt.s32.f32 %v1605
    %v2118 = vcvt.s32.f32 %v1606
    %v2119 = vcvt.s32.f32 %v1607
    %v2120 = vcvt.s32.f32 %v1608
    %v2121 = vcvt.s32.f32 %v1609
    %v2122 = vcvt.s32.f32 %v1610
    %v2123 = vcvt.s32.f32 %v1611
    %v2124 = vcvt.s32.f32 %v1612
    %v2125 = vcvt.s32.f32 %v1613
    %v2126 = vcvt.s32.f32 %v1614
    %v2127 = vcvt.s32.f32 %v1615
    %v2128 = vcvt.s32.f32 %v1616
    %v2129 = vcvt.s32.f32 %v1617
    %v2130 = vcvt.s32.f32 %v1618
    %v2131 = vcvt.s32.f32 %v1619
    %v2132 = vcvt.s32.f32 %v1620
    %v2133 = vcvt.s32.f32 %v1621
    %v2134 = vcvt.s32.f32 %v1622
    %v2135 = vcvt.s32.f32 %v1623
    %v2136 = vcvt.s32.f32 %v1624
    %v2137 = vcvt.s32.f32 %v1625
    %v2138 = vcvt.s32.f32 %v1626
    %v2139 = vcvt.s32.f32 %v1627
    %v2140 = vcvt.s32.f32 %v1628
    %v2141 = vcvt.s32.f32 %v1629
    %v2142 = vcvt.s32.f32 %v1630
    %v2143 = vcvt.s32.f32 %v1631
    %v2144 = vcvt.s32.f32 %v1632
    %v2145 = vcvt.s32.f32 %v1633
    %v2146 = vcvt.s32.f32 %v1634
    %v2147 = vcvt.s32.f32 %v1635
    %v2148 = vcvt.s32.f32 %v1636
    %v2149 = vcvt.s32.f32 %v1637
    %v2150 = vcvt.s32.f32 %v1638
    %v2151 = vcvt.s32.f32 %v1639
    %v2152 = vcvt.s32.f32 %v1640
    %v2153 = vcvt.s32.f32 %v1641
    %v2154 = vcvt.s32.f32 %v1642
    %v2155 = vcvt.s32.f32 %v1643
    %v2156 = vcvt.s32.f32 %v1644
    %v2157 = vcvt.s32.f32 %v1645
    %v2158 = vcvt.s32.f32 %v1646
    %v2159 = vcvt.s32.f32 %v1647
    %v2160 = vcvt.s32.f32 %v1648
    %v2161 = vcvt.s32.f32 %v1649
    %v2162 = vcvt.s32.f32 %v1650
    %v2163 = vcvt.s32.f32 %v1651
    %v2164 = vcvt.s32.f32 %v1652
    %v2165 = vcvt.s32.f32 %v1653
    %v2166 = vcvt.s32.f32 %v1654
    %v2167 = vcvt.s32.f32 %v1655
    %v2168 = vcvt.s32.f32 %v1656
    %v2169 = vcvt.s32.f32 %v1657
    %v2170 = vcvt.s32.f32 %v1658
    %v2171 = vcvt.s32.f32 %v1659
    %v2172 = vcvt.s32.f32 %v1660
    %v2173 = vcvt.s32.f32 %v1661
    %v2174 = vcvt.s32.f32 %v1662
    %v2175 = vcvt.s32.f32 %v1663
    %v2176 = vcvt.s32.f32 %v1664
    %v2177 = vcvt.s32.f32 %v1665
    %v2178 = vcvt.s32.f32 %v1666
    %v2179 = vcvt.s32.f32 %v1667
    %v2180 = vcvt.s32.f32 %v1668
    %v2181 = vcvt.s32.f32 %v1669
    %v2182 = vcvt.s32.f32 %v1670
    %v2183 = vcvt.s32.f32 %v1671
    %v2184 = vcvt.s32.f32 %v1672
    %v2185 = vcvt.s32.f32 %v1673
    %v2186 = vcvt.s32.f32 %v1674
    %v2187 = vcvt.s32.f32 %v1675
    %v2188 = vcvt.s32.f32 %v1676
    %v2189 = vcvt.s32.f32 %v1677
    %v2190 = vcvt.s32.f32 %v1678
    %v2191 = vcvt.s32.f32 %v1679
    %v2192 = vcvt.s32.f32 %v1680
    %v2193 = vcvt.s32.f32 %v1681
    %v2194 = vcvt.s32.f32 %v1682
    %v2195 = vcvt.s32.f32 %v1683
    %v2196 = vcvt.s32.f32 %v1684
    %v2197 = vcvt.s32.f32 %v1685
    %v2198 = vcvt.s32.f32 %v1686
    %v2199 = vcvt.s32.f32 %v1687
    %v2200 = vcvt.s32.f32 %v1688
    %v2201 = vcvt.s32.f32 %v1689
    %v2202 = vcvt.s32.f32 %v1690
    %v2203 = vcvt.s32.f32 %v1691
    %v2204 = vcvt.s32.f32 %v1692
    %v2205 = vcvt.s32.f32 %v1693
    %v2206 = vcvt.s32.f32 %v1694
    %v2207 = vcvt.s32.f32 %v1695
    %v2208 = vcvt.s32.f32 %v1696
    %v2209 = vcvt.s32.f32 %v1697
    %v2210 = vcvt.s32.f32 %v1698
    %v2211 = vcvt.s32.f32 %v1699
    %v2212 = vcvt.s32.f32 %v1700
    %v2213 = vcvt.s32.f32 %v1701
    %v2214 = vcvt.s32.f32 %v1702
    %v2215 = vcvt.s32.f32 %v1703
    %v2216 = vcvt.s32.f32 %v1704
    %v2217 = vcvt.s32.f32 %v1705
    %v2218 = vcvt.s32.f32 %v1706
    %v2219 = vcvt.s32.f32 %v1707
    %v2220 = vcvt.s32.f32 %v1708
    %v2221 = vcvt.s32.f32 %v1709
    %v2222 = vcvt.s32.f32 %v1710
    %v2223 = vcvt.s32.f32 %v1711
    %v2224 = vcvt.s32.f32 %v1712
    %v2225 = vcvt.s32.f32 %v1713
    %v2226 = vcvt.s32.f32 %v1714
    %v2227 = vcvt.s32.f32 %v1715
    %v2228 = vcvt.s32.f32 %v1716
    %v2229 = vcvt.s32.f32 %v1717
    %v2230 = vcvt.s32.f32 %v1718
    %v2231 = vcvt.s32.f32 %v1719
    %v2232 = vcvt.s32.f32 %v1720
    %v2233 = vcvt.s32.f32 %v1721
    %v2234 = vcvt.s32.f32 %v1722
    %v2235 = vcvt.s32.f32 %v1723
    %v2236 = vcvt.s32.f32 %v1724
    %v2237 = vcvt.s32.f32 %v1725
    %v2238 = vcvt.s32.f32 %v1726
    %v2239 = vcvt.s32.f32 %v1727
    %v2241 = vlaneseq
    %v2242 = vshrl.u32 %v2241, 7
    %v2243 = vsub.s32 0, %v2242
    %v2244 = vrot.slane %v1215, %v2243
    %v2245 = vlaneseq
    %v2246 = vshrl.u32 %v2245, 7
    %v2247 = vsub.s32 1, %v2246
    %v2248 = vrot.slane %v1215, %v2247
    %v2249 = vlaneseq
    %v2250 = vshrl.u32 %v2249, 7
    %v2251 = vsub.s32 2, %v2250
    %v2252 = vrot.slane %v1215, %v2251
    %v2253 = vlaneseq
    %v2254 = vshrl.u32 %v2253, 7
    %v2255 = vsub.s32 3, %v2254
    %v2256 = vrot.slane %v1215, %v2255
    %v2257 = vlaneseq
    %v2258 = vshrl.u32 %v2257, 7
    %v2259 = vsub.s32 4, %v2258
    %v2260 = vrot.slane %v1215, %v2259
    %v2261 = vlaneseq
    %v2262 = vshrl.u32 %v2261, 7
    %v2263 = vsub.s32 5, %v2262
    %v2264 = vrot.slane %v1215, %v2263
    %v2265 = vlaneseq
    %v2266 = vshrl.u32 %v2265, 7
    %v2267 = vsub.s32 6, %v2266
    %v2268 = vrot.slane %v1215, %v2267
    %v2269 = vlaneseq
    %v2270 = vshrl.u32 %v2269, 7
    %v2271 = vsub.s32 7, %v2270
    %v2272 = vrot.slane %v1215, %v2271
    %v2281 = vmul.f32 %v1728, %v2244
    %v2282 = vmul.f32 %v1729, %v2248
    %v2283 = vmul.f32 %v1730, %v2252
    %v2284 = vmul.f32 %v1731, %v2256
    %v2285 = vmul.f32 %v1732, %v2260
    %v2286 = vmul.f32 %v1733, %v2264
    %v2287 = vmul.f32 %v1734, %v2268
    %v2288 = vmul.f32 %v1735, %v2272
    %v2289 = vmul.f32 %v1736, %v2244
    %v2290 = vmul.f32 %v1737, %v2248
    %v2291 = vmul.f32 %v1738, %v2252
    %v2292 = vmul.f32 %v1739, %v2256
    %v2293 = vmul.f32 %v1740, %v2260
    %v2294 = vmul.f32 %v1741, %v2264
    %v2295 = vmul.f32 %v1742, %v2268
    %v2296 = vmul.f32 %v1743, %v2272
    %v2297 = vmul.f32 %v1744, %v2244
    %v2298 = vmul.f32 %v1745, %v2248
    %v2299 = vmul.f32 %v1746, %v2252
    %v2300 = vmul.f32 %v1747, %v2256
    %v2301 = vmul.f32 %v1748, %v2260
    %v2302 = vmul.f32 %v1749, %v2264
    %v2303 = vmul.f32 %v1750, %v2268
    %v2304 = vmul.f32 %v1751, %v2272
    %v2305 = vmul.f32 %v1752, %v2244
    %v2306 = vmul.f32 %v1753, %v2248
    %v2307 = vmul.f32 %v1754, %v2252
    %v2308 = vmul.f32 %v1755, %v2256
    %v2309 = vmul.f32 %v1756, %v2260
    %v2310 = vmul.f32 %v1757, %v2264
    %v2311 = vmul.f32 %v1758, %v2268
    %v2312 = vmul.f32 %v1759, %v2272
    %v2313 = vmul.f32 %v1760, %v2244
    %v2314 = vmul.f32 %v1761, %v2248
    %v2315 = vmul.f32 %v1762, %v2252
    %v2316 = vmul.f32 %v1763, %v2256
    %v2317 = vmul.f32 %v1764, %v2260
    %v2318 = vmul.f32 %v1765, %v2264
    %v2319 = vmul.f32 %v1766, %v2268
    %v2320 = vmul.f32 %v1767, %v2272
    %v2321 = vmul.f32 %v1768, %v2244
    %v2322 = vmul.f32 %v1769, %v2248
    %v2323 = vmul.f32 %v1770, %v2252
    %v2324 = vmul.f32 %v1771, %v2256
    %v2325 = vmul.f32 %v1772, %v2260
    %v2326 = vmul.f32 %v1773, %v2264
    %v2327 = vmul.f32 %v1774, %v2268
    %v2328 = vmul.f32 %v1775, %v2272
    %v2329 = vmul.f32 %v1776, %v2244
    %v2330 = vmul.f32 %v1777, %v2248
    %v2331 = vmul.f32 %v1778, %v2252
    %v2332 = vmul.f32 %v1779, %v2256
    %v2333 = vmul.f32 %v1780, %v2260
    %v2334 = vmul.f32 %v1781, %v2264
    %v2335 = vmul.f32 %v1782, %v2268
    %v2336 = vmul.f32 %v1783, %v2272
    %v2337 = vmul.f32 %v1784, %v2244
    %v2338 = vmul.f32 %v1785, %v2248
    %v2339 = vmul.f32 %v1786, %v2252
    %v2340 = vmul.f32 %v1787, %v2256
    %v2341 = vmul.f32 %v1788, %v2260
    %v2342 = vmul.f32 %v1789, %v2264
    %v2343 = vmul.f32 %v1790, %v2268
    %v2344 = vmul.f32 %v1791, %v2272
    %v2345 = vmul.f32 %v1792, %v2244
    %v2346 = vmul.f32 %v1793, %v2248
    %v2347 = vmul.f32 %v1794, %v2252
    %v2348 = vmul.f32 %v1795, %v2256
    %v2349 = vmul.f32 %v1796, %v2260
    %v2350 = vmul.f32 %v1797, %v2264
    %v2351 = vmul.f32 %v1798, %v2268
    %v2352 = vmul.f32 %v1799, %v2272
    %v2353 = vmul.f32 %v1800, %v2244
    %v2354 = vmul.f32 %v1801, %v2248
    %v2355 = vmul.f32 %v1802, %v2252
    %v2356 = vmul.f32 %v1803, %v2256
    %v2357 = vmul.f32 %v1804, %v2260
    %v2358 = vmul.f32 %v1805, %v2264
    %v2359 = vmul.f32 %v1806, %v2268
    %v2360 = vmul.f32 %v1807, %v2272
    %v2361 = vmul.f32 %v1808, %v2244
    %v2362 = vmul.f32 %v1809, %v2248
    %v2363 = vmul.f32 %v1810, %v2252
    %v2364 = vmul.f32 %v1811, %v2256
    %v2365 = vmul.f32 %v1812, %v2260
    %v2366 = vmul.f32 %v1813, %v2264
    %v2367 = vmul.f32 %v1814, %v2268
    %v2368 = vmul.f32 %v1815, %v2272
    %v2369 = vmul.f32 %v1816, %v2244
    %v2370 = vmul.f32 %v1817, %v2248
    %v2371 = vmul.f32 %v1818, %v2252
    %v2372 = vmul.f32 %v1819, %v2256
    %v2373 = vmul.f32 %v1820, %v2260
    %v2374 = vmul.f32 %v1821, %v2264
    %v2375 = vmul.f32 %v1822, %v2268
    %v2376 = vmul.f32 %v1823, %v2272
    %v2377 = vmul.f32 %v1824, %v2244
    %v2378 = vmul.f32 %v1825, %v2248
    %v2379 = vmul.f32 %v1826, %v2252
    %v2380 = vmul.f32 %v1827, %v2256
    %v2381 = vmul.f32 %v1828, %v2260
    %v2382 = vmul.f32 %v1829, %v2264
    %v2383 = vmul.f32 %v1830, %v2268
    %v2384 = vmul.f32 %v1831, %v2272
    %v2385 = vmul.f32 %v1832, %v2244
    %v2386 = vmul.f32 %v1833, %v2248
    %v2387 = vmul.f32 %v1834, %v2252
    %v2388 = vmul.f32 %v1835, %v2256
    %v2389 = vmul.f32 %v1836, %v2260
    %v2390 = vmul.f32 %v1837, %v2264
    %v2391 = vmul.f32 %v1838, %v2268
    %v2392 = vmul.f32 %v1839, %v2272
    %v2393 = vmul.f32 %v1840, %v2244
    %v2394 = vmul.f32 %v1841, %v2248
    %v2395 = vmul.f32 %v1842, %v2252
    %v2396 = vmul.f32 %v1843, %v2256
    %v2397 = vmul.f32 %v1844, %v2260
    %v2398 = vmul.f32 %v1845, %v2264
    %v2399 = vmul.f32 %v1846, %v2268
    %v2400 = vmul.f32 %v1847, %v2272
    %v2401 = vmul.f32 %v1848, %v2244
    %v2402 = vmul.f32 %v1849, %v2248
    %v2403 = vmul.f32 %v1850, %v2252
    %v2404 = vmul.f32 %v1851, %v2256
    %v2405 = vmul.f32 %v1852, %v2260
    %v2406 = vmul.f32 %v1853, %v2264
    %v2407 = vmul.f32 %v1854, %v2268
    %v2408 = vmul.f32 %v1855, %v2272
    %v2409 = vmul.f32 %v1856, %v2244
    %v2410 = vmul.f32 %v1857, %v2248
    %v2411 = vmul.f32 %v1858, %v2252
    %v2412 = vmul.f32 %v1859, %v2256
    %v2413 = vmul.f32 %v1860, %v2260
    %v2414 = vmul.f32 %v1861, %v2264
    %v2415 = vmul.f32 %v1862, %v2268
    %v2416 = vmul.f32 %v1863, %v2272
    %v2417 = vmul.f32 %v1864, %v2244
    %v2418 = vmul.f32 %v1865, %v2248
    %v2419 = vmul.f32 %v1866, %v2252
    %v2420 = vmul.f32 %v1867, %v2256
    %v2421 = vmul.f32 %v1868, %v2260
    %v2422 = vmul.f32 %v1869, %v2264
    %v2423 = vmul.f32 %v1870, %v2268
    %v2424 = vmul.f32 %v1871, %v2272
    %v2425 = vmul.f32 %v1872, %v2244
    %v2426 = vmul.f32 %v1873, %v2248
    %v2427 = vmul.f32 %v1874, %v2252
    %v2428 = vmul.f32 %v1875, %v2256
    %v2429 = vmul.f32 %v1876, %v2260
    %v2430 = vmul.f32 %v1877, %v2264
    %v2431 = vmul.f32 %v1878, %v2268
    %v2432 = vmul.f32 %v1879, %v2272
    %v2433 = vmul.f32 %v1880, %v2244
    %v2434 = vmul.f32 %v1881, %v2248
    %v2435 = vmul.f32 %v1882, %v2252
    %v2436 = vmul.f32 %v1883, %v2256
    %v2437 = vmul.f32 %v1884, %v2260
    %v2438 = vmul.f32 %v1885, %v2264
    %v2439 = vmul.f32 %v1886, %v2268
    %v2440 = vmul.f32 %v1887, %v2272
    %v2441 = vmul.f32 %v1888, %v2244
    %v2442 = vmul.f32 %v1889, %v2248
    %v2443 = vmul.f32 %v1890, %v2252
    %v2444 = vmul.f32 %v1891, %v2256
    %v2445 = vmul.f32 %v1892, %v2260
    %v2446 = vmul.f32 %v1893, %v2264
    %v2447 = vmul.f32 %v1894, %v2268
    %v2448 = vmul.f32 %v1895, %v2272
    %v2449 = vmul.f32 %v1896, %v2244
    %v2450 = vmul.f32 %v1897, %v2248
    %v2451 = vmul.f32 %v1898, %v2252
    %v2452 = vmul.f32 %v1899, %v2256
    %v2453 = vmul.f32 %v1900, %v2260
    %v2454 = vmul.f32 %v1901, %v2264
    %v2455 = vmul.f32 %v1902, %v2268
    %v2456 = vmul.f32 %v1903, %v2272
    %v2457 = vmul.f32 %v1904, %v2244
    %v2458 = vmul.f32 %v1905, %v2248
    %v2459 = vmul.f32 %v1906, %v2252
    %v2460 = vmul.f32 %v1907, %v2256
    %v2461 = vmul.f32 %v1908, %v2260
    %v2462 = vmul.f32 %v1909, %v2264
    %v2463 = vmul.f32 %v1910, %v2268
    %v2464 = vmul.f32 %v1911, %v2272
    %v2465 = vmul.f32 %v1912, %v2244
    %v2466 = vmul.f32 %v1913, %v2248
    %v2467 = vmul.f32 %v1914, %v2252
    %v2468 = vmul.f32 %v1915, %v2256
    %v2469 = vmul.f32 %v1916, %v2260
    %v2470 = vmul.f32 %v1917, %v2264
    %v2471 = vmul.f32 %v1918, %v2268
    %v2472 = vmul.f32 %v1919, %v2272
    %v2473 = vmul.f32 %v1920, %v2244
    %v2474 = vmul.f32 %v1921, %v2248
    %v2475 = vmul.f32 %v1922, %v2252
    %v2476 = vmul.f32 %v1923, %v2256
    %v2477 = vmul.f32 %v1924, %v2260
    %v2478 = vmul.f32 %v1925, %v2264
    %v2479 = vmul.f32 %v1926, %v2268
    %v2480 = vmul.f32 %v1927, %v2272
    %v2481 = vmul.f32 %v1928, %v2244
    %v2482 = vmul.f32 %v1929, %v2248
    %v2483 = vmul.f32 %v1930, %v2252
    %v2484 = vmul.f32 %v1931, %v2256
    %v2485 = vmul.f32 %v1932, %v2260
    %v2486 = vmul.f32 %v1933, %v2264
    %v2487 = vmul.f32 %v1934, %v2268
    %v2488 = vmul.f32 %v1935, %v2272
    %v2489 = vmul.f32 %v1936, %v2244
    %v2490 = vmul.f32 %v1937, %v2248
    %v2491 = vmul.f32 %v1938, %v2252
    %v2492 = vmul.f32 %v1939, %v2256
    %v2493 = vmul.f32 %v1940, %v2260
    %v2494 = vmul.f32 %v1941, %v2264
    %v2495 = vmul.f32 %v1942, %v2268
    %v2496 = vmul.f32 %v1943, %v2272
    %v2497 = vmul.f32 %v1944, %v2244
    %v2498 = vmul.f32 %v1945, %v2248
    %v2499 = vmul.f32 %v1946, %v2252
    %v2500 = vmul.f32 %v1947, %v2256
    %v2501 = vmul.f32 %v1948, %v2260
    %v2502 = vmul.f32 %v1949, %v2264
    %v2503 = vmul.f32 %v1950, %v2268
    %v2504 = vmul.f32 %v1951, %v2272
    %v2505 = vmul.f32 %v1952, %v2244
    %v2506 = vmul.f32 %v1953, %v2248
    %v2507 = vmul.f32 %v1954, %v2252
    %v2508 = vmul.f32 %v1955, %v2256
    %v2509 = vmul.f32 %v1956, %v2260
    %v2510 = vmul.f32 %v1957, %v2264
    %v2511 = vmul.f32 %v1958, %v2268
    %v2512 = vmul.f32 %v1959, %v2272
    %v2513 = vmul.f32 %v1960, %v2244
    %v2514 = vmul.f32 %v1961, %v2248
    %v2515 = vmul.f32 %v1962, %v2252
    %v2516 = vmul.f32 %v1963, %v2256
    %v2517 = vmul.f32 %v1964, %v2260
    %v2518 = vmul.f32 %v1965, %v2264
    %v2519 = vmul.f32 %v1966, %v2268
    %v2520 = vmul.f32 %v1967, %v2272
    %v2521 = vmul.f32 %v1968, %v2244
    %v2522 = vmul.f32 %v1969, %v2248
    %v2523 = vmul.f32 %v1970, %v2252
    %v2524 = vmul.f32 %v1971, %v2256
    %v2525 = vmul.f32 %v1972, %v2260
    %v2526 = vmul.f32 %v1973, %v2264
    %v2527 = vmul.f32 %v1974, %v2268
    %v2528 = vmul.f32 %v1975, %v2272
    %v2529 = vmul.f32 %v1976, %v2244
    %v2530 = vmul.f32 %v1977, %v2248
    %v2531 = vmul.f32 %v1978, %v2252
    %v2532 = vmul.f32 %v1979, %v2256
    %v2533 = vmul.f32 %v1980, %v2260
    %v2534 = vmul.f32 %v1981, %v2264
    %v2535 = vmul.f32 %v1982, %v2268
    %v2536 = vmul.f32 %v1983, %v2272
    %v2537 = vmul.f32 %v1984, %v2244
    %v2538 = vmul.f32 %v1985, %v2248
    %v2539 = vmul.f32 %v1986, %v2252
    %v2540 = vmul.f32 %v1987, %v2256
    %v2541 = vmul.f32 %v1988, %v2260
    %v2542 = vmul.f32 %v1989, %v2264
    %v2543 = vmul.f32 %v1990, %v2268
    %v2544 = vmul.f32 %v1991, %v2272
    %v2545 = vmul.f32 %v1992, %v2244
    %v2546 = vmul.f32 %v1993, %v2248
    %v2547 = vmul.f32 %v1994, %v2252
    %v2548 = vmul.f32 %v1995, %v2256
    %v2549 = vmul.f32 %v1996, %v2260
    %v2550 = vmul.f32 %v1997, %v2264
    %v2551 = vmul.f32 %v1998, %v2268
    %v2552 = vmul.f32 %v1999, %v2272
    %v2553 = vmul.f32 %v2000, %v2244
    %v2554 = vmul.f32 %v2001, %v2248
    %v2555 = vmul.f32 %v2002, %v2252
    %v2556 = vmul.f32 %v2003, %v2256
    %v2557 = vmul.f32 %v2004, %v2260
    %v2558 = vmul.f32 %v2005, %v2264
    %v2559 = vmul.f32 %v2006, %v2268
    %v2560 = vmul.f32 %v2007, %v2272
    %v2561 = vmul.f32 %v2008, %v2244
    %v2562 = vmul.f32 %v2009, %v2248
    %v2563 = vmul.f32 %v2010, %v2252
    %v2564 = vmul.f32 %v2011, %v2256
    %v2565 = vmul.f32 %v2012, %v2260
    %v2566 = vmul.f32 %v2013, %v2264
    %v2567 = vmul.f32 %v2014, %v2268
    %v2568 = vmul.f32 %v2015, %v2272
    %v2569 = vmul.f32 %v2016, %v2244
    %v2570 = vmul.f32 %v2017, %v2248
    %v2571 = vmul.f32 %v2018, %v2252
    %v2572 = vmul.f32 %v2019, %v2256
    %v2573 = vmul.f32 %v2020, %v2260
    %v2574 = vmul.f32 %v2021, %v2264
    %v2575 = vmul.f32 %v2022, %v2268
    %v2576 = vmul.f32 %v2023, %v2272
    %v2577 = vmul.f32 %v2024, %v2244
    %v2578 = vmul.f32 %v2025, %v2248
    %v2579 = vmul.f32 %v2026, %v2252
    %v2580 = vmul.f32 %v2027, %v2256
    %v2581 = vmul.f32 %v2028, %v2260
    %v2582 = vmul.f32 %v2029, %v2264
    %v2583 = vmul.f32 %v2030, %v2268
    %v2584 = vmul.f32 %v2031, %v2272
    %v2585 = vmul.f32 %v2032, %v2244
    %v2586 = vmul.f32 %v2033, %v2248
    %v2587 = vmul.f32 %v2034, %v2252
    %v2588 = vmul.f32 %v2035, %v2256
    %v2589 = vmul.f32 %v2036, %v2260
    %v2590 = vmul.f32 %v2037, %v2264
    %v2591 = vmul.f32 %v2038, %v2268
    %v2592 = vmul.f32 %v2039, %v2272
    %v2593 = vmul.f32 %v2040, %v2244
    %v2594 = vmul.f32 %v2041, %v2248
    %v2595 = vmul.f32 %v2042, %v2252
    %v2596 = vmul.f32 %v2043, %v2256
    %v2597 = vmul.f32 %v2044, %v2260
    %v2598 = vmul.f32 %v2045, %v2264
    %v2599 = vmul.f32 %v2046, %v2268
    %v2600 = vmul.f32 %v2047, %v2272
    %v2601 = vmul.f32 %v2048, %v2244
    %v2602 = vmul.f32 %v2049, %v2248
    %v2603 = vmul.f32 %v2050, %v2252
    %v2604 = vmul.f32 %v2051, %v2256
    %v2605 = vmul.f32 %v2052, %v2260
    %v2606 = vmul.f32 %v2053, %v2264
    %v2607 = vmul.f32 %v2054, %v2268
    %v2608 = vmul.f32 %v2055, %v2272
    %v2609 = vmul.f32 %v2056, %v2244
    %v2610 = vmul.f32 %v2057, %v2248
    %v2611 = vmul.f32 %v2058, %v2252
    %v2612 = vmul.f32 %v2059, %v2256
    %v2613 = vmul.f32 %v2060, %v2260
    %v2614 = vmul.f32 %v2061, %v2264
    %v2615 = vmul.f32 %v2062, %v2268
    %v2616 = vmul.f32 %v2063, %v2272
    %v2617 = vmul.f32 %v2064, %v2244
    %v2618 = vmul.f32 %v2065, %v2248
    %v2619 = vmul.f32 %v2066, %v2252
    %v2620 = vmul.f32 %v2067, %v2256
    %v2621 = vmul.f32 %v2068, %v2260
    %v2622 = vmul.f32 %v2069, %v2264
    %v2623 = vmul.f32 %v2070, %v2268
    %v2624 = vmul.f32 %v2071, %v2272
    %v2625 = vmul.f32 %v2072, %v2244
    %v2626 = vmul.f32 %v2073, %v2248
    %v2627 = vmul.f32 %v2074, %v2252
    %v2628 = vmul.f32 %v2075, %v2256
    %v2629 = vmul.f32 %v2076, %v2260
    %v2630 = vmul.f32 %v2077, %v2264
    %v2631 = vmul.f32 %v2078, %v2268
    %v2632 = vmul.f32 %v2079, %v2272
    %v2633 = vmul.f32 %v2080, %v2244
    %v2634 = vmul.f32 %v2081, %v2248
    %v2635 = vmul.f32 %v2082, %v2252
    %v2636 = vmul.f32 %v2083, %v2256
    %v2637 = vmul.f32 %v2084, %v2260
    %v2638 = vmul.f32 %v2085, %v2264
    %v2639 = vmul.f32 %v2086, %v2268
    %v2640 = vmul.f32 %v2087, %v2272
    %v2641 = vmul.f32 %v2088, %v2244
    %v2642 = vmul.f32 %v2089, %v2248
    %v2643 = vmul.f32 %v2090, %v2252
    %v2644 = vmul.f32 %v2091, %v2256
    %v2645 = vmul.f32 %v2092, %v2260
    %v2646 = vmul.f32 %v2093, %v2264
    %v2647 = vmul.f32 %v2094, %v2268
    %v2648 = vmul.f32 %v2095, %v2272
    %v2649 = vmul.f32 %v2096, %v2244
    %v2650 = vmul.f32 %v2097, %v2248
    %v2651 = vmul.f32 %v2098, %v2252
    %v2652 = vmul.f32 %v2099, %v2256
    %v2653 = vmul.f32 %v2100, %v2260
    %v2654 = vmul.f32 %v2101, %v2264
    %v2655 = vmul.f32 %v2102, %v2268
    %v2656 = vmul.f32 %v2103, %v2272
    %v2657 = vmul.f32 %v2104, %v2244
    %v2658 = vmul.f32 %v2105, %v2248
    %v2659 = vmul.f32 %v2106, %v2252
    %v2660 = vmul.f32 %v2107, %v2256
    %v2661 = vmul.f32 %v2108, %v2260
    %v2662 = vmul.f32 %v2109, %v2264
    %v2663 = vmul.f32 %v2110, %v2268
    %v2664 = vmul.f32 %v2111, %v2272
    %v2665 = vmul.f32 %v2112, %v2244
    %v2666 = vmul.f32 %v2113, %v2248
    %v2667 = vmul.f32 %v2114, %v2252
    %v2668 = vmul.f32 %v2115, %v2256
    %v2669 = vmul.f32 %v2116, %v2260
    %v2670 = vmul.f32 %v2117, %v2264
    %v2671 = vmul.f32 %v2118, %v2268
    %v2672 = vmul.f32 %v2119, %v2272
    %v2673 = vmul.f32 %v2120, %v2244
    %v2674 = vmul.f32 %v2121, %v2248
    %v2675 = vmul.f32 %v2122, %v2252
    %v2676 = vmul.f32 %v2123, %v2256
    %v2677 = vmul.f32 %v2124, %v2260
    %v2678 = vmul.f32 %v2125, %v2264
    %v2679 = vmul.f32 %v2126, %v2268
    %v2680 = vmul.f32 %v2127, %v2272
    %v2681 = vmul.f32 %v2128, %v2244
    %v2682 = vmul.f32 %v2129, %v2248
    %v2683 = vmul.f32 %v2130, %v2252
    %v2684 = vmul.f32 %v2131, %v2256
    %v2685 = vmul.f32 %v2132, %v2260
    %v2686 = vmul.f32 %v2133, %v2264
    %v2687 = vmul.f32 %v2134, %v2268
    %v2688 = vmul.f32 %v2135, %v2272
    %v2689 = vmul.f32 %v2136, %v2244
    %v2690 = vmul.f32 %v2137, %v2248
    %v2691 = vmul.f32 %v2138, %v2252
    %v2692 = vmul.f32 %v2139, %v2256
    %v2693 = vmul.f32 %v2140, %v2260
    %v2694 = vmul.f32 %v2141, %v2264
    %v2695 = vmul.f32 %v2142, %v2268
    %v2696 = vmul.f32 %v2143, %v2272
    %v2697 = vmul.f32 %v2144, %v2244
    %v2698 = vmul.f32 %v2145, %v2248
    %v2699 = vmul.f32 %v2146, %v2252
    %v2700 = vmul.f32 %v2147, %v2256
    %v2701 = vmul.f32 %v2148, %v2260
    %v2702 = vmul.f32 %v2149, %v2264
    %v2703 = vmul.f32 %v2150, %v2268
    %v2704 = vmul.f32 %v2151, %v2272
    %v2705 = vmul.f32 %v2152, %v2244
    %v2706 = vmul.f32 %v2153, %v2248
    %v2707 = vmul.f32 %v2154, %v2252
    %v2708 = vmul.f32 %v2155, %v2256
    %v2709 = vmul.f32 %v2156, %v2260
    %v2710 = vmul.f32 %v2157, %v2264
    %v2711 = vmul.f32 %v2158, %v2268
    %v2712 = vmul.f32 %v2159, %v2272
    %v2713 = vmul.f32 %v2160, %v2244
    %v2714 = vmul.f32 %v2161, %v2248
    %v2715 = vmul.f32 %v2162, %v2252
    %v2716 = vmul.f32 %v2163, %v2256
    %v2717 = vmul.f32 %v2164, %v2260
    %v2718 = vmul.f32 %v2165, %v2264
    %v2719 = vmul.f32 %v2166, %v2268
    %v2720 = vmul.f32 %v2167, %v2272
    %v2721 = vmul.f32 %v2168, %v2244
    %v2722 = vmul.f32 %v2169, %v2248
    %v2723 = vmul.f32 %v2170, %v2252
    %v2724 = vmul.f32 %v2171, %v2256
    %v2725 = vmul.f32 %v2172, %v2260
    %v2726 = vmul.f32 %v2173, %v2264
    %v2727 = vmul.f32 %v2174, %v2268
    %v2728 = vmul.f32 %v2175, %v2272
    %v2729 = vmul.f32 %v2176, %v2244
    %v2730 = vmul.f32 %v2177, %v2248
    %v2731 = vmul.f32 %v2178, %v2252
    %v2732 = vmul.f32 %v2179, %v2256
    %v2733 = vmul.f32 %v2180, %v2260
    %v2734 = vmul.f32 %v2181, %v2264
    %v2735 = vmul.f32 %v2182, %v2268
    %v2736 = vmul.f32 %v2183, %v2272
    %v2737 = vmul.f32 %v2184, %v2244
    %v2738 = vmul.f32 %v2185, %v2248
    %v2739 = vmul.f32 %v2186, %v2252
    %v2740 = vmul.f32 %v2187, %v2256
    %v2741 = vmul.f32 %v2188, %v2260
    %v2742 = vmul.f32 %v2189, %v2264
    %v2743 = vmul.f32 %v2190, %v2268
    %v2744 = vmul.f32 %v2191, %v2272
    %v2745 = vmul.f32 %v2192, %v2244
    %v2746 = vmul.f32 %v2193, %v2248
    %v2747 = vmul.f32 %v2194, %v2252
    %v2748 = vmul.f32 %v2195, %v2256
    %v2749 = vmul.f32 %v2196, %v2260
    %v2750 = vmul.f32 %v2197, %v2264
    %v2751 = vmul.f32 %v2198, %v2268
    %v2752 = vmul.f32 %v2199, %v2272
    %v2753 = vmul.f32 %v2200, %v2244
    %v2754 = vmul.f32 %v2201, %v2248
    %v2755 = vmul.f32 %v2202, %v2252
    %v2756 = vmul.f32 %v2203, %v2256
    %v2757 = vmul.f32 %v2204, %v2260
    %v2758 = vmul.f32 %v2205, %v2264
    %v2759 = vmul.f32 %v2206, %v2268
    %v2760 = vmul.f32 %v2207, %v2272
    %v2761 = vmul.f32 %v2208, %v2244
    %v2762 = vmul.f32 %v2209, %v2248
    %v2763 = vmul.f32 %v2210, %v2252
    %v2764 = vmul.f32 %v2211, %v2256
    %v2765 = vmul.f32 %v2212, %v2260
    %v2766 = vmul.f32 %v2213, %v2264
    %v2767 = vmul.f32 %v2214, %v2268
    %v2768 = vmul.f32 %v2215, %v2272
    %v2769 = vmul.f32 %v2216, %v2244
    %v2770 = vmul.f32 %v2217, %v2248
    %v2771 = vmul.f32 %v2218, %v2252
    %v2772 = vmul.f32 %v2219, %v2256
    %v2773 = vmul.f32 %v2220, %v2260
    %v2774 = vmul.f32 %v2221, %v2264
    %v2775 = vmul.f32 %v2222, %v2268
    %v2776 = vmul.f32 %v2223, %v2272
    %v2777 = vmul.f32 %v2224, %v2244
    %v2778 = vmul.f32 %v2225, %v2248
    %v2779 = vmul.f32 %v2226, %v2252
    %v2780 = vmul.f32 %v2227, %v2256
    %v2781 = vmul.f32 %v2228, %v2260
    %v2782 = vmul.f32 %v2229, %v2264
    %v2783 = vmul.f32 %v2230, %v2268
    %v2784 = vmul.f32 %v2231, %v2272
    %v2785 = vmul.f32 %v2232, %v2244
    %v2786 = vmul.f32 %v2233, %v2248
    %v2787 = vmul.f32 %v2234, %v2252
    %v2788 = vmul.f32 %v2235, %v2256
    %v2789 = vmul.f32 %v2236, %v2260
    %v2790 = vmul.f32 %v2237, %v2264
    %v2791 = vmul.f32 %v2238, %v2268
    %v2792 = vmul.f32 %v2239, %v2272
    %v2793 = vpack.c.bf16 %v2289, %v2281
    %v2794 = vpack.c.bf16 %v2290, %v2282
    %v2795 = vpack.c.bf16 %v2291, %v2283
    %v2796 = vpack.c.bf16 %v2292, %v2284
    %v2797 = vpack.c.bf16 %v2293, %v2285
    %v2798 = vpack.c.bf16 %v2294, %v2286
    %v2799 = vpack.c.bf16 %v2295, %v2287
    %v2800 = vpack.c.bf16 %v2296, %v2288
    %v2801 = vpack.c.bf16 %v2305, %v2297
    %v2802 = vpack.c.bf16 %v2306, %v2298
    %v2803 = vpack.c.bf16 %v2307, %v2299
    %v2804 = vpack.c.bf16 %v2308, %v2300
    %v2805 = vpack.c.bf16 %v2309, %v2301
    %v2806 = vpack.c.bf16 %v2310, %v2302
    %v2807 = vpack.c.bf16 %v2311, %v2303
    %v2808 = vpack.c.bf16 %v2312, %v2304
    %v2809 = vpack.c.bf16 %v2321, %v2313
    %v2810 = vpack.c.bf16 %v2322, %v2314
    %v2811 = vpack.c.bf16 %v2323, %v2315
    %v2812 = vpack.c.bf16 %v2324, %v2316
    %v2813 = vpack.c.bf16 %v2325, %v2317
    %v2814 = vpack.c.bf16 %v2326, %v2318
    %v2815 = vpack.c.bf16 %v2327, %v2319
    %v2816 = vpack.c.bf16 %v2328, %v2320
    %v2817 = vpack.c.bf16 %v2337, %v2329
    %v2818 = vpack.c.bf16 %v2338, %v2330
    %v2819 = vpack.c.bf16 %v2339, %v2331
    %v2820 = vpack.c.bf16 %v2340, %v2332
    %v2821 = vpack.c.bf16 %v2341, %v2333
    %v2822 = vpack.c.bf16 %v2342, %v2334
    %v2823 = vpack.c.bf16 %v2343, %v2335
    %v2824 = vpack.c.bf16 %v2344, %v2336
    %v2825 = vpack.c.bf16 %v2353, %v2345
    %v2826 = vpack.c.bf16 %v2354, %v2346
    %v2827 = vpack.c.bf16 %v2355, %v2347
    %v2828 = vpack.c.bf16 %v2356, %v2348
    %v2829 = vpack.c.bf16 %v2357, %v2349
    %v2830 = vpack.c.bf16 %v2358, %v2350
    %v2831 = vpack.c.bf16 %v2359, %v2351
    %v2832 = vpack.c.bf16 %v2360, %v2352
    %v2833 = vpack.c.bf16 %v2369, %v2361
    %v2834 = vpack.c.bf16 %v2370, %v2362
    %v2835 = vpack.c.bf16 %v2371, %v2363
    %v2836 = vpack.c.bf16 %v2372, %v2364
    %v2837 = vpack.c.bf16 %v2373, %v2365
    %v2838 = vpack.c.bf16 %v2374, %v2366
    %v2839 = vpack.c.bf16 %v2375, %v2367
    %v2840 = vpack.c.bf16 %v2376, %v2368
    %v2841 = vpack.c.bf16 %v2385, %v2377
    %v2842 = vpack.c.bf16 %v2386, %v2378
    %v2843 = vpack.c.bf16 %v2387, %v2379
    %v2844 = vpack.c.bf16 %v2388, %v2380
    %v2845 = vpack.c.bf16 %v2389, %v2381
    %v2846 = vpack.c.bf16 %v2390, %v2382
    %v2847 = vpack.c.bf16 %v2391, %v2383
    %v2848 = vpack.c.bf16 %v2392, %v2384
    %v2849 = vpack.c.bf16 %v2401, %v2393
    %v2850 = vpack.c.bf16 %v2402, %v2394
    %v2851 = vpack.c.bf16 %v2403, %v2395
    %v2852 = vpack.c.bf16 %v2404, %v2396
    %v2853 = vpack.c.bf16 %v2405, %v2397
    %v2854 = vpack.c.bf16 %v2406, %v2398
    %v2855 = vpack.c.bf16 %v2407, %v2399
    %v2856 = vpack.c.bf16 %v2408, %v2400
    %v2857 = vpack.c.bf16 %v2417, %v2409
    %v2858 = vpack.c.bf16 %v2418, %v2410
    %v2859 = vpack.c.bf16 %v2419, %v2411
    %v2860 = vpack.c.bf16 %v2420, %v2412
    %v2861 = vpack.c.bf16 %v2421, %v2413
    %v2862 = vpack.c.bf16 %v2422, %v2414
    %v2863 = vpack.c.bf16 %v2423, %v2415
    %v2864 = vpack.c.bf16 %v2424, %v2416
    %v2865 = vpack.c.bf16 %v2433, %v2425
    %v2866 = vpack.c.bf16 %v2434, %v2426
    %v2867 = vpack.c.bf16 %v2435, %v2427
    %v2868 = vpack.c.bf16 %v2436, %v2428
    %v2869 = vpack.c.bf16 %v2437, %v2429
    %v2870 = vpack.c.bf16 %v2438, %v2430
    %v2871 = vpack.c.bf16 %v2439, %v2431
    %v2872 = vpack.c.bf16 %v2440, %v2432
    %v2873 = vpack.c.bf16 %v2449, %v2441
    %v2874 = vpack.c.bf16 %v2450, %v2442
    %v2875 = vpack.c.bf16 %v2451, %v2443
    %v2876 = vpack.c.bf16 %v2452, %v2444
    %v2877 = vpack.c.bf16 %v2453, %v2445
    %v2878 = vpack.c.bf16 %v2454, %v2446
    %v2879 = vpack.c.bf16 %v2455, %v2447
    %v2880 = vpack.c.bf16 %v2456, %v2448
    %v2881 = vpack.c.bf16 %v2465, %v2457
    %v2882 = vpack.c.bf16 %v2466, %v2458
    %v2883 = vpack.c.bf16 %v2467, %v2459
    %v2884 = vpack.c.bf16 %v2468, %v2460
    %v2885 = vpack.c.bf16 %v2469, %v2461
    %v2886 = vpack.c.bf16 %v2470, %v2462
    %v2887 = vpack.c.bf16 %v2471, %v2463
    %v2888 = vpack.c.bf16 %v2472, %v2464
    %v2889 = vpack.c.bf16 %v2481, %v2473
    %v2890 = vpack.c.bf16 %v2482, %v2474
    %v2891 = vpack.c.bf16 %v2483, %v2475
    %v2892 = vpack.c.bf16 %v2484, %v2476
    %v2893 = vpack.c.bf16 %v2485, %v2477
    %v2894 = vpack.c.bf16 %v2486, %v2478
    %v2895 = vpack.c.bf16 %v2487, %v2479
    %v2896 = vpack.c.bf16 %v2488, %v2480
    %v2897 = vpack.c.bf16 %v2497, %v2489
    %v2898 = vpack.c.bf16 %v2498, %v2490
    %v2899 = vpack.c.bf16 %v2499, %v2491
    %v2900 = vpack.c.bf16 %v2500, %v2492
    %v2901 = vpack.c.bf16 %v2501, %v2493
    %v2902 = vpack.c.bf16 %v2502, %v2494
    %v2903 = vpack.c.bf16 %v2503, %v2495
    %v2904 = vpack.c.bf16 %v2504, %v2496
    %v2905 = vpack.c.bf16 %v2513, %v2505
    %v2906 = vpack.c.bf16 %v2514, %v2506
    %v2907 = vpack.c.bf16 %v2515, %v2507
    %v2908 = vpack.c.bf16 %v2516, %v2508
    %v2909 = vpack.c.bf16 %v2517, %v2509
    %v2910 = vpack.c.bf16 %v2518, %v2510
    %v2911 = vpack.c.bf16 %v2519, %v2511
    %v2912 = vpack.c.bf16 %v2520, %v2512
    %v2913 = vpack.c.bf16 %v2529, %v2521
    %v2914 = vpack.c.bf16 %v2530, %v2522
    %v2915 = vpack.c.bf16 %v2531, %v2523
    %v2916 = vpack.c.bf16 %v2532, %v2524
    %v2917 = vpack.c.bf16 %v2533, %v2525
    %v2918 = vpack.c.bf16 %v2534, %v2526
    %v2919 = vpack.c.bf16 %v2535, %v2527
    %v2920 = vpack.c.bf16 %v2536, %v2528
    %v2921 = vpack.c.bf16 %v2545, %v2537
    %v2922 = vpack.c.bf16 %v2546, %v2538
    %v2923 = vpack.c.bf16 %v2547, %v2539
    %v2924 = vpack.c.bf16 %v2548, %v2540
    %v2925 = vpack.c.bf16 %v2549, %v2541
    %v2926 = vpack.c.bf16 %v2550, %v2542
    %v2927 = vpack.c.bf16 %v2551, %v2543
    %v2928 = vpack.c.bf16 %v2552, %v2544
    %v2929 = vpack.c.bf16 %v2561, %v2553
    %v2930 = vpack.c.bf16 %v2562, %v2554
    %v2931 = vpack.c.bf16 %v2563, %v2555
    %v2932 = vpack.c.bf16 %v2564, %v2556
    %v2933 = vpack.c.bf16 %v2565, %v2557
    %v2934 = vpack.c.bf16 %v2566, %v2558
    %v2935 = vpack.c.bf16 %v2567, %v2559
    %v2936 = vpack.c.bf16 %v2568, %v2560
    %v2937 = vpack.c.bf16 %v2577, %v2569
    %v2938 = vpack.c.bf16 %v2578, %v2570
    %v2939 = vpack.c.bf16 %v2579, %v2571
    %v2940 = vpack.c.bf16 %v2580, %v2572
    %v2941 = vpack.c.bf16 %v2581, %v2573
    %v2942 = vpack.c.bf16 %v2582, %v2574
    %v2943 = vpack.c.bf16 %v2583, %v2575
    %v2944 = vpack.c.bf16 %v2584, %v2576
    %v2945 = vpack.c.bf16 %v2593, %v2585
    %v2946 = vpack.c.bf16 %v2594, %v2586
    %v2947 = vpack.c.bf16 %v2595, %v2587
    %v2948 = vpack.c.bf16 %v2596, %v2588
    %v2949 = vpack.c.bf16 %v2597, %v2589
    %v2950 = vpack.c.bf16 %v2598, %v2590
    %v2951 = vpack.c.bf16 %v2599, %v2591
    %v2952 = vpack.c.bf16 %v2600, %v2592
    %v2953 = vpack.c.bf16 %v2609, %v2601
    %v2954 = vpack.c.bf16 %v2610, %v2602
    %v2955 = vpack.c.bf16 %v2611, %v2603
    %v2956 = vpack.c.bf16 %v2612, %v2604
    %v2957 = vpack.c.bf16 %v2613, %v2605
    %v2958 = vpack.c.bf16 %v2614, %v2606
    %v2959 = vpack.c.bf16 %v2615, %v2607
    %v2960 = vpack.c.bf16 %v2616, %v2608
    %v2961 = vpack.c.bf16 %v2625, %v2617
    %v2962 = vpack.c.bf16 %v2626, %v2618
    %v2963 = vpack.c.bf16 %v2627, %v2619
    %v2964 = vpack.c.bf16 %v2628, %v2620
    %v2965 = vpack.c.bf16 %v2629, %v2621
    %v2966 = vpack.c.bf16 %v2630, %v2622
    %v2967 = vpack.c.bf16 %v2631, %v2623
    %v2968 = vpack.c.bf16 %v2632, %v2624
    %v2969 = vpack.c.bf16 %v2641, %v2633
    %v2970 = vpack.c.bf16 %v2642, %v2634
    %v2971 = vpack.c.bf16 %v2643, %v2635
    %v2972 = vpack.c.bf16 %v2644, %v2636
    %v2973 = vpack.c.bf16 %v2645, %v2637
    %v2974 = vpack.c.bf16 %v2646, %v2638
    %v2975 = vpack.c.bf16 %v2647, %v2639
    %v2976 = vpack.c.bf16 %v2648, %v2640
    %v2977 = vpack.c.bf16 %v2657, %v2649
    %v2978 = vpack.c.bf16 %v2658, %v2650
    %v2979 = vpack.c.bf16 %v2659, %v2651
    %v2980 = vpack.c.bf16 %v2660, %v2652
    %v2981 = vpack.c.bf16 %v2661, %v2653
    %v2982 = vpack.c.bf16 %v2662, %v2654
    %v2983 = vpack.c.bf16 %v2663, %v2655
    %v2984 = vpack.c.bf16 %v2664, %v2656
    %v2985 = vpack.c.bf16 %v2673, %v2665
    %v2986 = vpack.c.bf16 %v2674, %v2666
    %v2987 = vpack.c.bf16 %v2675, %v2667
    %v2988 = vpack.c.bf16 %v2676, %v2668
    %v2989 = vpack.c.bf16 %v2677, %v2669
    %v2990 = vpack.c.bf16 %v2678, %v2670
    %v2991 = vpack.c.bf16 %v2679, %v2671
    %v2992 = vpack.c.bf16 %v2680, %v2672
    %v2993 = vpack.c.bf16 %v2689, %v2681
    %v2994 = vpack.c.bf16 %v2690, %v2682
    %v2995 = vpack.c.bf16 %v2691, %v2683
    %v2996 = vpack.c.bf16 %v2692, %v2684
    %v2997 = vpack.c.bf16 %v2693, %v2685
    %v2998 = vpack.c.bf16 %v2694, %v2686
    %v2999 = vpack.c.bf16 %v2695, %v2687
    %v3000 = vpack.c.bf16 %v2696, %v2688
    %v3001 = vpack.c.bf16 %v2705, %v2697
    %v3002 = vpack.c.bf16 %v2706, %v2698
    %v3003 = vpack.c.bf16 %v2707, %v2699
    %v3004 = vpack.c.bf16 %v2708, %v2700
    %v3005 = vpack.c.bf16 %v2709, %v2701
    %v3006 = vpack.c.bf16 %v2710, %v2702
    %v3007 = vpack.c.bf16 %v2711, %v2703
    %v3008 = vpack.c.bf16 %v2712, %v2704
    %v3009 = vpack.c.bf16 %v2721, %v2713
    %v3010 = vpack.c.bf16 %v2722, %v2714
    %v3011 = vpack.c.bf16 %v2723, %v2715
    %v3012 = vpack.c.bf16 %v2724, %v2716
    %v3013 = vpack.c.bf16 %v2725, %v2717
    %v3014 = vpack.c.bf16 %v2726, %v2718
    %v3015 = vpack.c.bf16 %v2727, %v2719
    %v3016 = vpack.c.bf16 %v2728, %v2720
    %v3017 = vpack.c.bf16 %v2737, %v2729
    %v3018 = vpack.c.bf16 %v2738, %v2730
    %v3019 = vpack.c.bf16 %v2739, %v2731
    %v3020 = vpack.c.bf16 %v2740, %v2732
    %v3021 = vpack.c.bf16 %v2741, %v2733
    %v3022 = vpack.c.bf16 %v2742, %v2734
    %v3023 = vpack.c.bf16 %v2743, %v2735
    %v3024 = vpack.c.bf16 %v2744, %v2736
    %v3025 = vpack.c.bf16 %v2753, %v2745
    %v3026 = vpack.c.bf16 %v2754, %v2746
    %v3027 = vpack.c.bf16 %v2755, %v2747
    %v3028 = vpack.c.bf16 %v2756, %v2748
    %v3029 = vpack.c.bf16 %v2757, %v2749
    %v3030 = vpack.c.bf16 %v2758, %v2750
    %v3031 = vpack.c.bf16 %v2759, %v2751
    %v3032 = vpack.c.bf16 %v2760, %v2752
    %v3033 = vpack.c.bf16 %v2769, %v2761
    %v3034 = vpack.c.bf16 %v2770, %v2762
    %v3035 = vpack.c.bf16 %v2771, %v2763
    %v3036 = vpack.c.bf16 %v2772, %v2764
    %v3037 = vpack.c.bf16 %v2773, %v2765
    %v3038 = vpack.c.bf16 %v2774, %v2766
    %v3039 = vpack.c.bf16 %v2775, %v2767
    %v3040 = vpack.c.bf16 %v2776, %v2768
    %v3041 = vpack.c.bf16 %v2785, %v2777
    %v3042 = vpack.c.bf16 %v2786, %v2778
    %v3043 = vpack.c.bf16 %v2787, %v2779
    %v3044 = vpack.c.bf16 %v2788, %v2780
    %v3045 = vpack.c.bf16 %v2789, %v2781
    %v3046 = vpack.c.bf16 %v2790, %v2782
    %v3047 = vpack.c.bf16 %v2791, %v2783
    %v3048 = vpack.c.bf16 %v2792, %v2784
    %v3049 = vpack.c.bf16 %v1067, %v1067
    %v3050 = vpack.c.bf16 %v1068, %v1068
    %v3051 = vpack.c.bf16 %v1069, %v1069
    %v3052 = vpack.c.bf16 %v1070, %v1070
    %3053 = vmatprep.subr.bf16.mxu0 %v2794
    %3054 = vmatpush1.bf16.msra.mxu0 %v2793
    %3055 = vmatprep.subr.bf16.mxu0 %v2802
    %3056 = vmatpush1.bf16.msra.mxu0 %v2801
    %3057 = vmatprep.subr.bf16.mxu0 %v2810
    %3058 = vmatpush1.bf16.msra.mxu0 %v2809
    %3059 = vmatprep.subr.bf16.mxu0 %v2818
    %3060 = vmatpush1.bf16.msra.mxu0 %v2817
    %3061 = vmatprep.subr.bf16.mxu0 %v2826
    %3062 = vmatpush1.bf16.msra.mxu0 %v2825
    %3063 = vmatprep.subr.bf16.mxu0 %v2834
    %3064 = vmatpush1.bf16.msra.mxu0 %v2833
    %3065 = vmatprep.subr.bf16.mxu0 %v2842
    %3066 = vmatpush1.bf16.msra.mxu0 %v2841
    %3067 = vmatprep.subr.bf16.mxu0 %v2850
    %3068 = vmatpush1.bf16.msra.mxu0 %v2849
    %3069 = vmatprep.subr.bf16.mxu0 %v2858
    %3070 = vmatpush1.bf16.msra.mxu0 %v2857
    %3071 = vmatprep.subr.bf16.mxu0 %v2866
    %3072 = vmatpush1.bf16.msra.mxu0 %v2865
    %3073 = vmatprep.subr.bf16.mxu0 %v2874
    %3074 = vmatpush1.bf16.msra.mxu0 %v2873
    %3075 = vmatprep.subr.bf16.mxu0 %v2882
    %3076 = vmatpush1.bf16.msra.mxu0 %v2881
    %3077 = vmatprep.subr.bf16.mxu0 %v2890
    %3078 = vmatpush1.bf16.msra.mxu0 %v2889
    %3079 = vmatprep.subr.bf16.mxu0 %v2898
    %3080 = vmatpush1.bf16.msra.mxu0 %v2897
    %3081 = vmatprep.subr.bf16.mxu0 %v2906
    %3082 = vmatpush1.bf16.msra.mxu0 %v2905
    %3083 = vmatprep.subr.bf16.mxu0 %v2914
    %3084 = vmatpush1.bf16.msra.mxu0 %v2913
    %3085 = vmatprep.mubr.bf16.mxu0 %v3050
    %3086 = vmatmul.mubr.bf16.gmra.mrb[0].mxu0 %v3049
    %v3087 = vpop.f32.mrb[0].mxu0
    %v3088 = vadd.f32 0.0, %v3087
    %v3089 = vpop.f32.mrb[0].mxu0
    %v3090 = vadd.f32 0.0, %v3089
    %v3091 = vpop.f32.mrb[0].mxu0
    %v3092 = vpop.f32.mrb[0].mxu0
    %3093 = vdwg.mxu0
    %3094 = vmatprep.subr.bf16.mxu0 %v2922
    %3095 = vmatpush1.bf16.msra.mxu0 %v2921
    %3096 = vmatprep.subr.bf16.mxu0 %v2930
    %3097 = vmatpush1.bf16.msra.mxu0 %v2929
    %3098 = vmatprep.subr.bf16.mxu0 %v2938
    %3099 = vmatpush1.bf16.msra.mxu0 %v2937
    %3100 = vmatprep.subr.bf16.mxu0 %v2946
    %3101 = vmatpush1.bf16.msra.mxu0 %v2945
    %3102 = vmatprep.subr.bf16.mxu0 %v2954
    %3103 = vmatpush1.bf16.msra.mxu0 %v2953
    %3104 = vmatprep.subr.bf16.mxu0 %v2962
    %3105 = vmatpush1.bf16.msra.mxu0 %v2961
    %3106 = vmatprep.subr.bf16.mxu0 %v2970
    %3107 = vmatpush1.bf16.msra.mxu0 %v2969
    %3108 = vmatprep.subr.bf16.mxu0 %v2978
    %3109 = vmatpush1.bf16.msra.mxu0 %v2977
    %3110 = vmatprep.subr.bf16.mxu0 %v2986
    %3111 = vmatpush1.bf16.msra.mxu0 %v2985
    %3112 = vmatprep.subr.bf16.mxu0 %v2994
    %3113 = vmatpush1.bf16.msra.mxu0 %v2993
    %3114 = vmatprep.subr.bf16.mxu0 %v3002
    %3115 = vmatpush1.bf16.msra.mxu0 %v3001
    %3116 = vmatprep.subr.bf16.mxu0 %v3010
    %3117 = vmatpush1.bf16.msra.mxu0 %v3009
    %3118 = vmatprep.subr.bf16.mxu0 %v3018
    %3119 = vmatpush1.bf16.msra.mxu0 %v3017
    %3120 = vmatprep.subr.bf16.mxu0 %v3026
    %3121 = vmatpush1.bf16.msra.mxu0 %v3025
    %3122 = vmatprep.subr.bf16.mxu0 %v3034
    %3123 = vmatpush1.bf16.msra.mxu0 %v3033
    %3124 = vmatprep.subr.bf16.mxu0 %v3042
    %3125 = vmatpush1.bf16.msra.mxu0 %v3041
    %3126 = vmatprep.mubr.bf16.mxu0 %v3052
    %3127 = vmatmul.mubr.bf16.gmra.mrb[0].mxu0 %v3051
    %v3128 = vpop.f32.mrb[0].mxu0
    %v3129 = vadd.f32 %v3088, %v3128
    %v3130 = vpop.f32.mrb[0].mxu0
    %v3131 = vadd.f32 %v3090, %v3130
    %v3132 = vpop.f32.mrb[0].mxu0
    %v3133 = vpop.f32.mrb[0].mxu0
    %3134 = vdwg.mxu0
    %3135 = vmatprep.subr.bf16.mxu0 %v2796
    %3136 = vmatpush1.bf16.msra.mxu0 %v2795
    %3137 = vmatprep.subr.bf16.mxu0 %v2804
    %3138 = vmatpush1.bf16.msra.mxu0 %v2803
    %3139 = vmatprep.subr.bf16.mxu0 %v2812
    %3140 = vmatpush1.bf16.msra.mxu0 %v2811
    %3141 = vmatprep.subr.bf16.mxu0 %v2820
    %3142 = vmatpush1.bf16.msra.mxu0 %v2819
    %3143 = vmatprep.subr.bf16.mxu0 %v2828
    %3144 = vmatpush1.bf16.msra.mxu0 %v2827
    %3145 = vmatprep.subr.bf16.mxu0 %v2836
    %3146 = vmatpush1.bf16.msra.mxu0 %v2835
    %3147 = vmatprep.subr.bf16.mxu0 %v2844
    %3148 = vmatpush1.bf16.msra.mxu0 %v2843
    %3149 = vmatprep.subr.bf16.mxu0 %v2852
    %3150 = vmatpush1.bf16.msra.mxu0 %v2851
    %3151 = vmatprep.subr.bf16.mxu0 %v2860
    %3152 = vmatpush1.bf16.msra.mxu0 %v2859
    %3153 = vmatprep.subr.bf16.mxu0 %v2868
    %3154 = vmatpush1.bf16.msra.mxu0 %v2867
    %3155 = vmatprep.subr.bf16.mxu0 %v2876
    %3156 = vmatpush1.bf16.msra.mxu0 %v2875
    %3157 = vmatprep.subr.bf16.mxu0 %v2884
    %3158 = vmatpush1.bf16.msra.mxu0 %v2883
    %3159 = vmatprep.subr.bf16.mxu0 %v2892
    %3160 = vmatpush1.bf16.msra.mxu0 %v2891
    %3161 = vmatprep.subr.bf16.mxu0 %v2900
    %3162 = vmatpush1.bf16.msra.mxu0 %v2899
    %3163 = vmatprep.subr.bf16.mxu0 %v2908
    %3164 = vmatpush1.bf16.msra.mxu0 %v2907
    %3165 = vmatprep.subr.bf16.mxu0 %v2916
    %3166 = vmatpush1.bf16.msra.mxu0 %v2915
    %3167 = vmatprep.mubr.bf16.mxu0 %v3050
    %3168 = vmatmul.mubr.bf16.gmra.mrb[0].mxu0 %v3049
    %v3169 = vpop.f32.mrb[0].mxu0
    %v3170 = vadd.f32 0.0, %v3169
    %v3171 = vpop.f32.mrb[0].mxu0
    %v3172 = vadd.f32 0.0, %v3171
    %v3173 = vpop.f32.mrb[0].mxu0
    %v3174 = vpop.f32.mrb[0].mxu0
    %3175 = vdwg.mxu0
    %3176 = vmatprep.subr.bf16.mxu0 %v2924
    %3177 = vmatpush1.bf16.msra.mxu0 %v2923
    %3178 = vmatprep.subr.bf16.mxu0 %v2932
    %3179 = vmatpush1.bf16.msra.mxu0 %v2931
    %3180 = vmatprep.subr.bf16.mxu0 %v2940
    %3181 = vmatpush1.bf16.msra.mxu0 %v2939
    %3182 = vmatprep.subr.bf16.mxu0 %v2948
    %3183 = vmatpush1.bf16.msra.mxu0 %v2947
    %3184 = vmatprep.subr.bf16.mxu0 %v2956
    %3185 = vmatpush1.bf16.msra.mxu0 %v2955
    %3186 = vmatprep.subr.bf16.mxu0 %v2964
    %3187 = vmatpush1.bf16.msra.mxu0 %v2963
    %3188 = vmatprep.subr.bf16.mxu0 %v2972
    %3189 = vmatpush1.bf16.msra.mxu0 %v2971
    %3190 = vmatprep.subr.bf16.mxu0 %v2980
    %3191 = vmatpush1.bf16.msra.mxu0 %v2979
    %3192 = vmatprep.subr.bf16.mxu0 %v2988
    %3193 = vmatpush1.bf16.msra.mxu0 %v2987
    %3194 = vmatprep.subr.bf16.mxu0 %v2996
    %3195 = vmatpush1.bf16.msra.mxu0 %v2995
    %3196 = vmatprep.subr.bf16.mxu0 %v3004
    %3197 = vmatpush1.bf16.msra.mxu0 %v3003
    %3198 = vmatprep.subr.bf16.mxu0 %v3012
    %3199 = vmatpush1.bf16.msra.mxu0 %v3011
    %3200 = vmatprep.subr.bf16.mxu0 %v3020
    %3201 = vmatpush1.bf16.msra.mxu0 %v3019
    %3202 = vmatprep.subr.bf16.mxu0 %v3028
    %3203 = vmatpush1.bf16.msra.mxu0 %v3027
    %3204 = vmatprep.subr.bf16.mxu0 %v3036
    %3205 = vmatpush1.bf16.msra.mxu0 %v3035
    %3206 = vmatprep.subr.bf16.mxu0 %v3044
    %3207 = vmatpush1.bf16.msra.mxu0 %v3043
    %3208 = vmatprep.mubr.bf16.mxu0 %v3052
    %3209 = vmatmul.mubr.bf16.gmra.mrb[0].mxu0 %v3051
    %v3210 = vpop.f32.mrb[0].mxu0
    %v3211 = vadd.f32 %v3170, %v3210
    %v3212 = vpop.f32.mrb[0].mxu0
    %v3213 = vadd.f32 %v3172, %v3212
    %v3214 = vpop.f32.mrb[0].mxu0
    %v3215 = vpop.f32.mrb[0].mxu0
    %3216 = vdwg.mxu0
    %3217 = vmatprep.subr.bf16.mxu0 %v2798
    %3218 = vmatpush1.bf16.msra.mxu0 %v2797
    %3219 = vmatprep.subr.bf16.mxu0 %v2806
    %3220 = vmatpush1.bf16.msra.mxu0 %v2805
    %3221 = vmatprep.subr.bf16.mxu0 %v2814
    %3222 = vmatpush1.bf16.msra.mxu0 %v2813
    %3223 = vmatprep.subr.bf16.mxu0 %v2822
    %3224 = vmatpush1.bf16.msra.mxu0 %v2821
    %3225 = vmatprep.subr.bf16.mxu0 %v2830
    %3226 = vmatpush1.bf16.msra.mxu0 %v2829
    %3227 = vmatprep.subr.bf16.mxu0 %v2838
    %3228 = vmatpush1.bf16.msra.mxu0 %v2837
    %3229 = vmatprep.subr.bf16.mxu0 %v2846
    %3230 = vmatpush1.bf16.msra.mxu0 %v2845
    %3231 = vmatprep.subr.bf16.mxu0 %v2854
    %3232 = vmatpush1.bf16.msra.mxu0 %v2853
    %3233 = vmatprep.subr.bf16.mxu0 %v2862
    %3234 = vmatpush1.bf16.msra.mxu0 %v2861
    %3235 = vmatprep.subr.bf16.mxu0 %v2870
    %3236 = vmatpush1.bf16.msra.mxu0 %v2869
    %3237 = vmatprep.subr.bf16.mxu0 %v2878
    %3238 = vmatpush1.bf16.msra.mxu0 %v2877
    %3239 = vmatprep.subr.bf16.mxu0 %v2886
    %3240 = vmatpush1.bf16.msra.mxu0 %v2885
    %3241 = vmatprep.subr.bf16.mxu0 %v2894
    %3242 = vmatpush1.bf16.msra.mxu0 %v2893
    %3243 = vmatprep.subr.bf16.mxu0 %v2902
    %3244 = vmatpush1.bf16.msra.mxu0 %v2901
    %3245 = vmatprep.subr.bf16.mxu0 %v2910
    %3246 = vmatpush1.bf16.msra.mxu0 %v2909
    %3247 = vmatprep.subr.bf16.mxu0 %v2918
    %3248 = vmatpush1.bf16.msra.mxu0 %v2917
    %3249 = vmatprep.mubr.bf16.mxu0 %v3050
    %3250 = vmatmul.mubr.bf16.gmra.mrb[0].mxu0 %v3049
    %v3251 = vpop.f32.mrb[0].mxu0
    %v3252 = vadd.f32 0.0, %v3251
    %v3253 = vpop.f32.mrb[0].mxu0
    %v3254 = vadd.f32 0.0, %v3253
    %v3255 = vpop.f32.mrb[0].mxu0
    %v3256 = vpop.f32.mrb[0].mxu0
    %3257 = vdwg.mxu0
    %3258 = vmatprep.subr.bf16.mxu0 %v2926
    %3259 = vmatpush1.bf16.msra.mxu0 %v2925
    %3260 = vmatprep.subr.bf16.mxu0 %v2934
    %3261 = vmatpush1.bf16.msra.mxu0 %v2933
    %3262 = vmatprep.subr.bf16.mxu0 %v2942
    %3263 = vmatpush1.bf16.msra.mxu0 %v2941
    %3264 = vmatprep.subr.bf16.mxu0 %v2950
    %3265 = vmatpush1.bf16.msra.mxu0 %v2949
    %3266 = vmatprep.subr.bf16.mxu0 %v2958
    %3267 = vmatpush1.bf16.msra.mxu0 %v2957
    %3268 = vmatprep.subr.bf16.mxu0 %v2966
    %3269 = vmatpush1.bf16.msra.mxu0 %v2965
    %3270 = vmatprep.subr.bf16.mxu0 %v2974
    %3271 = vmatpush1.bf16.msra.mxu0 %v2973
    %3272 = vmatprep.subr.bf16.mxu0 %v2982
    %3273 = vmatpush1.bf16.msra.mxu0 %v2981
    %3274 = vmatprep.subr.bf16.mxu0 %v2990
    %3275 = vmatpush1.bf16.msra.mxu0 %v2989
    %3276 = vmatprep.subr.bf16.mxu0 %v2998
    %3277 = vmatpush1.bf16.msra.mxu0 %v2997
    %3278 = vmatprep.subr.bf16.mxu0 %v3006
    %3279 = vmatpush1.bf16.msra.mxu0 %v3005
    %3280 = vmatprep.subr.bf16.mxu0 %v3014
    %3281 = vmatpush1.bf16.msra.mxu0 %v3013
    %3282 = vmatprep.subr.bf16.mxu0 %v3022
    %3283 = vmatpush1.bf16.msra.mxu0 %v3021
    %3284 = vmatprep.subr.bf16.mxu0 %v3030
    %3285 = vmatpush1.bf16.msra.mxu0 %v3029
    %3286 = vmatprep.subr.bf16.mxu0 %v3038
    %3287 = vmatpush1.bf16.msra.mxu0 %v3037
    %3288 = vmatprep.subr.bf16.mxu0 %v3046
    %3289 = vmatpush1.bf16.msra.mxu0 %v3045
    %3290 = vmatprep.mubr.bf16.mxu0 %v3052
    %3291 = vmatmul.mubr.bf16.gmra.mrb[0].mxu0 %v3051
    %v3292 = vpop.f32.mrb[0].mxu0
    %v3293 = vadd.f32 %v3252, %v3292
    %v3294 = vpop.f32.mrb[0].mxu0
    %v3295 = vadd.f32 %v3254, %v3294
    %v3296 = vpop.f32.mrb[0].mxu0
    %v3297 = vpop.f32.mrb[0].mxu0
    %3298 = vdwg.mxu0
    %3299 = vmatprep.subr.bf16.mxu0 %v2800
    %3300 = vmatpush1.bf16.msra.mxu0 %v2799
    %3301 = vmatprep.subr.bf16.mxu0 %v2808
    %3302 = vmatpush1.bf16.msra.mxu0 %v2807
    %3303 = vmatprep.subr.bf16.mxu0 %v2816
    %3304 = vmatpush1.bf16.msra.mxu0 %v2815
    %3305 = vmatprep.subr.bf16.mxu0 %v2824
    %3306 = vmatpush1.bf16.msra.mxu0 %v2823
    %3307 = vmatprep.subr.bf16.mxu0 %v2832
    %3308 = vmatpush1.bf16.msra.mxu0 %v2831
    %3309 = vmatprep.subr.bf16.mxu0 %v2840
    %3310 = vmatpush1.bf16.msra.mxu0 %v2839
    %3311 = vmatprep.subr.bf16.mxu0 %v2848
    %3312 = vmatpush1.bf16.msra.mxu0 %v2847
    %3313 = vmatprep.subr.bf16.mxu0 %v2856
    %3314 = vmatpush1.bf16.msra.mxu0 %v2855
    %3315 = vmatprep.subr.bf16.mxu0 %v2864
    %3316 = vmatpush1.bf16.msra.mxu0 %v2863
    %3317 = vmatprep.subr.bf16.mxu0 %v2872
    %3318 = vmatpush1.bf16.msra.mxu0 %v2871
    %3319 = vmatprep.subr.bf16.mxu0 %v2880
    %3320 = vmatpush1.bf16.msra.mxu0 %v2879
    %3321 = vmatprep.subr.bf16.mxu0 %v2888
    %3322 = vmatpush1.bf16.msra.mxu0 %v2887
    %3323 = vmatprep.subr.bf16.mxu0 %v2896
    %3324 = vmatpush1.bf16.msra.mxu0 %v2895
    %3325 = vmatprep.subr.bf16.mxu0 %v2904
    %3326 = vmatpush1.bf16.msra.mxu0 %v2903
    %3327 = vmatprep.subr.bf16.mxu0 %v2912
    %3328 = vmatpush1.bf16.msra.mxu0 %v2911
    %3329 = vmatprep.subr.bf16.mxu0 %v2920
    %3330 = vmatpush1.bf16.msra.mxu0 %v2919
    %3331 = vmatprep.mubr.bf16.mxu0 %v3050
    %3332 = vmatmul.mubr.bf16.gmra.mrb[0].mxu0 %v3049
    %v3333 = vpop.f32.mrb[0].mxu0
    %v3334 = vadd.f32 0.0, %v3333
    %v3335 = vpop.f32.mrb[0].mxu0
    %v3336 = vadd.f32 0.0, %v3335
    %v3337 = vpop.f32.mrb[0].mxu0
    %v3338 = vpop.f32.mrb[0].mxu0
    %3339 = vdwg.mxu0
    %3340 = vmatprep.subr.bf16.mxu0 %v2928
    %3341 = vmatpush1.bf16.msra.mxu0 %v2927
    %3342 = vmatprep.subr.bf16.mxu0 %v2936
    %3343 = vmatpush1.bf16.msra.mxu0 %v2935
    %3344 = vmatprep.subr.bf16.mxu0 %v2944
    %3345 = vmatpush1.bf16.msra.mxu0 %v2943
    %3346 = vmatprep.subr.bf16.mxu0 %v2952
    %3347 = vmatpush1.bf16.msra.mxu0 %v2951
    %3348 = vmatprep.subr.bf16.mxu0 %v2960
    %3349 = vmatpush1.bf16.msra.mxu0 %v2959
    %3350 = vmatprep.subr.bf16.mxu0 %v2968
    %3351 = vmatpush1.bf16.msra.mxu0 %v2967
    %3352 = vmatprep.subr.bf16.mxu0 %v2976
    %3353 = vmatpush1.bf16.msra.mxu0 %v2975
    %3354 = vmatprep.subr.bf16.mxu0 %v2984
    %3355 = vmatpush1.bf16.msra.mxu0 %v2983
    %3356 = vmatprep.subr.bf16.mxu0 %v2992
    %3357 = vmatpush1.bf16.msra.mxu0 %v2991
    %3358 = vmatprep.subr.bf16.mxu0 %v3000
    %3359 = vmatpush1.bf16.msra.mxu0 %v2999
    %3360 = vmatprep.subr.bf16.mxu0 %v3008
    %3361 = vmatpush1.bf16.msra.mxu0 %v3007
    %3362 = vmatprep.subr.bf16.mxu0 %v3016
    %3363 = vmatpush1.bf16.msra.mxu0 %v3015
    %3364 = vmatprep.subr.bf16.mxu0 %v3024
    %3365 = vmatpush1.bf16.msra.mxu0 %v3023
    %3366 = vmatprep.subr.bf16.mxu0 %v3032
    %3367 = vmatpush1.bf16.msra.mxu0 %v3031
    %3368 = vmatprep.subr.bf16.mxu0 %v3040
    %3369 = vmatpush1.bf16.msra.mxu0 %v3039
    %3370 = vmatprep.subr.bf16.mxu0 %v3048
    %3371 = vmatpush1.bf16.msra.mxu0 %v3047
    %3372 = vmatprep.mubr.bf16.mxu0 %v3052
    %3373 = vmatmul.mubr.bf16.gmra.mrb[0].mxu0 %v3051
    %v3374 = vpop.f32.mrb[0].mxu0
    %v3375 = vadd.f32 %v3334, %v3374
    %v3376 = vpop.f32.mrb[0].mxu0
    %v3377 = vadd.f32 %v3336, %v3376
    %v3378 = vpop.f32.mrb[0].mxu0
    %v3379 = vpop.f32.mrb[0].mxu0
    %3380 = vdwg.mxu0
    %v3381 = vld [vmem:[%s11] sm:$0xff]
    %v3382 = vld [vmem:[%s12] sm:$0xff]
    %v3383 = vrot.slane %v3129, 4
    %v3384 = vadd.f32 %v3129, %v3383
    %v3385 = vrot.slane %v3384, 2
    %v3386 = vadd.f32 %v3384, %v3385
    %v3387 = vrot.slane %v3386, 1
    %v3388 = vadd.f32 %v3386, %v3387
    %v3389 = vrot.slane %v3131, 4
    %v3390 = vadd.f32 %v3131, %v3389
    %v3391 = vrot.slane %v3390, 2
    %v3392 = vadd.f32 %v3390, %v3391
    %v3393 = vrot.slane %v3392, 1
    %v3394 = vadd.f32 %v3392, %v3393
    %v3395 = vrot.slane %v3211, 4
    %v3396 = vadd.f32 %v3211, %v3395
    %v3397 = vrot.slane %v3396, 2
    %v3398 = vadd.f32 %v3396, %v3397
    %v3399 = vrot.slane %v3398, 1
    %v3400 = vadd.f32 %v3398, %v3399
    %v3401 = vrot.slane %v3213, 4
    %v3402 = vadd.f32 %v3213, %v3401
    %v3403 = vrot.slane %v3402, 2
    %v3404 = vadd.f32 %v3402, %v3403
    %v3405 = vrot.slane %v3404, 1
    %v3406 = vadd.f32 %v3404, %v3405
    %v3407 = vrot.slane %v3293, 4
    %v3408 = vadd.f32 %v3293, %v3407
    %v3409 = vrot.slane %v3408, 2
    %v3410 = vadd.f32 %v3408, %v3409
    %v3411 = vrot.slane %v3410, 1
    %v3412 = vadd.f32 %v3410, %v3411
    %v3413 = vrot.slane %v3295, 4
    %v3414 = vadd.f32 %v3295, %v3413
    %v3415 = vrot.slane %v3414, 2
    %v3416 = vadd.f32 %v3414, %v3415
    %v3417 = vrot.slane %v3416, 1
    %v3418 = vadd.f32 %v3416, %v3417
    %v3419 = vrot.slane %v3375, 4
    %v3420 = vadd.f32 %v3375, %v3419
    %v3421 = vrot.slane %v3420, 2
    %v3422 = vadd.f32 %v3420, %v3421
    %v3423 = vrot.slane %v3422, 1
    %v3424 = vadd.f32 %v3422, %v3423
    %v3425 = vrot.slane %v3377, 4
    %v3426 = vadd.f32 %v3377, %v3425
    %v3427 = vrot.slane %v3426, 2
    %v3428 = vadd.f32 %v3426, %v3427
    %v3429 = vrot.slane %v3428, 1
    %v3430 = vadd.f32 %v3428, %v3429
    %v3431 = vmul.f32 %v3388, %v404
    %v3432 = vmul.f32 %v3394, %v404
    %v3433 = vmul.f32 %v3400, %v404
    %v3434 = vmul.f32 %v3406, %v404
    %v3435 = vmul.f32 %v3412, %v404
    %v3436 = vmul.f32 %v3418, %v404
    %v3437 = vmul.f32 %v3424, %v404
    %v3438 = vmul.f32 %v3430, %v404
    %v3439 = vsub.f32 %v3129, %v3431
    %v3440 = vsub.f32 %v3131, %v3432
    %v3441 = vsub.f32 %v3211, %v3433
    %v3442 = vsub.f32 %v3213, %v3434
    %v3443 = vsub.f32 %v3293, %v3435
    %v3444 = vsub.f32 %v3295, %v3436
    %v3445 = vsub.f32 %v3375, %v3437
    %v3446 = vsub.f32 %v3377, %v3438
    %v3447 = vmul.f32 %v3439, %v3439
    %v3448 = vmul.f32 %v3440, %v3440
    %v3449 = vmul.f32 %v3441, %v3441
    %v3450 = vmul.f32 %v3442, %v3442
    %v3451 = vmul.f32 %v3443, %v3443
    %v3452 = vmul.f32 %v3444, %v3444
    %v3453 = vmul.f32 %v3445, %v3445
    %v3454 = vmul.f32 %v3446, %v3446
    %v3455 = vrot.slane %v3447, 4
    %v3456 = vadd.f32 %v3447, %v3455
    %v3457 = vrot.slane %v3456, 2
    %v3458 = vadd.f32 %v3456, %v3457
    %v3459 = vrot.slane %v3458, 1
    %v3460 = vadd.f32 %v3458, %v3459
    %v3461 = vrot.slane %v3448, 4
    %v3462 = vadd.f32 %v3448, %v3461
    %v3463 = vrot.slane %v3462, 2
    %v3464 = vadd.f32 %v3462, %v3463
    %v3465 = vrot.slane %v3464, 1
    %v3466 = vadd.f32 %v3464, %v3465
    %v3467 = vrot.slane %v3449, 4
    %v3468 = vadd.f32 %v3449, %v3467
    %v3469 = vrot.slane %v3468, 2
    %v3470 = vadd.f32 %v3468, %v3469
    %v3471 = vrot.slane %v3470, 1
    %v3472 = vadd.f32 %v3470, %v3471
    %v3473 = vrot.slane %v3450, 4
    %v3474 = vadd.f32 %v3450, %v3473
    %v3475 = vrot.slane %v3474, 2
    %v3476 = vadd.f32 %v3474, %v3475
    %v3477 = vrot.slane %v3476, 1
    %v3478 = vadd.f32 %v3476, %v3477
    %v3479 = vrot.slane %v3451, 4
    %v3480 = vadd.f32 %v3451, %v3479
    %v3481 = vrot.slane %v3480, 2
    %v3482 = vadd.f32 %v3480, %v3481
    %v3483 = vrot.slane %v3482, 1
    %v3484 = vadd.f32 %v3482, %v3483
    %v3485 = vrot.slane %v3452, 4
    %v3486 = vadd.f32 %v3452, %v3485
    %v3487 = vrot.slane %v3486, 2
    %v3488 = vadd.f32 %v3486, %v3487
    %v3489 = vrot.slane %v3488, 1
    %v3490 = vadd.f32 %v3488, %v3489
    %v3491 = vrot.slane %v3453, 4
    %v3492 = vadd.f32 %v3453, %v3491
    %v3493 = vrot.slane %v3492, 2
    %v3494 = vadd.f32 %v3492, %v3493
    %v3495 = vrot.slane %v3494, 1
    %v3496 = vadd.f32 %v3494, %v3495
    %v3497 = vrot.slane %v3454, 4
    %v3498 = vadd.f32 %v3454, %v3497
    %v3499 = vrot.slane %v3498, 2
    %v3500 = vadd.f32 %v3498, %v3499
    %v3501 = vrot.slane %v3500, 1
    %v3502 = vadd.f32 %v3500, %v3501
    %v3503 = vmul.f32 %v3460, %v404
    %v3504 = vmul.f32 %v3466, %v404
    %v3505 = vmul.f32 %v3472, %v404
    %v3506 = vmul.f32 %v3478, %v404
    %v3507 = vmul.f32 %v3484, %v404
    %v3508 = vmul.f32 %v3490, %v404
    %v3509 = vmul.f32 %v3496, %v404
    %v3510 = vmul.f32 %v3502, %v404
    %v3511 = vadd.f32 %v3503, 1e-05
    %v3512 = vadd.f32 %v3504, 1e-05
    %v3513 = vadd.f32 %v3505, 1e-05
    %v3514 = vadd.f32 %v3506, 1e-05
    %v3515 = vadd.f32 %v3507, 1e-05
    %v3516 = vadd.f32 %v3508, 1e-05
    %v3517 = vadd.f32 %v3509, 1e-05
    %v3518 = vadd.f32 %v3510, 1e-05
    %v3519 = vrsqrt.pop %v3511
    %v3520 = vrsqrt.pop %v3512
    %v3521 = vrsqrt.pop %v3513
    %v3522 = vrsqrt.pop %v3514
    %v3523 = vrsqrt.pop %v3515
    %v3524 = vrsqrt.pop %v3516
    %v3525 = vrsqrt.pop %v3517
    %v3526 = vrsqrt.pop %v3518
    %v3527 = vmul.f32 %v3439, %v3519
    %v3528 = vmul.f32 %v3440, %v3520
    %v3529 = vmul.f32 %v3441, %v3521
    %v3530 = vmul.f32 %v3442, %v3522
    %v3531 = vmul.f32 %v3443, %v3523
    %v3532 = vmul.f32 %v3444, %v3524
    %v3533 = vmul.f32 %v3445, %v3525
    %v3534 = vmul.f32 %v3446, %v3526
    %v3536 = vlaneseq
    %v3537 = vshrl.u32 %v3536, 7
    %v3538 = vsub.s32 0, %v3537
    %v3539 = vrot.slane %v3381, %v3538
    %v3540 = vlaneseq
    %v3541 = vshrl.u32 %v3540, 7
    %v3542 = vsub.s32 1, %v3541
    %v3543 = vrot.slane %v3381, %v3542
    %v3544 = vlaneseq
    %v3545 = vshrl.u32 %v3544, 7
    %v3546 = vsub.s32 2, %v3545
    %v3547 = vrot.slane %v3381, %v3546
    %v3548 = vlaneseq
    %v3549 = vshrl.u32 %v3548, 7
    %v3550 = vsub.s32 3, %v3549
    %v3551 = vrot.slane %v3381, %v3550
    %v3552 = vlaneseq
    %v3553 = vshrl.u32 %v3552, 7
    %v3554 = vsub.s32 4, %v3553
    %v3555 = vrot.slane %v3381, %v3554
    %v3556 = vlaneseq
    %v3557 = vshrl.u32 %v3556, 7
    %v3558 = vsub.s32 5, %v3557
    %v3559 = vrot.slane %v3381, %v3558
    %v3560 = vlaneseq
    %v3561 = vshrl.u32 %v3560, 7
    %v3562 = vsub.s32 6, %v3561
    %v3563 = vrot.slane %v3381, %v3562
    %v3564 = vlaneseq
    %v3565 = vshrl.u32 %v3564, 7
    %v3566 = vsub.s32 7, %v3565
    %v3567 = vrot.slane %v3381, %v3566
    %v3576 = vmul.f32 %v3527, %v3539
    %v3577 = vmul.f32 %v3528, %v3543
    %v3578 = vmul.f32 %v3529, %v3547
    %v3579 = vmul.f32 %v3530, %v3551
    %v3580 = vmul.f32 %v3531, %v3555
    %v3581 = vmul.f32 %v3532, %v3559
    %v3582 = vmul.f32 %v3533, %v3563
    %v3583 = vmul.f32 %v3534, %v3567
    %v3585 = vlaneseq
    %v3586 = vshrl.u32 %v3585, 7
    %v3587 = vsub.s32 0, %v3586
    %v3588 = vrot.slane %v3382, %v3587
    %v3589 = vlaneseq
    %v3590 = vshrl.u32 %v3589, 7
    %v3591 = vsub.s32 1, %v3590
    %v3592 = vrot.slane %v3382, %v3591
    %v3593 = vlaneseq
    %v3594 = vshrl.u32 %v3593, 7
    %v3595 = vsub.s32 2, %v3594
    %v3596 = vrot.slane %v3382, %v3595
    %v3597 = vlaneseq
    %v3598 = vshrl.u32 %v3597, 7
    %v3599 = vsub.s32 3, %v3598
    %v3600 = vrot.slane %v3382, %v3599
    %v3601 = vlaneseq
    %v3602 = vshrl.u32 %v3601, 7
    %v3603 = vsub.s32 4, %v3602
    %v3604 = vrot.slane %v3382, %v3603
    %v3605 = vlaneseq
    %v3606 = vshrl.u32 %v3605, 7
    %v3607 = vsub.s32 5, %v3606
    %v3608 = vrot.slane %v3382, %v3607
    %v3609 = vlaneseq
    %v3610 = vshrl.u32 %v3609, 7
    %v3611 = vsub.s32 6, %v3610
    %v3612 = vrot.slane %v3382, %v3611
    %v3613 = vlaneseq
    %v3614 = vshrl.u32 %v3613, 7
    %v3615 = vsub.s32 7, %v3614
    %v3616 = vrot.slane %v3382, %v3615
    %v3625 = vadd.f32 %v3576, %v3588
    %v3626 = vadd.f32 %v3577, %v3592
    %v3627 = vadd.f32 %v3578, %v3596
    %v3628 = vadd.f32 %v3579, %v3600
    %v3629 = vadd.f32 %v3580, %v3604
    %v3630 = vadd.f32 %v3581, %v3608
    %v3631 = vadd.f32 %v3582, %v3612
    %v3632 = vadd.f32 %v3583, %v3616
    %vm3633 = vcmp.gt.f32.partialorder %v3625, 0.0
    %vm3634 = vcmp.gt.f32.partialorder %v3626, 0.0
    %vm3635 = vcmp.gt.f32.partialorder %v3627, 0.0
    %vm3636 = vcmp.gt.f32.partialorder %v3628, 0.0
    %vm3637 = vcmp.gt.f32.partialorder %v3629, 0.0
    %vm3638 = vcmp.gt.f32.partialorder %v3630, 0.0
    %vm3639 = vcmp.gt.f32.partialorder %v3631, 0.0
    %vm3640 = vcmp.gt.f32.partialorder %v3632, 0.0
    %v3641 = vmul.f32 %v3625, 0.2
    %v3642 = vmul.f32 %v3626, 0.2
    %v3643 = vmul.f32 %v3627, 0.2
    %v3644 = vmul.f32 %v3628, 0.2
    %v3645 = vmul.f32 %v3629, 0.2
    %v3646 = vmul.f32 %v3630, 0.2
    %v3647 = vmul.f32 %v3631, 0.2
    %v3648 = vmul.f32 %v3632, 0.2
    %v3649 = vsel %vm3633, %v3625, %v3641
    %v3650 = vsel %vm3634, %v3626, %v3642
    %v3651 = vsel %vm3635, %v3627, %v3643
    %v3652 = vsel %vm3636, %v3628, %v3644
    %v3653 = vsel %vm3637, %v3629, %v3645
    %v3654 = vsel %vm3638, %v3630, %v3646
    %v3655 = vsel %vm3639, %v3631, %v3647
    %v3656 = vsel %vm3640, %v3632, %v3648
    %s3657 = smul.u32 2, 128
    %s3658 = smul.u32 %s3657, 4
    %s3659 = sshll.u32 %s3658, 4
    %3660 = dma.done %s1075, %s3659
    %s3661 = scalar_lea.sflag [#allocation5], 2
    // Predicated region
    $region90: #{generator_forward.1} parent=1 // pred_check
      _
    $region91: #{generator_forward.1} parent=1 // pred_check_branch
      %3663 = sbr.rel target = $region93
    $region92: #{generator_forward.1} parent=1 // pred_region
      %3664 = sst [smem:[#allocation18]] [#allocation23]
      %3665 = sst [smem:[#allocation19]] [#allocation22]
    $region93: #{generator_forward.1} parent=1 // pred_fallthru
      _
    %3667 = shalt.err (0)
    %s3669 = sshll.u32 [#allocation4], 4
    %s3670 = int_to_ptr.vmem [resolvable:$true] %s3669
    %3672 = dma.hbm_to_vmem [thread:$0]  %s14, 12288, %s3670, %s3661
    %v3673 = vld [vmem:[#allocation3] sm:$0xff]
    %v3674 = vld [vmem:[#allocation3 + $0x8] sm:$0xff]
    %v3675 = vld [vmem:[#allocation3 + $0x10] sm:$0xff]
    %v3676 = vld [vmem:[#allocation3 + $0x18] sm:$0xff]
    %v3677 = vld [vmem:[#allocation3 + $0x20] sm:$0xff]
    %v3678 = vld [vmem:[#allocation3 + $0x28] sm:$0xff]
    %v3679 = vld [vmem:[#allocation3 + $0x30] sm:$0xff]
    %v3680 = vld [vmem:[#allocation3 + $0x38] sm:$0xff]
    %v3681 = vld [vmem:[#allocation3 + $0x40] sm:$0xff]
    %v3682 = vld [vmem:[#allocation3 + $0x48] sm:$0xff]
    %v3683 = vld [vmem:[#allocation3 + $0x50] sm:$0xff]
    %v3684 = vld [vmem:[#allocation3 + $0x58] sm:$0xff]
    %v3685 = vld [vmem:[#allocation3 + $0x60] sm:$0xff]
    %v3686 = vld [vmem:[#allocation3 + $0x68] sm:$0xff]
    %v3687 = vld [vmem:[#allocation3 + $0x70] sm:$0xff]
    %v3688 = vld [vmem:[#allocation3 + $0x78] sm:$0xff]
    %v3689 = vld [vmem:[#allocation3 + $0x80] sm:$0xff]
    %v3690 = vld [vmem:[#allocation3 + $0x88] sm:$0xff]
    %v3691 = vld [vmem:[#allocation3 + $0x90] sm:$0xff]
    %v3692 = vld [vmem:[#allocation3 + $0x98] sm:$0xff]
    %v3693 = vld [vmem:[#allocation3 + $0xa0] sm:$0xff]
    %v3694 = vld [vmem:[#allocation3 + $0xa8] sm:$0xff]
    %v3695 = vld [vmem:[#allocation3 + $0xb0] sm:$0xff]
    %v3696 = vld [vmem:[#allocation3 + $0xb8] sm:$0xff]
    %v3697 = vld [vmem:[#allocation3 + $0xc0] sm:$0xff]
    %v3698 = vld [vmem:[#allocation3 + $0xc8] sm:$0xff]
    %v3699 = vld [vmem:[#allocation3 + $0xd0] sm:$0xff]
    %v3700 = vld [vmem:[#allocation3 + $0xd8] sm:$0xff]
    %v3701 = vld [vmem:[#allocation3 + $0xe0] sm:$0xff]
    %v3702 = vld [vmem:[#allocation3 + $0xe8] sm:$0xff]
    %v3703 = vld [vmem:[#allocation3 + $0xf0] sm:$0xff]
    %v3704 = vld [vmem:[#allocation3 + $0xf8] sm:$0xff]
    %v3705 = vld [vmem:[#allocation3 + $0x100] sm:$0xff]
    %v3706 = vld [vmem:[#allocation3 + $0x108] sm:$0xff]
    %v3707 = vld [vmem:[#allocation3 + $0x110] sm:$0xff]
    %v3708 = vld [vmem:[#allocation3 + $0x118] sm:$0xff]
    %v3709 = vld [vmem:[#allocation3 + $0x120] sm:$0xff]
    %v3710 = vld [vmem:[#allocation3 + $0x128] sm:$0xff]
    %v3711 = vld [vmem:[#allocation3 + $0x130] sm:$0xff]
    %v3712 = vld [vmem:[#allocation3 + $0x138] sm:$0xff]
    %v3713 = vld [vmem:[#allocation3 + $0x140] sm:$0xff]
    %v3714 = vld [vmem:[#allocation3 + $0x148] sm:$0xff]
    %v3715 = vld [vmem:[#allocation3 + $0x150] sm:$0xff]
    %v3716 = vld [vmem:[#allocation3 + $0x158] sm:$0xff]
    %v3717 = vld [vmem:[#allocation3 + $0x160] sm:$0xff]
    %v3718 = vld [vmem:[#allocation3 + $0x168] sm:$0xff]
    %v3719 = vld [vmem:[#allocation3 + $0x170] sm:$0xff]
    %v3720 = vld [vmem:[#allocation3 + $0x178] sm:$0xff]
    %v3721 = vld [vmem:[#allocation3 + $0x180] sm:$0xff]
    %v3722 = vld [vmem:[#allocation3 + $0x188] sm:$0xff]
    %v3723 = vld [vmem:[#allocation3 + $0x190] sm:$0xff]
    %v3724 = vld [vmem:[#allocation3 + $0x198] sm:$0xff]
    %v3725 = vld [vmem:[#allocation3 + $0x1a0] sm:$0xff]
    %v3726 = vld [vmem:[#allocation3 + $0x1a8] sm:$0xff]
    %v3727 = vld [vmem:[#allocation3 + $0x1b0] sm:$0xff]
    %v3728 = vld [vmem:[#allocation3 + $0x1b8] sm:$0xff]
    %v3729 = vld [vmem:[#allocation3 + $0x1c0] sm:$0xff]
    %v3730 = vld [vmem:[#allocation3 + $0x1c8] sm:$0xff]
    %v3731 = vld [vmem:[#allocation3 + $0x1d0] sm:$0xff]
    %v3732 = vld [vmem:[#allocation3 + $0x1d8] sm:$0xff]
    %v3733 = vld [vmem:[#allocation3 + $0x1e0] sm:$0xff]
    %v3734 = vld [vmem:[#allocation3 + $0x1e8] sm:$0xff]
    %v3735 = vld [vmem:[#allocation3 + $0x1f0] sm:$0xff]
    %v3736 = vld [vmem:[#allocation3 + $0x1f8] sm:$0xff]
    %v3737 = vld [vmem:[#allocation3 + $0x200] sm:$0xff]
    %v3738 = vld [vmem:[#allocation3 + $0x208] sm:$0xff]
    %v3739 = vld [vmem:[#allocation3 + $0x210] sm:$0xff]
    %v3740 = vld [vmem:[#allocation3 + $0x218] sm:$0xff]
    %v3741 = vld [vmem:[#allocation3 + $0x220] sm:$0xff]
    %v3742 = vld [vmem:[#allocation3 + $0x228] sm:$0xff]
    %v3743 = vld [vmem:[#allocation3 + $0x230] sm:$0xff]
    %v3744 = vld [vmem:[#allocation3 + $0x238] sm:$0xff]
    %v3745 = vld [vmem:[#allocation3 + $0x240] sm:$0xff]
    %v3746 = vld [vmem:[#allocation3 + $0x248] sm:$0xff]
    %v3747 = vld [vmem:[#allocation3 + $0x250] sm:$0xff]
    %v3748 = vld [vmem:[#allocation3 + $0x258] sm:$0xff]
    %v3749 = vld [vmem:[#allocation3 + $0x260] sm:$0xff]
    %v3750 = vld [vmem:[#allocation3 + $0x268] sm:$0xff]
    %v3751 = vld [vmem:[#allocation3 + $0x270] sm:$0xff]
    %v3752 = vld [vmem:[#allocation3 + $0x278] sm:$0xff]
    %v3753 = vld [vmem:[#allocation3 + $0x280] sm:$0xff]
    %v3754 = vld [vmem:[#allocation3 + $0x288] sm:$0xff]
    %v3755 = vld [vmem:[#allocation3 + $0x290] sm:$0xff]
    %v3756 = vld [vmem:[#allocation3 + $0x298] sm:$0xff]
    %v3757 = vld [vmem:[#allocation3 + $0x2a0] sm:$0xff]
    %v3758 = vld [vmem:[#allocation3 + $0x2a8] sm:$0xff]
    %v3759 = vld [vmem:[#allocation3 + $0x2b0] sm:$0xff]
    %v3760 = vld [vmem:[#allocation3 + $0x2b8] sm:$0xff]
    %v3761 = vld [vmem:[#allocation3 + $0x2c0] sm:$0xff]
    %v3762 = vld [vmem:[#allocation3 + $0x2c8] sm:$0xff]
    %v3763 = vld [vmem:[#allocation3 + $0x2d0] sm:$0xff]
    %v3764 = vld [vmem:[#allocation3 + $0x2d8] sm:$0xff]
    %v3765 = vld [vmem:[#allocation3 + $0x2e0] sm:$0xff]
    %v3766 = vld [vmem:[#allocation3 + $0x2e8] sm:$0xff]
    %v3767 = vld [vmem:[#allocation3 + $0x2f0] sm:$0xff]
    %v3768 = vld [vmem:[#allocation3 + $0x2f8] sm:$0xff]
    %v3769 = vld [vmem:[#allocation3 + $0x300] sm:$0xff]
    %v3770 = vld [vmem:[#allocation3 + $0x308] sm:$0xff]
    %v3771 = vld [vmem:[#allocation3 + $0x310] sm:$0xff]
    %v3772 = vld [vmem:[#allocation3 + $0x318] sm:$0xff]
    %v3773 = vld [vmem:[#allocation3 + $0x320] sm:$0xff]
    %v3774 = vld [vmem:[#allocation3 + $0x328] sm:$0xff]
    %v3775 = vld [vmem:[#allocation3 + $0x330] sm:$0xff]
    %v3776 = vld [vmem:[#allocation3 + $0x338] sm:$0xff]
    %v3777 = vld [vmem:[#allocation3 + $0x340] sm:$0xff]
    %v3778 = vld [vmem:[#allocation3 + $0x348] sm:$0xff]
    %v3779 = vld [vmem:[#allocation3 + $0x350] sm:$0xff]
    %v3780 = vld [vmem:[#allocation3 + $0x358] sm:$0xff]
    %v3781 = vld [vmem:[#allocation3 + $0x360] sm:$0xff]
    %v3782 = vld [vmem:[#allocation3 + $0x368] sm:$0xff]
    %v3783 = vld [vmem:[#allocation3 + $0x370] sm:$0xff]
    %v3784 = vld [vmem:[#allocation3 + $0x378] sm:$0xff]
    %v3785 = vld [vmem:[#allocation3 + $0x380] sm:$0xff]
    %v3786 = vld [vmem:[#allocation3 + $0x388] sm:$0xff]
    %v3787 = vld [vmem:[#allocation3 + $0x390] sm:$0xff]
    %v3788 = vld [vmem:[#allocation3 + $0x398] sm:$0xff]
    %v3789 = vld [vmem:[#allocation3 + $0x3a0] sm:$0xff]
    %v3790 = vld [vmem:[#allocation3 + $0x3a8] sm:$0xff]
    %v3791 = vld [vmem:[#allocation3 + $0x3b0] sm:$0xff]
    %v3792 = vld [vmem:[#allocation3 + $0x3b8] sm:$0xff]
    %v3793 = vld [vmem:[#allocation3 + $0x3c0] sm:$0xff]
    %v3794 = vld [vmem:[#allocation3 + $0x3c8] sm:$0xff]
    %v3795 = vld [vmem:[#allocation3 + $0x3d0] sm:$0xff]
    %v3796 = vld [vmem:[#allocation3 + $0x3d8] sm:$0xff]
    %v3797 = vld [vmem:[#allocation3 + $0x3e0] sm:$0xff]
    %v3798 = vld [vmem:[#allocation3 + $0x3e8] sm:$0xff]
    %v3799 = vld [vmem:[#allocation3 + $0x3f0] sm:$0xff]
    %v3800 = vld [vmem:[#allocation3 + $0x3f8] sm:$0xff]
    %v3801 = vld [vmem:[%s15] sm:$0xf]
    %v3802 = vunpack.c.0.s8 %v3673
    %v3803 = vunpack.c.0.s8 %v3674
    %v3804 = vunpack.c.0.s8 %v3675
    %v3805 = vunpack.c.0.s8 %v3676
    %v3806 = vunpack.c.1.s8 %v3673
    %v3807 = vunpack.c.1.s8 %v3674
    %v3808 = vunpack.c.1.s8 %v3675
    %v3809 = vunpack.c.1.s8 %v3676
    %v3810 = vunpack.c.2.s8 %v3673
    %v3811 = vunpack.c.2.s8 %v3674
    %v3812 = vunpack.c.2.s8 %v3675
    %v3813 = vunpack.c.2.s8 %v3676
    %v3814 = vunpack.c.3.s8 %v3673
    %v3815 = vunpack.c.3.s8 %v3674
    %v3816 = vunpack.c.3.s8 %v3675
    %v3817 = vunpack.c.3.s8 %v3676
    %v3818 = vunpack.c.0.s8 %v3677
    %v3819 = vunpack.c.0.s8 %v3678
    %v3820 = vunpack.c.0.s8 %v3679
    %v3821 = vunpack.c.0.s8 %v3680
    %v3822 = vunpack.c.1.s8 %v3677
    %v3823 = vunpack.c.1.s8 %v3678
    %v3824 = vunpack.c.1.s8 %v3679
    %v3825 = vunpack.c.1.s8 %v3680
    %v3826 = vunpack.c.2.s8 %v3677
    %v3827 = vunpack.c.2.s8 %v3678
    %v3828 = vunpack.c.2.s8 %v3679
    %v3829 = vunpack.c.2.s8 %v3680
    %v3830 = vunpack.c.3.s8 %v3677
    %v3831 = vunpack.c.3.s8 %v3678
    %v3832 = vunpack.c.3.s8 %v3679
    %v3833 = vunpack.c.3.s8 %v3680
    %v3834 = vunpack.c.0.s8 %v3681
    %v3835 = vunpack.c.0.s8 %v3682
    %v3836 = vunpack.c.0.s8 %v3683
    %v3837 = vunpack.c.0.s8 %v3684
    %v3838 = vunpack.c.1.s8 %v3681
    %v3839 = vunpack.c.1.s8 %v3682
    %v3840 = vunpack.c.1.s8 %v3683
    %v3841 = vunpack.c.1.s8 %v3684
    %v3842 = vunpack.c.2.s8 %v3681
    %v3843 = vunpack.c.2.s8 %v3682
    %v3844 = vunpack.c.2.s8 %v3683
    %v3845 = vunpack.c.2.s8 %v3684
    %v3846 = vunpack.c.3.s8 %v3681
    %v3847 = vunpack.c.3.s8 %v3682
    %v3848 = vunpack.c.3.s8 %v3683
    %v3849 = vunpack.c.3.s8 %v3684
    %v3850 = vunpack.c.0.s8 %v3685
    %v3851 = vunpack.c.0.s8 %v3686
    %v3852 = vunpack.c.0.s8 %v3687
    %v3853 = vunpack.c.0.s8 %v3688
    %v3854 = vunpack.c.1.s8 %v3685
    %v3855 = vunpack.c.1.s8 %v3686
    %v3856 = vunpack.c.1.s8 %v3687
    %v3857 = vunpack.c.1.s8 %v3688
    %v3858 = vunpack.c.2.s8 %v3685
    %v3859 = vunpack.c.2.s8 %v3686
    %v3860 = vunpack.c.2.s8 %v3687
    %v3861 = vunpack.c.2.s8 %v3688
    %v3862 = vunpack.c.3.s8 %v3685
    %v3863 = vunpack.c.3.s8 %v3686
    %v3864 = vunpack.c.3.s8 %v3687
    %v3865 = vunpack.c.3.s8 %v3688
    %v3866 = vunpack.c.0.s8 %v3689
    %v3867 = vunpack.c.0.s8 %v3690
    %v3868 = vunpack.c.0.s8 %v3691
    %v3869 = vunpack.c.0.s8 %v3692
    %v3870 = vunpack.c.1.s8 %v3689
    %v3871 = vunpack.c.1.s8 %v3690
    %v3872 = vunpack.c.1.s8 %v3691
    %v3873 = vunpack.c.1.s8 %v3692
    %v3874 = vunpack.c.2.s8 %v3689
    %v3875 = vunpack.c.2.s8 %v3690
    %v3876 = vunpack.c.2.s8 %v3691
    %v3877 = vunpack.c.2.s8 %v3692
    %v3878 = vunpack.c.3.s8 %v3689
    %v3879 = vunpack.c.3.s8 %v3690
    %v3880 = vunpack.c.3.s8 %v3691
    %v3881 = vunpack.c.3.s8 %v3692
    %v3882 = vunpack.c.0.s8 %v3693
    %v3883 = vunpack.c.0.s8 %v3694
    %v3884 = vunpack.c.0.s8 %v3695
    %v3885 = vunpack.c.0.s8 %v3696
    %v3886 = vunpack.c.1.s8 %v3693
    %v3887 = vunpack.c.1.s8 %v3694
    %v3888 = vunpack.c.1.s8 %v3695
    %v3889 = vunpack.c.1.s8 %v3696
    %v3890 = vunpack.c.2.s8 %v3693
    %v3891 = vunpack.c.2.s8 %v3694
    %v3892 = vunpack.c.2.s8 %v3695
    %v3893 = vunpack.c.2.s8 %v3696
    %v3894 = vunpack.c.3.s8 %v3693
    %v3895 = vunpack.c.3.s8 %v3694
    %v3896 = vunpack.c.3.s8 %v3695
    %v3897 = vunpack.c.3.s8 %v3696
    %v3898 = vunpack.c.0.s8 %v3697
    %v3899 = vunpack.c.0.s8 %v3698
    %v3900 = vunpack.c.0.s8 %v3699
    %v3901 = vunpack.c.0.s8 %v3700
    %v3902 = vunpack.c.1.s8 %v3697
    %v3903 = vunpack.c.1.s8 %v3698
    %v3904 = vunpack.c.1.s8 %v3699
    %v3905 = vunpack.c.1.s8 %v3700
    %v3906 = vunpack.c.2.s8 %v3697
    %v3907 = vunpack.c.2.s8 %v3698
    %v3908 = vunpack.c.2.s8 %v3699
    %v3909 = vunpack.c.2.s8 %v3700
    %v3910 = vunpack.c.3.s8 %v3697
    %v3911 = vunpack.c.3.s8 %v3698
    %v3912 = vunpack.c.3.s8 %v3699
    %v3913 = vunpack.c.3.s8 %v3700
    %v3914 = vunpack.c.0.s8 %v3701
    %v3915 = vunpack.c.0.s8 %v3702
    %v3916 = vunpack.c.0.s8 %v3703
    %v3917 = vunpack.c.0.s8 %v3704
    %v3918 = vunpack.c.1.s8 %v3701
    %v3919 = vunpack.c.1.s8 %v3702
    %v3920 = vunpack.c.1.s8 %v3703
    %v3921 = vunpack.c.1.s8 %v3704
    %v3922 = vunpack.c.2.s8 %v3701
    %v3923 = vunpack.c.2.s8 %v3702
    %v3924 = vunpack.c.2.s8 %v3703
    %v3925 = vunpack.c.2.s8 %v3704
    %v3926 = vunpack.c.3.s8 %v3701
    %v3927 = vunpack.c.3.s8 %v3702
    %v3928 = vunpack.c.3.s8 %v3703
    %v3929 = vunpack.c.3.s8 %v3704
    %v3930 = vunpack.c.0.s8 %v3705
    %v3931 = vunpack.c.0.s8 %v3706
    %v3932 = vunpack.c.0.s8 %v3707
    %v3933 = vunpack.c.0.s8 %v3708
    %v3934 = vunpack.c.1.s8 %v3705
    %v3935 = vunpack.c.1.s8 %v3706
    %v3936 = vunpack.c.1.s8 %v3707
    %v3937 = vunpack.c.1.s8 %v3708
    %v3938 = vunpack.c.2.s8 %v3705
    %v3939 = vunpack.c.2.s8 %v3706
    %v3940 = vunpack.c.2.s8 %v3707
    %v3941 = vunpack.c.2.s8 %v3708
    %v3942 = vunpack.c.3.s8 %v3705
    %v3943 = vunpack.c.3.s8 %v3706
    %v3944 = vunpack.c.3.s8 %v3707
    %v3945 = vunpack.c.3.s8 %v3708
    %v3946 = vunpack.c.0.s8 %v3709
    %v3947 = vunpack.c.0.s8 %v3710
    %v3948 = vunpack.c.0.s8 %v3711
    %v3949 = vunpack.c.0.s8 %v3712
    %v3950 = vunpack.c.1.s8 %v3709
    %v3951 = vunpack.c.1.s8 %v3710
    %v3952 = vunpack.c.1.s8 %v3711
    %v3953 = vunpack.c.1.s8 %v3712
    %v3954 = vunpack.c.2.s8 %v3709
    %v3955 = vunpack.c.2.s8 %v3710
    %v3956 = vunpack.c.2.s8 %v3711
    %v3957 = vunpack.c.2.s8 %v3712
    %v3958 = vunpack.c.3.s8 %v3709
    %v3959 = vunpack.c.3.s8 %v3710
    %v3960 = vunpack.c.3.s8 %v3711
    %v3961 = vunpack.c.3.s8 %v3712
    %v3962 = vunpack.c.0.s8 %v3713
    %v3963 = vunpack.c.0.s8 %v3714
    %v3964 = vunpack.c.0.s8 %v3715
    %v3965 = vunpack.c.0.s8 %v3716
    %v3966 = vunpack.c.1.s8 %v3713
    %v3967 = vunpack.c.1.s8 %v3714
    %v3968 = vunpack.c.1.s8 %v3715
    %v3969 = vunpack.c.1.s8 %v3716
    %v3970 = vunpack.c.2.s8 %v3713
    %v3971 = vunpack.c.2.s8 %v3714
    %v3972 = vunpack.c.2.s8 %v3715
    %v3973 = vunpack.c.2.s8 %v3716
    %v3974 = vunpack.c.3.s8 %v3713
    %v3975 = vunpack.c.3.s8 %v3714
    %v3976 = vunpack.c.3.s8 %v3715
    %v3977 = vunpack.c.3.s8 %v3716
    %v3978 = vunpack.c.0.s8 %v3717
    %v3979 = vunpack.c.0.s8 %v3718
    %v3980 = vunpack.c.0.s8 %v3719
    %v3981 = vunpack.c.0.s8 %v3720
    %v3982 = vunpack.c.1.s8 %v3717
    %v3983 = vunpack.c.1.s8 %v3718
    %v3984 = vunpack.c.1.s8 %v3719
    %v3985 = vunpack.c.1.s8 %v3720
    %v3986 = vunpack.c.2.s8 %v3717
    %v3987 = vunpack.c.2.s8 %v3718
    %v3988 = vunpack.c.2.s8 %v3719
    %v3989 = vunpack.c.2.s8 %v3720
    %v3990 = vunpack.c.3.s8 %v3717
    %v3991 = vunpack.c.3.s8 %v3718
    %v3992 = vunpack.c.3.s8 %v3719
    %v3993 = vunpack.c.3.s8 %v3720
    %v3994 = vunpack.c.0.s8 %v3721
    %v3995 = vunpack.c.0.s8 %v3722
    %v3996 = vunpack.c.0.s8 %v3723
    %v3997 = vunpack.c.0.s8 %v3724
    %v3998 = vunpack.c.1.s8 %v3721
    %v3999 = vunpack.c.1.s8 %v3722
    %v4000 = vunpack.c.1.s8 %v3723
    %v4001 = vunpack.c.1.s8 %v3724
    %v4002 = vunpack.c.2.s8 %v3721
    %v4003 = vunpack.c.2.s8 %v3722
    %v4004 = vunpack.c.2.s8 %v3723
    %v4005 = vunpack.c.2.s8 %v3724
    %v4006 = vunpack.c.3.s8 %v3721
    %v4007 = vunpack.c.3.s8 %v3722
    %v4008 = vunpack.c.3.s8 %v3723
    %v4009 = vunpack.c.3.s8 %v3724
    %v4010 = vunpack.c.0.s8 %v3725
    %v4011 = vunpack.c.0.s8 %v3726
    %v4012 = vunpack.c.0.s8 %v3727
    %v4013 = vunpack.c.0.s8 %v3728
    %v4014 = vunpack.c.1.s8 %v3725
    %v4015 = vunpack.c.1.s8 %v3726
    %v4016 = vunpack.c.1.s8 %v3727
    %v4017 = vunpack.c.1.s8 %v3728
    %v4018 = vunpack.c.2.s8 %v3725
    %v4019 = vunpack.c.2.s8 %v3726
    %v4020 = vunpack.c.2.s8 %v3727
    %v4021 = vunpack.c.2.s8 %v3728
    %v4022 = vunpack.c.3.s8 %v3725
    %v4023 = vunpack.c.3.s8 %v3726
    %v4024 = vunpack.c.3.s8 %v3727
    %v4025 = vunpack.c.3.s8 %v3728
    %v4026 = vunpack.c.0.s8 %v3729
    %v4027 = vunpack.c.0.s8 %v3730
    %v4028 = vunpack.c.0.s8 %v3731
    %v4029 = vunpack.c.0.s8 %v3732
    %v4030 = vunpack.c.1.s8 %v3729
    %v4031 = vunpack.c.1.s8 %v3730
    %v4032 = vunpack.c.1.s8 %v3731
    %v4033 = vunpack.c.1.s8 %v3732
    %v4034 = vunpack.c.2.s8 %v3729
    %v4035 = vunpack.c.2.s8 %v3730
    %v4036 = vunpack.c.2.s8 %v3731
    %v4037 = vunpack.c.2.s8 %v3732
    %v4038 = vunpack.c.3.s8 %v3729
    %v4039 = vunpack.c.3.s8 %v3730
    %v4040 = vunpack.c.3.s8 %v3731
    %v4041 = vunpack.c.3.s8 %v3732
    %v4042 = vunpack.c.0.s8 %v3733
    %v4043 = vunpack.c.0.s8 %v3734
    %v4044 = vunpack.c.0.s8 %v3735
    %v4045 = vunpack.c.0.s8 %v3736
    %v4046 = vunpack.c.1.s8 %v3733
    %v4047 = vunpack.c.1.s8 %v3734
    %v4048 = vunpack.c.1.s8 %v3735
    %v4049 = vunpack.c.1.s8 %v3736
    %v4050 = vunpack.c.2.s8 %v3733
    %v4051 = vunpack.c.2.s8 %v3734
    %v4052 = vunpack.c.2.s8 %v3735
    %v4053 = vunpack.c.2.s8 %v3736
    %v4054 = vunpack.c.3.s8 %v3733
    %v4055 = vunpack.c.3.s8 %v3734
    %v4056 = vunpack.c.3.s8 %v3735
    %v4057 = vunpack.c.3.s8 %v3736
    %v4058 = vunpack.c.0.s8 %v3737
    %v4059 = vunpack.c.0.s8 %v3738
    %v4060 = vunpack.c.0.s8 %v3739
    %v4061 = vunpack.c.0.s8 %v3740
    %v4062 = vunpack.c.1.s8 %v3737
    %v4063 = vunpack.c.1.s8 %v3738
    %v4064 = vunpack.c.1.s8 %v3739
    %v4065 = vunpack.c.1.s8 %v3740
    %v4066 = vunpack.c.2.s8 %v3737
    %v4067 = vunpack.c.2.s8 %v3738
    %v4068 = vunpack.c.2.s8 %v3739
    %v4069 = vunpack.c.2.s8 %v3740
    %v4070 = vunpack.c.3.s8 %v3737
    %v4071 = vunpack.c.3.s8 %v3738
    %v4072 = vunpack.c.3.s8 %v3739
    %v4073 = vunpack.c.3.s8 %v3740
    %v4074 = vunpack.c.0.s8 %v3741
    %v4075 = vunpack.c.0.s8 %v3742
    %v4076 = vunpack.c.0.s8 %v3743
    %v4077 = vunpack.c.0.s8 %v3744
    %v4078 = vunpack.c.1.s8 %v3741
    %v4079 = vunpack.c.1.s8 %v3742
    %v4080 = vunpack.c.1.s8 %v3743
    %v4081 = vunpack.c.1.s8 %v3744
    %v4082 = vunpack.c.2.s8 %v3741
    %v4083 = vunpack.c.2.s8 %v3742
    %v4084 = vunpack.c.2.s8 %v3743
    %v4085 = vunpack.c.2.s8 %v3744
    %v4086 = vunpack.c.3.s8 %v3741
    %v4087 = vunpack.c.3.s8 %v3742
    %v4088 = vunpack.c.3.s8 %v3743
    %v4089 = vunpack.c.3.s8 %v3744
    %v4090 = vunpack.c.0.s8 %v3745
    %v4091 = vunpack.c.0.s8 %v3746
    %v4092 = vunpack.c.0.s8 %v3747
    %v4093 = vunpack.c.0.s8 %v3748
    %v4094 = vunpack.c.1.s8 %v3745
    %v4095 = vunpack.c.1.s8 %v3746
    %v4096 = vunpack.c.1.s8 %v3747
    %v4097 = vunpack.c.1.s8 %v3748
    %v4098 = vunpack.c.2.s8 %v3745
    %v4099 = vunpack.c.2.s8 %v3746
    %v4100 = vunpack.c.2.s8 %v3747
    %v4101 = vunpack.c.2.s8 %v3748
    %v4102 = vunpack.c.3.s8 %v3745
    %v4103 = vunpack.c.3.s8 %v3746
    %v4104 = vunpack.c.3.s8 %v3747
    %v4105 = vunpack.c.3.s8 %v3748
    %v4106 = vunpack.c.0.s8 %v3749
    %v4107 = vunpack.c.0.s8 %v3750
    %v4108 = vunpack.c.0.s8 %v3751
    %v4109 = vunpack.c.0.s8 %v3752
    %v4110 = vunpack.c.1.s8 %v3749
    %v4111 = vunpack.c.1.s8 %v3750
    %v4112 = vunpack.c.1.s8 %v3751
    %v4113 = vunpack.c.1.s8 %v3752
    %v4114 = vunpack.c.2.s8 %v3749
    %v4115 = vunpack.c.2.s8 %v3750
    %v4116 = vunpack.c.2.s8 %v3751
    %v4117 = vunpack.c.2.s8 %v3752
    %v4118 = vunpack.c.3.s8 %v3749
    %v4119 = vunpack.c.3.s8 %v3750
    %v4120 = vunpack.c.3.s8 %v3751
    %v4121 = vunpack.c.3.s8 %v3752
    %v4122 = vunpack.c.0.s8 %v3753
    %v4123 = vunpack.c.0.s8 %v3754
    %v4124 = vunpack.c.0.s8 %v3755
    %v4125 = vunpack.c.0.s8 %v3756
    %v4126 = vunpack.c.1.s8 %v3753
    %v4127 = vunpack.c.1.s8 %v3754
    %v4128 = vunpack.c.1.s8 %v3755
    %v4129 = vunpack.c.1.s8 %v3756
    %v4130 = vunpack.c.2.s8 %v3753
    %v4131 = vunpack.c.2.s8 %v3754
    %v4132 = vunpack.c.2.s8 %v3755
    %v4133 = vunpack.c.2.s8 %v3756
    %v4134 = vunpack.c.3.s8 %v3753
    %v4135 = vunpack.c.3.s8 %v3754
    %v4136 = vunpack.c.3.s8 %v3755
    %v4137 = vunpack.c.3.s8 %v3756
    %v4138 = vunpack.c.0.s8 %v3757
    %v4139 = vunpack.c.0.s8 %v3758
    %v4140 = vunpack.c.0.s8 %v3759
    %v4141 = vunpack.c.0.s8 %v3760
    %v4142 = vunpack.c.1.s8 %v3757
    %v4143 = vunpack.c.1.s8 %v3758
    %v4144 = vunpack.c.1.s8 %v3759
    %v4145 = vunpack.c.1.s8 %v3760
    %v4146 = vunpack.c.2.s8 %v3757
    %v4147 = vunpack.c.2.s8 %v3758
    %v4148 = vunpack.c.2.s8 %v3759
    %v4149 = vunpack.c.2.s8 %v3760
    %v4150 = vunpack.c.3.s8 %v3757
    %v4151 = vunpack.c.3.s8 %v3758
    %v4152 = vunpack.c.3.s8 %v3759
    %v4153 = vunpack.c.3.s8 %v3760
    %v4154 = vunpack.c.0.s8 %v3761
    %v4155 = vunpack.c.0.s8 %v3762
    %v4156 = vunpack.c.0.s8 %v3763
    %v4157 = vunpack.c.0.s8 %v3764
    %v4158 = vunpack.c.1.s8 %v3761
    %v4159 = vunpack.c.1.s8 %v3762
    %v4160 = vunpack.c.1.s8 %v3763
    %v4161 = vunpack.c.1.s8 %v3764
    %v4162 = vunpack.c.2.s8 %v3761
    %v4163 = vunpack.c.2.s8 %v3762
    %v4164 = vunpack.c.2.s8 %v3763
    %v4165 = vunpack.c.2.s8 %v3764
    %v4166 = vunpack.c.3.s8 %v3761
    %v4167 = vunpack.c.3.s8 %v3762
    %v4168 = vunpack.c.3.s8 %v3763
    %v4169 = vunpack.c.3.s8 %v3764
    %v4170 = vunpack.c.0.s8 %v3765
    %v4171 = vunpack.c.0.s8 %v3766
    %v4172 = vunpack.c.0.s8 %v3767
    %v4173 = vunpack.c.0.s8 %v3768
    %v4174 = vunpack.c.1.s8 %v3765
    %v4175 = vunpack.c.1.s8 %v3766
    %v4176 = vunpack.c.1.s8 %v3767
    %v4177 = vunpack.c.1.s8 %v3768
    %v4178 = vunpack.c.2.s8 %v3765
    %v4179 = vunpack.c.2.s8 %v3766
    %v4180 = vunpack.c.2.s8 %v3767
    %v4181 = vunpack.c.2.s8 %v3768
    %v4182 = vunpack.c.3.s8 %v3765
    %v4183 = vunpack.c.3.s8 %v3766
    %v4184 = vunpack.c.3.s8 %v3767
    %v4185 = vunpack.c.3.s8 %v3768
    %v4186 = vunpack.c.0.s8 %v3769
    %v4187 = vunpack.c.0.s8 %v3770
    %v4188 = vunpack.c.0.s8 %v3771
    %v4189 = vunpack.c.0.s8 %v3772
    %v4190 = vunpack.c.1.s8 %v3769
    %v4191 = vunpack.c.1.s8 %v3770
    %v4192 = vunpack.c.1.s8 %v3771
    %v4193 = vunpack.c.1.s8 %v3772
    %v4194 = vunpack.c.2.s8 %v3769
    %v4195 = vunpack.c.2.s8 %v3770
    %v4196 = vunpack.c.2.s8 %v3771
    %v4197 = vunpack.c.2.s8 %v3772
    %v4198 = vunpack.c.3.s8 %v3769
    %v4199 = vunpack.c.3.s8 %v3770
    %v4200 = vunpack.c.3.s8 %v3771
    %v4201 = vunpack.c.3.s8 %v3772
    %v4202 = vunpack.c.0.s8 %v3773
    %v4203 = vunpack.c.0.s8 %v3774
    %v4204 = vunpack.c.0.s8 %v3775
    %v4205 = vunpack.c.0.s8 %v3776
    %v4206 = vunpack.c.1.s8 %v3773
    %v4207 = vunpack.c.1.s8 %v3774
    %v4208 = vunpack.c.1.s8 %v3775
    %v4209 = vunpack.c.1.s8 %v3776
    %v4210 = vunpack.c.2.s8 %v3773
    %v4211 = vunpack.c.2.s8 %v3774
    %v4212 = vunpack.c.2.s8 %v3775
    %v4213 = vunpack.c.2.s8 %v3776
    %v4214 = vunpack.c.3.s8 %v3773
    %v4215 = vunpack.c.3.s8 %v3774
    %v4216 = vunpack.c.3.s8 %v3775
    %v4217 = vunpack.c.3.s8 %v3776
    %v4218 = vunpack.c.0.s8 %v3777
    %v4219 = vunpack.c.0.s8 %v3778
    %v4220 = vunpack.c.0.s8 %v3779
    %v4221 = vunpack.c.0.s8 %v3780
    %v4222 = vunpack.c.1.s8 %v3777
    %v4223 = vunpack.c.1.s8 %v3778
    %v4224 = vunpack.c.1.s8 %v3779
    %v4225 = vunpack.c.1.s8 %v3780
    %v4226 = vunpack.c.2.s8 %v3777
    %v4227 = vunpack.c.2.s8 %v3778
    %v4228 = vunpack.c.2.s8 %v3779
    %v4229 = vunpack.c.2.s8 %v3780
    %v4230 = vunpack.c.3.s8 %v3777
    %v4231 = vunpack.c.3.s8 %v3778
    %v4232 = vunpack.c.3.s8 %v3779
    %v4233 = vunpack.c.3.s8 %v3780
    %v4234 = vunpack.c.0.s8 %v3781
    %v4235 = vunpack.c.0.s8 %v3782
    %v4236 = vunpack.c.0.s8 %v3783
    %v4237 = vunpack.c.0.s8 %v3784
    %v4238 = vunpack.c.1.s8 %v3781
    %v4239 = vunpack.c.1.s8 %v3782
    %v4240 = vunpack.c.1.s8 %v3783
    %v4241 = vunpack.c.1.s8 %v3784
    %v4242 = vunpack.c.2.s8 %v3781
    %v4243 = vunpack.c.2.s8 %v3782
    %v4244 = vunpack.c.2.s8 %v3783
    %v4245 = vunpack.c.2.s8 %v3784
    %v4246 = vunpack.c.3.s8 %v3781
    %v4247 = vunpack.c.3.s8 %v3782
    %v4248 = vunpack.c.3.s8 %v3783
    %v4249 = vunpack.c.3.s8 %v3784
    %v4250 = vunpack.c.0.s8 %v3785
    %v4251 = vunpack.c.0.s8 %v3786
    %v4252 = vunpack.c.0.s8 %v3787
    %v4253 = vunpack.c.0.s8 %v3788
    %v4254 = vunpack.c.1.s8 %v3785
    %v4255 = vunpack.c.1.s8 %v3786
    %v4256 = vunpack.c.1.s8 %v3787
    %v4257 = vunpack.c.1.s8 %v3788
    %v4258 = vunpack.c.2.s8 %v3785
    %v4259 = vunpack.c.2.s8 %v3786
    %v4260 = vunpack.c.2.s8 %v3787
    %v4261 = vunpack.c.2.s8 %v3788
    %v4262 = vunpack.c.3.s8 %v3785
    %v4263 = vunpack.c.3.s8 %v3786
    %v4264 = vunpack.c.3.s8 %v3787
    %v4265 = vunpack.c.3.s8 %v3788
    %v4266 = vunpack.c.0.s8 %v3789
    %v4267 = vunpack.c.0.s8 %v3790
    %v4268 = vunpack.c.0.s8 %v3791
    %v4269 = vunpack.c.0.s8 %v3792
    %v4270 = vunpack.c.1.s8 %v3789
    %v4271 = vunpack.c.1.s8 %v3790
    %v4272 = vunpack.c.1.s8 %v3791
    %v4273 = vunpack.c.1.s8 %v3792
    %v4274 = vunpack.c.2.s8 %v3789
    %v4275 = vunpack.c.2.s8 %v3790
    %v4276 = vunpack.c.2.s8 %v3791
    %v4277 = vunpack.c.2.s8 %v3792
    %v4278 = vunpack.c.3.s8 %v3789
    %v4279 = vunpack.c.3.s8 %v3790
    %v4280 = vunpack.c.3.s8 %v3791
    %v4281 = vunpack.c.3.s8 %v3792
    %v4282 = vunpack.c.0.s8 %v3793
    %v4283 = vunpack.c.0.s8 %v3794
    %v4284 = vunpack.c.0.s8 %v3795
    %v4285 = vunpack.c.0.s8 %v3796
    %v4286 = vunpack.c.1.s8 %v3793
    %v4287 = vunpack.c.1.s8 %v3794
    %v4288 = vunpack.c.1.s8 %v3795
    %v4289 = vunpack.c.1.s8 %v3796
    %v4290 = vunpack.c.2.s8 %v3793
    %v4291 = vunpack.c.2.s8 %v3794
    %v4292 = vunpack.c.2.s8 %v3795
    %v4293 = vunpack.c.2.s8 %v3796
    %v4294 = vunpack.c.3.s8 %v3793
    %v4295 = vunpack.c.3.s8 %v3794
    %v4296 = vunpack.c.3.s8 %v3795
    %v4297 = vunpack.c.3.s8 %v3796
    %v4298 = vunpack.c.0.s8 %v3797
    %v4299 = vunpack.c.0.s8 %v3798
    %v4300 = vunpack.c.0.s8 %v3799
    %v4301 = vunpack.c.0.s8 %v3800
    %v4302 = vunpack.c.1.s8 %v3797
    %v4303 = vunpack.c.1.s8 %v3798
    %v4304 = vunpack.c.1.s8 %v3799
    %v4305 = vunpack.c.1.s8 %v3800
    %v4306 = vunpack.c.2.s8 %v3797
    %v4307 = vunpack.c.2.s8 %v3798
    %v4308 = vunpack.c.2.s8 %v3799
    %v4309 = vunpack.c.2.s8 %v3800
    %v4310 = vunpack.c.3.s8 %v3797
    %v4311 = vunpack.c.3.s8 %v3798
    %v4312 = vunpack.c.3.s8 %v3799
    %v4313 = vunpack.c.3.s8 %v3800
    %v4314 = vcvt.s32.f32 %v3802
    %v4315 = vcvt.s32.f32 %v3803
    %v4316 = vcvt.s32.f32 %v3804
    %v4317 = vcvt.s32.f32 %v3805
    %v4318 = vcvt.s32.f32 %v3806
    %v4319 = vcvt.s32.f32 %v3807
    %v4320 = vcvt.s32.f32 %v3808
    %v4321 = vcvt.s32.f32 %v3809
    %v4322 = vcvt.s32.f32 %v3810
    %v4323 = vcvt.s32.f32 %v3811
    %v4324 = vcvt.s32.f32 %v3812
    %v4325 = vcvt.s32.f32 %v3813
    %v4326 = vcvt.s32.f32 %v3814
    %v4327 = vcvt.s32.f32 %v3815
    %v4328 = vcvt.s32.f32 %v3816
    %v4329 = vcvt.s32.f32 %v3817
    %v4330 = vcvt.s32.f32 %v3818
    %v4331 = vcvt.s32.f32 %v3819
    %v4332 = vcvt.s32.f32 %v3820
    %v4333 = vcvt.s32.f32 %v3821
    %v4334 = vcvt.s32.f32 %v3822
    %v4335 = vcvt.s32.f32 %v3823
    %v4336 = vcvt.s32.f32 %v3824
    %v4337 = vcvt.s32.f32 %v3825
    %v4338 = vcvt.s32.f32 %v3826
    %v4339 = vcvt.s32.f32 %v3827
    %v4340 = vcvt.s32.f32 %v3828
    %v4341 = vcvt.s32.f32 %v3829
    %v4342 = vcvt.s32.f32 %v3830
    %v4343 = vcvt.s32.f32 %v3831
    %v4344 = vcvt.s32.f32 %v3832
    %v4345 = vcvt.s32.f32 %v3833
    %v4346 = vcvt.s32.f32 %v3834
    %v4347 = vcvt.s32.f32 %v3835
    %v4348 = vcvt.s32.f32 %v3836
    %v4349 = vcvt.s32.f32 %v3837
    %v4350 = vcvt.s32.f32 %v3838
    %v4351 = vcvt.s32.f32 %v3839
    %v4352 = vcvt.s32.f32 %v3840
    %v4353 = vcvt.s32.f32 %v3841
    %v4354 = vcvt.s32.f32 %v3842
    %v4355 = vcvt.s32.f32 %v3843
    %v4356 = vcvt.s32.f32 %v3844
    %v4357 = vcvt.s32.f32 %v3845
    %v4358 = vcvt.s32.f32 %v3846
    %v4359 = vcvt.s32.f32 %v3847
    %v4360 = vcvt.s32.f32 %v3848
    %v4361 = vcvt.s32.f32 %v3849
    %v4362 = vcvt.s32.f32 %v3850
    %v4363 = vcvt.s32.f32 %v3851
    %v4364 = vcvt.s32.f32 %v3852
    %v4365 = vcvt.s32.f32 %v3853
    %v4366 = vcvt.s32.f32 %v3854
    %v4367 = vcvt.s32.f32 %v3855
    %v4368 = vcvt.s32.f32 %v3856
    %v4369 = vcvt.s32.f32 %v3857
    %v4370 = vcvt.s32.f32 %v3858
    %v4371 = vcvt.s32.f32 %v3859
    %v4372 = vcvt.s32.f32 %v3860
    %v4373 = vcvt.s32.f32 %v3861
    %v4374 = vcvt.s32.f32 %v3862
    %v4375 = vcvt.s32.f32 %v3863
    %v4376 = vcvt.s32.f32 %v3864
    %v4377 = vcvt.s32.f32 %v3865
    %v4378 = vcvt.s32.f32 %v3866
    %v4379 = vcvt.s32.f32 %v3867
    %v4380 = vcvt.s32.f32 %v3868
    %v4381 = vcvt.s32.f32 %v3869
    %v4382 = vcvt.s32.f32 %v3870
    %v4383 = vcvt.s32.f32 %v3871
    %v4384 = vcvt.s32.f32 %v3872
    %v4385 = vcvt.s32.f32 %v3873
    %v4386 = vcvt.s32.f32 %v3874
    %v4387 = vcvt.s32.f32 %v3875
    %v4388 = vcvt.s32.f32 %v3876
    %v4389 = vcvt.s32.f32 %v3877
    %v4390 = vcvt.s32.f32 %v3878
    %v4391 = vcvt.s32.f32 %v3879
    %v4392 = vcvt.s32.f32 %v3880
    %v4393 = vcvt.s32.f32 %v3881
    %v4394 = vcvt.s32.f32 %v3882
    %v4395 = vcvt.s32.f32 %v3883
    %v4396 = vcvt.s32.f32 %v3884
    %v4397 = vcvt.s32.f32 %v3885
    %v4398 = vcvt.s32.f32 %v3886
    %v4399 = vcvt.s32.f32 %v3887
    %v4400 = vcvt.s32.f32 %v3888
    %v4401 = vcvt.s32.f32 %v3889
    %v4402 = vcvt.s32.f32 %v3890
    %v4403 = vcvt.s32.f32 %v3891
    %v4404 = vcvt.s32.f32 %v3892
    %v4405 = vcvt.s32.f32 %v3893
    %v4406 = vcvt.s32.f32 %v3894
    %v4407 = vcvt.s32.f32 %v3895
    %v4408 = vcvt.s32.f32 %v3896
    %v4409 = vcvt.s32.f32 %v3897
    %v4410 = vcvt.s32.f32 %v3898
    %v4411 = vcvt.s32.f32 %v3899
    %v4412 = vcvt.s32.f32 %v3900
    %v4413 = vcvt.s32.f32 %v3901
    %v4414 = vcvt.s32.f32 %v3902
    %v4415 = vcvt.s32.f32 %v3903
    %v4416 = vcvt.s32.f32 %v3904
    %v4417 = vcvt.s32.f32 %v3905
    %v4418 = vcvt.s32.f32 %v3906
    %v4419 = vcvt.s32.f32 %v3907
    %v4420 = vcvt.s32.f32 %v3908
    %v4421 = vcvt.s32.f32 %v3909
    %v4422 = vcvt.s32.f32 %v3910
    %v4423 = vcvt.s32.f32 %v3911
    %v4424 = vcvt.s32.f32 %v3912
    %v4425 = vcvt.s32.f32 %v3913
    %v4426 = vcvt.s32.f32 %v3914
    %v4427 = vcvt.s32.f32 %v3915
    %v4428 = vcvt.s32.f32 %v3916
    %v4429 = vcvt.s32.f32 %v3917
    %v4430 = vcvt.s32.f32 %v3918
    %v4431 = vcvt.s32.f32 %v3919
    %v4432 = vcvt.s32.f32 %v3920
    %v4433 = vcvt.s32.f32 %v3921
    %v4434 = vcvt.s32.f32 %v3922
    %v4435 = vcvt.s32.f32 %v3923
    %v4436 = vcvt.s32.f32 %v3924
    %v4437 = vcvt.s32.f32 %v3925
    %v4438 = vcvt.s32.f32 %v3926
    %v4439 = vcvt.s32.f32 %v3927
    %v4440 = vcvt.s32.f32 %v3928
    %v4441 = vcvt.s32.f32 %v3929
    %v4442 = vcvt.s32.f32 %v3930
    %v4443 = vcvt.s32.f32 %v3931
    %v4444 = vcvt.s32.f32 %v3932
    %v4445 = vcvt.s32.f32 %v3933
    %v4446 = vcvt.s32.f32 %v3934
    %v4447 = vcvt.s32.f32 %v3935
    %v4448 = vcvt.s32.f32 %v3936
    %v4449 = vcvt.s32.f32 %v3937
    %v4450 = vcvt.s32.f32 %v3938
    %v4451 = vcvt.s32.f32 %v3939
    %v4452 = vcvt.s32.f32 %v3940
    %v4453 = vcvt.s32.f32 %v3941
    %v4454 = vcvt.s32.f32 %v3942
    %v4455 = vcvt.s32.f32 %v3943
    %v4456 = vcvt.s32.f32 %v3944
    %v4457 = vcvt.s32.f32 %v3945
    %v4458 = vcvt.s32.f32 %v3946
    %v4459 = vcvt.s32.f32 %v3947
    %v4460 = vcvt.s32.f32 %v3948
    %v4461 = vcvt.s32.f32 %v3949
    %v4462 = vcvt.s32.f32 %v3950
    %v4463 = vcvt.s32.f32 %v3951
    %v4464 = vcvt.s32.f32 %v3952
    %v4465 = vcvt.s32.f32 %v3953
    %v4466 = vcvt.s32.f32 %v3954
    %v4467 = vcvt.s32.f32 %v3955
    %v4468 = vcvt.s32.f32 %v3956
    %v4469 = vcvt.s32.f32 %v3957
    %v4470 = vcvt.s32.f32 %v3958
    %v4471 = vcvt.s32.f32 %v3959
    %v4472 = vcvt.s32.f32 %v3960
    %v4473 = vcvt.s32.f32 %v3961
    %v4474 = vcvt.s32.f32 %v3962
    %v4475 = vcvt.s32.f32 %v3963
    %v4476 = vcvt.s32.f32 %v3964
    %v4477 = vcvt.s32.f32 %v3965
    %v4478 = vcvt.s32.f32 %v3966
    %v4479 = vcvt.s32.f32 %v3967
    %v4480 = vcvt.s32.f32 %v3968
    %v4481 = vcvt.s32.f32 %v3969
    %v4482 = vcvt.s32.f32 %v3970
    %v4483 = vcvt.s32.f32 %v3971
    %v4484 = vcvt.s32.f32 %v3972
    %v4485 = vcvt.s32.f32 %v3973
    %v4486 = vcvt.s32.f32 %v3974
    %v4487 = vcvt.s32.f32 %v3975
    %v4488 = vcvt.s32.f32 %v3976
    %v4489 = vcvt.s32.f32 %v3977
    %v4490 = vcvt.s32.f32 %v3978
    %v4491 = vcvt.s32.f32 %v3979
    %v4492 = vcvt.s32.f32 %v3980
    %v4493 = vcvt.s32.f32 %v3981
    %v4494 = vcvt.s32.f32 %v3982
    %v4495 = vcvt.s32.f32 %v3983
    %v4496 = vcvt.s32.f32 %v3984
    %v4497 = vcvt.s32.f32 %v3985
    %v4498 = vcvt.s32.f32 %v3986
    %v4499 = vcvt.s32.f32 %v3987
    %v4500 = vcvt.s32.f32 %v3988
    %v4501 = vcvt.s32.f32 %v3989
    %v4502 = vcvt.s32.f32 %v3990
    %v4503 = vcvt.s32.f32 %v3991
    %v4504 = vcvt.s32.f32 %v3992
    %v4505 = vcvt.s32.f32 %v3993
    %v4506 = vcvt.s32.f32 %v3994
    %v4507 = vcvt.s32.f32 %v3995
    %v4508 = vcvt.s32.f32 %v3996
    %v4509 = vcvt.s32.f32 %v3997
    %v4510 = vcvt.s32.f32 %v3998
    %v4511 = vcvt.s32.f32 %v3999
    %v4512 = vcvt.s32.f32 %v4000
    %v4513 = vcvt.s32.f32 %v4001
    %v4514 = vcvt.s32.f32 %v4002
    %v4515 = vcvt.s32.f32 %v4003
    %v4516 = vcvt.s32.f32 %v4004
    %v4517 = vcvt.s32.f32 %v4005
    %v4518 = vcvt.s32.f32 %v4006
    %v4519 = vcvt.s32.f32 %v4007
    %v4520 = vcvt.s32.f32 %v4008
    %v4521 = vcvt.s32.f32 %v4009
    %v4522 = vcvt.s32.f32 %v4010
    %v4523 = vcvt.s32.f32 %v4011
    %v4524 = vcvt.s32.f32 %v4012
    %v4525 = vcvt.s32.f32 %v4013
    %v4526 = vcvt.s32.f32 %v4014
    %v4527 = vcvt.s32.f32 %v4015
    %v4528 = vcvt.s32.f32 %v4016
    %v4529 = vcvt.s32.f32 %v4017
    %v4530 = vcvt.s32.f32 %v4018
    %v4531 = vcvt.s32.f32 %v4019
    %v4532 = vcvt.s32.f32 %v4020
    %v4533 = vcvt.s32.f32 %v4021
    %v4534 = vcvt.s32.f32 %v4022
    %v4535 = vcvt.s32.f32 %v4023
    %v4536 = vcvt.s32.f32 %v4024
    %v4537 = vcvt.s32.f32 %v4025
    %v4538 = vcvt.s32.f32 %v4026
    %v4539 = vcvt.s32.f32 %v4027
    %v4540 = vcvt.s32.f32 %v4028
    %v4541 = vcvt.s32.f32 %v4029
    %v4542 = vcvt.s32.f32 %v4030
    %v4543 = vcvt.s32.f32 %v4031
    %v4544 = vcvt.s32.f32 %v4032
    %v4545 = vcvt.s32.f32 %v4033
    %v4546 = vcvt.s32.f32 %v4034
    %v4547 = vcvt.s32.f32 %v4035
    %v4548 = vcvt.s32.f32 %v4036
    %v4549 = vcvt.s32.f32 %v4037
    %v4550 = vcvt.s32.f32 %v4038
    %v4551 = vcvt.s32.f32 %v4039
    %v4552 = vcvt.s32.f32 %v4040
    %v4553 = vcvt.s32.f32 %v4041
    %v4554 = vcvt.s32.f32 %v4042
    %v4555 = vcvt.s32.f32 %v4043
    %v4556 = vcvt.s32.f32 %v4044
    %v4557 = vcvt.s32.f32 %v4045
    %v4558 = vcvt.s32.f32 %v4046
    %v4559 = vcvt.s32.f32 %v4047
    %v4560 = vcvt.s32.f32 %v4048
    %v4561 = vcvt.s32.f32 %v4049
    %v4562 = vcvt.s32.f32 %v4050
    %v4563 = vcvt.s32.f32 %v4051
    %v4564 = vcvt.s32.f32 %v4052
    %v4565 = vcvt.s32.f32 %v4053
    %v4566 = vcvt.s32.f32 %v4054
    %v4567 = vcvt.s32.f32 %v4055
    %v4568 = vcvt.s32.f32 %v4056
    %v4569 = vcvt.s32.f32 %v4057
    %v4570 = vcvt.s32.f32 %v4058
    %v4571 = vcvt.s32.f32 %v4059
    %v4572 = vcvt.s32.f32 %v4060
    %v4573 = vcvt.s32.f32 %v4061
    %v4574 = vcvt.s32.f32 %v4062
    %v4575 = vcvt.s32.f32 %v4063
    %v4576 = vcvt.s32.f32 %v4064
    %v4577 = vcvt.s32.f32 %v4065
    %v4578 = vcvt.s32.f32 %v4066
    %v4579 = vcvt.s32.f32 %v4067
    %v4580 = vcvt.s32.f32 %v4068
    %v4581 = vcvt.s32.f32 %v4069
    %v4582 = vcvt.s32.f32 %v4070
    %v4583 = vcvt.s32.f32 %v4071
    %v4584 = vcvt.s32.f32 %v4072
    %v4585 = vcvt.s32.f32 %v4073
    %v4586 = vcvt.s32.f32 %v4074
    %v4587 = vcvt.s32.f32 %v4075
    %v4588 = vcvt.s32.f32 %v4076
    %v4589 = vcvt.s32.f32 %v4077
    %v4590 = vcvt.s32.f32 %v4078
    %v4591 = vcvt.s32.f32 %v4079
    %v4592 = vcvt.s32.f32 %v4080
    %v4593 = vcvt.s32.f32 %v4081
    %v4594 = vcvt.s32.f32 %v4082
    %v4595 = vcvt.s32.f32 %v4083
    %v4596 = vcvt.s32.f32 %v4084
    %v4597 = vcvt.s32.f32 %v4085
    %v4598 = vcvt.s32.f32 %v4086
    %v4599 = vcvt.s32.f32 %v4087
    %v4600 = vcvt.s32.f32 %v4088
    %v4601 = vcvt.s32.f32 %v4089
    %v4602 = vcvt.s32.f32 %v4090
    %v4603 = vcvt.s32.f32 %v4091
    %v4604 = vcvt.s32.f32 %v4092
    %v4605 = vcvt.s32.f32 %v4093
    %v4606 = vcvt.s32.f32 %v4094
    %v4607 = vcvt.s32.f32 %v4095
    %v4608 = vcvt.s32.f32 %v4096
    %v4609 = vcvt.s32.f32 %v4097
    %v4610 = vcvt.s32.f32 %v4098
    %v4611 = vcvt.s32.f32 %v4099
    %v4612 = vcvt.s32.f32 %v4100
    %v4613 = vcvt.s32.f32 %v4101
    %v4614 = vcvt.s32.f32 %v4102
    %v4615 = vcvt.s32.f32 %v4103
    %v4616 = vcvt.s32.f32 %v4104
    %v4617 = vcvt.s32.f32 %v4105
    %v4618 = vcvt.s32.f32 %v4106
    %v4619 = vcvt.s32.f32 %v4107
    %v4620 = vcvt.s32.f32 %v4108
    %v4621 = vcvt.s32.f32 %v4109
    %v4622 = vcvt.s32.f32 %v4110
    %v4623 = vcvt.s32.f32 %v4111
    %v4624 = vcvt.s32.f32 %v4112
    %v4625 = vcvt.s32.f32 %v4113
    %v4626 = vcvt.s32.f32 %v4114
    %v4627 = vcvt.s32.f32 %v4115
    %v4628 = vcvt.s32.f32 %v4116
    %v4629 = vcvt.s32.f32 %v4117
    %v4630 = vcvt.s32.f32 %v4118
    %v4631 = vcvt.s32.f32 %v4119
    %v4632 = vcvt.s32.f32 %v4120
    %v4633 = vcvt.s32.f32 %v4121
    %v4634 = vcvt.s32.f32 %v4122
    %v4635 = vcvt.s32.f32 %v4123
    %v4636 = vcvt.s32.f32 %v4124
    %v4637 = vcvt.s32.f32 %v4125
    %v4638 = vcvt.s32.f32 %v4126
    %v4639 = vcvt.s32.f32 %v4127
    %v4640 = vcvt.s32.f32 %v4128
    %v4641 = vcvt.s32.f32 %v4129
    %v4642 = vcvt.s32.f32 %v4130
    %v4643 = vcvt.s32.f32 %v4131
    %v4644 = vcvt.s32.f32 %v4132
    %v4645 = vcvt.s32.f32 %v4133
    %v4646 = vcvt.s32.f32 %v4134
    %v4647 = vcvt.s32.f32 %v4135
    %v4648 = vcvt.s32.f32 %v4136
    %v4649 = vcvt.s32.f32 %v4137
    %v4650 = vcvt.s32.f32 %v4138
    %v4651 = vcvt.s32.f32 %v4139
    %v4652 = vcvt.s32.f32 %v4140
    %v4653 = vcvt.s32.f32 %v4141
    %v4654 = vcvt.s32.f32 %v4142
    %v4655 = vcvt.s32.f32 %v4143
    %v4656 = vcvt.s32.f32 %v4144
    %v4657 = vcvt.s32.f32 %v4145
    %v4658 = vcvt.s32.f32 %v4146
    %v4659 = vcvt.s32.f32 %v4147
    %v4660 = vcvt.s32.f32 %v4148
    %v4661 = vcvt.s32.f32 %v4149
    %v4662 = vcvt.s32.f32 %v4150
    %v4663 = vcvt.s32.f32 %v4151
    %v4664 = vcvt.s32.f32 %v4152
    %v4665 = vcvt.s32.f32 %v4153
    %v4666 = vcvt.s32.f32 %v4154
    %v4667 = vcvt.s32.f32 %v4155
    %v4668 = vcvt.s32.f32 %v4156
    %v4669 = vcvt.s32.f32 %v4157
    %v4670 = vcvt.s32.f32 %v4158
    %v4671 = vcvt.s32.f32 %v4159
    %v4672 = vcvt.s32.f32 %v4160
    %v4673 = vcvt.s32.f32 %v4161
    %v4674 = vcvt.s32.f32 %v4162
    %v4675 = vcvt.s32.f32 %v4163
    %v4676 = vcvt.s32.f32 %v4164
    %v4677 = vcvt.s32.f32 %v4165
    %v4678 = vcvt.s32.f32 %v4166
    %v4679 = vcvt.s32.f32 %v4167
    %v4680 = vcvt.s32.f32 %v4168
    %v4681 = vcvt.s32.f32 %v4169
    %v4682 = vcvt.s32.f32 %v4170
    %v4683 = vcvt.s32.f32 %v4171
    %v4684 = vcvt.s32.f32 %v4172
    %v4685 = vcvt.s32.f32 %v4173
    %v4686 = vcvt.s32.f32 %v4174
    %v4687 = vcvt.s32.f32 %v4175
    %v4688 = vcvt.s32.f32 %v4176
    %v4689 = vcvt.s32.f32 %v4177
    %v4690 = vcvt.s32.f32 %v4178
    %v4691 = vcvt.s32.f32 %v4179
    %v4692 = vcvt.s32.f32 %v4180
    %v4693 = vcvt.s32.f32 %v4181
    %v4694 = vcvt.s32.f32 %v4182
    %v4695 = vcvt.s32.f32 %v4183
    %v4696 = vcvt.s32.f32 %v4184
    %v4697 = vcvt.s32.f32 %v4185
    %v4698 = vcvt.s32.f32 %v4186
    %v4699 = vcvt.s32.f32 %v4187
    %v4700 = vcvt.s32.f32 %v4188
    %v4701 = vcvt.s32.f32 %v4189
    %v4702 = vcvt.s32.f32 %v4190
    %v4703 = vcvt.s32.f32 %v4191
    %v4704 = vcvt.s32.f32 %v4192
    %v4705 = vcvt.s32.f32 %v4193
    %v4706 = vcvt.s32.f32 %v4194
    %v4707 = vcvt.s32.f32 %v4195
    %v4708 = vcvt.s32.f32 %v4196
    %v4709 = vcvt.s32.f32 %v4197
    %v4710 = vcvt.s32.f32 %v4198
    %v4711 = vcvt.s32.f32 %v4199
    %v4712 = vcvt.s32.f32 %v4200
    %v4713 = vcvt.s32.f32 %v4201
    %v4714 = vcvt.s32.f32 %v4202
    %v4715 = vcvt.s32.f32 %v4203
    %v4716 = vcvt.s32.f32 %v4204
    %v4717 = vcvt.s32.f32 %v4205
    %v4718 = vcvt.s32.f32 %v4206
    %v4719 = vcvt.s32.f32 %v4207
    %v4720 = vcvt.s32.f32 %v4208
    %v4721 = vcvt.s32.f32 %v4209
    %v4722 = vcvt.s32.f32 %v4210
    %v4723 = vcvt.s32.f32 %v4211
    %v4724 = vcvt.s32.f32 %v4212
    %v4725 = vcvt.s32.f32 %v4213
    %v4726 = vcvt.s32.f32 %v4214
    %v4727 = vcvt.s32.f32 %v4215
    %v4728 = vcvt.s32.f32 %v4216
    %v4729 = vcvt.s32.f32 %v4217
    %v4730 = vcvt.s32.f32 %v4218
    %v4731 = vcvt.s32.f32 %v4219
    %v4732 = vcvt.s32.f32 %v4220
    %v4733 = vcvt.s32.f32 %v4221
    %v4734 = vcvt.s32.f32 %v4222
    %v4735 = vcvt.s32.f32 %v4223
    %v4736 = vcvt.s32.f32 %v4224
    %v4737 = vcvt.s32.f32 %v4225
    %v4738 = vcvt.s32.f32 %v4226
    %v4739 = vcvt.s32.f32 %v4227
    %v4740 = vcvt.s32.f32 %v4228
    %v4741 = vcvt.s32.f32 %v4229
    %v4742 = vcvt.s32.f32 %v4230
    %v4743 = vcvt.s32.f32 %v4231
    %v4744 = vcvt.s32.f32 %v4232
    %v4745 = vcvt.s32.f32 %v4233
    %v4746 = vcvt.s32.f32 %v4234
    %v4747 = vcvt.s32.f32 %v4235
    %v4748 = vcvt.s32.f32 %v4236
    %v4749 = vcvt.s32.f32 %v4237
    %v4750 = vcvt.s32.f32 %v4238
    %v4751 = vcvt.s32.f32 %v4239
    %v4752 = vcvt.s32.f32 %v4240
    %v4753 = vcvt.s32.f32 %v4241
    %v4754 = vcvt.s32.f32 %v4242
    %v4755 = vcvt.s32.f32 %v4243
    %v4756 = vcvt.s32.f32 %v4244
    %v4757 = vcvt.s32.f32 %v4245
    %v4758 = vcvt.s32.f32 %v4246
    %v4759 = vcvt.s32.f32 %v4247
    %v4760 = vcvt.s32.f32 %v4248
    %v4761 = vcvt.s32.f32 %v4249
    %v4762 = vcvt.s32.f32 %v4250
    %v4763 = vcvt.s32.f32 %v4251
    %v4764 = vcvt.s32.f32 %v4252
    %v4765 = vcvt.s32.f32 %v4253
    %v4766 = vcvt.s32.f32 %v4254
    %v4767 = vcvt.s32.f32 %v4255
    %v4768 = vcvt.s32.f32 %v4256
    %v4769 = vcvt.s32.f32 %v4257
    %v4770 = vcvt.s32.f32 %v4258
    %v4771 = vcvt.s32.f32 %v4259
    %v4772 = vcvt.s32.f32 %v4260
    %v4773 = vcvt.s32.f32 %v4261
    %v4774 = vcvt.s32.f32 %v4262
    %v4775 = vcvt.s32.f32 %v4263
    %v4776 = vcvt.s32.f32 %v4264
    %v4777 = vcvt.s32.f32 %v4265
    %v4778 = vcvt.s32.f32 %v4266
    %v4779 = vcvt.s32.f32 %v4267
    %v4780 = vcvt.s32.f32 %v4268
    %v4781 = vcvt.s32.f32 %v4269
    %v4782 = vcvt.s32.f32 %v4270
    %v4783 = vcvt.s32.f32 %v4271
    %v4784 = vcvt.s32.f32 %v4272
    %v4785 = vcvt.s32.f32 %v4273
    %v4786 = vcvt.s32.f32 %v4274
    %v4787 = vcvt.s32.f32 %v4275
    %v4788 = vcvt.s32.f32 %v4276
    %v4789 = vcvt.s32.f32 %v4277
    %v4790 = vcvt.s32.f32 %v4278
    %v4791 = vcvt.s32.f32 %v4279
    %v4792 = vcvt.s32.f32 %v4280
    %v4793 = vcvt.s32.f32 %v4281
    %v4794 = vcvt.s32.f32 %v4282
    %v4795 = vcvt.s32.f32 %v4283
    %v4796 = vcvt.s32.f32 %v4284
    %v4797 = vcvt.s32.f32 %v4285
    %v4798 = vcvt.s32.f32 %v4286
    %v4799 = vcvt.s32.f32 %v4287
    %v4800 = vcvt.s32.f32 %v4288
    %v4801 = vcvt.s32.f32 %v4289
    %v4802 = vcvt.s32.f32 %v4290
    %v4803 = vcvt.s32.f32 %v4291
    %v4804 = vcvt.s32.f32 %v4292
    %v4805 = vcvt.s32.f32 %v4293
    %v4806 = vcvt.s32.f32 %v4294
    %v4807 = vcvt.s32.f32 %v4295
    %v4808 = vcvt.s32.f32 %v4296
    %v4809 = vcvt.s32.f32 %v4297
    %v4810 = vcvt.s32.f32 %v4298
    %v4811 = vcvt.s32.f32 %v4299
    %v4812 = vcvt.s32.f32 %v4300
    %v4813 = vcvt.s32.f32 %v4301
    %v4814 = vcvt.s32.f32 %v4302
    %v4815 = vcvt.s32.f32 %v4303
    %v4816 = vcvt.s32.f32 %v4304
    %v4817 = vcvt.s32.f32 %v4305
    %v4818 = vcvt.s32.f32 %v4306
    %v4819 = vcvt.s32.f32 %v4307
    %v4820 = vcvt.s32.f32 %v4308
    %v4821 = vcvt.s32.f32 %v4309
    %v4822 = vcvt.s32.f32 %v4310
    %v4823 = vcvt.s32.f32 %v4311
    %v4824 = vcvt.s32.f32 %v4312
    %v4825 = vcvt.s32.f32 %v4313
    %v4827 = vlaneseq
    %v4828 = vshrl.u32 %v4827, 7
    %v4829 = vsub.s32 0, %v4828
    %v4830 = vrot.slane %v3801, %v4829
    %v4831 = vlaneseq
    %v4832 = vshrl.u32 %v4831, 7
    %v4833 = vsub.s32 1, %v4832
    %v4834 = vrot.slane %v3801, %v4833
    %v4835 = vlaneseq
    %v4836 = vshrl.u32 %v4835, 7
    %v4837 = vsub.s32 2, %v4836
    %v4838 = vrot.slane %v3801, %v4837
    %v4839 = vlaneseq
    %v4840 = vshrl.u32 %v4839, 7
    %v4841 = vsub.s32 3, %v4840
    %v4842 = vrot.slane %v3801, %v4841
    %v4847 = vmul.f32 %v4314, %v4830
    %v4848 = vmul.f32 %v4315, %v4834
    %v4849 = vmul.f32 %v4316, %v4838
    %v4850 = vmul.f32 %v4317, %v4842
    %v4851 = vmul.f32 %v4318, %v4830
    %v4852 = vmul.f32 %v4319, %v4834
    %v4853 = vmul.f32 %v4320, %v4838
    %v4854 = vmul.f32 %v4321, %v4842
    %v4855 = vmul.f32 %v4322, %v4830
    %v4856 = vmul.f32 %v4323, %v4834
    %v4857 = vmul.f32 %v4324, %v4838
    %v4858 = vmul.f32 %v4325, %v4842
    %v4859 = vmul.f32 %v4326, %v4830
    %v4860 = vmul.f32 %v4327, %v4834
    %v4861 = vmul.f32 %v4328, %v4838
    %v4862 = vmul.f32 %v4329, %v4842
    %v4863 = vmul.f32 %v4330, %v4830
    %v4864 = vmul.f32 %v4331, %v4834
    %v4865 = vmul.f32 %v4332, %v4838
    %v4866 = vmul.f32 %v4333, %v4842
    %v4867 = vmul.f32 %v4334, %v4830
    %v4868 = vmul.f32 %v4335, %v4834
    %v4869 = vmul.f32 %v4336, %v4838
    %v4870 = vmul.f32 %v4337, %v4842
    %v4871 = vmul.f32 %v4338, %v4830
    %v4872 = vmul.f32 %v4339, %v4834
    %v4873 = vmul.f32 %v4340, %v4838
    %v4874 = vmul.f32 %v4341, %v4842
    %v4875 = vmul.f32 %v4342, %v4830
    %v4876 = vmul.f32 %v4343, %v4834
    %v4877 = vmul.f32 %v4344, %v4838
    %v4878 = vmul.f32 %v4345, %v4842
    %v4879 = vmul.f32 %v4346, %v4830
    %v4880 = vmul.f32 %v4347, %v4834
    %v4881 = vmul.f32 %v4348, %v4838
    %v4882 = vmul.f32 %v4349, %v4842
    %v4883 = vmul.f32 %v4350, %v4830
    %v4884 = vmul.f32 %v4351, %v4834
    %v4885 = vmul.f32 %v4352, %v4838
    %v4886 = vmul.f32 %v4353, %v4842
    %v4887 = vmul.f32 %v4354, %v4830
    %v4888 = vmul.f32 %v4355, %v4834
    %v4889 = vmul.f32 %v4356, %v4838
    %v4890 = vmul.f32 %v4357, %v4842
    %v4891 = vmul.f32 %v4358, %v4830
    %v4892 = vmul.f32 %v4359, %v4834
    %v4893 = vmul.f32 %v4360, %v4838
    %v4894 = vmul.f32 %v4361, %v4842
    %v4895 = vmul.f32 %v4362, %v4830
    %v4896 = vmul.f32 %v4363, %v4834
    %v4897 = vmul.f32 %v4364, %v4838
    %v4898 = vmul.f32 %v4365, %v4842
    %v4899 = vmul.f32 %v4366, %v4830
    %v4900 = vmul.f32 %v4367, %v4834
    %v4901 = vmul.f32 %v4368, %v4838
    %v4902 = vmul.f32 %v4369, %v4842
    %v4903 = vmul.f32 %v4370, %v4830
    %v4904 = vmul.f32 %v4371, %v4834
    %v4905 = vmul.f32 %v4372, %v4838
    %v4906 = vmul.f32 %v4373, %v4842
    %v4907 = vmul.f32 %v4374, %v4830
    %v4908 = vmul.f32 %v4375, %v4834
    %v4909 = vmul.f32 %v4376, %v4838
    %v4910 = vmul.f32 %v4377, %v4842
    %v4911 = vmul.f32 %v4378, %v4830
    %v4912 = vmul.f32 %v4379, %v4834
    %v4913 = vmul.f32 %v4380, %v4838
    %v4914 = vmul.f32 %v4381, %v4842
    %v4915 = vmul.f32 %v4382, %v4830
    %v4916 = vmul.f32 %v4383, %v4834
    %v4917 = vmul.f32 %v4384, %v4838
    %v4918 = vmul.f32 %v4385, %v4842
    %v4919 = vmul.f32 %v4386, %v4830
    %v4920 = vmul.f32 %v4387, %v4834
    %v4921 = vmul.f32 %v4388, %v4838
    %v4922 = vmul.f32 %v4389, %v4842
    %v4923 = vmul.f32 %v4390, %v4830
    %v4924 = vmul.f32 %v4391, %v4834
    %v4925 = vmul.f32 %v4392, %v4838
    %v4926 = vmul.f32 %v4393, %v4842
    %v4927 = vmul.f32 %v4394, %v4830
    %v4928 = vmul.f32 %v4395, %v4834
    %v4929 = vmul.f32 %v4396, %v4838
    %v4930 = vmul.f32 %v4397, %v4842
    %v4931 = vmul.f32 %v4398, %v4830
    %v4932 = vmul.f32 %v4399, %v4834
    %v4933 = vmul.f32 %v4400, %v4838
    %v4934 = vmul.f32 %v4401, %v4842
    %v4935 = vmul.f32 %v4402, %v4830
    %v4936 = vmul.f32 %v4403, %v4834
    %v4937 = vmul.f32 %v4404, %v4838
    %v4938 = vmul.f32 %v4405, %v4842
    %v4939 = vmul.f32 %v4406, %v4830
    %v4940 = vmul.f32 %v4407, %v4834
    %v4941 = vmul.f32 %v4408, %v4838
    %v4942 = vmul.f32 %v4409, %v4842
    %v4943 = vmul.f32 %v4410, %v4830
    %v4944 = vmul.f32 %v4411, %v4834
    %v4945 = vmul.f32 %v4412, %v4838
    %v4946 = vmul.f32 %v4413, %v4842
    %v4947 = vmul.f32 %v4414, %v4830
    %v4948 = vmul.f32 %v4415, %v4834
    %v4949 = vmul.f32 %v4416, %v4838
    %v4950 = vmul.f32 %v4417, %v4842
    %v4951 = vmul.f32 %v4418, %v4830
    %v4952 = vmul.f32 %v4419, %v4834
    %v4953 = vmul.f32 %v4420, %v4838
    %v4954 = vmul.f32 %v4421, %v4842
    %v4955 = vmul.f32 %v4422, %v4830
    %v4956 = vmul.f32 %v4423, %v4834
    %v4957 = vmul.f32 %v4424, %v4838
    %v4958 = vmul.f32 %v4425, %v4842
    %v4959 = vmul.f32 %v4426, %v4830
    %v4960 = vmul.f32 %v4427, %v4834
    %v4961 = vmul.f32 %v4428, %v4838
    %v4962 = vmul.f32 %v4429, %v4842
    %v4963 = vmul.f32 %v4430, %v4830
    %v4964 = vmul.f32 %v4431, %v4834
    %v4965 = vmul.f32 %v4432, %v4838
    %v4966 = vmul.f32 %v4433, %v4842
    %v4967 = vmul.f32 %v4434, %v4830
    %v4968 = vmul.f32 %v4435, %v4834
    %v4969 = vmul.f32 %v4436, %v4838
    %v4970 = vmul.f32 %v4437, %v4842
    %v4971 = vmul.f32 %v4438, %v4830
    %v4972 = vmul.f32 %v4439, %v4834
    %v4973 = vmul.f32 %v4440, %v4838
    %v4974 = vmul.f32 %v4441, %v4842
    %v4975 = vmul.f32 %v4442, %v4830
    %v4976 = vmul.f32 %v4443, %v4834
    %v4977 = vmul.f32 %v4444, %v4838
    %v4978 = vmul.f32 %v4445, %v4842
    %v4979 = vmul.f32 %v4446, %v4830
    %v4980 = vmul.f32 %v4447, %v4834
    %v4981 = vmul.f32 %v4448, %v4838
    %v4982 = vmul.f32 %v4449, %v4842
    %v4983 = vmul.f32 %v4450, %v4830
    %v4984 = vmul.f32 %v4451, %v4834
    %v4985 = vmul.f32 %v4452, %v4838
    %v4986 = vmul.f32 %v4453, %v4842
    %v4987 = vmul.f32 %v4454, %v4830
    %v4988 = vmul.f32 %v4455, %v4834
    %v4989 = vmul.f32 %v4456, %v4838
    %v4990 = vmul.f32 %v4457, %v4842
    %v4991 = vmul.f32 %v4458, %v4830
    %v4992 = vmul.f32 %v4459, %v4834
    %v4993 = vmul.f32 %v4460, %v4838
    %v4994 = vmul.f32 %v4461, %v4842
    %v4995 = vmul.f32 %v4462, %v4830
    %v4996 = vmul.f32 %v4463, %v4834
    %v4997 = vmul.f32 %v4464, %v4838
    %v4998 = vmul.f32 %v4465, %v4842
    %v4999 = vmul.f32 %v4466, %v4830
    %v5000 = vmul.f32 %v4467, %v4834
    %v5001 = vmul.f32 %v4468, %v4838
    %v5002 = vmul.f32 %v4469, %v4842
    %v5003 = vmul.f32 %v4470, %v4830
    %v5004 = vmul.f32 %v4471, %v4834
    %v5005 = vmul.f32 %v4472, %v4838
    %v5006 = vmul.f32 %v4473, %v4842
    %v5007 = vmul.f32 %v4474, %v4830
    %v5008 = vmul.f32 %v4475, %v4834
    %v5009 = vmul.f32 %v4476, %v4838
    %v5010 = vmul.f32 %v4477, %v4842
    %v5011 = vmul.f32 %v4478, %v4830
    %v5012 = vmul.f32 %v4479, %v4834
    %v5013 = vmul.f32 %v4480, %v4838
    %v5014 = vmul.f32 %v4481, %v4842
    %v5015 = vmul.f32 %v4482, %v4830
    %v5016 = vmul.f32 %v4483, %v4834
    %v5017 = vmul.f32 %v4484, %v4838
    %v5018 = vmul.f32 %v4485, %v4842
    %v5019 = vmul.f32 %v4486, %v4830
    %v5020 = vmul.f32 %v4487, %v4834
    %v5021 = vmul.f32 %v4488, %v4838
    %v5022 = vmul.f32 %v4489, %v4842
    %v5023 = vmul.f32 %v4490, %v4830
    %v5024 = vmul.f32 %v4491, %v4834
    %v5025 = vmul.f32 %v4492, %v4838
    %v5026 = vmul.f32 %v4493, %v4842
    %v5027 = vmul.f32 %v4494, %v4830
    %v5028 = vmul.f32 %v4495, %v4834
    %v5029 = vmul.f32 %v4496, %v4838
    %v5030 = vmul.f32 %v4497, %v4842
    %v5031 = vmul.f32 %v4498, %v4830
    %v5032 = vmul.f32 %v4499, %v4834
    %v5033 = vmul.f32 %v4500, %v4838
    %v5034 = vmul.f32 %v4501, %v4842
    %v5035 = vmul.f32 %v4502, %v4830
    %v5036 = vmul.f32 %v4503, %v4834
    %v5037 = vmul.f32 %v4504, %v4838
    %v5038 = vmul.f32 %v4505, %v4842
    %v5039 = vmul.f32 %v4506, %v4830
    %v5040 = vmul.f32 %v4507, %v4834
    %v5041 = vmul.f32 %v4508, %v4838
    %v5042 = vmul.f32 %v4509, %v4842
    %v5043 = vmul.f32 %v4510, %v4830
    %v5044 = vmul.f32 %v4511, %v4834
    %v5045 = vmul.f32 %v4512, %v4838
    %v5046 = vmul.f32 %v4513, %v4842
    %v5047 = vmul.f32 %v4514, %v4830
    %v5048 = vmul.f32 %v4515, %v4834
    %v5049 = vmul.f32 %v4516, %v4838
    %v5050 = vmul.f32 %v4517, %v4842
    %v5051 = vmul.f32 %v4518, %v4830
    %v5052 = vmul.f32 %v4519, %v4834
    %v5053 = vmul.f32 %v4520, %v4838
    %v5054 = vmul.f32 %v4521, %v4842
    %v5055 = vmul.f32 %v4522, %v4830
    %v5056 = vmul.f32 %v4523, %v4834
    %v5057 = vmul.f32 %v4524, %v4838
    %v5058 = vmul.f32 %v4525, %v4842
    %v5059 = vmul.f32 %v4526, %v4830
    %v5060 = vmul.f32 %v4527, %v4834
    %v5061 = vmul.f32 %v4528, %v4838
    %v5062 = vmul.f32 %v4529, %v4842
    %v5063 = vmul.f32 %v4530, %v4830
    %v5064 = vmul.f32 %v4531, %v4834
    %v5065 = vmul.f32 %v4532, %v4838
    %v5066 = vmul.f32 %v4533, %v4842
    %v5067 = vmul.f32 %v4534, %v4830
    %v5068 = vmul.f32 %v4535, %v4834
    %v5069 = vmul.f32 %v4536, %v4838
    %v5070 = vmul.f32 %v4537, %v4842
    %v5071 = vmul.f32 %v4538, %v4830
    %v5072 = vmul.f32 %v4539, %v4834
    %v5073 = vmul.f32 %v4540, %v4838
    %v5074 = vmul.f32 %v4541, %v4842
    %v5075 = vmul.f32 %v4542, %v4830
    %v5076 = vmul.f32 %v4543, %v4834
    %v5077 = vmul.f32 %v4544, %v4838
    %v5078 = vmul.f32 %v4545, %v4842
    %v5079 = vmul.f32 %v4546, %v4830
    %v5080 = vmul.f32 %v4547, %v4834
    %v5081 = vmul.f32 %v4548, %v4838
    %v5082 = vmul.f32 %v4549, %v4842
    %v5083 = vmul.f32 %v4550, %v4830
    %v5084 = vmul.f32 %v4551, %v4834
    %v5085 = vmul.f32 %v4552, %v4838
    %v5086 = vmul.f32 %v4553, %v4842
    %v5087 = vmul.f32 %v4554, %v4830
    %v5088 = vmul.f32 %v4555, %v4834
    %v5089 = vmul.f32 %v4556, %v4838
    %v5090 = vmul.f32 %v4557, %v4842
    %v5091 = vmul.f32 %v4558, %v4830
    %v5092 = vmul.f32 %v4559, %v4834
    %v5093 = vmul.f32 %v4560, %v4838
    %v5094 = vmul.f32 %v4561, %v4842
    %v5095 = vmul.f32 %v4562, %v4830
    %v5096 = vmul.f32 %v4563, %v4834
    %v5097 = vmul.f32 %v4564, %v4838
    %v5098 = vmul.f32 %v4565, %v4842
    %v5099 = vmul.f32 %v4566, %v4830
    %v5100 = vmul.f32 %v4567, %v4834
    %v5101 = vmul.f32 %v4568, %v4838
    %v5102 = vmul.f32 %v4569, %v4842
    %v5103 = vmul.f32 %v4570, %v4830
    %v5104 = vmul.f32 %v4571, %v4834
    %v5105 = vmul.f32 %v4572, %v4838
    %v5106 = vmul.f32 %v4573, %v4842
    %v5107 = vmul.f32 %v4574, %v4830
    %v5108 = vmul.f32 %v4575, %v4834
    %v5109 = vmul.f32 %v4576, %v4838
    %v5110 = vmul.f32 %v4577, %v4842
    %v5111 = vmul.f32 %v4578, %v4830
    %v5112 = vmul.f32 %v4579, %v4834
    %v5113 = vmul.f32 %v4580, %v4838
    %v5114 = vmul.f32 %v4581, %v4842
    %v5115 = vmul.f32 %v4582, %v4830
    %v5116 = vmul.f32 %v4583, %v4834
    %v5117 = vmul.f32 %v4584, %v4838
    %v5118 = vmul.f32 %v4585, %v4842
    %v5119 = vmul.f32 %v4586, %v4830
    %v5120 = vmul.f32 %v4587, %v4834
    %v5121 = vmul.f32 %v4588, %v4838
    %v5122 = vmul.f32 %v4589, %v4842
    %v5123 = vmul.f32 %v4590, %v4830
    %v5124 = vmul.f32 %v4591, %v4834
    %v5125 = vmul.f32 %v4592, %v4838
    %v5126 = vmul.f32 %v4593, %v4842
    %v5127 = vmul.f32 %v4594, %v4830
    %v5128 = vmul.f32 %v4595, %v4834
    %v5129 = vmul.f32 %v4596, %v4838
    %v5130 = vmul.f32 %v4597, %v4842
    %v5131 = vmul.f32 %v4598, %v4830
    %v5132 = vmul.f32 %v4599, %v4834
    %v5133 = vmul.f32 %v4600, %v4838
    %v5134 = vmul.f32 %v4601, %v4842
    %v5135 = vmul.f32 %v4602, %v4830
    %v5136 = vmul.f32 %v4603, %v4834
    %v5137 = vmul.f32 %v4604, %v4838
    %v5138 = vmul.f32 %v4605, %v4842
    %v5139 = vmul.f32 %v4606, %v4830
    %v5140 = vmul.f32 %v4607, %v4834
    %v5141 = vmul.f32 %v4608, %v4838
    %v5142 = vmul.f32 %v4609, %v4842
    %v5143 = vmul.f32 %v4610, %v4830
    %v5144 = vmul.f32 %v4611, %v4834
    %v5145 = vmul.f32 %v4612, %v4838
    %v5146 = vmul.f32 %v4613, %v4842
    %v5147 = vmul.f32 %v4614, %v4830
    %v5148 = vmul.f32 %v4615, %v4834
    %v5149 = vmul.f32 %v4616, %v4838
    %v5150 = vmul.f32 %v4617, %v4842
    %v5151 = vmul.f32 %v4618, %v4830
    %v5152 = vmul.f32 %v4619, %v4834
    %v5153 = vmul.f32 %v4620, %v4838
    %v5154 = vmul.f32 %v4621, %v4842
    %v5155 = vmul.f32 %v4622, %v4830
    %v5156 = vmul.f32 %v4623, %v4834
    %v5157 = vmul.f32 %v4624, %v4838
    %v5158 = vmul.f32 %v4625, %v4842
    %v5159 = vmul.f32 %v4626, %v4830
    %v5160 = vmul.f32 %v4627, %v4834
    %v5161 = vmul.f32 %v4628, %v4838
    %v5162 = vmul.f32 %v4629, %v4842
    %v5163 = vmul.f32 %v4630, %v4830
    %v5164 = vmul.f32 %v4631, %v4834
    %v5165 = vmul.f32 %v4632, %v4838
    %v5166 = vmul.f32 %v4633, %v4842
    %v5167 = vmul.f32 %v4634, %v4830
    %v5168 = vmul.f32 %v4635, %v4834
    %v5169 = vmul.f32 %v4636, %v4838
    %v5170 = vmul.f32 %v4637, %v4842
    %v5171 = vmul.f32 %v4638, %v4830
    %v5172 = vmul.f32 %v4639, %v4834
    %v5173 = vmul.f32 %v4640, %v4838
    %v5174 = vmul.f32 %v4641, %v4842
    %v5175 = vmul.f32 %v4642, %v4830
    %v5176 = vmul.f32 %v4643, %v4834
    %v5177 = vmul.f32 %v4644, %v4838
    %v5178 = vmul.f32 %v4645, %v4842
    %v5179 = vmul.f32 %v4646, %v4830
    %v5180 = vmul.f32 %v4647, %v4834
    %v5181 = vmul.f32 %v4648, %v4838
    %v5182 = vmul.f32 %v4649, %v4842
    %v5183 = vmul.f32 %v4650, %v4830
    %v5184 = vmul.f32 %v4651, %v4834
    %v5185 = vmul.f32 %v4652, %v4838
    %v5186 = vmul.f32 %v4653, %v4842
    %v5187 = vmul.f32 %v4654, %v4830
    %v5188 = vmul.f32 %v4655, %v4834
    %v5189 = vmul.f32 %v4656, %v4838
    %v5190 = vmul.f32 %v4657, %v4842
    %v5191 = vmul.f32 %v4658, %v4830
    %v5192 = vmul.f32 %v4659, %v4834
    %v5193 = vmul.f32 %v4660, %v4838
    %v5194 = vmul.f32 %v4661, %v4842
    %v5195 = vmul.f32 %v4662, %v4830
    %v5196 = vmul.f32 %v4663, %v4834
    %v5197 = vmul.f32 %v4664, %v4838
    %v5198 = vmul.f32 %v4665, %v4842
    %v5199 = vmul.f32 %v4666, %v4830
    %v5200 = vmul.f32 %v4667, %v4834
    %v5201 = vmul.f32 %v4668, %v4838
    %v5202 = vmul.f32 %v4669, %v4842
    %v5203 = vmul.f32 %v4670, %v4830
    %v5204 = vmul.f32 %v4671, %v4834
    %v5205 = vmul.f32 %v4672, %v4838
    %v5206 = vmul.f32 %v4673, %v4842
    %v5207 = vmul.f32 %v4674, %v4830
    %v5208 = vmul.f32 %v4675, %v4834
    %v5209 = vmul.f32 %v4676, %v4838
    %v5210 = vmul.f32 %v4677, %v4842
    %v5211 = vmul.f32 %v4678, %v4830
    %v5212 = vmul.f32 %v4679, %v4834
    %v5213 = vmul.f32 %v4680, %v4838
    %v5214 = vmul.f32 %v4681, %v4842
    %v5215 = vmul.f32 %v4682, %v4830
    %v5216 = vmul.f32 %v4683, %v4834
    %v5217 = vmul.f32 %v4684, %v4838
    %v5218 = vmul.f32 %v4685, %v4842
    %v5219 = vmul.f32 %v4686, %v4830
    %v5220 = vmul.f32 %v4687, %v4834
    %v5221 = vmul.f32 %v4688, %v4838
    %v5222 = vmul.f32 %v4689, %v4842
    %v5223 = vmul.f32 %v4690, %v4830
    %v5224 = vmul.f32 %v4691, %v4834
    %v5225 = vmul.f32 %v4692, %v4838
    %v5226 = vmul.f32 %v4693, %v4842
    %v5227 = vmul.f32 %v4694, %v4830
    %v5228 = vmul.f32 %v4695, %v4834
    %v5229 = vmul.f32 %v4696, %v4838
    %v5230 = vmul.f32 %v4697, %v4842
    %v5231 = vmul.f32 %v4698, %v4830
    %v5232 = vmul.f32 %v4699, %v4834
    %v5233 = vmul.f32 %v4700, %v4838
    %v5234 = vmul.f32 %v4701, %v4842
    %v5235 = vmul.f32 %v4702, %v4830
    %v5236 = vmul.f32 %v4703, %v4834
    %v5237 = vmul.f32 %v4704, %v4838
    %v5238 = vmul.f32 %v4705, %v4842
    %v5239 = vmul.f32 %v4706, %v4830
    %v5240 = vmul.f32 %v4707, %v4834
    %v5241 = vmul.f32 %v4708, %v4838
    %v5242 = vmul.f32 %v4709, %v4842
    %v5243 = vmul.f32 %v4710, %v4830
    %v5244 = vmul.f32 %v4711, %v4834
    %v5245 = vmul.f32 %v4712, %v4838
    %v5246 = vmul.f32 %v4713, %v4842
    %v5247 = vmul.f32 %v4714, %v4830
    %v5248 = vmul.f32 %v4715, %v4834
    %v5249 = vmul.f32 %v4716, %v4838
    %v5250 = vmul.f32 %v4717, %v4842
    %v5251 = vmul.f32 %v4718, %v4830
    %v5252 = vmul.f32 %v4719, %v4834
    %v5253 = vmul.f32 %v4720, %v4838
    %v5254 = vmul.f32 %v4721, %v4842
    %v5255 = vmul.f32 %v4722, %v4830
    %v5256 = vmul.f32 %v4723, %v4834
    %v5257 = vmul.f32 %v4724, %v4838
    %v5258 = vmul.f32 %v4725, %v4842
    %v5259 = vmul.f32 %v4726, %v4830
    %v5260 = vmul.f32 %v4727, %v4834
    %v5261 = vmul.f32 %v4728, %v4838
    %v5262 = vmul.f32 %v4729, %v4842
    %v5263 = vmul.f32 %v4730, %v4830
    %v5264 = vmul.f32 %v4731, %v4834
    %v5265 = vmul.f32 %v4732, %v4838
    %v5266 = vmul.f32 %v4733, %v4842
    %v5267 = vmul.f32 %v4734, %v4830
    %v5268 = vmul.f32 %v4735, %v4834
    %v5269 = vmul.f32 %v4736, %v4838
    %v5270 = vmul.f32 %v4737, %v4842
    %v5271 = vmul.f32 %v4738, %v4830
    %v5272 = vmul.f32 %v4739, %v4834
    %v5273 = vmul.f32 %v4740, %v4838
    %v5274 = vmul.f32 %v4741, %v4842
    %v5275 = vmul.f32 %v4742, %v4830
    %v5276 = vmul.f32 %v4743, %v4834
    %v5277 = vmul.f32 %v4744, %v4838
    %v5278 = vmul.f32 %v4745, %v4842
    %v5279 = vmul.f32 %v4746, %v4830
    %v5280 = vmul.f32 %v4747, %v4834
    %v5281 = vmul.f32 %v4748, %v4838
    %v5282 = vmul.f32 %v4749, %v4842
    %v5283 = vmul.f32 %v4750, %v4830
    %v5284 = vmul.f32 %v4751, %v4834
    %v5285 = vmul.f32 %v4752, %v4838
    %v5286 = vmul.f32 %v4753, %v4842
    %v5287 = vmul.f32 %v4754, %v4830
    %v5288 = vmul.f32 %v4755, %v4834
    %v5289 = vmul.f32 %v4756, %v4838
    %v5290 = vmul.f32 %v4757, %v4842
    %v5291 = vmul.f32 %v4758, %v4830
    %v5292 = vmul.f32 %v4759, %v4834
    %v5293 = vmul.f32 %v4760, %v4838
    %v5294 = vmul.f32 %v4761, %v4842
    %v5295 = vmul.f32 %v4762, %v4830
    %v5296 = vmul.f32 %v4763, %v4834
    %v5297 = vmul.f32 %v4764, %v4838
    %v5298 = vmul.f32 %v4765, %v4842
    %v5299 = vmul.f32 %v4766, %v4830
    %v5300 = vmul.f32 %v4767, %v4834
    %v5301 = vmul.f32 %v4768, %v4838
    %v5302 = vmul.f32 %v4769, %v4842
    %v5303 = vmul.f32 %v4770, %v4830
    %v5304 = vmul.f32 %v4771, %v4834
    %v5305 = vmul.f32 %v4772, %v4838
    %v5306 = vmul.f32 %v4773, %v4842
    %v5307 = vmul.f32 %v4774, %v4830
    %v5308 = vmul.f32 %v4775, %v4834
    %v5309 = vmul.f32 %v4776, %v4838
    %v5310 = vmul.f32 %v4777, %v4842
    %v5311 = vmul.f32 %v4778, %v4830
    %v5312 = vmul.f32 %v4779, %v4834
    %v5313 = vmul.f32 %v4780, %v4838
    %v5314 = vmul.f32 %v4781, %v4842
    %v5315 = vmul.f32 %v4782, %v4830
    %v5316 = vmul.f32 %v4783, %v4834
    %v5317 = vmul.f32 %v4784, %v4838
    %v5318 = vmul.f32 %v4785, %v4842
    %v5319 = vmul.f32 %v4786, %v4830
    %v5320 = vmul.f32 %v4787, %v4834
    %v5321 = vmul.f32 %v4788, %v4838
    %v5322 = vmul.f32 %v4789, %v4842
    %v5323 = vmul.f32 %v4790, %v4830
    %v5324 = vmul.f32 %v4791, %v4834
    %v5325 = vmul.f32 %v4792, %v4838
    %v5326 = vmul.f32 %v4793, %v4842
    %v5327 = vmul.f32 %v4794, %v4830
    %v5328 = vmul.f32 %v4795, %v4834
    %v5329 = vmul.f32 %v4796, %v4838
    %v5330 = vmul.f32 %v4797, %v4842
    %v5331 = vmul.f32 %v4798, %v4830
    %v5332 = vmul.f32 %v4799, %v4834
    %v5333 = vmul.f32 %v4800, %v4838
    %v5334 = vmul.f32 %v4801, %v4842
    %v5335 = vmul.f32 %v4802, %v4830
    %v5336 = vmul.f32 %v4803, %v4834
    %v5337 = vmul.f32 %v4804, %v4838
    %v5338 = vmul.f32 %v4805, %v4842
    %v5339 = vmul.f32 %v4806, %v4830
    %v5340 = vmul.f32 %v4807, %v4834
    %v5341 = vmul.f32 %v4808, %v4838
    %v5342 = vmul.f32 %v4809, %v4842
    %v5343 = vmul.f32 %v4810, %v4830
    %v5344 = vmul.f32 %v4811, %v4834
    %v5345 = vmul.f32 %v4812, %v4838
    %v5346 = vmul.f32 %v4813, %v4842
    %v5347 = vmul.f32 %v4814, %v4830
    %v5348 = vmul.f32 %v4815, %v4834
    %v5349 = vmul.f32 %v4816, %v4838
    %v5350 = vmul.f32 %v4817, %v4842
    %v5351 = vmul.f32 %v4818, %v4830
    %v5352 = vmul.f32 %v4819, %v4834
    %v5353 = vmul.f32 %v4820, %v4838
    %v5354 = vmul.f32 %v4821, %v4842
    %v5355 = vmul.f32 %v4822, %v4830
    %v5356 = vmul.f32 %v4823, %v4834
    %v5357 = vmul.f32 %v4824, %v4838
    %v5358 = vmul.f32 %v4825, %v4842
    %v5359 = vpack.c.bf16 %v4851, %v4847
    %v5360 = vpack.c.bf16 %v4852, %v4848
    %v5361 = vpack.c.bf16 %v4853, %v4849
    %v5362 = vpack.c.bf16 %v4854, %v4850
    %v5363 = vpack.c.bf16 %v4859, %v4855
    %v5364 = vpack.c.bf16 %v4860, %v4856
    %v5365 = vpack.c.bf16 %v4861, %v4857
    %v5366 = vpack.c.bf16 %v4862, %v4858
    %v5367 = vpack.c.bf16 %v4867, %v4863
    %v5368 = vpack.c.bf16 %v4868, %v4864
    %v5369 = vpack.c.bf16 %v4869, %v4865
    %v5370 = vpack.c.bf16 %v4870, %v4866
    %v5371 = vpack.c.bf16 %v4875, %v4871
    %v5372 = vpack.c.bf16 %v4876, %v4872
    %v5373 = vpack.c.bf16 %v4877, %v4873
    %v5374 = vpack.c.bf16 %v4878, %v4874
    %v5375 = vpack.c.bf16 %v4883, %v4879
    %v5376 = vpack.c.bf16 %v4884, %v4880
    %v5377 = vpack.c.bf16 %v4885, %v4881
    %v5378 = vpack.c.bf16 %v4886, %v4882
    %v5379 = vpack.c.bf16 %v4891, %v4887
    %v5380 = vpack.c.bf16 %v4892, %v4888
    %v5381 = vpack.c.bf16 %v4893, %v4889
    %v5382 = vpack.c.bf16 %v4894, %v4890
    %v5383 = vpack.c.bf16 %v4899, %v4895
    %v5384 = vpack.c.bf16 %v4900, %v4896
    %v5385 = vpack.c.bf16 %v4901, %v4897
    %v5386 = vpack.c.bf16 %v4902, %v4898
    %v5387 = vpack.c.bf16 %v4907, %v4903
    %v5388 = vpack.c.bf16 %v4908, %v4904
    %v5389 = vpack.c.bf16 %v4909, %v4905
    %v5390 = vpack.c.bf16 %v4910, %v4906
    %v5391 = vpack.c.bf16 %v4915, %v4911
    %v5392 = vpack.c.bf16 %v4916, %v4912
    %v5393 = vpack.c.bf16 %v4917, %v4913
    %v5394 = vpack.c.bf16 %v4918, %v4914
    %v5395 = vpack.c.bf16 %v4923, %v4919
    %v5396 = vpack.c.bf16 %v4924, %v4920
    %v5397 = vpack.c.bf16 %v4925, %v4921
    %v5398 = vpack.c.bf16 %v4926, %v4922
    %v5399 = vpack.c.bf16 %v4931, %v4927
    %v5400 = vpack.c.bf16 %v4932, %v4928
    %v5401 = vpack.c.bf16 %v4933, %v4929
    %v5402 = vpack.c.bf16 %v4934, %v4930
    %v5403 = vpack.c.bf16 %v4939, %v4935
    %v5404 = vpack.c.bf16 %v4940, %v4936
    %v5405 = vpack.c.bf16 %v4941, %v4937
    %v5406 = vpack.c.bf16 %v4942, %v4938
    %v5407 = vpack.c.bf16 %v4947, %v4943
    %v5408 = vpack.c.bf16 %v4948, %v4944
    %v5409 = vpack.c.bf16 %v4949, %v4945
    %v5410 = vpack.c.bf16 %v4950, %v4946
    %v5411 = vpack.c.bf16 %v4955, %v4951
    %v5412 = vpack.c.bf16 %v4956, %v4952
    %v5413 = vpack.c.bf16 %v4957, %v4953
    %v5414 = vpack.c.bf16 %v4958, %v4954
    %v5415 = vpack.c.bf16 %v4963, %v4959
    %v5416 = vpack.c.bf16 %v4964, %v4960
    %v5417 = vpack.c.bf16 %v4965, %v4961
    %v5418 = vpack.c.bf16 %v4966, %v4962
    %v5419 = vpack.c.bf16 %v4971, %v4967
    %v5420 = vpack.c.bf16 %v4972, %v4968
    %v5421 = vpack.c.bf16 %v4973, %v4969
    %v5422 = vpack.c.bf16 %v4974, %v4970
    %v5423 = vpack.c.bf16 %v4979, %v4975
    %v5424 = vpack.c.bf16 %v4980, %v4976
    %v5425 = vpack.c.bf16 %v4981, %v4977
    %v5426 = vpack.c.bf16 %v4982, %v4978
    %v5427 = vpack.c.bf16 %v4987, %v4983
    %v5428 = vpack.c.bf16 %v4988, %v4984
    %v5429 = vpack.c.bf16 %v4989, %v4985
    %v5430 = vpack.c.bf16 %v4990, %v4986
    %v5431 = vpack.c.bf16 %v4995, %v4991
    %v5432 = vpack.c.bf16 %v4996, %v4992
    %v5433 = vpack.c.bf16 %v4997, %v4993
    %v5434 = vpack.c.bf16 %v4998, %v4994
    %v5435 = vpack.c.bf16 %v5003, %v4999
    %v5436 = vpack.c.bf16 %v5004, %v5000
    %v5437 = vpack.c.bf16 %v5005, %v5001
    %v5438 = vpack.c.bf16 %v5006, %v5002
    %v5439 = vpack.c.bf16 %v5011, %v5007
    %v5440 = vpack.c.bf16 %v5012, %v5008
    %v5441 = vpack.c.bf16 %v5013, %v5009
    %v5442 = vpack.c.bf16 %v5014, %v5010
    %v5443 = vpack.c.bf16 %v5019, %v5015
    %v5444 = vpack.c.bf16 %v5020, %v5016
    %v5445 = vpack.c.bf16 %v5021, %v5017
    %v5446 = vpack.c.bf16 %v5022, %v5018
    %v5447 = vpack.c.bf16 %v5027, %v5023
    %v5448 = vpack.c.bf16 %v5028, %v5024
    %v5449 = vpack.c.bf16 %v5029, %v5025
    %v5450 = vpack.c.bf16 %v5030, %v5026
    %v5451 = vpack.c.bf16 %v5035, %v5031
    %v5452 = vpack.c.bf16 %v5036, %v5032
    %v5453 = vpack.c.bf16 %v5037, %v5033
    %v5454 = vpack.c.bf16 %v5038, %v5034
    %v5455 = vpack.c.bf16 %v5043, %v5039
    %v5456 = vpack.c.bf16 %v5044, %v5040
    %v5457 = vpack.c.bf16 %v5045, %v5041
    %v5458 = vpack.c.bf16 %v5046, %v5042
    %v5459 = vpack.c.bf16 %v5051, %v5047
    %v5460 = vpack.c.bf16 %v5052, %v5048
    %v5461 = vpack.c.bf16 %v5053, %v5049
    %v5462 = vpack.c.bf16 %v5054, %v5050
    %v5463 = vpack.c.bf16 %v5059, %v5055
    %v5464 = vpack.c.bf16 %v5060, %v5056
    %v5465 = vpack.c.bf16 %v5061, %v5057
    %v5466 = vpack.c.bf16 %v5062, %v5058
    %v5467 = vpack.c.bf16 %v5067, %v5063
    %v5468 = vpack.c.bf16 %v5068, %v5064
    %v5469 = vpack.c.bf16 %v5069, %v5065
    %v5470 = vpack.c.bf16 %v5070, %v5066
    %v5471 = vpack.c.bf16 %v5075, %v5071
    %v5472 = vpack.c.bf16 %v5076, %v5072
    %v5473 = vpack.c.bf16 %v5077, %v5073
    %v5474 = vpack.c.bf16 %v5078, %v5074
    %v5475 = vpack.c.bf16 %v5083, %v5079
    %v5476 = vpack.c.bf16 %v5084, %v5080
    %v5477 = vpack.c.bf16 %v5085, %v5081
    %v5478 = vpack.c.bf16 %v5086, %v5082
    %v5479 = vpack.c.bf16 %v5091, %v5087
    %v5480 = vpack.c.bf16 %v5092, %v5088
    %v5481 = vpack.c.bf16 %v5093, %v5089
    %v5482 = vpack.c.bf16 %v5094, %v5090
    %v5483 = vpack.c.bf16 %v5099, %v5095
    %v5484 = vpack.c.bf16 %v5100, %v5096
    %v5485 = vpack.c.bf16 %v5101, %v5097
    %v5486 = vpack.c.bf16 %v5102, %v5098
    %v5487 = vpack.c.bf16 %v5107, %v5103
    %v5488 = vpack.c.bf16 %v5108, %v5104
    %v5489 = vpack.c.bf16 %v5109, %v5105
    %v5490 = vpack.c.bf16 %v5110, %v5106
    %v5491 = vpack.c.bf16 %v5115, %v5111
    %v5492 = vpack.c.bf16 %v5116, %v5112
    %v5493 = vpack.c.bf16 %v5117, %v5113
    %v5494 = vpack.c.bf16 %v5118, %v5114
    %v5495 = vpack.c.bf16 %v5123, %v5119
    %v5496 = vpack.c.bf16 %v5124, %v5120
    %v5497 = vpack.c.bf16 %v5125, %v5121
    %v5498 = vpack.c.bf16 %v5126, %v5122
    %v5499 = vpack.c.bf16 %v5131, %v5127
    %v5500 = vpack.c.bf16 %v5132, %v5128
    %v5501 = vpack.c.bf16 %v5133, %v5129
    %v5502 = vpack.c.bf16 %v5134, %v5130
    %v5503 = vpack.c.bf16 %v5139, %v5135
    %v5504 = vpack.c.bf16 %v5140, %v5136
    %v5505 = vpack.c.bf16 %v5141, %v5137
    %v5506 = vpack.c.bf16 %v5142, %v5138
    %v5507 = vpack.c.bf16 %v5147, %v5143
    %v5508 = vpack.c.bf16 %v5148, %v5144
    %v5509 = vpack.c.bf16 %v5149, %v5145
    %v5510 = vpack.c.bf16 %v5150, %v5146
    %v5511 = vpack.c.bf16 %v5155, %v5151
    %v5512 = vpack.c.bf16 %v5156, %v5152
    %v5513 = vpack.c.bf16 %v5157, %v5153
    %v5514 = vpack.c.bf16 %v5158, %v5154
    %v5515 = vpack.c.bf16 %v5163, %v5159
    %v5516 = vpack.c.bf16 %v5164, %v5160
    %v5517 = vpack.c.bf16 %v5165, %v5161
    %v5518 = vpack.c.bf16 %v5166, %v5162
    %v5519 = vpack.c.bf16 %v5171, %v5167
    %v5520 = vpack.c.bf16 %v5172, %v5168
    %v5521 = vpack.c.bf16 %v5173, %v5169
    %v5522 = vpack.c.bf16 %v5174, %v5170
    %v5523 = vpack.c.bf16 %v5179, %v5175
    %v5524 = vpack.c.bf16 %v5180, %v5176
    %v5525 = vpack.c.bf16 %v5181, %v5177
    %v5526 = vpack.c.bf16 %v5182, %v5178
    %v5527 = vpack.c.bf16 %v5187, %v5183
    %v5528 = vpack.c.bf16 %v5188, %v5184
    %v5529 = vpack.c.bf16 %v5189, %v5185
    %v5530 = vpack.c.bf16 %v5190, %v5186
    %v5531 = vpack.c.bf16 %v5195, %v5191
    %v5532 = vpack.c.bf16 %v5196, %v5192
    %v5533 = vpack.c.bf16 %v5197, %v5193
    %v5534 = vpack.c.bf16 %v5198, %v5194
    %v5535 = vpack.c.bf16 %v5203, %v5199
    %v5536 = vpack.c.bf16 %v5204, %v5200
    %v5537 = vpack.c.bf16 %v5205, %v5201
    %v5538 = vpack.c.bf16 %v5206, %v5202
    %v5539 = vpack.c.bf16 %v5211, %v5207
    %v5540 = vpack.c.bf16 %v5212, %v5208
    %v5541 = vpack.c.bf16 %v5213, %v5209
    %v5542 = vpack.c.bf16 %v5214, %v5210
    %v5543 = vpack.c.bf16 %v5219, %v5215
    %v5544 = vpack.c.bf16 %v5220, %v5216
    %v5545 = vpack.c.bf16 %v5221, %v5217
    %v5546 = vpack.c.bf16 %v5222, %v5218
    %v5547 = vpack.c.bf16 %v5227, %v5223
    %v5548 = vpack.c.bf16 %v5228, %v5224
    %v5549 = vpack.c.bf16 %v5229, %v5225
    %v5550 = vpack.c.bf16 %v5230, %v5226
    %v5551 = vpack.c.bf16 %v5235, %v5231
    %v5552 = vpack.c.bf16 %v5236, %v5232
    %v5553 = vpack.c.bf16 %v5237, %v5233
    %v5554 = vpack.c.bf16 %v5238, %v5234
    %v5555 = vpack.c.bf16 %v5243, %v5239
    %v5556 = vpack.c.bf16 %v5244, %v5240
    %v5557 = vpack.c.bf16 %v5245, %v5241
    %v5558 = vpack.c.bf16 %v5246, %v5242
    %v5559 = vpack.c.bf16 %v5251, %v5247
    %v5560 = vpack.c.bf16 %v5252, %v5248
    %v5561 = vpack.c.bf16 %v5253, %v5249
    %v5562 = vpack.c.bf16 %v5254, %v5250
    %v5563 = vpack.c.bf16 %v5259, %v5255
    %v5564 = vpack.c.bf16 %v5260, %v5256
    %v5565 = vpack.c.bf16 %v5261, %v5257
    %v5566 = vpack.c.bf16 %v5262, %v5258
    %v5567 = vpack.c.bf16 %v5267, %v5263
    %v5568 = vpack.c.bf16 %v5268, %v5264
    %v5569 = vpack.c.bf16 %v5269, %v5265
    %v5570 = vpack.c.bf16 %v5270, %v5266
    %v5571 = vpack.c.bf16 %v5275, %v5271
    %v5572 = vpack.c.bf16 %v5276, %v5272
    %v5573 = vpack.c.bf16 %v5277, %v5273
    %v5574 = vpack.c.bf16 %v5278, %v5274
    %v5575 = vpack.c.bf16 %v5283, %v5279
    %v5576 = vpack.c.bf16 %v5284, %v5280
    %v5577 = vpack.c.bf16 %v5285, %v5281
    %v5578 = vpack.c.bf16 %v5286, %v5282
    %v5579 = vpack.c.bf16 %v5291, %v5287
    %v5580 = vpack.c.bf16 %v5292, %v5288
    %v5581 = vpack.c.bf16 %v5293, %v5289
    %v5582 = vpack.c.bf16 %v5294, %v5290
    %v5583 = vpack.c.bf16 %v5299, %v5295
    %v5584 = vpack.c.bf16 %v5300, %v5296
    %v5585 = vpack.c.bf16 %v5301, %v5297
    %v5586 = vpack.c.bf16 %v5302, %v5298
    %v5587 = vpack.c.bf16 %v5307, %v5303
    %v5588 = vpack.c.bf16 %v5308, %v5304
    %v5589 = vpack.c.bf16 %v5309, %v5305
    %v5590 = vpack.c.bf16 %v5310, %v5306
    %v5591 = vpack.c.bf16 %v5315, %v5311
    %v5592 = vpack.c.bf16 %v5316, %v5312
    %v5593 = vpack.c.bf16 %v5317, %v5313
    %v5594 = vpack.c.bf16 %v5318, %v5314
    %v5595 = vpack.c.bf16 %v5323, %v5319
    %v5596 = vpack.c.bf16 %v5324, %v5320
    %v5597 = vpack.c.bf16 %v5325, %v5321
    %v5598 = vpack.c.bf16 %v5326, %v5322
    %v5599 = vpack.c.bf16 %v5331, %v5327
    %v5600 = vpack.c.bf16 %v5332, %v5328
    %v5601 = vpack.c.bf16 %v5333, %v5329
    %v5602 = vpack.c.bf16 %v5334, %v5330
    %v5603 = vpack.c.bf16 %v5339, %v5335
    %v5604 = vpack.c.bf16 %v5340, %v5336
    %v5605 = vpack.c.bf16 %v5341, %v5337
    %v5606 = vpack.c.bf16 %v5342, %v5338
    %v5607 = vpack.c.bf16 %v5347, %v5343
    %v5608 = vpack.c.bf16 %v5348, %v5344
    %v5609 = vpack.c.bf16 %v5349, %v5345
    %v5610 = vpack.c.bf16 %v5350, %v5346
    %v5611 = vpack.c.bf16 %v5355, %v5351
    %v5612 = vpack.c.bf16 %v5356, %v5352
    %v5613 = vpack.c.bf16 %v5357, %v5353
    %v5614 = vpack.c.bf16 %v5358, %v5354
    %v5615 = vpack.c.bf16 %v3649, %v3649
    %v5616 = vpack.c.bf16 %v3650, %v3650
    %v5617 = vpack.c.bf16 %v3651, %v3651
    %v5618 = vpack.c.bf16 %v3652, %v3652
    %v5619 = vpack.c.bf16 %v3653, %v3653
    %v5620 = vpack.c.bf16 %v3654, %v3654
    %v5621 = vpack.c.bf16 %v3655, %v3655
    %v5622 = vpack.c.bf16 %v3656, %v3656
    %v5623 = vld [vmem:[%s16] sm:$0xf]
    %v5625 = vlaneseq
    %v5626 = vshrl.u32 %v5625, 7
    %v5627 = vsub.s32 0, %v5626
    %v5628 = vrot.slane %v5623, %v5627
    %v5629 = vlaneseq
    %v5630 = vshrl.u32 %v5629, 7
    %v5631 = vsub.s32 1, %v5630
    %v5632 = vrot.slane %v5623, %v5631
    %v5633 = vlaneseq
    %v5634 = vshrl.u32 %v5633, 7
    %v5635 = vsub.s32 2, %v5634
    %v5636 = vrot.slane %v5623, %v5635
    %v5637 = vlaneseq
    %v5638 = vshrl.u32 %v5637, 7
    %v5639 = vsub.s32 3, %v5638
    %v5640 = vrot.slane %v5623, %v5639
    %5645 = vmatprep.subr.bf16.mxu0 %v5360
    %5646 = vmatpush1.bf16.msra.mxu0 %v5359
    %5647 = vmatprep.subr.bf16.mxu0 %v5364
    %5648 = vmatpush1.bf16.msra.mxu0 %v5363
    %5649 = vmatprep.subr.bf16.mxu0 %v5368
    %5650 = vmatpush1.bf16.msra.mxu0 %v5367
    %5651 = vmatprep.subr.bf16.mxu0 %v5372
    %5652 = vmatpush1.bf16.msra.mxu0 %v5371
    %5653 = vmatprep.subr.bf16.mxu0 %v5376
    %5654 = vmatpush1.bf16.msra.mxu0 %v5375
    %5655 = vmatprep.subr.bf16.mxu0 %v5380
    %5656 = vmatpush1.bf16.msra.mxu0 %v5379
    %5657 = vmatprep.subr.bf16.mxu0 %v5384
    %5658 = vmatpush1.bf16.msra.mxu0 %v5383
    %5659 = vmatprep.subr.bf16.mxu0 %v5388
    %5660 = vmatpush1.bf16.msra.mxu0 %v5387
    %5661 = vmatprep.subr.bf16.mxu0 %v5392
    %5662 = vmatpush1.bf16.msra.mxu0 %v5391
    %5663 = vmatprep.subr.bf16.mxu0 %v5396
    %5664 = vmatpush1.bf16.msra.mxu0 %v5395
    %5665 = vmatprep.subr.bf16.mxu0 %v5400
    %5666 = vmatpush1.bf16.msra.mxu0 %v5399
    %5667 = vmatprep.subr.bf16.mxu0 %v5404
    %5668 = vmatpush1.bf16.msra.mxu0 %v5403
    %5669 = vmatprep.subr.bf16.mxu0 %v5408
    %5670 = vmatpush1.bf16.msra.mxu0 %v5407
    %5671 = vmatprep.subr.bf16.mxu0 %v5412
    %5672 = vmatpush1.bf16.msra.mxu0 %v5411
    %5673 = vmatprep.subr.bf16.mxu0 %v5416
    %5674 = vmatpush1.bf16.msra.mxu0 %v5415
    %5675 = vmatprep.subr.bf16.mxu0 %v5420
    %5676 = vmatpush1.bf16.msra.mxu0 %v5419
    %5677 = vmatprep.mubr.bf16.mxu0 %v5616
    %5678 = vmatmul.mubr.bf16.gmra.mrb[0].mxu0 %v5615
    %v5679 = vpop.f32.mrb[0].mxu0
    %v5680 = vadd.f32 %v5628, %v5679
    %v5681 = vpop.f32.mrb[0].mxu0
    %v5682 = vadd.f32 %v5632, %v5681
    %v5683 = vpop.f32.mrb[0].mxu0
    %v5684 = vpop.f32.mrb[0].mxu0
    %5685 = vdwg.mxu0
    %5686 = vmatprep.subr.bf16.mxu0 %v5424
    %5687 = vmatpush1.bf16.msra.mxu0 %v5423
    %5688 = vmatprep.subr.bf16.mxu0 %v5428
    %5689 = vmatpush1.bf16.msra.mxu0 %v5427
    %5690 = vmatprep.subr.bf16.mxu0 %v5432
    %5691 = vmatpush1.bf16.msra.mxu0 %v5431
    %5692 = vmatprep.subr.bf16.mxu0 %v5436
    %5693 = vmatpush1.bf16.msra.mxu0 %v5435
    %5694 = vmatprep.subr.bf16.mxu0 %v5440
    %5695 = vmatpush1.bf16.msra.mxu0 %v5439
    %5696 = vmatprep.subr.bf16.mxu0 %v5444
    %5697 = vmatpush1.bf16.msra.mxu0 %v5443
    %5698 = vmatprep.subr.bf16.mxu0 %v5448
    %5699 = vmatpush1.bf16.msra.mxu0 %v5447
    %5700 = vmatprep.subr.bf16.mxu0 %v5452
    %5701 = vmatpush1.bf16.msra.mxu0 %v5451
    %5702 = vmatprep.subr.bf16.mxu0 %v5456
    %5703 = vmatpush1.bf16.msra.mxu0 %v5455
    %5704 = vmatprep.subr.bf16.mxu0 %v5460
    %5705 = vmatpush1.bf16.msra.mxu0 %v5459
    %5706 = vmatprep.subr.bf16.mxu0 %v5464
    %5707 = vmatpush1.bf16.msra.mxu0 %v5463
    %5708 = vmatprep.subr.bf16.mxu0 %v5468
    %5709 = vmatpush1.bf16.msra.mxu0 %v5467
    %5710 = vmatprep.subr.bf16.mxu0 %v5472
    %5711 = vmatpush1.bf16.msra.mxu0 %v5471
    %5712 = vmatprep.subr.bf16.mxu0 %v5476
    %5713 = vmatpush1.bf16.msra.mxu0 %v5475
    %5714 = vmatprep.subr.bf16.mxu0 %v5480
    %5715 = vmatpush1.bf16.msra.mxu0 %v5479
    %5716 = vmatprep.subr.bf16.mxu0 %v5484
    %5717 = vmatpush1.bf16.msra.mxu0 %v5483
    %5718 = vmatprep.mubr.bf16.mxu0 %v5618
    %5719 = vmatmul.mubr.bf16.gmra.mrb[0].mxu0 %v5617
    %v5720 = vpop.f32.mrb[0].mxu0
    %v5721 = vadd.f32 %v5680, %v5720
    %v5722 = vpop.f32.mrb[0].mxu0
    %v5723 = vadd.f32 %v5682, %v5722
    %v5724 = vpop.f32.mrb[0].mxu0
    %v5725 = vpop.f32.mrb[0].mxu0
    %5726 = vdwg.mxu0
    %5727 = vmatprep.subr.bf16.mxu0 %v5488
    %5728 = vmatpush1.bf16.msra.mxu0 %v5487
    %5729 = vmatprep.subr.bf16.mxu0 %v5492
    %5730 = vmatpush1.bf16.msra.mxu0 %v5491
    %5731 = vmatprep.subr.bf16.mxu0 %v5496
    %5732 = vmatpush1.bf16.msra.mxu0 %v5495
    %5733 = vmatprep.subr.bf16.mxu0 %v5500
    %5734 = vmatpush1.bf16.msra.mxu0 %v5499
    %5735 = vmatprep.subr.bf16.mxu0 %v5504
    %5736 = vmatpush1.bf16.msra.mxu0 %v5503
    %5737 = vmatprep.subr.bf16.mxu0 %v5508
    %5738 = vmatpush1.bf16.msra.mxu0 %v5507
    %5739 = vmatprep.subr.bf16.mxu0 %v5512
    %5740 = vmatpush1.bf16.msra.mxu0 %v5511
    %5741 = vmatprep.subr.bf16.mxu0 %v5516
    %5742 = vmatpush1.bf16.msra.mxu0 %v5515
    %5743 = vmatprep.subr.bf16.mxu0 %v5520
    %5744 = vmatpush1.bf16.msra.mxu0 %v5519
    %5745 = vmatprep.subr.bf16.mxu0 %v5524
    %5746 = vmatpush1.bf16.msra.mxu0 %v5523
    %5747 = vmatprep.subr.bf16.mxu0 %v5528
    %5748 = vmatpush1.bf16.msra.mxu0 %v5527
    %5749 = vmatprep.subr.bf16.mxu0 %v5532
    %5750 = vmatpush1.bf16.msra.mxu0 %v5531
    %5751 = vmatprep.subr.bf16.mxu0 %v5536
    %5752 = vmatpush1.bf16.msra.mxu0 %v5535
    %5753 = vmatprep.subr.bf16.mxu0 %v5540
    %5754 = vmatpush1.bf16.msra.mxu0 %v5539
    %5755 = vmatprep.subr.bf16.mxu0 %v5544
    %5756 = vmatpush1.bf16.msra.mxu0 %v5543
    %5757 = vmatprep.subr.bf16.mxu0 %v5548
    %5758 = vmatpush1.bf16.msra.mxu0 %v5547
    %5759 = vmatprep.mubr.bf16.mxu0 %v5620
    %5760 = vmatmul.mubr.bf16.gmra.mrb[0].mxu0 %v5619
    %v5761 = vpop.f32.mrb[0].mxu0
    %v5762 = vadd.f32 %v5721, %v5761
    %v5763 = vpop.f32.mrb[0].mxu0
    %v5764 = vadd.f32 %v5723, %v5763
    %v5765 = vpop.f32.mrb[0].mxu0
    %v5766 = vpop.f32.mrb[0].mxu0
    %5767 = vdwg.mxu0
    %5768 = vmatprep.subr.bf16.mxu0 %v5552
    %5769 = vmatpush1.bf16.msra.mxu0 %v5551
    %5770 = vmatprep.subr.bf16.mxu0 %v5556
    %5771 = vmatpush1.bf16.msra.mxu0 %v5555
    %5772 = vmatprep.subr.bf16.mxu0 %v5560
    %5773 = vmatpush1.bf16.msra.mxu0 %v5559
    %5774 = vmatprep.subr.bf16.mxu0 %v5564
    %5775 = vmatpush1.bf16.msra.mxu0 %v5563
    %5776 = vmatprep.subr.bf16.mxu0 %v5568
    %5777 = vmatpush1.bf16.msra.mxu0 %v5567
    %5778 = vmatprep.subr.bf16.mxu0 %v5572
    %5779 = vmatpush1.bf16.msra.mxu0 %v5571
    %5780 = vmatprep.subr.bf16.mxu0 %v5576
    %5781 = vmatpush1.bf16.msra.mxu0 %v5575
    %5782 = vmatprep.subr.bf16.mxu0 %v5580
    %5783 = vmatpush1.bf16.msra.mxu0 %v5579
    %5784 = vmatprep.subr.bf16.mxu0 %v5584
    %5785 = vmatpush1.bf16.msra.mxu0 %v5583
    %5786 = vmatprep.subr.bf16.mxu0 %v5588
    %5787 = vmatpush1.bf16.msra.mxu0 %v5587
    %5788 = vmatprep.subr.bf16.mxu0 %v5592
    %5789 = vmatpush1.bf16.msra.mxu0 %v5591
    %5790 = vmatprep.subr.bf16.mxu0 %v5596
    %5791 = vmatpush1.bf16.msra.mxu0 %v5595
    %5792 = vmatprep.subr.bf16.mxu0 %v5600
    %5793 = vmatpush1.bf16.msra.mxu0 %v5599
    %5794 = vmatprep.subr.bf16.mxu0 %v5604
    %5795 = vmatpush1.bf16.msra.mxu0 %v5603
    %5796 = vmatprep.subr.bf16.mxu0 %v5608
    %5797 = vmatpush1.bf16.msra.mxu0 %v5607
    %5798 = vmatprep.subr.bf16.mxu0 %v5612
    %5799 = vmatpush1.bf16.msra.mxu0 %v5611
    %5800 = vmatprep.mubr.bf16.mxu0 %v5622
    %5801 = vmatmul.mubr.bf16.gmra.mrb[0].mxu0 %v5621
    %v5802 = vpop.f32.mrb[0].mxu0
    %v5803 = vadd.f32 %v5762, %v5802
    %v5804 = vpop.f32.mrb[0].mxu0
    %v5805 = vadd.f32 %v5764, %v5804
    %v5806 = vpop.f32.mrb[0].mxu0
    %v5807 = vpop.f32.mrb[0].mxu0
    %5808 = vdwg.mxu0
    %5809 = vmatprep.subr.bf16.mxu0 %v5362
    %5810 = vmatpush1.bf16.msra.mxu0 %v5361
    %5811 = vmatprep.subr.bf16.mxu0 %v5366
    %5812 = vmatpush1.bf16.msra.mxu0 %v5365
    %5813 = vmatprep.subr.bf16.mxu0 %v5370
    %5814 = vmatpush1.bf16.msra.mxu0 %v5369
    %5815 = vmatprep.subr.bf16.mxu0 %v5374
    %5816 = vmatpush1.bf16.msra.mxu0 %v5373
    %5817 = vmatprep.subr.bf16.mxu0 %v5378
    %5818 = vmatpush1.bf16.msra.mxu0 %v5377
    %5819 = vmatprep.subr.bf16.mxu0 %v5382
    %5820 = vmatpush1.bf16.msra.mxu0 %v5381
    %5821 = vmatprep.subr.bf16.mxu0 %v5386
    %5822 = vmatpush1.bf16.msra.mxu0 %v5385
    %5823 = vmatprep.subr.bf16.mxu0 %v5390
    %5824 = vmatpush1.bf16.msra.mxu0 %v5389
    %5825 = vmatprep.subr.bf16.mxu0 %v5394
    %5826 = vmatpush1.bf16.msra.mxu0 %v5393
    %5827 = vmatprep.subr.bf16.mxu0 %v5398
    %5828 = vmatpush1.bf16.msra.mxu0 %v5397
    %5829 = vmatprep.subr.bf16.mxu0 %v5402
    %5830 = vmatpush1.bf16.msra.mxu0 %v5401
    %5831 = vmatprep.subr.bf16.mxu0 %v5406
    %5832 = vmatpush1.bf16.msra.mxu0 %v5405
    %5833 = vmatprep.subr.bf16.mxu0 %v5410
    %5834 = vmatpush1.bf16.msra.mxu0 %v5409
    %5835 = vmatprep.subr.bf16.mxu0 %v5414
    %5836 = vmatpush1.bf16.msra.mxu0 %v5413
    %5837 = vmatprep.subr.bf16.mxu0 %v5418
    %5838 = vmatpush1.bf16.msra.mxu0 %v5417
    %5839 = vmatprep.subr.bf16.mxu0 %v5422
    %5840 = vmatpush1.bf16.msra.mxu0 %v5421
    %5841 = vmatprep.mubr.bf16.mxu0 %v5616
    %5842 = vmatmul.mubr.bf16.gmra.mrb[0].mxu0 %v5615
    %v5843 = vpop.f32.mrb[0].mxu0
    %v5844 = vadd.f32 %v5636, %v5843
    %v5845 = vpop.f32.mrb[0].mxu0
    %v5846 = vadd.f32 %v5640, %v5845
    %v5847 = vpop.f32.mrb[0].mxu0
    %v5848 = vpop.f32.mrb[0].mxu0
    %5849 = vdwg.mxu0
    %5850 = vmatprep.subr.bf16.mxu0 %v5426
    %5851 = vmatpush1.bf16.msra.mxu0 %v5425
    %5852 = vmatprep.subr.bf16.mxu0 %v5430
    %5853 = vmatpush1.bf16.msra.mxu0 %v5429
    %5854 = vmatprep.subr.bf16.mxu0 %v5434
    %5855 = vmatpush1.bf16.msra.mxu0 %v5433
    %5856 = vmatprep.subr.bf16.mxu0 %v5438
    %5857 = vmatpush1.bf16.msra.mxu0 %v5437
    %5858 = vmatprep.subr.bf16.mxu0 %v5442
    %5859 = vmatpush1.bf16.msra.mxu0 %v5441
    %5860 = vmatprep.subr.bf16.mxu0 %v5446
    %5861 = vmatpush1.bf16.msra.mxu0 %v5445
    %5862 = vmatprep.subr.bf16.mxu0 %v5450
    %5863 = vmatpush1.bf16.msra.mxu0 %v5449
    %5864 = vmatprep.subr.bf16.mxu0 %v5454
    %5865 = vmatpush1.bf16.msra.mxu0 %v5453
    %5866 = vmatprep.subr.bf16.mxu0 %v5458
    %5867 = vmatpush1.bf16.msra.mxu0 %v5457
    %5868 = vmatprep.subr.bf16.mxu0 %v5462
    %5869 = vmatpush1.bf16.msra.mxu0 %v5461
    %5870 = vmatprep.subr.bf16.mxu0 %v5466
    %5871 = vmatpush1.bf16.msra.mxu0 %v5465
    %5872 = vmatprep.subr.bf16.mxu0 %v5470
    %5873 = vmatpush1.bf16.msra.mxu0 %v5469
    %5874 = vmatprep.subr.bf16.mxu0 %v5474
    %5875 = vmatpush1.bf16.msra.mxu0 %v5473
    %5876 = vmatprep.subr.bf16.mxu0 %v5478
    %5877 = vmatpush1.bf16.msra.mxu0 %v5477
    %5878 = vmatprep.subr.bf16.mxu0 %v5482
    %5879 = vmatpush1.bf16.msra.mxu0 %v5481
    %5880 = vmatprep.subr.bf16.mxu0 %v5486
    %5881 = vmatpush1.bf16.msra.mxu0 %v5485
    %5882 = vmatprep.mubr.bf16.mxu0 %v5618
    %5883 = vmatmul.mubr.bf16.gmra.mrb[0].mxu0 %v5617
    %v5884 = vpop.f32.mrb[0].mxu0
    %v5885 = vadd.f32 %v5844, %v5884
    %v5886 = vpop.f32.mrb[0].mxu0
    %v5887 = vadd.f32 %v5846, %v5886
    %v5888 = vpop.f32.mrb[0].mxu0
    %v5889 = vpop.f32.mrb[0].mxu0
    %5890 = vdwg.mxu0
    %5891 = vmatprep.subr.bf16.mxu0 %v5490
    %5892 = vmatpush1.bf16.msra.mxu0 %v5489
    %5893 = vmatprep.subr.bf16.mxu0 %v5494
    %5894 = vmatpush1.bf16.msra.mxu0 %v5493
    %5895 = vmatprep.subr.bf16.mxu0 %v5498
    %5896 = vmatpush1.bf16.msra.mxu0 %v5497
    %5897 = vmatprep.subr.bf16.mxu0 %v5502
    %5898 = vmatpush1.bf16.msra.mxu0 %v5501
    %5899 = vmatprep.subr.bf16.mxu0 %v5506
    %5900 = vmatpush1.bf16.msra.mxu0 %v5505
    %5901 = vmatprep.subr.bf16.mxu0 %v5510
    %5902 = vmatpush1.bf16.msra.mxu0 %v5509
    %5903 = vmatprep.subr.bf16.mxu0 %v5514
    %5904 = vmatpush1.bf16.msra.mxu0 %v5513
    %5905 = vmatprep.subr.bf16.mxu0 %v5518
    %5906 = vmatpush1.bf16.msra.mxu0 %v5517
    %5907 = vmatprep.subr.bf16.mxu0 %v5522
    %5908 = vmatpush1.bf16.msra.mxu0 %v5521
    %5909 = vmatprep.subr.bf16.mxu0 %v5526
    %5910 = vmatpush1.bf16.msra.mxu0 %v5525
    %5911 = vmatprep.subr.bf16.mxu0 %v5530
    %5912 = vmatpush1.bf16.msra.mxu0 %v5529
    %5913 = vmatprep.subr.bf16.mxu0 %v5534
    %5914 = vmatpush1.bf16.msra.mxu0 %v5533
    %5915 = vmatprep.subr.bf16.mxu0 %v5538
    %5916 = vmatpush1.bf16.msra.mxu0 %v5537
    %5917 = vmatprep.subr.bf16.mxu0 %v5542
    %5918 = vmatpush1.bf16.msra.mxu0 %v5541
    %5919 = vmatprep.subr.bf16.mxu0 %v5546
    %5920 = vmatpush1.bf16.msra.mxu0 %v5545
    %5921 = vmatprep.subr.bf16.mxu0 %v5550
    %5922 = vmatpush1.bf16.msra.mxu0 %v5549
    %5923 = vmatprep.mubr.bf16.mxu0 %v5620
    %5924 = vmatmul.mubr.bf16.gmra.mrb[0].mxu0 %v5619
    %v5925 = vpop.f32.mrb[0].mxu0
    %v5926 = vadd.f32 %v5885, %v5925
    %v5927 = vpop.f32.mrb[0].mxu0
    %v5928 = vadd.f32 %v5887, %v5927
    %v5929 = vpop.f32.mrb[0].mxu0
    %v5930 = vpop.f32.mrb[0].mxu0
    %5931 = vdwg.mxu0
    %5932 = vmatprep.subr.bf16.mxu0 %v5554
    %5933 = vmatpush1.bf16.msra.mxu0 %v5553
    %5934 = vmatprep.subr.bf16.mxu0 %v5558
    %5935 = vmatpush1.bf16.msra.mxu0 %v5557
    %5936 = vmatprep.subr.bf16.mxu0 %v5562
    %5937 = vmatpush1.bf16.msra.mxu0 %v5561
    %5938 = vmatprep.subr.bf16.mxu0 %v5566
    %5939 = vmatpush1.bf16.msra.mxu0 %v5565
    %5940 = vmatprep.subr.bf16.mxu0 %v5570
    %5941 = vmatpush1.bf16.msra.mxu0 %v5569
    %5942 = vmatprep.subr.bf16.mxu0 %v5574
    %5943 = vmatpush1.bf16.msra.mxu0 %v5573
    %5944 = vmatprep.subr.bf16.mxu0 %v5578
    %5945 = vmatpush1.bf16.msra.mxu0 %v5577
    %5946 = vmatprep.subr.bf16.mxu0 %v5582
    %5947 = vmatpush1.bf16.msra.mxu0 %v5581
    %5948 = vmatprep.subr.bf16.mxu0 %v5586
    %5949 = vmatpush1.bf16.msra.mxu0 %v5585
    %5950 = vmatprep.subr.bf16.mxu0 %v5590
    %5951 = vmatpush1.bf16.msra.mxu0 %v5589
    %5952 = vmatprep.subr.bf16.mxu0 %v5594
    %5953 = vmatpush1.bf16.msra.mxu0 %v5593
    %5954 = vmatprep.subr.bf16.mxu0 %v5598
    %5955 = vmatpush1.bf16.msra.mxu0 %v5597
    %5956 = vmatprep.subr.bf16.mxu0 %v5602
    %5957 = vmatpush1.bf16.msra.mxu0 %v5601
    %5958 = vmatprep.subr.bf16.mxu0 %v5606
    %5959 = vmatpush1.bf16.msra.mxu0 %v5605
    %5960 = vmatprep.subr.bf16.mxu0 %v5610
    %5961 = vmatpush1.bf16.msra.mxu0 %v5609
    %5962 = vmatprep.subr.bf16.mxu0 %v5614
    %5963 = vmatpush1.bf16.msra.mxu0 %v5613
    %5964 = vmatprep.mubr.bf16.mxu0 %v5622
    %5965 = vmatmul.mubr.bf16.gmra.mrb[0].mxu0 %v5621
    %v5966 = vpop.f32.mrb[0].mxu0
    %v5967 = vadd.f32 %v5926, %v5966
    %v5968 = vpop.f32.mrb[0].mxu0
    %v5969 = vadd.f32 %v5928, %v5968
    %v5970 = vpop.f32.mrb[0].mxu0
    %v5971 = vpop.f32.mrb[0].mxu0
    %5972 = vdwg.mxu0
    %v5973 = vtanh.pop %v5803
    %v5974 = vtanh.pop %v5805
    %v5975 = vtanh.pop %v5967
    %v5976 = vtanh.pop %v5969
    %5977 = vst [vmem:[%s17] sm:$0xff] %v5973
    %5978 = vst [vmem:[%s17 + $0x8] sm:$0xff] %v5974
    %5979 = vst [vmem:[%s17 + $0x10] sm:$0xff] %v5975
    %5980 = vst [vmem:[%s17 + $0x18] sm:$0xff] %v5976
    %s5981 = smul.u32 %s3657, 3
    %s5982 = sshll.u32 %s5981, 4
    %5983 = dma.done %s3661, %s5982
    %v5984 = vld [vmem:[#allocation4] sm:$0xff]
    %v5985 = vld [vmem:[#allocation4 + $0x8] sm:$0xff]
    %v5986 = vld [vmem:[#allocation4 + $0x10] sm:$0xff]
    %v5987 = vld [vmem:[#allocation4 + $0x18] sm:$0xff]
    %v5988 = vld [vmem:[#allocation4 + $0x20] sm:$0xff]
    %v5989 = vld [vmem:[#allocation4 + $0x28] sm:$0xff]
    %v5990 = vld [vmem:[#allocation4 + $0x30] sm:$0xff]
    %v5991 = vld [vmem:[#allocation4 + $0x38] sm:$0xff]
    %v5992 = vld [vmem:[#allocation4 + $0x40] sm:$0xff]
    %v5993 = vld [vmem:[#allocation4 + $0x48] sm:$0xff]
    %v5994 = vld [vmem:[#allocation4 + $0x50] sm:$0xff]
    %v5995 = vld [vmem:[#allocation4 + $0x58] sm:$0xff]
    %v5996 = vld [vmem:[#allocation4 + $0x60] sm:$0xff]
    %v5997 = vld [vmem:[#allocation4 + $0x68] sm:$0xff]
    %v5998 = vld [vmem:[#allocation4 + $0x70] sm:$0xff]
    %v5999 = vld [vmem:[#allocation4 + $0x78] sm:$0xff]
    %v6000 = vld [vmem:[#allocation4 + $0x80] sm:$0xff]
    %v6001 = vld [vmem:[#allocation4 + $0x88] sm:$0xff]
    %v6002 = vld [vmem:[#allocation4 + $0x90] sm:$0xff]
    %v6003 = vld [vmem:[#allocation4 + $0x98] sm:$0xff]
    %v6004 = vld [vmem:[#allocation4 + $0xa0] sm:$0xff]
    %v6005 = vld [vmem:[#allocation4 + $0xa8] sm:$0xff]
    %v6006 = vld [vmem:[#allocation4 + $0xb0] sm:$0xff]
    %v6007 = vld [vmem:[#allocation4 + $0xb8] sm:$0xff]
    %v6008 = vld [vmem:[#allocation4 + $0xc0] sm:$0xff]
    %v6009 = vld [vmem:[#allocation4 + $0xc8] sm:$0xff]
    %v6010 = vld [vmem:[#allocation4 + $0xd0] sm:$0xff]
    %v6011 = vld [vmem:[#allocation4 + $0xd8] sm:$0xff]
    %v6012 = vld [vmem:[#allocation4 + $0xe0] sm:$0xff]
    %v6013 = vld [vmem:[#allocation4 + $0xe8] sm:$0xff]
    %v6014 = vld [vmem:[#allocation4 + $0xf0] sm:$0xff]
    %v6015 = vld [vmem:[#allocation4 + $0xf8] sm:$0xff]
    %v6016 = vld [vmem:[#allocation4 + $0x100] sm:$0xff]
    %v6017 = vld [vmem:[#allocation4 + $0x108] sm:$0xff]
    %v6018 = vld [vmem:[#allocation4 + $0x110] sm:$0xff]
    %v6019 = vld [vmem:[#allocation4 + $0x118] sm:$0xff]
    %v6020 = vld [vmem:[#allocation4 + $0x120] sm:$0xff]
    %v6021 = vld [vmem:[#allocation4 + $0x128] sm:$0xff]
    %v6022 = vld [vmem:[#allocation4 + $0x130] sm:$0xff]
    %v6023 = vld [vmem:[#allocation4 + $0x138] sm:$0xff]
    %v6024 = vld [vmem:[#allocation4 + $0x140] sm:$0xff]
    %v6025 = vld [vmem:[#allocation4 + $0x148] sm:$0xff]
    %v6026 = vld [vmem:[#allocation4 + $0x150] sm:$0xff]
    %v6027 = vld [vmem:[#allocation4 + $0x158] sm:$0xff]
    %v6028 = vld [vmem:[#allocation4 + $0x160] sm:$0xff]
    %v6029 = vld [vmem:[#allocation4 + $0x168] sm:$0xff]
    %v6030 = vld [vmem:[#allocation4 + $0x170] sm:$0xff]
    %v6031 = vld [vmem:[#allocation4 + $0x178] sm:$0xff]
    %v6032 = vld [vmem:[#allocation4 + $0x180] sm:$0xff]
    %v6033 = vld [vmem:[#allocation4 + $0x188] sm:$0xff]
    %v6034 = vld [vmem:[#allocation4 + $0x190] sm:$0xff]
    %v6035 = vld [vmem:[#allocation4 + $0x198] sm:$0xff]
    %v6036 = vld [vmem:[#allocation4 + $0x1a0] sm:$0xff]
    %v6037 = vld [vmem:[#allocation4 + $0x1a8] sm:$0xff]
    %v6038 = vld [vmem:[#allocation4 + $0x1b0] sm:$0xff]
    %v6039 = vld [vmem:[#allocation4 + $0x1b8] sm:$0xff]
    %v6040 = vld [vmem:[#allocation4 + $0x1c0] sm:$0xff]
    %v6041 = vld [vmem:[#allocation4 + $0x1c8] sm:$0xff]
    %v6042 = vld [vmem:[#allocation4 + $0x1d0] sm:$0xff]
    %v6043 = vld [vmem:[#allocation4 + $0x1d8] sm:$0xff]
    %v6044 = vld [vmem:[#allocation4 + $0x1e0] sm:$0xff]
    %v6045 = vld [vmem:[#allocation4 + $0x1e8] sm:$0xff]
    %v6046 = vld [vmem:[#allocation4 + $0x1f0] sm:$0xff]
    %v6047 = vld [vmem:[#allocation4 + $0x1f8] sm:$0xff]
    %v6048 = vld [vmem:[#allocation4 + $0x200] sm:$0xff]
    %v6049 = vld [vmem:[#allocation4 + $0x208] sm:$0xff]
    %v6050 = vld [vmem:[#allocation4 + $0x210] sm:$0xff]
    %v6051 = vld [vmem:[#allocation4 + $0x218] sm:$0xff]
    %v6052 = vld [vmem:[#allocation4 + $0x220] sm:$0xff]
    %v6053 = vld [vmem:[#allocation4 + $0x228] sm:$0xff]
    %v6054 = vld [vmem:[#allocation4 + $0x230] sm:$0xff]
    %v6055 = vld [vmem:[#allocation4 + $0x238] sm:$0xff]
    %v6056 = vld [vmem:[#allocation4 + $0x240] sm:$0xff]
    %v6057 = vld [vmem:[#allocation4 + $0x248] sm:$0xff]
    %v6058 = vld [vmem:[#allocation4 + $0x250] sm:$0xff]
    %v6059 = vld [vmem:[#allocation4 + $0x258] sm:$0xff]
    %v6060 = vld [vmem:[#allocation4 + $0x260] sm:$0xff]
    %v6061 = vld [vmem:[#allocation4 + $0x268] sm:$0xff]
    %v6062 = vld [vmem:[#allocation4 + $0x270] sm:$0xff]
    %v6063 = vld [vmem:[#allocation4 + $0x278] sm:$0xff]
    %v6064 = vld [vmem:[#allocation4 + $0x280] sm:$0xff]
    %v6065 = vld [vmem:[#allocation4 + $0x288] sm:$0xff]
    %v6066 = vld [vmem:[#allocation4 + $0x290] sm:$0xff]
    %v6067 = vld [vmem:[#allocation4 + $0x298] sm:$0xff]
    %v6068 = vld [vmem:[#allocation4 + $0x2a0] sm:$0xff]
    %v6069 = vld [vmem:[#allocation4 + $0x2a8] sm:$0xff]
    %v6070 = vld [vmem:[#allocation4 + $0x2b0] sm:$0xff]
    %v6071 = vld [vmem:[#allocation4 + $0x2b8] sm:$0xff]
    %v6072 = vld [vmem:[#allocation4 + $0x2c0] sm:$0xff]
    %v6073 = vld [vmem:[#allocation4 + $0x2c8] sm:$0xff]
    %v6074 = vld [vmem:[#allocation4 + $0x2d0] sm:$0xff]
    %v6075 = vld [vmem:[#allocation4 + $0x2d8] sm:$0xff]
    %v6076 = vld [vmem:[#allocation4 + $0x2e0] sm:$0xff]
    %v6077 = vld [vmem:[#allocation4 + $0x2e8] sm:$0xff]
    %v6078 = vld [vmem:[#allocation4 + $0x2f0] sm:$0xff]
    %v6079 = vld [vmem:[#allocation4 + $0x2f8] sm:$0xff]
    %v6080 = vld [vmem:[%s15 + $0x4] sm:$0x7]
    %v6081 = vunpack.c.0.s8 %v5984
    %v6082 = vunpack.c.0.s8 %v5985
    %v6083 = vunpack.c.0.s8 %v5986
    %v6084 = vunpack.c.1.s8 %v5984
    %v6085 = vunpack.c.1.s8 %v5985
    %v6086 = vunpack.c.1.s8 %v5986
    %v6087 = vunpack.c.2.s8 %v5984
    %v6088 = vunpack.c.2.s8 %v5985
    %v6089 = vunpack.c.2.s8 %v5986
    %v6090 = vunpack.c.3.s8 %v5984
    %v6091 = vunpack.c.3.s8 %v5985
    %v6092 = vunpack.c.3.s8 %v5986
    %v6093 = vunpack.c.0.s8 %v5987
    %v6094 = vunpack.c.0.s8 %v5988
    %v6095 = vunpack.c.0.s8 %v5989
    %v6096 = vunpack.c.1.s8 %v5987
    %v6097 = vunpack.c.1.s8 %v5988
    %v6098 = vunpack.c.1.s8 %v5989
    %v6099 = vunpack.c.2.s8 %v5987
    %v6100 = vunpack.c.2.s8 %v5988
    %v6101 = vunpack.c.2.s8 %v5989
    %v6102 = vunpack.c.3.s8 %v5987
    %v6103 = vunpack.c.3.s8 %v5988
    %v6104 = vunpack.c.3.s8 %v5989
    %v6105 = vunpack.c.0.s8 %v5990
    %v6106 = vunpack.c.0.s8 %v5991
    %v6107 = vunpack.c.0.s8 %v5992
    %v6108 = vunpack.c.1.s8 %v5990
    %v6109 = vunpack.c.1.s8 %v5991
    %v6110 = vunpack.c.1.s8 %v5992
    %v6111 = vunpack.c.2.s8 %v5990
    %v6112 = vunpack.c.2.s8 %v5991
    %v6113 = vunpack.c.2.s8 %v5992
    %v6114 = vunpack.c.3.s8 %v5990
    %v6115 = vunpack.c.3.s8 %v5991
    %v6116 = vunpack.c.3.s8 %v5992
    %v6117 = vunpack.c.0.s8 %v5993
    %v6118 = vunpack.c.0.s8 %v5994
    %v6119 = vunpack.c.0.s8 %v5995
    %v6120 = vunpack.c.1.s8 %v5993
    %v6121 = vunpack.c.1.s8 %v5994
    %v6122 = vunpack.c.1.s8 %v5995
    %v6123 = vunpack.c.2.s8 %v5993
    %v6124 = vunpack.c.2.s8 %v5994
    %v6125 = vunpack.c.2.s8 %v5995
    %v6126 = vunpack.c.3.s8 %v5993
    %v6127 = vunpack.c.3.s8 %v5994
    %v6128 = vunpack.c.3.s8 %v5995
    %v6129 = vunpack.c.0.s8 %v5996
    %v6130 = vunpack.c.0.s8 %v5997
    %v6131 = vunpack.c.0.s8 %v5998
    %v6132 = vunpack.c.1.s8 %v5996
    %v6133 = vunpack.c.1.s8 %v5997
    %v6134 = vunpack.c.1.s8 %v5998
    %v6135 = vunpack.c.2.s8 %v5996
    %v6136 = vunpack.c.2.s8 %v5997
    %v6137 = vunpack.c.2.s8 %v5998
    %v6138 = vunpack.c.3.s8 %v5996
    %v6139 = vunpack.c.3.s8 %v5997
    %v6140 = vunpack.c.3.s8 %v5998
    %v6141 = vunpack.c.0.s8 %v5999
    %v6142 = vunpack.c.0.s8 %v6000
    %v6143 = vunpack.c.0.s8 %v6001
    %v6144 = vunpack.c.1.s8 %v5999
    %v6145 = vunpack.c.1.s8 %v6000
    %v6146 = vunpack.c.1.s8 %v6001
    %v6147 = vunpack.c.2.s8 %v5999
    %v6148 = vunpack.c.2.s8 %v6000
    %v6149 = vunpack.c.2.s8 %v6001
    %v6150 = vunpack.c.3.s8 %v5999
    %v6151 = vunpack.c.3.s8 %v6000
    %v6152 = vunpack.c.3.s8 %v6001
    %v6153 = vunpack.c.0.s8 %v6002
    %v6154 = vunpack.c.0.s8 %v6003
    %v6155 = vunpack.c.0.s8 %v6004
    %v6156 = vunpack.c.1.s8 %v6002
    %v6157 = vunpack.c.1.s8 %v6003
    %v6158 = vunpack.c.1.s8 %v6004
    %v6159 = vunpack.c.2.s8 %v6002
    %v6160 = vunpack.c.2.s8 %v6003
    %v6161 = vunpack.c.2.s8 %v6004
    %v6162 = vunpack.c.3.s8 %v6002
    %v6163 = vunpack.c.3.s8 %v6003
    %v6164 = vunpack.c.3.s8 %v6004
    %v6165 = vunpack.c.0.s8 %v6005
    %v6166 = vunpack.c.0.s8 %v6006
    %v6167 = vunpack.c.0.s8 %v6007
    %v6168 = vunpack.c.1.s8 %v6005
    %v6169 = vunpack.c.1.s8 %v6006
    %v6170 = vunpack.c.1.s8 %v6007
    %v6171 = vunpack.c.2.s8 %v6005
    %v6172 = vunpack.c.2.s8 %v6006
    %v6173 = vunpack.c.2.s8 %v6007
    %v6174 = vunpack.c.3.s8 %v6005
    %v6175 = vunpack.c.3.s8 %v6006
    %v6176 = vunpack.c.3.s8 %v6007
    %v6177 = vunpack.c.0.s8 %v6008
    %v6178 = vunpack.c.0.s8 %v6009
    %v6179 = vunpack.c.0.s8 %v6010
    %v6180 = vunpack.c.1.s8 %v6008
    %v6181 = vunpack.c.1.s8 %v6009
    %v6182 = vunpack.c.1.s8 %v6010
    %v6183 = vunpack.c.2.s8 %v6008
    %v6184 = vunpack.c.2.s8 %v6009
    %v6185 = vunpack.c.2.s8 %v6010
    %v6186 = vunpack.c.3.s8 %v6008
    %v6187 = vunpack.c.3.s8 %v6009
    %v6188 = vunpack.c.3.s8 %v6010
    %v6189 = vunpack.c.0.s8 %v6011
    %v6190 = vunpack.c.0.s8 %v6012
    %v6191 = vunpack.c.0.s8 %v6013
    %v6192 = vunpack.c.1.s8 %v6011
    %v6193 = vunpack.c.1.s8 %v6012
    %v6194 = vunpack.c.1.s8 %v6013
    %v6195 = vunpack.c.2.s8 %v6011
    %v6196 = vunpack.c.2.s8 %v6012
    %v6197 = vunpack.c.2.s8 %v6013
    %v6198 = vunpack.c.3.s8 %v6011
    %v6199 = vunpack.c.3.s8 %v6012
    %v6200 = vunpack.c.3.s8 %v6013
    %v6201 = vunpack.c.0.s8 %v6014
    %v6202 = vunpack.c.0.s8 %v6015
    %v6203 = vunpack.c.0.s8 %v6016
    %v6204 = vunpack.c.1.s8 %v6014
    %v6205 = vunpack.c.1.s8 %v6015
    %v6206 = vunpack.c.1.s8 %v6016
    %v6207 = vunpack.c.2.s8 %v6014
    %v6208 = vunpack.c.2.s8 %v6015
    %v6209 = vunpack.c.2.s8 %v6016
    %v6210 = vunpack.c.3.s8 %v6014
    %v6211 = vunpack.c.3.s8 %v6015
    %v6212 = vunpack.c.3.s8 %v6016
    %v6213 = vunpack.c.0.s8 %v6017
    %v6214 = vunpack.c.0.s8 %v6018
    %v6215 = vunpack.c.0.s8 %v6019
    %v6216 = vunpack.c.1.s8 %v6017
    %v6217 = vunpack.c.1.s8 %v6018
    %v6218 = vunpack.c.1.s8 %v6019
    %v6219 = vunpack.c.2.s8 %v6017
    %v6220 = vunpack.c.2.s8 %v6018
    %v6221 = vunpack.c.2.s8 %v6019
    %v6222 = vunpack.c.3.s8 %v6017
    %v6223 = vunpack.c.3.s8 %v6018
    %v6224 = vunpack.c.3.s8 %v6019
    %v6225 = vunpack.c.0.s8 %v6020
    %v6226 = vunpack.c.0.s8 %v6021
    %v6227 = vunpack.c.0.s8 %v6022
    %v6228 = vunpack.c.1.s8 %v6020
    %v6229 = vunpack.c.1.s8 %v6021
    %v6230 = vunpack.c.1.s8 %v6022
    %v6231 = vunpack.c.2.s8 %v6020
    %v6232 = vunpack.c.2.s8 %v6021
    %v6233 = vunpack.c.2.s8 %v6022
    %v6234 = vunpack.c.3.s8 %v6020
    %v6235 = vunpack.c.3.s8 %v6021
    %v6236 = vunpack.c.3.s8 %v6022
    %v6237 = vunpack.c.0.s8 %v6023
    %v6238 = vunpack.c.0.s8 %v6024
    %v6239 = vunpack.c.0.s8 %v6025
    %v6240 = vunpack.c.1.s8 %v6023
    %v6241 = vunpack.c.1.s8 %v6024
    %v6242 = vunpack.c.1.s8 %v6025
    %v6243 = vunpack.c.2.s8 %v6023
    %v6244 = vunpack.c.2.s8 %v6024
    %v6245 = vunpack.c.2.s8 %v6025
    %v6246 = vunpack.c.3.s8 %v6023
    %v6247 = vunpack.c.3.s8 %v6024
    %v6248 = vunpack.c.3.s8 %v6025
    %v6249 = vunpack.c.0.s8 %v6026
    %v6250 = vunpack.c.0.s8 %v6027
    %v6251 = vunpack.c.0.s8 %v6028
    %v6252 = vunpack.c.1.s8 %v6026
    %v6253 = vunpack.c.1.s8 %v6027
    %v6254 = vunpack.c.1.s8 %v6028
    %v6255 = vunpack.c.2.s8 %v6026
    %v6256 = vunpack.c.2.s8 %v6027
    %v6257 = vunpack.c.2.s8 %v6028
    %v6258 = vunpack.c.3.s8 %v6026
    %v6259 = vunpack.c.3.s8 %v6027
    %v6260 = vunpack.c.3.s8 %v6028
    %v6261 = vunpack.c.0.s8 %v6029
    %v6262 = vunpack.c.0.s8 %v6030
    %v6263 = vunpack.c.0.s8 %v6031
    %v6264 = vunpack.c.1.s8 %v6029
    %v6265 = vunpack.c.1.s8 %v6030
    %v6266 = vunpack.c.1.s8 %v6031
    %v6267 = vunpack.c.2.s8 %v6029
    %v6268 = vunpack.c.2.s8 %v6030
    %v6269 = vunpack.c.2.s8 %v6031
    %v6270 = vunpack.c.3.s8 %v6029
    %v6271 = vunpack.c.3.s8 %v6030
    %v6272 = vunpack.c.3.s8 %v6031
    %v6273 = vunpack.c.0.s8 %v6032
    %v6274 = vunpack.c.0.s8 %v6033
    %v6275 = vunpack.c.0.s8 %v6034
    %v6276 = vunpack.c.1.s8 %v6032
    %v6277 = vunpack.c.1.s8 %v6033
    %v6278 = vunpack.c.1.s8 %v6034
    %v6279 = vunpack.c.2.s8 %v6032
    %v6280 = vunpack.c.2.s8 %v6033
    %v6281 = vunpack.c.2.s8 %v6034
    %v6282 = vunpack.c.3.s8 %v6032
    %v6283 = vunpack.c.3.s8 %v6033
    %v6284 = vunpack.c.3.s8 %v6034
    %v6285 = vunpack.c.0.s8 %v6035
    %v6286 = vunpack.c.0.s8 %v6036
    %v6287 = vunpack.c.0.s8 %v6037
    %v6288 = vunpack.c.1.s8 %v6035
    %v6289 = vunpack.c.1.s8 %v6036
    %v6290 = vunpack.c.1.s8 %v6037
    %v6291 = vunpack.c.2.s8 %v6035
    %v6292 = vunpack.c.2.s8 %v6036
    %v6293 = vunpack.c.2.s8 %v6037
    %v6294 = vunpack.c.3.s8 %v6035
    %v6295 = vunpack.c.3.s8 %v6036
    %v6296 = vunpack.c.3.s8 %v6037
    %v6297 = vunpack.c.0.s8 %v6038
    %v6298 = vunpack.c.0.s8 %v6039
    %v6299 = vunpack.c.0.s8 %v6040
    %v6300 = vunpack.c.1.s8 %v6038
    %v6301 = vunpack.c.1.s8 %v6039
    %v6302 = vunpack.c.1.s8 %v6040
    %v6303 = vunpack.c.2.s8 %v6038
    %v6304 = vunpack.c.2.s8 %v6039
    %v6305 = vunpack.c.2.s8 %v6040
    %v6306 = vunpack.c.3.s8 %v6038
    %v6307 = vunpack.c.3.s8 %v6039
    %v6308 = vunpack.c.3.s8 %v6040
    %v6309 = vunpack.c.0.s8 %v6041
    %v6310 = vunpack.c.0.s8 %v6042
    %v6311 = vunpack.c.0.s8 %v6043
    %v6312 = vunpack.c.1.s8 %v6041
    %v6313 = vunpack.c.1.s8 %v6042
    %v6314 = vunpack.c.1.s8 %v6043
    %v6315 = vunpack.c.2.s8 %v6041
    %v6316 = vunpack.c.2.s8 %v6042
    %v6317 = vunpack.c.2.s8 %v6043
    %v6318 = vunpack.c.3.s8 %v6041
    %v6319 = vunpack.c.3.s8 %v6042
    %v6320 = vunpack.c.3.s8 %v6043
    %v6321 = vunpack.c.0.s8 %v6044
    %v6322 = vunpack.c.0.s8 %v6045
    %v6323 = vunpack.c.0.s8 %v6046
    %v6324 = vunpack.c.1.s8 %v6044
    %v6325 = vunpack.c.1.s8 %v6045
    %v6326 = vunpack.c.1.s8 %v6046
    %v6327 = vunpack.c.2.s8 %v6044
    %v6328 = vunpack.c.2.s8 %v6045
    %v6329 = vunpack.c.2.s8 %v6046
    %v6330 = vunpack.c.3.s8 %v6044
    %v6331 = vunpack.c.3.s8 %v6045
    %v6332 = vunpack.c.3.s8 %v6046
    %v6333 = vunpack.c.0.s8 %v6047
    %v6334 = vunpack.c.0.s8 %v6048
    %v6335 = vunpack.c.0.s8 %v6049
    %v6336 = vunpack.c.1.s8 %v6047
    %v6337 = vunpack.c.1.s8 %v6048
    %v6338 = vunpack.c.1.s8 %v6049
    %v6339 = vunpack.c.2.s8 %v6047
    %v6340 = vunpack.c.2.s8 %v6048
    %v6341 = vunpack.c.2.s8 %v6049
    %v6342 = vunpack.c.3.s8 %v6047
    %v6343 = vunpack.c.3.s8 %v6048
    %v6344 = vunpack.c.3.s8 %v6049
    %v6345 = vunpack.c.0.s8 %v6050
    %v6346 = vunpack.c.0.s8 %v6051
    %v6347 = vunpack.c.0.s8 %v6052
    %v6348 = vunpack.c.1.s8 %v6050
    %v6349 = vunpack.c.1.s8 %v6051
    %v6350 = vunpack.c.1.s8 %v6052
    %v6351 = vunpack.c.2.s8 %v6050
    %v6352 = vunpack.c.2.s8 %v6051
    %v6353 = vunpack.c.2.s8 %v6052
    %v6354 = vunpack.c.3.s8 %v6050
    %v6355 = vunpack.c.3.s8 %v6051
    %v6356 = vunpack.c.3.s8 %v6052
    %v6357 = vunpack.c.0.s8 %v6053
    %v6358 = vunpack.c.0.s8 %v6054
    %v6359 = vunpack.c.0.s8 %v6055
    %v6360 = vunpack.c.1.s8 %v6053
    %v6361 = vunpack.c.1.s8 %v6054
    %v6362 = vunpack.c.1.s8 %v6055
    %v6363 = vunpack.c.2.s8 %v6053
    %v6364 = vunpack.c.2.s8 %v6054
    %v6365 = vunpack.c.2.s8 %v6055
    %v6366 = vunpack.c.3.s8 %v6053
    %v6367 = vunpack.c.3.s8 %v6054
    %v6368 = vunpack.c.3.s8 %v6055
    %v6369 = vunpack.c.0.s8 %v6056
    %v6370 = vunpack.c.0.s8 %v6057
    %v6371 = vunpack.c.0.s8 %v6058
    %v6372 = vunpack.c.1.s8 %v6056
    %v6373 = vunpack.c.1.s8 %v6057
    %v6374 = vunpack.c.1.s8 %v6058
    %v6375 = vunpack.c.2.s8 %v6056
    %v6376 = vunpack.c.2.s8 %v6057
    %v6377 = vunpack.c.2.s8 %v6058
    %v6378 = vunpack.c.3.s8 %v6056
    %v6379 = vunpack.c.3.s8 %v6057
    %v6380 = vunpack.c.3.s8 %v6058
    %v6381 = vunpack.c.0.s8 %v6059
    %v6382 = vunpack.c.0.s8 %v6060
    %v6383 = vunpack.c.0.s8 %v6061
    %v6384 = vunpack.c.1.s8 %v6059
    %v6385 = vunpack.c.1.s8 %v6060
    %v6386 = vunpack.c.1.s8 %v6061
    %v6387 = vunpack.c.2.s8 %v6059
    %v6388 = vunpack.c.2.s8 %v6060
    %v6389 = vunpack.c.2.s8 %v6061
    %v6390 = vunpack.c.3.s8 %v6059
    %v6391 = vunpack.c.3.s8 %v6060
    %v6392 = vunpack.c.3.s8 %v6061
    %v6393 = vunpack.c.0.s8 %v6062
    %v6394 = vunpack.c.0.s8 %v6063
    %v6395 = vunpack.c.0.s8 %v6064
    %v6396 = vunpack.c.1.s8 %v6062
    %v6397 = vunpack.c.1.s8 %v6063
    %v6398 = vunpack.c.1.s8 %v6064
    %v6399 = vunpack.c.2.s8 %v6062
    %v6400 = vunpack.c.2.s8 %v6063
    %v6401 = vunpack.c.2.s8 %v6064
    %v6402 = vunpack.c.3.s8 %v6062
    %v6403 = vunpack.c.3.s8 %v6063
    %v6404 = vunpack.c.3.s8 %v6064
    %v6405 = vunpack.c.0.s8 %v6065
    %v6406 = vunpack.c.0.s8 %v6066
    %v6407 = vunpack.c.0.s8 %v6067
    %v6408 = vunpack.c.1.s8 %v6065
    %v6409 = vunpack.c.1.s8 %v6066
    %v6410 = vunpack.c.1.s8 %v6067
    %v6411 = vunpack.c.2.s8 %v6065
    %v6412 = vunpack.c.2.s8 %v6066
    %v6413 = vunpack.c.2.s8 %v6067
    %v6414 = vunpack.c.3.s8 %v6065
    %v6415 = vunpack.c.3.s8 %v6066
    %v6416 = vunpack.c.3.s8 %v6067
    %v6417 = vunpack.c.0.s8 %v6068
    %v6418 = vunpack.c.0.s8 %v6069
    %v6419 = vunpack.c.0.s8 %v6070
    %v6420 = vunpack.c.1.s8 %v6068
    %v6421 = vunpack.c.1.s8 %v6069
    %v6422 = vunpack.c.1.s8 %v6070
    %v6423 = vunpack.c.2.s8 %v6068
    %v6424 = vunpack.c.2.s8 %v6069
    %v6425 = vunpack.c.2.s8 %v6070
    %v6426 = vunpack.c.3.s8 %v6068
    %v6427 = vunpack.c.3.s8 %v6069
    %v6428 = vunpack.c.3.s8 %v6070
    %v6429 = vunpack.c.0.s8 %v6071
    %v6430 = vunpack.c.0.s8 %v6072
    %v6431 = vunpack.c.0.s8 %v6073
    %v6432 = vunpack.c.1.s8 %v6071
    %v6433 = vunpack.c.1.s8 %v6072
    %v6434 = vunpack.c.1.s8 %v6073
    %v6435 = vunpack.c.2.s8 %v6071
    %v6436 = vunpack.c.2.s8 %v6072
    %v6437 = vunpack.c.2.s8 %v6073
    %v6438 = vunpack.c.3.s8 %v6071
    %v6439 = vunpack.c.3.s8 %v6072
    %v6440 = vunpack.c.3.s8 %v6073
    %v6441 = vunpack.c.0.s8 %v6074
    %v6442 = vunpack.c.0.s8 %v6075
    %v6443 = vunpack.c.0.s8 %v6076
    %v6444 = vunpack.c.1.s8 %v6074
    %v6445 = vunpack.c.1.s8 %v6075
    %v6446 = vunpack.c.1.s8 %v6076
    %v6447 = vunpack.c.2.s8 %v6074
    %v6448 = vunpack.c.2.s8 %v6075
    %v6449 = vunpack.c.2.s8 %v6076
    %v6450 = vunpack.c.3.s8 %v6074
    %v6451 = vunpack.c.3.s8 %v6075
    %v6452 = vunpack.c.3.s8 %v6076
    %v6453 = vunpack.c.0.s8 %v6077
    %v6454 = vunpack.c.0.s8 %v6078
    %v6455 = vunpack.c.0.s8 %v6079
    %v6456 = vunpack.c.1.s8 %v6077
    %v6457 = vunpack.c.1.s8 %v6078
    %v6458 = vunpack.c.1.s8 %v6079
    %v6459 = vunpack.c.2.s8 %v6077
    %v6460 = vunpack.c.2.s8 %v6078
    %v6461 = vunpack.c.2.s8 %v6079
    %v6462 = vunpack.c.3.s8 %v6077
    %v6463 = vunpack.c.3.s8 %v6078
    %v6464 = vunpack.c.3.s8 %v6079
    %v6465 = vcvt.s32.f32 %v6081
    %v6466 = vcvt.s32.f32 %v6082
    %v6467 = vcvt.s32.f32 %v6083
    %v6468 = vcvt.s32.f32 %v6084
    %v6469 = vcvt.s32.f32 %v6085
    %v6470 = vcvt.s32.f32 %v6086
    %v6471 = vcvt.s32.f32 %v6087
    %v6472 = vcvt.s32.f32 %v6088
    %v6473 = vcvt.s32.f32 %v6089
    %v6474 = vcvt.s32.f32 %v6090
    %v6475 = vcvt.s32.f32 %v6091
    %v6476 = vcvt.s32.f32 %v6092
    %v6477 = vcvt.s32.f32 %v6093
    %v6478 = vcvt.s32.f32 %v6094
    %v6479 = vcvt.s32.f32 %v6095
    %v6480 = vcvt.s32.f32 %v6096
    %v6481 = vcvt.s32.f32 %v6097
    %v6482 = vcvt.s32.f32 %v6098
    %v6483 = vcvt.s32.f32 %v6099
    %v6484 = vcvt.s32.f32 %v6100
    %v6485 = vcvt.s32.f32 %v6101
    %v6486 = vcvt.s32.f32 %v6102
    %v6487 = vcvt.s32.f32 %v6103
    %v6488 = vcvt.s32.f32 %v6104
    %v6489 = vcvt.s32.f32 %v6105
    %v6490 = vcvt.s32.f32 %v6106
    %v6491 = vcvt.s32.f32 %v6107
    %v6492 = vcvt.s32.f32 %v6108
    %v6493 = vcvt.s32.f32 %v6109
    %v6494 = vcvt.s32.f32 %v6110
    %v6495 = vcvt.s32.f32 %v6111
    %v6496 = vcvt.s32.f32 %v6112
    %v6497 = vcvt.s32.f32 %v6113
    %v6498 = vcvt.s32.f32 %v6114
    %v6499 = vcvt.s32.f32 %v6115
    %v6500 = vcvt.s32.f32 %v6116
    %v6501 = vcvt.s32.f32 %v6117
    %v6502 = vcvt.s32.f32 %v6118
    %v6503 = vcvt.s32.f32 %v6119
    %v6504 = vcvt.s32.f32 %v6120
    %v6505 = vcvt.s32.f32 %v6121
    %v6506 = vcvt.s32.f32 %v6122
    %v6507 = vcvt.s32.f32 %v6123
    %v6508 = vcvt.s32.f32 %v6124
    %v6509 = vcvt.s32.f32 %v6125
    %v6510 = vcvt.s32.f32 %v6126
    %v6511 = vcvt.s32.f32 %v6127
    %v6512 = vcvt.s32.f32 %v6128
    %v6513 = vcvt.s32.f32 %v6129
    %v6514 = vcvt.s32.f32 %v6130
    %v6515 = vcvt.s32.f32 %v6131
    %v6516 = vcvt.s32.f32 %v6132
    %v6517 = vcvt.s32.f32 %v6133
    %v6518 = vcvt.s32.f32 %v6134
    %v6519 = vcvt.s32.f32 %v6135
    %v6520 = vcvt.s32.f32 %v6136
    %v6521 = vcvt.s32.f32 %v6137
    %v6522 = vcvt.s32.f32 %v6138
    %v6523 = vcvt.s32.f32 %v6139
    %v6524 = vcvt.s32.f32 %v6140
    %v6525 = vcvt.s32.f32 %v6141
    %v6526 = vcvt.s32.f32 %v6142
    %v6527 = vcvt.s32.f32 %v6143
    %v6528 = vcvt.s32.f32 %v6144
    %v6529 = vcvt.s32.f32 %v6145
    %v6530 = vcvt.s32.f32 %v6146
    %v6531 = vcvt.s32.f32 %v6147
    %v6532 = vcvt.s32.f32 %v6148
    %v6533 = vcvt.s32.f32 %v6149
    %v6534 = vcvt.s32.f32 %v6150
    %v6535 = vcvt.s32.f32 %v6151
    %v6536 = vcvt.s32.f32 %v6152
    %v6537 = vcvt.s32.f32 %v6153
    %v6538 = vcvt.s32.f32 %v6154
    %v6539 = vcvt.s32.f32 %v6155
    %v6540 = vcvt.s32.f32 %v6156
    %v6541 = vcvt.s32.f32 %v6157
    %v6542 = vcvt.s32.f32 %v6158
    %v6543 = vcvt.s32.f32 %v6159
    %v6544 = vcvt.s32.f32 %v6160
    %v6545 = vcvt.s32.f32 %v6161
    %v6546 = vcvt.s32.f32 %v6162
    %v6547 = vcvt.s32.f32 %v6163
    %v6548 = vcvt.s32.f32 %v6164
    %v6549 = vcvt.s32.f32 %v6165
    %v6550 = vcvt.s32.f32 %v6166
    %v6551 = vcvt.s32.f32 %v6167
    %v6552 = vcvt.s32.f32 %v6168
    %v6553 = vcvt.s32.f32 %v6169
    %v6554 = vcvt.s32.f32 %v6170
    %v6555 = vcvt.s32.f32 %v6171
    %v6556 = vcvt.s32.f32 %v6172
    %v6557 = vcvt.s32.f32 %v6173
    %v6558 = vcvt.s32.f32 %v6174
    %v6559 = vcvt.s32.f32 %v6175
    %v6560 = vcvt.s32.f32 %v6176
    %v6561 = vcvt.s32.f32 %v6177
    %v6562 = vcvt.s32.f32 %v6178
    %v6563 = vcvt.s32.f32 %v6179
    %v6564 = vcvt.s32.f32 %v6180
    %v6565 = vcvt.s32.f32 %v6181
    %v6566 = vcvt.s32.f32 %v6182
    %v6567 = vcvt.s32.f32 %v6183
    %v6568 = vcvt.s32.f32 %v6184
    %v6569 = vcvt.s32.f32 %v6185
    %v6570 = vcvt.s32.f32 %v6186
    %v6571 = vcvt.s32.f32 %v6187
    %v6572 = vcvt.s32.f32 %v6188
    %v6573 = vcvt.s32.f32 %v6189
    %v6574 = vcvt.s32.f32 %v6190
    %v6575 = vcvt.s32.f32 %v6191
    %v6576 = vcvt.s32.f32 %v6192
    %v6577 = vcvt.s32.f32 %v6193
    %v6578 = vcvt.s32.f32 %v6194
    %v6579 = vcvt.s32.f32 %v6195
    %v6580 = vcvt.s32.f32 %v6196
    %v6581 = vcvt.s32.f32 %v6197
    %v6582 = vcvt.s32.f32 %v6198
    %v6583 = vcvt.s32.f32 %v6199
    %v6584 = vcvt.s32.f32 %v6200
    %v6585 = vcvt.s32.f32 %v6201
    %v6586 = vcvt.s32.f32 %v6202
    %v6587 = vcvt.s32.f32 %v6203
    %v6588 = vcvt.s32.f32 %v6204
    %v6589 = vcvt.s32.f32 %v6205
    %v6590 = vcvt.s32.f32 %v6206
    %v6591 = vcvt.s32.f32 %v6207
    %v6592 = vcvt.s32.f32 %v6208
    %v6593 = vcvt.s32.f32 %v6209
    %v6594 = vcvt.s32.f32 %v6210
    %v6595 = vcvt.s32.f32 %v6211
    %v6596 = vcvt.s32.f32 %v6212
    %v6597 = vcvt.s32.f32 %v6213
    %v6598 = vcvt.s32.f32 %v6214
    %v6599 = vcvt.s32.f32 %v6215
    %v6600 = vcvt.s32.f32 %v6216
    %v6601 = vcvt.s32.f32 %v6217
    %v6602 = vcvt.s32.f32 %v6218
    %v6603 = vcvt.s32.f32 %v6219
    %v6604 = vcvt.s32.f32 %v6220
    %v6605 = vcvt.s32.f32 %v6221
    %v6606 = vcvt.s32.f32 %v6222
    %v6607 = vcvt.s32.f32 %v6223
    %v6608 = vcvt.s32.f32 %v6224
    %v6609 = vcvt.s32.f32 %v6225
    %v6610 = vcvt.s32.f32 %v6226
    %v6611 = vcvt.s32.f32 %v6227
    %v6612 = vcvt.s32.f32 %v6228
    %v6613 = vcvt.s32.f32 %v6229
    %v6614 = vcvt.s32.f32 %v6230
    %v6615 = vcvt.s32.f32 %v6231
    %v6616 = vcvt.s32.f32 %v6232
    %v6617 = vcvt.s32.f32 %v6233
    %v6618 = vcvt.s32.f32 %v6234
    %v6619 = vcvt.s32.f32 %v6235
    %v6620 = vcvt.s32.f32 %v6236
    %v6621 = vcvt.s32.f32 %v6237
    %v6622 = vcvt.s32.f32 %v6238
    %v6623 = vcvt.s32.f32 %v6239
    %v6624 = vcvt.s32.f32 %v6240
    %v6625 = vcvt.s32.f32 %v6241
    %v6626 = vcvt.s32.f32 %v6242
    %v6627 = vcvt.s32.f32 %v6243
    %v6628 = vcvt.s32.f32 %v6244
    %v6629 = vcvt.s32.f32 %v6245
    %v6630 = vcvt.s32.f32 %v6246
    %v6631 = vcvt.s32.f32 %v6247
    %v6632 = vcvt.s32.f32 %v6248
    %v6633 = vcvt.s32.f32 %v6249
    %v6634 = vcvt.s32.f32 %v6250
    %v6635 = vcvt.s32.f32 %v6251
    %v6636 = vcvt.s32.f32 %v6252
    %v6637 = vcvt.s32.f32 %v6253
    %v6638 = vcvt.s32.f32 %v6254
    %v6639 = vcvt.s32.f32 %v6255
    %v6640 = vcvt.s32.f32 %v6256
    %v6641 = vcvt.s32.f32 %v6257
    %v6642 = vcvt.s32.f32 %v6258
    %v6643 = vcvt.s32.f32 %v6259
    %v6644 = vcvt.s32.f32 %v6260
    %v6645 = vcvt.s32.f32 %v6261
    %v6646 = vcvt.s32.f32 %v6262
    %v6647 = vcvt.s32.f32 %v6263
    %v6648 = vcvt.s32.f32 %v6264
    %v6649 = vcvt.s32.f32 %v6265
    %v6650 = vcvt.s32.f32 %v6266
    %v6651 = vcvt.s32.f32 %v6267
    %v6652 = vcvt.s32.f32 %v6268
    %v6653 = vcvt.s32.f32 %v6269
    %v6654 = vcvt.s32.f32 %v6270
    %v6655 = vcvt.s32.f32 %v6271
    %v6656 = vcvt.s32.f32 %v6272
    %v6657 = vcvt.s32.f32 %v6273
    %v6658 = vcvt.s32.f32 %v6274
    %v6659 = vcvt.s32.f32 %v6275
    %v6660 = vcvt.s32.f32 %v6276
    %v6661 = vcvt.s32.f32 %v6277
    %v6662 = vcvt.s32.f32 %v6278
    %v6663 = vcvt.s32.f32 %v6279
    %v6664 = vcvt.s32.f32 %v6280
    %v6665 = vcvt.s32.f32 %v6281
    %v6666 = vcvt.s32.f32 %v6282
    %v6667 = vcvt.s32.f32 %v6283
    %v6668 = vcvt.s32.f32 %v6284
    %v6669 = vcvt.s32.f32 %v6285
    %v6670 = vcvt.s32.f32 %v6286
    %v6671 = vcvt.s32.f32 %v6287
    %v6672 = vcvt.s32.f32 %v6288
    %v6673 = vcvt.s32.f32 %v6289
    %v6674 = vcvt.s32.f32 %v6290
    %v6675 = vcvt.s32.f32 %v6291
    %v6676 = vcvt.s32.f32 %v6292
    %v6677 = vcvt.s32.f32 %v6293
    %v6678 = vcvt.s32.f32 %v6294
    %v6679 = vcvt.s32.f32 %v6295
    %v6680 = vcvt.s32.f32 %v6296
    %v6681 = vcvt.s32.f32 %v6297
    %v6682 = vcvt.s32.f32 %v6298
    %v6683 = vcvt.s32.f32 %v6299
    %v6684 = vcvt.s32.f32 %v6300
    %v6685 = vcvt.s32.f32 %v6301
    %v6686 = vcvt.s32.f32 %v6302
    %v6687 = vcvt.s32.f32 %v6303
    %v6688 = vcvt.s32.f32 %v6304
    %v6689 = vcvt.s32.f32 %v6305
    %v6690 = vcvt.s32.f32 %v6306
    %v6691 = vcvt.s32.f32 %v6307
    %v6692 = vcvt.s32.f32 %v6308
    %v6693 = vcvt.s32.f32 %v6309
    %v6694 = vcvt.s32.f32 %v6310
    %v6695 = vcvt.s32.f32 %v6311
    %v6696 = vcvt.s32.f32 %v6312
    %v6697 = vcvt.s32.f32 %v6313
    %v6698 = vcvt.s32.f32 %v6314
    %v6699 = vcvt.s32.f32 %v6315
    %v6700 = vcvt.s32.f32 %v6316
    %v6701 = vcvt.s32.f32 %v6317
    %v6702 = vcvt.s32.f32 %v6318
    %v6703 = vcvt.s32.f32 %v6319
    %v6704 = vcvt.s32.f32 %v6320
    %v6705 = vcvt.s32.f32 %v6321
    %v6706 = vcvt.s32.f32 %v6322
    %v6707 = vcvt.s32.f32 %v6323
    %v6708 = vcvt.s32.f32 %v6324
    %v6709 = vcvt.s32.f32 %v6325
    %v6710 = vcvt.s32.f32 %v6326
    %v6711 = vcvt.s32.f32 %v6327
    %v6712 = vcvt.s32.f32 %v6328
    %v6713 = vcvt.s32.f32 %v6329
    %v6714 = vcvt.s32.f32 %v6330
    %v6715 = vcvt.s32.f32 %v6331
    %v6716 = vcvt.s32.f32 %v6332
    %v6717 = vcvt.s32.f32 %v6333
    %v6718 = vcvt.s32.f32 %v6334
    %v6719 = vcvt.s32.f32 %v6335
    %v6720 = vcvt.s32.f32 %v6336
    %v6721 = vcvt.s32.f32 %v6337
    %v6722 = vcvt.s32.f32 %v6338
    %v6723 = vcvt.s32.f32 %v6339
    %v6724 = vcvt.s32.f32 %v6340
    %v6725 = vcvt.s32.f32 %v6341
    %v6726 = vcvt.s32.f32 %v6342
    %v6727 = vcvt.s32.f32 %v6343
    %v6728 = vcvt.s32.f32 %v6344
    %v6729 = vcvt.s32.f32 %v6345
    %v6730 = vcvt.s32.f32 %v6346
    %v6731 = vcvt.s32.f32 %v6347
    %v6732 = vcvt.s32.f32 %v6348
    %v6733 = vcvt.s32.f32 %v6349
    %v6734 = vcvt.s32.f32 %v6350
    %v6735 = vcvt.s32.f32 %v6351
    %v6736 = vcvt.s32.f32 %v6352
    %v6737 = vcvt.s32.f32 %v6353
    %v6738 = vcvt.s32.f32 %v6354
    %v6739 = vcvt.s32.f32 %v6355
    %v6740 = vcvt.s32.f32 %v6356
    %v6741 = vcvt.s32.f32 %v6357
    %v6742 = vcvt.s32.f32 %v6358
    %v6743 = vcvt.s32.f32 %v6359
    %v6744 = vcvt.s32.f32 %v6360
    %v6745 = vcvt.s32.f32 %v6361
    %v6746 = vcvt.s32.f32 %v6362
    %v6747 = vcvt.s32.f32 %v6363
    %v6748 = vcvt.s32.f32 %v6364
    %v6749 = vcvt.s32.f32 %v6365
    %v6750 = vcvt.s32.f32 %v6366
    %v6751 = vcvt.s32.f32 %v6367
    %v6752 = vcvt.s32.f32 %v6368
    %v6753 = vcvt.s32.f32 %v6369
    %v6754 = vcvt.s32.f32 %v6370
    %v6755 = vcvt.s32.f32 %v6371
    %v6756 = vcvt.s32.f32 %v6372
    %v6757 = vcvt.s32.f32 %v6373
    %v6758 = vcvt.s32.f32 %v6374
    %v6759 = vcvt.s32.f32 %v6375
    %v6760 = vcvt.s32.f32 %v6376
    %v6761 = vcvt.s32.f32 %v6377
    %v6762 = vcvt.s32.f32 %v6378
    %v6763 = vcvt.s32.f32 %v6379
    %v6764 = vcvt.s32.f32 %v6380
    %v6765 = vcvt.s32.f32 %v6381
    %v6766 = vcvt.s32.f32 %v6382
    %v6767 = vcvt.s32.f32 %v6383
    %v6768 = vcvt.s32.f32 %v6384
    %v6769 = vcvt.s32.f32 %v6385
    %v6770 = vcvt.s32.f32 %v6386
    %v6771 = vcvt.s32.f32 %v6387
    %v6772 = vcvt.s32.f32 %v6388
    %v6773 = vcvt.s32.f32 %v6389
    %v6774 = vcvt.s32.f32 %v6390
    %v6775 = vcvt.s32.f32 %v6391
    %v6776 = vcvt.s32.f32 %v6392
    %v6777 = vcvt.s32.f32 %v6393
    %v6778 = vcvt.s32.f32 %v6394
    %v6779 = vcvt.s32.f32 %v6395
    %v6780 = vcvt.s32.f32 %v6396
    %v6781 = vcvt.s32.f32 %v6397
    %v6782 = vcvt.s32.f32 %v6398
    %v6783 = vcvt.s32.f32 %v6399
    %v6784 = vcvt.s32.f32 %v6400
    %v6785 = vcvt.s32.f32 %v6401
    %v6786 = vcvt.s32.f32 %v6402
    %v6787 = vcvt.s32.f32 %v6403
    %v6788 = vcvt.s32.f32 %v6404
    %v6789 = vcvt.s32.f32 %v6405
    %v6790 = vcvt.s32.f32 %v6406
    %v6791 = vcvt.s32.f32 %v6407
    %v6792 = vcvt.s32.f32 %v6408
    %v6793 = vcvt.s32.f32 %v6409
    %v6794 = vcvt.s32.f32 %v6410
    %v6795 = vcvt.s32.f32 %v6411
    %v6796 = vcvt.s32.f32 %v6412
    %v6797 = vcvt.s32.f32 %v6413
    %v6798 = vcvt.s32.f32 %v6414
    %v6799 = vcvt.s32.f32 %v6415
    %v6800 = vcvt.s32.f32 %v6416
    %v6801 = vcvt.s32.f32 %v6417
    %v6802 = vcvt.s32.f32 %v6418
    %v6803 = vcvt.s32.f32 %v6419
    %v6804 = vcvt.s32.f32 %v6420
    %v6805 = vcvt.s32.f32 %v6421
    %v6806 = vcvt.s32.f32 %v6422
    %v6807 = vcvt.s32.f32 %v6423
    %v6808 = vcvt.s32.f32 %v6424
    %v6809 = vcvt.s32.f32 %v6425
    %v6810 = vcvt.s32.f32 %v6426
    %v6811 = vcvt.s32.f32 %v6427
    %v6812 = vcvt.s32.f32 %v6428
    %v6813 = vcvt.s32.f32 %v6429
    %v6814 = vcvt.s32.f32 %v6430
    %v6815 = vcvt.s32.f32 %v6431
    %v6816 = vcvt.s32.f32 %v6432
    %v6817 = vcvt.s32.f32 %v6433
    %v6818 = vcvt.s32.f32 %v6434
    %v6819 = vcvt.s32.f32 %v6435
    %v6820 = vcvt.s32.f32 %v6436
    %v6821 = vcvt.s32.f32 %v6437
    %v6822 = vcvt.s32.f32 %v6438
    %v6823 = vcvt.s32.f32 %v6439
    %v6824 = vcvt.s32.f32 %v6440
    %v6825 = vcvt.s32.f32 %v6441
    %v6826 = vcvt.s32.f32 %v6442
    %v6827 = vcvt.s32.f32 %v6443
    %v6828 = vcvt.s32.f32 %v6444
    %v6829 = vcvt.s32.f32 %v6445
    %v6830 = vcvt.s32.f32 %v6446
    %v6831 = vcvt.s32.f32 %v6447
    %v6832 = vcvt.s32.f32 %v6448
    %v6833 = vcvt.s32.f32 %v6449
    %v6834 = vcvt.s32.f32 %v6450
    %v6835 = vcvt.s32.f32 %v6451
    %v6836 = vcvt.s32.f32 %v6452
    %v6837 = vcvt.s32.f32 %v6453
    %v6838 = vcvt.s32.f32 %v6454
    %v6839 = vcvt.s32.f32 %v6455
    %v6840 = vcvt.s32.f32 %v6456
    %v6841 = vcvt.s32.f32 %v6457
    %v6842 = vcvt.s32.f32 %v6458
    %v6843 = vcvt.s32.f32 %v6459
    %v6844 = vcvt.s32.f32 %v6460
    %v6845 = vcvt.s32.f32 %v6461
    %v6846 = vcvt.s32.f32 %v6462
    %v6847 = vcvt.s32.f32 %v6463
    %v6848 = vcvt.s32.f32 %v6464
    %v6850 = vlaneseq
    %v6851 = vshrl.u32 %v6850, 7
    %v6852 = vsub.s32 0, %v6851
    %v6853 = vrot.slane %v6080, %v6852
    %v6854 = vlaneseq
    %v6855 = vshrl.u32 %v6854, 7
    %v6856 = vsub.s32 1, %v6855
    %v6857 = vrot.slane %v6080, %v6856
    %v6858 = vlaneseq
    %v6859 = vshrl.u32 %v6858, 7
    %v6860 = vsub.s32 2, %v6859
    %v6861 = vrot.slane %v6080, %v6860
    %v6865 = vmul.f32 %v6465, %v6853
    %v6866 = vmul.f32 %v6466, %v6857
    %v6867 = vmul.f32 %v6467, %v6861
    %v6868 = vmul.f32 %v6468, %v6853
    %v6869 = vmul.f32 %v6469, %v6857
    %v6870 = vmul.f32 %v6470, %v6861
    %v6871 = vmul.f32 %v6471, %v6853
    %v6872 = vmul.f32 %v6472, %v6857
    %v6873 = vmul.f32 %v6473, %v6861
    %v6874 = vmul.f32 %v6474, %v6853
    %v6875 = vmul.f32 %v6475, %v6857
    %v6876 = vmul.f32 %v6476, %v6861
    %v6877 = vmul.f32 %v6477, %v6853
    %v6878 = vmul.f32 %v6478, %v6857
    %v6879 = vmul.f32 %v6479, %v6861
    %v6880 = vmul.f32 %v6480, %v6853
    %v6881 = vmul.f32 %v6481, %v6857
    %v6882 = vmul.f32 %v6482, %v6861
    %v6883 = vmul.f32 %v6483, %v6853
    %v6884 = vmul.f32 %v6484, %v6857
    %v6885 = vmul.f32 %v6485, %v6861
    %v6886 = vmul.f32 %v6486, %v6853
    %v6887 = vmul.f32 %v6487, %v6857
    %v6888 = vmul.f32 %v6488, %v6861
    %v6889 = vmul.f32 %v6489, %v6853
    %v6890 = vmul.f32 %v6490, %v6857
    %v6891 = vmul.f32 %v6491, %v6861
    %v6892 = vmul.f32 %v6492, %v6853
    %v6893 = vmul.f32 %v6493, %v6857
    %v6894 = vmul.f32 %v6494, %v6861
    %v6895 = vmul.f32 %v6495, %v6853
    %v6896 = vmul.f32 %v6496, %v6857
    %v6897 = vmul.f32 %v6497, %v6861
    %v6898 = vmul.f32 %v6498, %v6853
    %v6899 = vmul.f32 %v6499, %v6857
    %v6900 = vmul.f32 %v6500, %v6861
    %v6901 = vmul.f32 %v6501, %v6853
    %v6902 = vmul.f32 %v6502, %v6857
    %v6903 = vmul.f32 %v6503, %v6861
    %v6904 = vmul.f32 %v6504, %v6853
    %v6905 = vmul.f32 %v6505, %v6857
    %v6906 = vmul.f32 %v6506, %v6861
    %v6907 = vmul.f32 %v6507, %v6853
    %v6908 = vmul.f32 %v6508, %v6857
    %v6909 = vmul.f32 %v6509, %v6861
    %v6910 = vmul.f32 %v6510, %v6853
    %v6911 = vmul.f32 %v6511, %v6857
    %v6912 = vmul.f32 %v6512, %v6861
    %v6913 = vmul.f32 %v6513, %v6853
    %v6914 = vmul.f32 %v6514, %v6857
    %v6915 = vmul.f32 %v6515, %v6861
    %v6916 = vmul.f32 %v6516, %v6853
    %v6917 = vmul.f32 %v6517, %v6857
    %v6918 = vmul.f32 %v6518, %v6861
    %v6919 = vmul.f32 %v6519, %v6853
    %v6920 = vmul.f32 %v6520, %v6857
    %v6921 = vmul.f32 %v6521, %v6861
    %v6922 = vmul.f32 %v6522, %v6853
    %v6923 = vmul.f32 %v6523, %v6857
    %v6924 = vmul.f32 %v6524, %v6861
    %v6925 = vmul.f32 %v6525, %v6853
    %v6926 = vmul.f32 %v6526, %v6857
    %v6927 = vmul.f32 %v6527, %v6861
    %v6928 = vmul.f32 %v6528, %v6853
    %v6929 = vmul.f32 %v6529, %v6857
    %v6930 = vmul.f32 %v6530, %v6861
    %v6931 = vmul.f32 %v6531, %v6853
    %v6932 = vmul.f32 %v6532, %v6857
    %v6933 = vmul.f32 %v6533, %v6861
    %v6934 = vmul.f32 %v6534, %v6853
    %v6935 = vmul.f32 %v6535, %v6857
    %v6936 = vmul.f32 %v6536, %v6861
    %v6937 = vmul.f32 %v6537, %v6853
    %v6938 = vmul.f32 %v6538, %v6857
    %v6939 = vmul.f32 %v6539, %v6861
    %v6940 = vmul.f32 %v6540, %v6853
    %v6941 = vmul.f32 %v6541, %v6857
    %v6942 = vmul.f32 %v6542, %v6861
    %v6943 = vmul.f32 %v6543, %v6853
    %v6944 = vmul.f32 %v6544, %v6857
    %v6945 = vmul.f32 %v6545, %v6861
    %v6946 = vmul.f32 %v6546, %v6853
    %v6947 = vmul.f32 %v6547, %v6857
    %v6948 = vmul.f32 %v6548, %v6861
    %v6949 = vmul.f32 %v6549, %v6853
    %v6950 = vmul.f32 %v6550, %v6857
    %v6951 = vmul.f32 %v6551, %v6861
    %v6952 = vmul.f32 %v6552, %v6853
    %v6953 = vmul.f32 %v6553, %v6857
    %v6954 = vmul.f32 %v6554, %v6861
    %v6955 = vmul.f32 %v6555, %v6853
    %v6956 = vmul.f32 %v6556, %v6857
    %v6957 = vmul.f32 %v6557, %v6861
    %v6958 = vmul.f32 %v6558, %v6853
    %v6959 = vmul.f32 %v6559, %v6857
    %v6960 = vmul.f32 %v6560, %v6861
    %v6961 = vmul.f32 %v6561, %v6853
    %v6962 = vmul.f32 %v6562, %v6857
    %v6963 = vmul.f32 %v6563, %v6861
    %v6964 = vmul.f32 %v6564, %v6853
    %v6965 = vmul.f32 %v6565, %v6857
    %v6966 = vmul.f32 %v6566, %v6861
    %v6967 = vmul.f32 %v6567, %v6853
    %v6968 = vmul.f32 %v6568, %v6857
    %v6969 = vmul.f32 %v6569, %v6861
    %v6970 = vmul.f32 %v6570, %v6853
    %v6971 = vmul.f32 %v6571, %v6857
    %v6972 = vmul.f32 %v6572, %v6861
    %v6973 = vmul.f32 %v6573, %v6853
    %v6974 = vmul.f32 %v6574, %v6857
    %v6975 = vmul.f32 %v6575, %v6861
    %v6976 = vmul.f32 %v6576, %v6853
    %v6977 = vmul.f32 %v6577, %v6857
    %v6978 = vmul.f32 %v6578, %v6861
    %v6979 = vmul.f32 %v6579, %v6853
    %v6980 = vmul.f32 %v6580, %v6857
    %v6981 = vmul.f32 %v6581, %v6861
    %v6982 = vmul.f32 %v6582, %v6853
    %v6983 = vmul.f32 %v6583, %v6857
    %v6984 = vmul.f32 %v6584, %v6861
    %v6985 = vmul.f32 %v6585, %v6853
    %v6986 = vmul.f32 %v6586, %v6857
    %v6987 = vmul.f32 %v6587, %v6861
    %v6988 = vmul.f32 %v6588, %v6853
    %v6989 = vmul.f32 %v6589, %v6857
    %v6990 = vmul.f32 %v6590, %v6861
    %v6991 = vmul.f32 %v6591, %v6853
    %v6992 = vmul.f32 %v6592, %v6857
    %v6993 = vmul.f32 %v6593, %v6861
    %v6994 = vmul.f32 %v6594, %v6853
    %v6995 = vmul.f32 %v6595, %v6857
    %v6996 = vmul.f32 %v6596, %v6861
    %v6997 = vmul.f32 %v6597, %v6853
    %v6998 = vmul.f32 %v6598, %v6857
    %v6999 = vmul.f32 %v6599, %v6861
    %v7000 = vmul.f32 %v6600, %v6853
    %v7001 = vmul.f32 %v6601, %v6857
    %v7002 = vmul.f32 %v6602, %v6861
    %v7003 = vmul.f32 %v6603, %v6853
    %v7004 = vmul.f32 %v6604, %v6857
    %v7005 = vmul.f32 %v6605, %v6861
    %v7006 = vmul.f32 %v6606, %v6853
    %v7007 = vmul.f32 %v6607, %v6857
    %v7008 = vmul.f32 %v6608, %v6861
    %v7009 = vmul.f32 %v6609, %v6853
    %v7010 = vmul.f32 %v6610, %v6857
    %v7011 = vmul.f32 %v6611, %v6861
    %v7012 = vmul.f32 %v6612, %v6853
    %v7013 = vmul.f32 %v6613, %v6857
    %v7014 = vmul.f32 %v6614, %v6861
    %v7015 = vmul.f32 %v6615, %v6853
    %v7016 = vmul.f32 %v6616, %v6857
    %v7017 = vmul.f32 %v6617, %v6861
    %v7018 = vmul.f32 %v6618, %v6853
    %v7019 = vmul.f32 %v6619, %v6857
    %v7020 = vmul.f32 %v6620, %v6861
    %v7021 = vmul.f32 %v6621, %v6853
    %v7022 = vmul.f32 %v6622, %v6857
    %v7023 = vmul.f32 %v6623, %v6861
    %v7024 = vmul.f32 %v6624, %v6853
    %v7025 = vmul.f32 %v6625, %v6857
    %v7026 = vmul.f32 %v6626, %v6861
    %v7027 = vmul.f32 %v6627, %v6853
    %v7028 = vmul.f32 %v6628, %v6857
    %v7029 = vmul.f32 %v6629, %v6861
    %v7030 = vmul.f32 %v6630, %v6853
    %v7031 = vmul.f32 %v6631, %v6857
    %v7032 = vmul.f32 %v6632, %v6861
    %v7033 = vmul.f32 %v6633, %v6853
    %v7034 = vmul.f32 %v6634, %v6857
    %v7035 = vmul.f32 %v6635, %v6861
    %v7036 = vmul.f32 %v6636, %v6853
    %v7037 = vmul.f32 %v6637, %v6857
    %v7038 = vmul.f32 %v6638, %v6861
    %v7039 = vmul.f32 %v6639, %v6853
    %v7040 = vmul.f32 %v6640, %v6857
    %v7041 = vmul.f32 %v6641, %v6861
    %v7042 = vmul.f32 %v6642, %v6853
    %v7043 = vmul.f32 %v6643, %v6857
    %v7044 = vmul.f32 %v6644, %v6861
    %v7045 = vmul.f32 %v6645, %v6853
    %v7046 = vmul.f32 %v6646, %v6857
    %v7047 = vmul.f32 %v6647, %v6861
    %v7048 = vmul.f32 %v6648, %v6853
    %v7049 = vmul.f32 %v6649, %v6857
    %v7050 = vmul.f32 %v6650, %v6861
    %v7051 = vmul.f32 %v6651, %v6853
    %v7052 = vmul.f32 %v6652, %v6857
    %v7053 = vmul.f32 %v6653, %v6861
    %v7054 = vmul.f32 %v6654, %v6853
    %v7055 = vmul.f32 %v6655, %v6857
    %v7056 = vmul.f32 %v6656, %v6861
    %v7057 = vmul.f32 %v6657, %v6853
    %v7058 = vmul.f32 %v6658, %v6857
    %v7059 = vmul.f32 %v6659, %v6861
    %v7060 = vmul.f32 %v6660, %v6853
    %v7061 = vmul.f32 %v6661, %v6857
    %v7062 = vmul.f32 %v6662, %v6861
    %v7063 = vmul.f32 %v6663, %v6853
    %v7064 = vmul.f32 %v6664, %v6857
    %v7065 = vmul.f32 %v6665, %v6861
    %v7066 = vmul.f32 %v6666, %v6853
    %v7067 = vmul.f32 %v6667, %v6857
    %v7068 = vmul.f32 %v6668, %v6861
    %v7069 = vmul.f32 %v6669, %v6853
    %v7070 = vmul.f32 %v6670, %v6857
    %v7071 = vmul.f32 %v6671, %v6861
    %v7072 = vmul.f32 %v6672, %v6853
    %v7073 = vmul.f32 %v6673, %v6857
    %v7074 = vmul.f32 %v6674, %v6861
    %v7075 = vmul.f32 %v6675, %v6853
    %v7076 = vmul.f32 %v6676, %v6857
    %v7077 = vmul.f32 %v6677, %v6861
    %v7078 = vmul.f32 %v6678, %v6853
    %v7079 = vmul.f32 %v6679, %v6857
    %v7080 = vmul.f32 %v6680, %v6861
    %v7081 = vmul.f32 %v6681, %v6853
    %v7082 = vmul.f32 %v6682, %v6857
    %v7083 = vmul.f32 %v6683, %v6861
    %v7084 = vmul.f32 %v6684, %v6853
    %v7085 = vmul.f32 %v6685, %v6857
    %v7086 = vmul.f32 %v6686, %v6861
    %v7087 = vmul.f32 %v6687, %v6853
    %v7088 = vmul.f32 %v6688, %v6857
    %v7089 = vmul.f32 %v6689, %v6861
    %v7090 = vmul.f32 %v6690, %v6853
    %v7091 = vmul.f32 %v6691, %v6857
    %v7092 = vmul.f32 %v6692, %v6861
    %v7093 = vmul.f32 %v6693, %v6853
    %v7094 = vmul.f32 %v6694, %v6857
    %v7095 = vmul.f32 %v6695, %v6861
    %v7096 = vmul.f32 %v6696, %v6853
    %v7097 = vmul.f32 %v6697, %v6857
    %v7098 = vmul.f32 %v6698, %v6861
    %v7099 = vmul.f32 %v6699, %v6853
    %v7100 = vmul.f32 %v6700, %v6857
    %v7101 = vmul.f32 %v6701, %v6861
    %v7102 = vmul.f32 %v6702, %v6853
    %v7103 = vmul.f32 %v6703, %v6857
    %v7104 = vmul.f32 %v6704, %v6861
    %v7105 = vmul.f32 %v6705, %v6853
    %v7106 = vmul.f32 %v6706, %v6857
    %v7107 = vmul.f32 %v6707, %v6861
    %v7108 = vmul.f32 %v6708, %v6853
    %v7109 = vmul.f32 %v6709, %v6857
    %v7110 = vmul.f32 %v6710, %v6861
    %v7111 = vmul.f32 %v6711, %v6853
    %v7112 = vmul.f32 %v6712, %v6857
    %v7113 = vmul.f32 %v6713, %v6861
    %v7114 = vmul.f32 %v6714, %v6853
    %v7115 = vmul.f32 %v6715, %v6857
    %v7116 = vmul.f32 %v6716, %v6861
    %v7117 = vmul.f32 %v6717, %v6853
    %v7118 = vmul.f32 %v6718, %v6857
    %v7119 = vmul.f32 %v6719, %v6861
    %v7120 = vmul.f32 %v6720, %v6853
    %v7121 = vmul.f32 %v6721, %v6857
    %v7122 = vmul.f32 %v6722, %v6861
    %v7123 = vmul.f32 %v6723, %v6853
    %v7124 = vmul.f32 %v6724, %v6857
    %v7125 = vmul.f32 %v6725, %v6861
    %v7126 = vmul.f32 %v6726, %v6853
    %v7127 = vmul.f32 %v6727, %v6857
    %v7128 = vmul.f32 %v6728, %v6861
    %v7129 = vmul.f32 %v6729, %v6853
    %v7130 = vmul.f32 %v6730, %v6857
    %v7131 = vmul.f32 %v6731, %v6861
    %v7132 = vmul.f32 %v6732, %v6853
    %v7133 = vmul.f32 %v6733, %v6857
    %v7134 = vmul.f32 %v6734, %v6861
    %v7135 = vmul.f32 %v6735, %v6853
    %v7136 = vmul.f32 %v6736, %v6857
    %v7137 = vmul.f32 %v6737, %v6861
    %v7138 = vmul.f32 %v6738, %v6853
    %v7139 = vmul.f32 %v6739, %v6857
    %v7140 = vmul.f32 %v6740, %v6861
    %v7141 = vmul.f32 %v6741, %v6853
    %v7142 = vmul.f32 %v6742, %v6857
    %v7143 = vmul.f32 %v6743, %v6861
    %v7144 = vmul.f32 %v6744, %v6853
    %v7145 = vmul.f32 %v6745, %v6857
    %v7146 = vmul.f32 %v6746, %v6861
    %v7147 = vmul.f32 %v6747, %v6853
    %v7148 = vmul.f32 %v6748, %v6857
    %v7149 = vmul.f32 %v6749, %v6861
    %v7150 = vmul.f32 %v6750, %v6853
    %v7151 = vmul.f32 %v6751, %v6857
    %v7152 = vmul.f32 %v6752, %v6861
    %v7153 = vmul.f32 %v6753, %v6853
    %v7154 = vmul.f32 %v6754, %v6857
    %v7155 = vmul.f32 %v6755, %v6861
    %v7156 = vmul.f32 %v6756, %v6853
    %v7157 = vmul.f32 %v6757, %v6857
    %v7158 = vmul.f32 %v6758, %v6861
    %v7159 = vmul.f32 %v6759, %v6853
    %v7160 = vmul.f32 %v6760, %v6857
    %v7161 = vmul.f32 %v6761, %v6861
    %v7162 = vmul.f32 %v6762, %v6853
    %v7163 = vmul.f32 %v6763, %v6857
    %v7164 = vmul.f32 %v6764, %v6861
    %v7165 = vmul.f32 %v6765, %v6853
    %v7166 = vmul.f32 %v6766, %v6857
    %v7167 = vmul.f32 %v6767, %v6861
    %v7168 = vmul.f32 %v6768, %v6853
    %v7169 = vmul.f32 %v6769, %v6857
    %v7170 = vmul.f32 %v6770, %v6861
    %v7171 = vmul.f32 %v6771, %v6853
    %v7172 = vmul.f32 %v6772, %v6857
    %v7173 = vmul.f32 %v6773, %v6861
    %v7174 = vmul.f32 %v6774, %v6853
    %v7175 = vmul.f32 %v6775, %v6857
    %v7176 = vmul.f32 %v6776, %v6861
    %v7177 = vmul.f32 %v6777, %v6853
    %v7178 = vmul.f32 %v6778, %v6857
    %v7179 = vmul.f32 %v6779, %v6861
    %v7180 = vmul.f32 %v6780, %v6853
    %v7181 = vmul.f32 %v6781, %v6857
    %v7182 = vmul.f32 %v6782, %v6861
    %v7183 = vmul.f32 %v6783, %v6853
    %v7184 = vmul.f32 %v6784, %v6857
    %v7185 = vmul.f32 %v6785, %v6861
    %v7186 = vmul.f32 %v6786, %v6853
    %v7187 = vmul.f32 %v6787, %v6857
    %v7188 = vmul.f32 %v6788, %v6861
    %v7189 = vmul.f32 %v6789, %v6853
    %v7190 = vmul.f32 %v6790, %v6857
    %v7191 = vmul.f32 %v6791, %v6861
    %v7192 = vmul.f32 %v6792, %v6853
    %v7193 = vmul.f32 %v6793, %v6857
    %v7194 = vmul.f32 %v6794, %v6861
    %v7195 = vmul.f32 %v6795, %v6853
    %v7196 = vmul.f32 %v6796, %v6857
    %v7197 = vmul.f32 %v6797, %v6861
    %v7198 = vmul.f32 %v6798, %v6853
    %v7199 = vmul.f32 %v6799, %v6857
    %v7200 = vmul.f32 %v6800, %v6861
    %v7201 = vmul.f32 %v6801, %v6853
    %v7202 = vmul.f32 %v6802, %v6857
    %v7203 = vmul.f32 %v6803, %v6861
    %v7204 = vmul.f32 %v6804, %v6853
    %v7205 = vmul.f32 %v6805, %v6857
    %v7206 = vmul.f32 %v6806, %v6861
    %v7207 = vmul.f32 %v6807, %v6853
    %v7208 = vmul.f32 %v6808, %v6857
    %v7209 = vmul.f32 %v6809, %v6861
    %v7210 = vmul.f32 %v6810, %v6853
    %v7211 = vmul.f32 %v6811, %v6857
    %v7212 = vmul.f32 %v6812, %v6861
    %v7213 = vmul.f32 %v6813, %v6853
    %v7214 = vmul.f32 %v6814, %v6857
    %v7215 = vmul.f32 %v6815, %v6861
    %v7216 = vmul.f32 %v6816, %v6853
    %v7217 = vmul.f32 %v6817, %v6857
    %v7218 = vmul.f32 %v6818, %v6861
    %v7219 = vmul.f32 %v6819, %v6853
    %v7220 = vmul.f32 %v6820, %v6857
    %v7221 = vmul.f32 %v6821, %v6861
    %v7222 = vmul.f32 %v6822, %v6853
    %v7223 = vmul.f32 %v6823, %v6857
    %v7224 = vmul.f32 %v6824, %v6861
    %v7225 = vmul.f32 %v6825, %v6853
    %v7226 = vmul.f32 %v6826, %v6857
    %v7227 = vmul.f32 %v6827, %v6861
    %v7228 = vmul.f32 %v6828, %v6853
    %v7229 = vmul.f32 %v6829, %v6857
    %v7230 = vmul.f32 %v6830, %v6861
    %v7231 = vmul.f32 %v6831, %v6853
    %v7232 = vmul.f32 %v6832, %v6857
    %v7233 = vmul.f32 %v6833, %v6861
    %v7234 = vmul.f32 %v6834, %v6853
    %v7235 = vmul.f32 %v6835, %v6857
    %v7236 = vmul.f32 %v6836, %v6861
    %v7237 = vmul.f32 %v6837, %v6853
    %v7238 = vmul.f32 %v6838, %v6857
    %v7239 = vmul.f32 %v6839, %v6861
    %v7240 = vmul.f32 %v6840, %v6853
    %v7241 = vmul.f32 %v6841, %v6857
    %v7242 = vmul.f32 %v6842, %v6861
    %v7243 = vmul.f32 %v6843, %v6853
    %v7244 = vmul.f32 %v6844, %v6857
    %v7245 = vmul.f32 %v6845, %v6861
    %v7246 = vmul.f32 %v6846, %v6853
    %v7247 = vmul.f32 %v6847, %v6857
    %v7248 = vmul.f32 %v6848, %v6861
    %v7249 = vpack.c.bf16 %v6868, %v6865
    %v7250 = vpack.c.bf16 %v6869, %v6866
    %v7251 = vpack.c.bf16 %v6870, %v6867
    %v7252 = vpack.c.bf16 %v6874, %v6871
    %v7253 = vpack.c.bf16 %v6875, %v6872
    %v7254 = vpack.c.bf16 %v6876, %v6873
    %v7255 = vpack.c.bf16 %v6880, %v6877
    %v7256 = vpack.c.bf16 %v6881, %v6878
    %v7257 = vpack.c.bf16 %v6882, %v6879
    %v7258 = vpack.c.bf16 %v6886, %v6883
    %v7259 = vpack.c.bf16 %v6887, %v6884
    %v7260 = vpack.c.bf16 %v6888, %v6885
    %v7261 = vpack.c.bf16 %v6892, %v6889
    %v7262 = vpack.c.bf16 %v6893, %v6890
    %v7263 = vpack.c.bf16 %v6894, %v6891
    %v7264 = vpack.c.bf16 %v6898, %v6895
    %v7265 = vpack.c.bf16 %v6899, %v6896
    %v7266 = vpack.c.bf16 %v6900, %v6897
    %v7267 = vpack.c.bf16 %v6904, %v6901
    %v7268 = vpack.c.bf16 %v6905, %v6902
    %v7269 = vpack.c.bf16 %v6906, %v6903
    %v7270 = vpack.c.bf16 %v6910, %v6907
    %v7271 = vpack.c.bf16 %v6911, %v6908
    %v7272 = vpack.c.bf16 %v6912, %v6909
    %v7273 = vpack.c.bf16 %v6916, %v6913
    %v7274 = vpack.c.bf16 %v6917, %v6914
    %v7275 = vpack.c.bf16 %v6918, %v6915
    %v7276 = vpack.c.bf16 %v6922, %v6919
    %v7277 = vpack.c.bf16 %v6923, %v6920
    %v7278 = vpack.c.bf16 %v6924, %v6921
    %v7279 = vpack.c.bf16 %v6928, %v6925
    %v7280 = vpack.c.bf16 %v6929, %v6926
    %v7281 = vpack.c.bf16 %v6930, %v6927
    %v7282 = vpack.c.bf16 %v6934, %v6931
    %v7283 = vpack.c.bf16 %v6935, %v6932
    %v7284 = vpack.c.bf16 %v6936, %v6933
    %v7285 = vpack.c.bf16 %v6940, %v6937
    %v7286 = vpack.c.bf16 %v6941, %v6938
    %v7287 = vpack.c.bf16 %v6942, %v6939
    %v7288 = vpack.c.bf16 %v6946, %v6943
    %v7289 = vpack.c.bf16 %v6947, %v6944
    %v7290 = vpack.c.bf16 %v6948, %v6945
    %v7291 = vpack.c.bf16 %v6952, %v6949
    %v7292 = vpack.c.bf16 %v6953, %v6950
    %v7293 = vpack.c.bf16 %v6954, %v6951
    %v7294 = vpack.c.bf16 %v6958, %v6955
    %v7295 = vpack.c.bf16 %v6959, %v6956
    %v7296 = vpack.c.bf16 %v6960, %v6957
    %v7297 = vpack.c.bf16 %v6964, %v6961
    %v7298 = vpack.c.bf16 %v6965, %v6962
    %v7299 = vpack.c.bf16 %v6966, %v6963
    %v7300 = vpack.c.bf16 %v6970, %v6967
    %v7301 = vpack.c.bf16 %v6971, %v6968
    %v7302 = vpack.c.bf16 %v6972, %v6969
    %v7303 = vpack.c.bf16 %v6976, %v6973
    %v7304 = vpack.c.bf16 %v6977, %v6974
    %v7305 = vpack.c.bf16 %v6978, %v6975
    %v7306 = vpack.c.bf16 %v6982, %v6979
    %v7307 = vpack.c.bf16 %v6983, %v6980
    %v7308 = vpack.c.bf16 %v6984, %v6981
    %v7309 = vpack.c.bf16 %v6988, %v6985
    %v7310 = vpack.c.bf16 %v6989, %v6986
    %v7311 = vpack.c.bf16 %v6990, %v6987
    %v7312 = vpack.c.bf16 %v6994, %v6991
    %v7313 = vpack.c.bf16 %v6995, %v6992
    %v7314 = vpack.c.bf16 %v6996, %v6993
    %v7315 = vpack.c.bf16 %v7000, %v6997
    %v7316 = vpack.c.bf16 %v7001, %v6998
    %v7317 = vpack.c.bf16 %v7002, %v6999
    %v7318 = vpack.c.bf16 %v7006, %v7003
    %v7319 = vpack.c.bf16 %v7007, %v7004
    %v7320 = vpack.c.bf16 %v7008, %v7005
    %v7321 = vpack.c.bf16 %v7012, %v7009
    %v7322 = vpack.c.bf16 %v7013, %v7010
    %v7323 = vpack.c.bf16 %v7014, %v7011
    %v7324 = vpack.c.bf16 %v7018, %v7015
    %v7325 = vpack.c.bf16 %v7019, %v7016
    %v7326 = vpack.c.bf16 %v7020, %v7017
    %v7327 = vpack.c.bf16 %v7024, %v7021
    %v7328 = vpack.c.bf16 %v7025, %v7022
    %v7329 = vpack.c.bf16 %v7026, %v7023
    %v7330 = vpack.c.bf16 %v7030, %v7027
    %v7331 = vpack.c.bf16 %v7031, %v7028
    %v7332 = vpack.c.bf16 %v7032, %v7029
    %v7333 = vpack.c.bf16 %v7036, %v7033
    %v7334 = vpack.c.bf16 %v7037, %v7034
    %v7335 = vpack.c.bf16 %v7038, %v7035
    %v7336 = vpack.c.bf16 %v7042, %v7039
    %v7337 = vpack.c.bf16 %v7043, %v7040
    %v7338 = vpack.c.bf16 %v7044, %v7041
    %v7339 = vpack.c.bf16 %v7048, %v7045
    %v7340 = vpack.c.bf16 %v7049, %v7046
    %v7341 = vpack.c.bf16 %v7050, %v7047
    %v7342 = vpack.c.bf16 %v7054, %v7051
    %v7343 = vpack.c.bf16 %v7055, %v7052
    %v7344 = vpack.c.bf16 %v7056, %v7053
    %v7345 = vpack.c.bf16 %v7060, %v7057
    %v7346 = vpack.c.bf16 %v7061, %v7058
    %v7347 = vpack.c.bf16 %v7062, %v7059
    %v7348 = vpack.c.bf16 %v7066, %v7063
    %v7349 = vpack.c.bf16 %v7067, %v7064
    %v7350 = vpack.c.bf16 %v7068, %v7065
    %v7351 = vpack.c.bf16 %v7072, %v7069
    %v7352 = vpack.c.bf16 %v7073, %v7070
    %v7353 = vpack.c.bf16 %v7074, %v7071
    %v7354 = vpack.c.bf16 %v7078, %v7075
    %v7355 = vpack.c.bf16 %v7079, %v7076
    %v7356 = vpack.c.bf16 %v7080, %v7077
    %v7357 = vpack.c.bf16 %v7084, %v7081
    %v7358 = vpack.c.bf16 %v7085, %v7082
    %v7359 = vpack.c.bf16 %v7086, %v7083
    %v7360 = vpack.c.bf16 %v7090, %v7087
    %v7361 = vpack.c.bf16 %v7091, %v7088
    %v7362 = vpack.c.bf16 %v7092, %v7089
    %v7363 = vpack.c.bf16 %v7096, %v7093
    %v7364 = vpack.c.bf16 %v7097, %v7094
    %v7365 = vpack.c.bf16 %v7098, %v7095
    %v7366 = vpack.c.bf16 %v7102, %v7099
    %v7367 = vpack.c.bf16 %v7103, %v7100
    %v7368 = vpack.c.bf16 %v7104, %v7101
    %v7369 = vpack.c.bf16 %v7108, %v7105
    %v7370 = vpack.c.bf16 %v7109, %v7106
    %v7371 = vpack.c.bf16 %v7110, %v7107
    %v7372 = vpack.c.bf16 %v7114, %v7111
    %v7373 = vpack.c.bf16 %v7115, %v7112
    %v7374 = vpack.c.bf16 %v7116, %v7113
    %v7375 = vpack.c.bf16 %v7120, %v7117
    %v7376 = vpack.c.bf16 %v7121, %v7118
    %v7377 = vpack.c.bf16 %v7122, %v7119
    %v7378 = vpack.c.bf16 %v7126, %v7123
    %v7379 = vpack.c.bf16 %v7127, %v7124
    %v7380 = vpack.c.bf16 %v7128, %v7125
    %v7381 = vpack.c.bf16 %v7132, %v7129
    %v7382 = vpack.c.bf16 %v7133, %v7130
    %v7383 = vpack.c.bf16 %v7134, %v7131
    %v7384 = vpack.c.bf16 %v7138, %v7135
    %v7385 = vpack.c.bf16 %v7139, %v7136
    %v7386 = vpack.c.bf16 %v7140, %v7137
    %v7387 = vpack.c.bf16 %v7144, %v7141
    %v7388 = vpack.c.bf16 %v7145, %v7142
    %v7389 = vpack.c.bf16 %v7146, %v7143
    %v7390 = vpack.c.bf16 %v7150, %v7147
    %v7391 = vpack.c.bf16 %v7151, %v7148
    %v7392 = vpack.c.bf16 %v7152, %v7149
    %v7393 = vpack.c.bf16 %v7156, %v7153
    %v7394 = vpack.c.bf16 %v7157, %v7154
    %v7395 = vpack.c.bf16 %v7158, %v7155
    %v7396 = vpack.c.bf16 %v7162, %v7159
    %v7397 = vpack.c.bf16 %v7163, %v7160
    %v7398 = vpack.c.bf16 %v7164, %v7161
    %v7399 = vpack.c.bf16 %v7168, %v7165
    %v7400 = vpack.c.bf16 %v7169, %v7166
    %v7401 = vpack.c.bf16 %v7170, %v7167
    %v7402 = vpack.c.bf16 %v7174, %v7171
    %v7403 = vpack.c.bf16 %v7175, %v7172
    %v7404 = vpack.c.bf16 %v7176, %v7173
    %v7405 = vpack.c.bf16 %v7180, %v7177
    %v7406 = vpack.c.bf16 %v7181, %v7178
    %v7407 = vpack.c.bf16 %v7182, %v7179
    %v7408 = vpack.c.bf16 %v7186, %v7183
    %v7409 = vpack.c.bf16 %v7187, %v7184
    %v7410 = vpack.c.bf16 %v7188, %v7185
    %v7411 = vpack.c.bf16 %v7192, %v7189
    %v7412 = vpack.c.bf16 %v7193, %v7190
    %v7413 = vpack.c.bf16 %v7194, %v7191
    %v7414 = vpack.c.bf16 %v7198, %v7195
    %v7415 = vpack.c.bf16 %v7199, %v7196
    %v7416 = vpack.c.bf16 %v7200, %v7197
    %v7417 = vpack.c.bf16 %v7204, %v7201
    %v7418 = vpack.c.bf16 %v7205, %v7202
    %v7419 = vpack.c.bf16 %v7206, %v7203
    %v7420 = vpack.c.bf16 %v7210, %v7207
    %v7421 = vpack.c.bf16 %v7211, %v7208
    %v7422 = vpack.c.bf16 %v7212, %v7209
    %v7423 = vpack.c.bf16 %v7216, %v7213
    %v7424 = vpack.c.bf16 %v7217, %v7214
    %v7425 = vpack.c.bf16 %v7218, %v7215
    %v7426 = vpack.c.bf16 %v7222, %v7219
    %v7427 = vpack.c.bf16 %v7223, %v7220
    %v7428 = vpack.c.bf16 %v7224, %v7221
    %v7429 = vpack.c.bf16 %v7228, %v7225
    %v7430 = vpack.c.bf16 %v7229, %v7226
    %v7431 = vpack.c.bf16 %v7230, %v7227
    %v7432 = vpack.c.bf16 %v7234, %v7231
    %v7433 = vpack.c.bf16 %v7235, %v7232
    %v7434 = vpack.c.bf16 %v7236, %v7233
    %v7435 = vpack.c.bf16 %v7240, %v7237
    %v7436 = vpack.c.bf16 %v7241, %v7238
    %v7437 = vpack.c.bf16 %v7242, %v7239
    %v7438 = vpack.c.bf16 %v7246, %v7243
    %v7439 = vpack.c.bf16 %v7247, %v7244
    %v7440 = vpack.c.bf16 %v7248, %v7245
    %v7441 = vld [vmem:[%s16 + $0x4] sm:$0x7]
    %v7443 = vlaneseq
    %v7444 = vshrl.u32 %v7443, 7
    %v7445 = vsub.s32 0, %v7444
    %v7446 = vrot.slane %v7441, %v7445
    %v7447 = vlaneseq
    %v7448 = vshrl.u32 %v7447, 7
    %v7449 = vsub.s32 1, %v7448
    %v7450 = vrot.slane %v7441, %v7449
    %v7451 = vlaneseq
    %v7452 = vshrl.u32 %v7451, 7
    %v7453 = vsub.s32 2, %v7452
    %v7454 = vrot.slane %v7441, %v7453
    %7458 = vmatprep.subr.bf16.mxu0 %v7250
    %7459 = vmatpush1.bf16.msra.mxu0 %v7249
    %7460 = vmatprep.subr.bf16.mxu0 %v7253
    %7461 = vmatpush1.bf16.msra.mxu0 %v7252
    %7462 = vmatprep.subr.bf16.mxu0 %v7256
    %7463 = vmatpush1.bf16.msra.mxu0 %v7255
    %7464 = vmatprep.subr.bf16.mxu0 %v7259
    %7465 = vmatpush1.bf16.msra.mxu0 %v7258
    %7466 = vmatprep.subr.bf16.mxu0 %v7262
    %7467 = vmatpush1.bf16.msra.mxu0 %v7261
    %7468 = vmatprep.subr.bf16.mxu0 %v7265
    %7469 = vmatpush1.bf16.msra.mxu0 %v7264
    %7470 = vmatprep.subr.bf16.mxu0 %v7268
    %7471 = vmatpush1.bf16.msra.mxu0 %v7267
    %7472 = vmatprep.subr.bf16.mxu0 %v7271
    %7473 = vmatpush1.bf16.msra.mxu0 %v7270
    %7474 = vmatprep.subr.bf16.mxu0 %v7274
    %7475 = vmatpush1.bf16.msra.mxu0 %v7273
    %7476 = vmatprep.subr.bf16.mxu0 %v7277
    %7477 = vmatpush1.bf16.msra.mxu0 %v7276
    %7478 = vmatprep.subr.bf16.mxu0 %v7280
    %7479 = vmatpush1.bf16.msra.mxu0 %v7279
    %7480 = vmatprep.subr.bf16.mxu0 %v7283
    %7481 = vmatpush1.bf16.msra.mxu0 %v7282
    %7482 = vmatprep.subr.bf16.mxu0 %v7286
    %7483 = vmatpush1.bf16.msra.mxu0 %v7285
    %7484 = vmatprep.subr.bf16.mxu0 %v7289
    %7485 = vmatpush1.bf16.msra.mxu0 %v7288
    %7486 = vmatprep.subr.bf16.mxu0 %v7292
    %7487 = vmatpush1.bf16.msra.mxu0 %v7291
    %7488 = vmatprep.subr.bf16.mxu0 %v7295
    %7489 = vmatpush1.bf16.msra.mxu0 %v7294
    %7490 = vmatprep.mubr.bf16.mxu0 %v5616
    %7491 = vmatmul.mubr.bf16.gmra.mrb[0].mxu0 %v5615
    %v7492 = vpop.f32.mrb[0].mxu0
    %v7493 = vadd.f32 %v7446, %v7492
    %v7494 = vpop.f32.mrb[0].mxu0
    %v7495 = vadd.f32 %v7450, %v7494
    %v7496 = vpop.f32.mrb[0].mxu0
    %v7497 = vpop.f32.mrb[0].mxu0
    %7498 = vdwg.mxu0
    %7499 = vmatprep.subr.bf16.mxu0 %v7298
    %7500 = vmatpush1.bf16.msra.mxu0 %v7297
    %7501 = vmatprep.subr.bf16.mxu0 %v7301
    %7502 = vmatpush1.bf16.msra.mxu0 %v7300
    %7503 = vmatprep.subr.bf16.mxu0 %v7304
    %7504 = vmatpush1.bf16.msra.mxu0 %v7303
    %7505 = vmatprep.subr.bf16.mxu0 %v7307
    %7506 = vmatpush1.bf16.msra.mxu0 %v7306
    %7507 = vmatprep.subr.bf16.mxu0 %v7310
    %7508 = vmatpush1.bf16.msra.mxu0 %v7309
    %7509 = vmatprep.subr.bf16.mxu0 %v7313
    %7510 = vmatpush1.bf16.msra.mxu0 %v7312
    %7511 = vmatprep.subr.bf16.mxu0 %v7316
    %7512 = vmatpush1.bf16.msra.mxu0 %v7315
    %7513 = vmatprep.subr.bf16.mxu0 %v7319
    %7514 = vmatpush1.bf16.msra.mxu0 %v7318
    %7515 = vmatprep.subr.bf16.mxu0 %v7322
    %7516 = vmatpush1.bf16.msra.mxu0 %v7321
    %7517 = vmatprep.subr.bf16.mxu0 %v7325
    %7518 = vmatpush1.bf16.msra.mxu0 %v7324
    %7519 = vmatprep.subr.bf16.mxu0 %v7328
    %7520 = vmatpush1.bf16.msra.mxu0 %v7327
    %7521 = vmatprep.subr.bf16.mxu0 %v7331
    %7522 = vmatpush1.bf16.msra.mxu0 %v7330
    %7523 = vmatprep.subr.bf16.mxu0 %v7334
    %7524 = vmatpush1.bf16.msra.mxu0 %v7333
    %7525 = vmatprep.subr.bf16.mxu0 %v7337
    %7526 = vmatpush1.bf16.msra.mxu0 %v7336
    %7527 = vmatprep.subr.bf16.mxu0 %v7340
    %7528 = vmatpush1.bf16.msra.mxu0 %v7339
    %7529 = vmatprep.subr.bf16.mxu0 %v7343
    %7530 = vmatpush1.bf16.msra.mxu0 %v7342
    %7531 = vmatprep.mubr.bf16.mxu0 %v5618
    %7532 = vmatmul.mubr.bf16.gmra.mrb[0].mxu0 %v5617
    %v7533 = vpop.f32.mrb[0].mxu0
    %v7534 = vadd.f32 %v7493, %v7533
    %v7535 = vpop.f32.mrb[0].mxu0
    %v7536 = vadd.f32 %v7495, %v7535
    %v7537 = vpop.f32.mrb[0].mxu0
    %v7538 = vpop.f32.mrb[0].mxu0
    %7539 = vdwg.mxu0
    %7540 = vmatprep.subr.bf16.mxu0 %v7346
    %7541 = vmatpush1.bf16.msra.mxu0 %v7345
    %7542 = vmatprep.subr.bf16.mxu0 %v7349
    %7543 = vmatpush1.bf16.msra.mxu0 %v7348
    %7544 = vmatprep.subr.bf16.mxu0 %v7352
    %7545 = vmatpush1.bf16.msra.mxu0 %v7351
    %7546 = vmatprep.subr.bf16.mxu0 %v7355
    %7547 = vmatpush1.bf16.msra.mxu0 %v7354
    %7548 = vmatprep.subr.bf16.mxu0 %v7358
    %7549 = vmatpush1.bf16.msra.mxu0 %v7357
    %7550 = vmatprep.subr.bf16.mxu0 %v7361
    %7551 = vmatpush1.bf16.msra.mxu0 %v7360
    %7552 = vmatprep.subr.bf16.mxu0 %v7364
    %7553 = vmatpush1.bf16.msra.mxu0 %v7363
    %7554 = vmatprep.subr.bf16.mxu0 %v7367
    %7555 = vmatpush1.bf16.msra.mxu0 %v7366
    %7556 = vmatprep.subr.bf16.mxu0 %v7370
    %7557 = vmatpush1.bf16.msra.mxu0 %v7369
    %7558 = vmatprep.subr.bf16.mxu0 %v7373
    %7559 = vmatpush1.bf16.msra.mxu0 %v7372
    %7560 = vmatprep.subr.bf16.mxu0 %v7376
    %7561 = vmatpush1.bf16.msra.mxu0 %v7375
    %7562 = vmatprep.subr.bf16.mxu0 %v7379
    %7563 = vmatpush1.bf16.msra.mxu0 %v7378
    %7564 = vmatprep.subr.bf16.mxu0 %v7382
    %7565 = vmatpush1.bf16.msra.mxu0 %v7381
    %7566 = vmatprep.subr.bf16.mxu0 %v7385
    %7567 = vmatpush1.bf16.msra.mxu0 %v7384
    %7568 = vmatprep.subr.bf16.mxu0 %v7388
    %7569 = vmatpush1.bf16.msra.mxu0 %v7387
    %7570 = vmatprep.subr.bf16.mxu0 %v7391
    %7571 = vmatpush1.bf16.msra.mxu0 %v7390
    %7572 = vmatprep.mubr.bf16.mxu0 %v5620
    %7573 = vmatmul.mubr.bf16.gmra.mrb[0].mxu0 %v5619
    %v7574 = vpop.f32.mrb[0].mxu0
    %v7575 = vadd.f32 %v7534, %v7574
    %v7576 = vpop.f32.mrb[0].mxu0
    %v7577 = vadd.f32 %v7536, %v7576
    %v7578 = vpop.f32.mrb[0].mxu0
    %v7579 = vpop.f32.mrb[0].mxu0
    %7580 = vdwg.mxu0
    %7581 = vmatprep.subr.bf16.mxu0 %v7394
    %7582 = vmatpush1.bf16.msra.mxu0 %v7393
    %7583 = vmatprep.subr.bf16.mxu0 %v7397
    %7584 = vmatpush1.bf16.msra.mxu0 %v7396
    %7585 = vmatprep.subr.bf16.mxu0 %v7400
    %7586 = vmatpush1.bf16.msra.mxu0 %v7399
    %7587 = vmatprep.subr.bf16.mxu0 %v7403
    %7588 = vmatpush1.bf16.msra.mxu0 %v7402
    %7589 = vmatprep.subr.bf16.mxu0 %v7406
    %7590 = vmatpush1.bf16.msra.mxu0 %v7405
    %7591 = vmatprep.subr.bf16.mxu0 %v7409
    %7592 = vmatpush1.bf16.msra.mxu0 %v7408
    %7593 = vmatprep.subr.bf16.mxu0 %v7412
    %7594 = vmatpush1.bf16.msra.mxu0 %v7411
    %7595 = vmatprep.subr.bf16.mxu0 %v7415
    %7596 = vmatpush1.bf16.msra.mxu0 %v7414
    %7597 = vmatprep.subr.bf16.mxu0 %v7418
    %7598 = vmatpush1.bf16.msra.mxu0 %v7417
    %7599 = vmatprep.subr.bf16.mxu0 %v7421
    %7600 = vmatpush1.bf16.msra.mxu0 %v7420
    %7601 = vmatprep.subr.bf16.mxu0 %v7424
    %7602 = vmatpush1.bf16.msra.mxu0 %v7423
    %7603 = vmatprep.subr.bf16.mxu0 %v7427
    %7604 = vmatpush1.bf16.msra.mxu0 %v7426
    %7605 = vmatprep.subr.bf16.mxu0 %v7430
    %7606 = vmatpush1.bf16.msra.mxu0 %v7429
    %7607 = vmatprep.subr.bf16.mxu0 %v7433
    %7608 = vmatpush1.bf16.msra.mxu0 %v7432
    %7609 = vmatprep.subr.bf16.mxu0 %v7436
    %7610 = vmatpush1.bf16.msra.mxu0 %v7435
    %7611 = vmatprep.subr.bf16.mxu0 %v7439
    %7612 = vmatpush1.bf16.msra.mxu0 %v7438
    %7613 = vmatprep.mubr.bf16.mxu0 %v5622
    %7614 = vmatmul.mubr.bf16.gmra.mrb[0].mxu0 %v5621
    %v7615 = vpop.f32.mrb[0].mxu0
    %v7616 = vadd.f32 %v7575, %v7615
    %v7617 = vpop.f32.mrb[0].mxu0
    %v7618 = vadd.f32 %v7577, %v7617
    %v7619 = vpop.f32.mrb[0].mxu0
    %v7620 = vpop.f32.mrb[0].mxu0
    %7621 = vdwg.mxu0
    %7622 = vmatprep.subr.bf16.mxu0 0
    %7623 = vmatpush1.bf16.msra.mxu0 %v7251
    %7624 = vmatprep.subr.bf16.mxu0 0
    %7625 = vmatpush1.bf16.msra.mxu0 %v7254
    %7626 = vmatprep.subr.bf16.mxu0 0
    %7627 = vmatpush1.bf16.msra.mxu0 %v7257
    %7628 = vmatprep.subr.bf16.mxu0 0
    %7629 = vmatpush1.bf16.msra.mxu0 %v7260
    %7630 = vmatprep.subr.bf16.mxu0 0
    %7631 = vmatpush1.bf16.msra.mxu0 %v7263
    %7632 = vmatprep.subr.bf16.mxu0 0
    %7633 = vmatpush1.bf16.msra.mxu0 %v7266
    %7634 = vmatprep.subr.bf16.mxu0 0
    %7635 = vmatpush1.bf16.msra.mxu0 %v7269
    %7636 = vmatprep.subr.bf16.mxu0 0
    %7637 = vmatpush1.bf16.msra.mxu0 %v7272
    %7638 = vmatprep.subr.bf16.mxu0 0
    %7639 = vmatpush1.bf16.msra.mxu0 %v7275
    %7640 = vmatprep.subr.bf16.mxu0 0
    %7641 = vmatpush1.bf16.msra.mxu0 %v7278
    %7642 = vmatprep.subr.bf16.mxu0 0
    %7643 = vmatpush1.bf16.msra.mxu0 %v7281
    %7644 = vmatprep.subr.bf16.mxu0 0
    %7645 = vmatpush1.bf16.msra.mxu0 %v7284
    %7646 = vmatprep.subr.bf16.mxu0 0
    %7647 = vmatpush1.bf16.msra.mxu0 %v7287
    %7648 = vmatprep.subr.bf16.mxu0 0
    %7649 = vmatpush1.bf16.msra.mxu0 %v7290
    %7650 = vmatprep.subr.bf16.mxu0 0
    %7651 = vmatpush1.bf16.msra.mxu0 %v7293
    %7652 = vmatprep.subr.bf16.mxu0 0
    %7653 = vmatpush1.bf16.msra.mxu0 %v7296
    %7654 = vmatprep.mubr.bf16.mxu0 %v5616
    %7655 = vmatmul.mubr.bf16.gmra.mrb[0].mxu0 %v5615
    %v7656 = vpop.f32.mrb[0].mxu0
    %v7657 = vadd.f32 %v7454, %v7656
    %v7658 = vpop.f32.mrb[0].mxu0
    %v7659 = vpop.f32.mrb[0].mxu0
    %v7660 = vpop.f32.mrb[0].mxu0
    %7661 = vdwg.mxu0
    %7662 = vmatprep.subr.bf16.mxu0 0
    %7663 = vmatpush1.bf16.msra.mxu0 %v7299
    %7664 = vmatprep.subr.bf16.mxu0 0
    %7665 = vmatpush1.bf16.msra.mxu0 %v7302
    %7666 = vmatprep.subr.bf16.mxu0 0
    %7667 = vmatpush1.bf16.msra.mxu0 %v7305
    %7668 = vmatprep.subr.bf16.mxu0 0
    %7669 = vmatpush1.bf16.msra.mxu0 %v7308
    %7670 = vmatprep.subr.bf16.mxu0 0
    %7671 = vmatpush1.bf16.msra.mxu0 %v7311
    %7672 = vmatprep.subr.bf16.mxu0 0
    %7673 = vmatpush1.bf16.msra.mxu0 %v7314
    %7674 = vmatprep.subr.bf16.mxu0 0
    %7675 = vmatpush1.bf16.msra.mxu0 %v7317
    %7676 = vmatprep.subr.bf16.mxu0 0
    %7677 = vmatpush1.bf16.msra.mxu0 %v7320
    %7678 = vmatprep.subr.bf16.mxu0 0
    %7679 = vmatpush1.bf16.msra.mxu0 %v7323
    %7680 = vmatprep.subr.bf16.mxu0 0
    %7681 = vmatpush1.bf16.msra.mxu0 %v7326
    %7682 = vmatprep.subr.bf16.mxu0 0
    %7683 = vmatpush1.bf16.msra.mxu0 %v7329
    %7684 = vmatprep.subr.bf16.mxu0 0
    %7685 = vmatpush1.bf16.msra.mxu0 %v7332
    %7686 = vmatprep.subr.bf16.mxu0 0
    %7687 = vmatpush1.bf16.msra.mxu0 %v7335
    %7688 = vmatprep.subr.bf16.mxu0 0
    %7689 = vmatpush1.bf16.msra.mxu0 %v7338
    %7690 = vmatprep.subr.bf16.mxu0 0
    %7691 = vmatpush1.bf16.msra.mxu0 %v7341
    %7692 = vmatprep.subr.bf16.mxu0 0
    %7693 = vmatpush1.bf16.msra.mxu0 %v7344
    %7694 = vmatprep.mubr.bf16.mxu0 %v5618
    %7695 = vmatmul.mubr.bf16.gmra.mrb[0].mxu0 %v5617
    %v7696 = vpop.f32.mrb[0].mxu0
    %v7697 = vadd.f32 %v7657, %v7696
    %v7698 = vpop.f32.mrb[0].mxu0
    %v7699 = vpop.f32.mrb[0].mxu0
    %v7700 = vpop.f32.mrb[0].mxu0
    %7701 = vdwg.mxu0
    %7702 = vmatprep.subr.bf16.mxu0 0
    %7703 = vmatpush1.bf16.msra.mxu0 %v7347
    %7704 = vmatprep.subr.bf16.mxu0 0
    %7705 = vmatpush1.bf16.msra.mxu0 %v7350
    %7706 = vmatprep.subr.bf16.mxu0 0
    %7707 = vmatpush1.bf16.msra.mxu0 %v7353
    %7708 = vmatprep.subr.bf16.mxu0 0
    %7709 = vmatpush1.bf16.msra.mxu0 %v7356
    %7710 = vmatprep.subr.bf16.mxu0 0
    %7711 = vmatpush1.bf16.msra.mxu0 %v7359
    %7712 = vmatprep.subr.bf16.mxu0 0
    %7713 = vmatpush1.bf16.msra.mxu0 %v7362
    %7714 = vmatprep.subr.bf16.mxu0 0
    %7715 = vmatpush1.bf16.msra.mxu0 %v7365
    %7716 = vmatprep.subr.bf16.mxu0 0
    %7717 = vmatpush1.bf16.msra.mxu0 %v7368
    %7718 = vmatprep.subr.bf16.mxu0 0
    %7719 = vmatpush1.bf16.msra.mxu0 %v7371
    %7720 = vmatprep.subr.bf16.mxu0 0
    %7721 = vmatpush1.bf16.msra.mxu0 %v7374
    %7722 = vmatprep.subr.bf16.mxu0 0
    %7723 = vmatpush1.bf16.msra.mxu0 %v7377
    %7724 = vmatprep.subr.bf16.mxu0 0
    %7725 = vmatpush1.bf16.msra.mxu0 %v7380
    %7726 = vmatprep.subr.bf16.mxu0 0
    %7727 = vmatpush1.bf16.msra.mxu0 %v7383
    %7728 = vmatprep.subr.bf16.mxu0 0
    %7729 = vmatpush1.bf16.msra.mxu0 %v7386
    %7730 = vmatprep.subr.bf16.mxu0 0
    %7731 = vmatpush1.bf16.msra.mxu0 %v7389
    %7732 = vmatprep.subr.bf16.mxu0 0
    %7733 = vmatpush1.bf16.msra.mxu0 %v7392
    %7734 = vmatprep.mubr.bf16.mxu0 %v5620
    %7735 = vmatmul.mubr.bf16.gmra.mrb[0].mxu0 %v5619
    %v7736 = vpop.f32.mrb[0].mxu0
    %v7737 = vadd.f32 %v7697, %v7736
    %v7738 = vpop.f32.mrb[0].mxu0
    %v7739 = vpop.f32.mrb[0].mxu0
    %v7740 = vpop.f32.mrb[0].mxu0
    %7741 = vdwg.mxu0
    %7742 = vmatprep.subr.bf16.mxu0 0
    %7743 = vmatpush1.bf16.msra.mxu0 %v7395
    %7744 = vmatprep.subr.bf16.mxu0 0
    %7745 = vmatpush1.bf16.msra.mxu0 %v7398
    %7746 = vmatprep.subr.bf16.mxu0 0
    %7747 = vmatpush1.bf16.msra.mxu0 %v7401
    %7748 = vmatprep.subr.bf16.mxu0 0
    %7749 = vmatpush1.bf16.msra.mxu0 %v7404
    %7750 = vmatprep.subr.bf16.mxu0 0
    %7751 = vmatpush1.bf16.msra.mxu0 %v7407
    %7752 = vmatprep.subr.bf16.mxu0 0
    %7753 = vmatpush1.bf16.msra.mxu0 %v7410
    %7754 = vmatprep.subr.bf16.mxu0 0
    %7755 = vmatpush1.bf16.msra.mxu0 %v7413
    %7756 = vmatprep.subr.bf16.mxu0 0
    %7757 = vmatpush1.bf16.msra.mxu0 %v7416
    %7758 = vmatprep.subr.bf16.mxu0 0
    %7759 = vmatpush1.bf16.msra.mxu0 %v7419
    %7760 = vmatprep.subr.bf16.mxu0 0
    %7761 = vmatpush1.bf16.msra.mxu0 %v7422
    %7762 = vmatprep.subr.bf16.mxu0 0
    %7763 = vmatpush1.bf16.msra.mxu0 %v7425
    %7764 = vmatprep.subr.bf16.mxu0 0
    %7765 = vmatpush1.bf16.msra.mxu0 %v7428
    %7766 = vmatprep.subr.bf16.mxu0 0
    %7767 = vmatpush1.bf16.msra.mxu0 %v7431
    %7768 = vmatprep.subr.bf16.mxu0 0
    %7769 = vmatpush1.bf16.msra.mxu0 %v7434
    %7770 = vmatprep.subr.bf16.mxu0 0
    %7771 = vmatpush1.bf16.msra.mxu0 %v7437
    %7772 = vmatprep.subr.bf16.mxu0 0
    %7773 = vmatpush1.bf16.msra.mxu0 %v7440
    %7774 = vmatprep.mubr.bf16.mxu0 %v5622
    %7775 = vmatmul.mubr.bf16.gmra.mrb[0].mxu0 %v5621
    %v7776 = vpop.f32.mrb[0].mxu0
    %v7777 = vadd.f32 %v7737, %v7776
    %v7778 = vpop.f32.mrb[0].mxu0
    %v7779 = vpop.f32.mrb[0].mxu0
    %v7780 = vpop.f32.mrb[0].mxu0
    %7781 = vdwg.mxu0
    %v7782 = vtanh.pop %v7616
    %v7783 = vtanh.pop %v7618
    %v7784 = vtanh.pop %v7777
    %7785 = vst [vmem:[%s17 + $0x20] sm:$0xff] %v7782
    %7786 = vst [vmem:[%s17 + $0x28] sm:$0xff] %v7783
    %7787 = vst [vmem:[%s17 + $0x30] sm:$0xff] %v7784
    // Predicated region
    $region94: #{generator_forward.1} parent=1 // pred_check
      _
    $region95: #{generator_forward.1} parent=1 // pred_check_branch
      %7789 = sbr.rel (0) target = $region97
    $region96: #{generator_forward.1} parent=1 // pred_region
      _
    $region97: #{generator_forward.1} parent=1 // pred_fallthru
      _
    // Predicated region
    $region98: #{generator_forward.1} parent=1 // pred_check
      _
    $region99: #{generator_forward.1} parent=1 // pred_check_branch
      %7791 = sbr.rel (0) target = $region101
    $region100: #{generator_forward.1} parent=1 // pred_region
      _
    $region101: #{generator_forward.1} parent=1 // pred_fallthru
      _
    %7792 = vsyncpa [#allocation7], 1
    %7793 = vsyncpa [#allocation9], 1
    %7794 = vsyncpa [#allocation12], 1
    %7795 = vsyncpa [#allocation15], 1
  %7796 = vsyncmov [#allocation5]
  %s7797 = vpop.sfrf %7796
  %p7798 = scmp.eq.s32.totalorder %s7797, 0
  %p7799 = pneg %p7798
  %7801 = shalt.err (%p7799)
  %s7802 = scalar_lea.sflag [#allocation5], 1
  %7803 = vsyncmov %s7802
  %s7804 = vpop.sfrf %7803
  %p7805 = scmp.eq.s32.totalorder %s7804, 0
  %p7806 = pneg %p7805
  %7808 = shalt.err (%p7806)
  %s7809 = scalar_lea.sflag [#allocation5], 2
  %7810 = vsyncmov %s7809
  %s7811 = vpop.sfrf %7810
  %p7812 = scmp.eq.s32.totalorder %s7811, 0
  %p7813 = pneg %p7812
  %7815 = shalt.err (%p7813)

</llo_original>
